<compile_context>
chip_gen: v7x
topology: tpu7x:2x2x1
jax: 0.10.0
libtpu: 0.0.40
codegen_flags: <defaults>
</compile_context>

<pallas_src>
import functools

import jax
import jax.numpy as jnp
from jax.experimental import pallas as pl
from jax.experimental.pallas import tpu as pltpu


def _round_up(x, m):
    return (x + m - 1) // m * m


_MOSAIC_1D = pltpu.CompilerParams(
    dimension_semantics=("arbitrary",),
    vmem_limit_bytes=32 * 1024 * 1024,   # default-scoped; per-step footprint ~1 MiB
)


# ---------------------------------------------------------------------------
# Fused ConvBlock kernel: conv3x3 (tap-packed single MXU matmul per image)
# + BN batch statistics + BN affine + ReLU (+ fused 2x2 max-pool).
# Whole batch handled in one grid step so the two-pass BN stays in-kernel.
# ---------------------------------------------------------------------------
def fused_block_kernel(slab_ref, w_ref, mask_ref, gb_ref, out_ref, y_scr, v_scr,
                       *, N, H, W, Wp, C, count, use_pool):
    # slab_ref: (N, R, Cin_pad)      zero-padded images, rows (Hp*Wp)+tail, bf16
    # w_ref:    (9*Cin_pad, C)       conv weights, tap-major rows, bf16
    # mask_ref: (1, Mrow)            1.0 where the output column is valid (w < W)
    # gb_ref:   (2, C)               [gamma; beta], f32
    # out_ref:  (N, H/2, W/2, C) bf16 (pool) or (N, Mrow, C) bf16 (no pool)
    # y_scr:    (N, Mrow, C) f32     raw conv outputs (resident for 2-pass BN)
    # v_scr:    (H/2, Wp, C) f32     per-image vertical-max rows (pool only)
    mrow = H * Wp

    # ---- pass 1: conv (one K-packed matmul / image) + BN partial stats -------
    stats = None
    for n in range(N):
        pieces = [slab_ref[n, pl.ds(ky * Wp + kx, mrow), :]
                  for ky in range(3) for kx in range(3)]
        lhs = jnp.concatenate(pieces, axis=-1)                 # (Mrow, 9*Cin_pad) bf16
        y = jnp.dot(lhs, w_ref[...], preferred_element_type=jnp.float32)  # (Mrow, C)
        y_scr[n] = y
        st = jnp.dot(mask_ref[...],                            # (1, 2*C): [sum, sumsq]
                     jnp.concatenate([y, y * y], axis=-1),
                     preferred_element_type=jnp.float32)
        stats = st if stats is None else stats + st

    # ---- batch statistics -> per-channel affine (tiny (1, C) vector math) ----
    inv_count = 1.0 / count
    mean = stats[:, :C] * inv_count
    var = jnp.maximum(stats[:, C:] * inv_count - mean * mean, 0.0)
    scale = gb_ref[0:1, :] * jax.lax.rsqrt(var + 1e-5)         # (1, C)
    shift = gb_ref[1:2, :] - mean * scale

    # ---- pass 2: affine + ReLU (+ pool), bulk stores --------------------------
    if use_pool:
        H2, W2 = H // 2, W // 2
        scale_w = jnp.broadcast_to(scale, (Wp, C))             # hoisted broadcasts
        shift_w = jnp.broadcast_to(shift, (Wp, C))
        for n in range(N):
            for h2 in range(H2):                               # Wp % 8 == 0 -> aligned reads
                r0 = y_scr[n, pl.ds((2 * h2) * Wp, Wp), :]
                r1 = y_scr[n, pl.ds((2 * h2 + 1) * Wp, Wp), :]
                v = jnp.maximum(
                    jnp.maximum(r0 * scale_w + shift_w, r1 * scale_w + shift_w), 0.0)
                v_scr[h2] = v                                  # vertical max (+relu)
            pe = v_scr[:, pl.ds(0, W2, stride=2), :]           # even-w columns
            po = v_scr[:, pl.ds(1, W2, stride=2), :]           # odd-w columns
            out_ref[n] = jnp.maximum(pe, po).astype(out_ref.dtype)  # one bulk store
    else:
        scale_m = jnp.broadcast_to(scale, (mrow, C))
        shift_m = jnp.broadcast_to(shift, (mrow, C))
        for n in range(N):
            out_ref[n] = jnp.maximum(y_scr[n] * scale_m + shift_m,
                                     0.0).astype(out_ref.dtype)


# ---------------------------------------------------------------------------
# Classifier kernel: resident bf16 matmul with f32 accumulation, 128 output lanes.
# ---------------------------------------------------------------------------
def linear_kernel(x_ref, w_ref, b_ref, o_ref):
    o_ref[...] = (jnp.dot(x_ref[...], w_ref[...], preferred_element_type=jnp.float32)
                  + b_ref[...])


# ---------------------------------------------------------------------------
# Wrappers
# ---------------------------------------------------------------------------
def conv_block(x_nhwc, w_packed, gamma_beta, use_maxpool):
    n, h, w, cin = x_nhwc.shape
    cin_p = w_packed.shape[0] // 9
    cout = w_packed.shape[1]
    hp = h + 2
    wp = _round_up(w + 2, 8)                        # width pad -> 8-aligned tap shifts
    mrow = h * wp
    r = _round_up(hp * wp + 2, 8)                   # +2 reach for the (ky=2,kx=2) tap

    # Zero-pad spatially (conv padding=1, extra right pad to reach wp) and in
    # channels, flatten each image to a (rows, Cin_pad) slab, cast to bf16 ONCE.
    xp = jnp.pad(x_nhwc, ((0, 0), (1, 1), (1, wp - w - 1), (0, cin_p - cin)))
    slab = xp.reshape(n, hp * wp, cin_p)
    slab = jnp.pad(slab, ((0, 0), (0, r - hp * wp), (0, 0))).astype(jnp.bfloat16)

    # 1.0 for conv-output rows that correspond to real (w < W) positions.
    mask_row = ((jnp.arange(mrow) % wp) < w).astype(jnp.float32).reshape(1, mrow)
    count = float(n * h * w)

    if use_maxpool:
        h2, w2 = h // 2, w // 2
        out_shape = jax.ShapeDtypeStruct((n, h2, w2, cout), jnp.bfloat16)
        out_spec = pl.BlockSpec((n, h2, w2, cout), lambda i: (0, 0, 0, 0))
    else:
        out_shape = jax.ShapeDtypeStruct((n, mrow, cout), jnp.bfloat16)
        out_spec = pl.BlockSpec((n, mrow, cout), lambda i: (0, 0, 0))

    out = pl.pallas_call(
        functools.partial(fused_block_kernel, N=n, H=h, W=w, Wp=wp, C=cout,
                          count=count, use_pool=use_maxpool),
        out_shape=out_shape,
        grid=(1,),
        in_specs=[pl.BlockSpec((n, r, cin_p), lambda i: (0, 0, 0)),
                  pl.BlockSpec((9 * cin_p, cout), lambda i: (0, 0)),
                  pl.BlockSpec((1, mrow), lambda i: (0, 0)),
                  pl.BlockSpec((2, cout), lambda i: (0, 0))],
        out_specs=out_spec,
        scratch_shapes=[pltpu.VMEM((n, mrow, cout), jnp.float32),
                        pltpu.VMEM((max(h // 2, 1), wp, cout), jnp.float32)],
        compiler_params=_MOSAIC_1D,
    )(slab, w_packed, mask_row, gamma_beta)

    if use_maxpool:
        return out                                   # (n, h/2, w/2, cout) bf16 (NHWC)
    return out.reshape(n, h, wp, cout)[:, :, :w, :]  # drop padded garbage columns


def classifier(feat, w_pad, b_pad, num_way, scale=1.0):
    n, f = feat.shape
    n_pad = w_pad.shape[1]                           # 128 (padded output lanes)
    out = pl.pallas_call(
        linear_kernel,
        out_shape=jax.ShapeDtypeStruct((n, n_pad), jnp.float32),
        grid=(1,),
        in_specs=[pl.BlockSpec((n, f), lambda i: (0, 0)),
                  pl.BlockSpec((f, n_pad), lambda i: (0, 0)),
                  pl.BlockSpec((1, n_pad), lambda i: (0, 0))],
        out_specs=pl.BlockSpec((n, n_pad), lambda i: (0, 0)),
        compiler_params=_MOSAIC_1D,
    )(feat, w_pad, b_pad)
    return scale * out[:, :num_way]


@functools.partial(jax.jit, static_argnames=("depth", "num_way"))
def convnet_forward(x_nchw, params, depth, num_way):
    x = jnp.transpose(x_nchw, (0, 2, 3, 1))          # NCHW -> NHWC (channels in lanes)
    for i in range(depth):
        w_packed, gb = params["blocks"][i]
        x = conv_block(x, w_packed, gb, use_maxpool=(i < 4))
    n = x.shape[0]
    # nn.Flatten's (C,H,W) order is folded into the classifier weight layout, so
    # the NHWC feature map flattens directly (free reshape, already bf16).
    feat = x.reshape(n, -1)
    w_pad, b_pad = params["classifier"]
    return classifier(feat, w_pad, b_pad, num_way, scale=1.0)


# ---------------------------------------------------------------------------
# Deterministic parameter init (kaiming-uniform conv/linear weights, BN gamma=1 /
# beta=0, biases 0).  Weights are pre-laid-out ONCE for the kernels:
#   conv:       (Cout, Cin, 3, 3) -> (9*Cin_pad, Cout)  bf16 (tap-packed K rows)
#   classifier: (num_way, C*5*5)  -> (5*5*C, 128)       bf16 (HWC row order)
# ---------------------------------------------------------------------------
def init_params(key, depth, hidden_channels, num_way):
    blocks = []
    for i in range(depth):
        cin = 3 if i == 0 else 64                    # mirrors the reference constructor
        key, kw = jax.random.split(key)
        bound = (6.0 / (cin * 9)) ** 0.5             # kaiming_uniform_ (fan_in, a=0)
        wt = jax.random.uniform(kw, (hidden_channels, cin, 3, 3), jnp.float32,
                                -bound, bound)
        cin_p = _round_up(cin, 8)
        w9 = jnp.transpose(wt, (2, 3, 1, 0)).reshape(9, cin, hidden_channels)
        w9 = jnp.pad(w9, ((0, 0), (0, cin_p - cin), (0, 0)))
        w_packed = w9.reshape(9 * cin_p, hidden_channels).astype(jnp.bfloat16)
        gamma = jnp.ones((hidden_channels,), jnp.float32)
        beta = jnp.zeros((hidden_channels,), jnp.float32)
        gb = jnp.stack([gamma, beta], axis=0)        # (2, Cout)
        # conv bias (init 0) omitted: cancelled exactly by train-mode BN mean subtraction.
        blocks.append((w_packed, gb))

    feat_dim = hidden_channels * 5 * 5
    key, kl = jax.random.split(key)
    bound = (6.0 / feat_dim) ** 0.5
    lw = jax.random.uniform(kl, (num_way, feat_dim), jnp.float32, -bound, bound)
    lw_hwc = jnp.transpose(lw.reshape(num_way, hidden_channels, 5, 5),
                           (2, 3, 1, 0)).reshape(feat_dim, num_way)
    n_pad = 128                                      # pad classifier lanes to a full vreg
    w_pad = jnp.zeros((feat_dim, n_pad), jnp.float32).at[:, :num_way].set(lw_hwc)
    w_pad = w_pad.astype(jnp.bfloat16)
    b_pad = jnp.zeros((1, n_pad), jnp.float32)       # Linear bias init 0 (padded)
    return {"blocks": blocks, "classifier": (w_pad, b_pad)}


if __name__ == "__main__":
    # hidden_channels must be 64 (blocks i>0 hardcode 64 input channels) and the
    # classifier expects a final 5x5 map: depth=2 with 20x20 input gives 20->10->5.
    batch, in_channels, spatial = 2, 3, 20
    hidden_channels, num_way, depth = 64, 5, 2

    key = jax.random.PRNGKey(0)
    key, kx = jax.random.split(key)
    x = jax.random.normal(kx, (batch, in_channels, spatial, spatial), jnp.float32)
    params = init_params(key, depth, hidden_channels, num_way)

    out = convnet_forward(x, params, depth, num_way)
    out = jax.block_until_ready(out)
    assert out.shape == (batch, num_way), out.shape
    assert bool(jnp.all(jnp.isfinite(out)))
    print("KERNEL_OK")
</pallas_src>

<mosaic_0001>
module attributes {stable_mosaic.version = 11 : i64} {
  func.func @fused_block_kernel(%arg0: i32, %arg1: memref<2x536x8xbf16, #tpu.memory_space<vmem>>, %arg2: memref<72x64xbf16, #tpu.memory_space<vmem>>, %arg3: memref<1x480xf32, #tpu.memory_space<vmem>>, %arg4: memref<2x64xf32, #tpu.memory_space<vmem>>, %arg5: memref<2x10x10x64xbf16, #tpu.memory_space<vmem>>, %arg6: memref<2x480x64xf32, #tpu.memory_space<vmem>>, %arg7: memref<10x24x64xf32, #tpu.memory_space<vmem>>) attributes {dimension_semantics = [#tpu.dimension_semantics<arbitrary>], iteration_bounds = array<i64: 1>, scalar_prefetch = 0 : i64, scratch_operands = 2 : i64, tpu.core_type = #tpu.core_type<tc>, window_params = [{pipeline_mode = #tpu.pipeline_mode<synchronous>, transform_indices = @transform_0, window_bounds = array<i64: 2, 536, 8>}, {pipeline_mode = #tpu.pipeline_mode<synchronous>, transform_indices = @transform_1, window_bounds = array<i64: 72, 64>}, {pipeline_mode = #tpu.pipeline_mode<synchronous>, transform_indices = @transform_2, window_bounds = array<i64: 1, 480>}, {pipeline_mode = #tpu.pipeline_mode<synchronous>, transform_indices = @transform_3, window_bounds = array<i64: 2, 64>}, {pipeline_mode = #tpu.pipeline_mode<synchronous>, transform_indices = @transform_4, window_bounds = array<i64: 2, 10, 10, 64>}]} {
    %c0 = arith.constant 0 : index
    %c0_0 = arith.constant 0 : index
    %c0_1 = arith.constant 0 : index
    %0 = vector.load %arg1[%c0, %c0_0, %c0_1] : memref<2x536x8xbf16, #tpu.memory_space<vmem>>, vector<1x480x8xbf16>
    %1 = vector.shape_cast %0 : vector<1x480x8xbf16> to vector<480x8xbf16>
    %c0_2 = arith.constant 0 : index
    %c1 = arith.constant 1 : index
    %c0_3 = arith.constant 0 : index
    %2 = vector.load %arg1[%c0_2, %c1, %c0_3] : memref<2x536x8xbf16, #tpu.memory_space<vmem>>, vector<1x480x8xbf16>
    %3 = vector.shape_cast %2 : vector<1x480x8xbf16> to vector<480x8xbf16>
    %c0_4 = arith.constant 0 : index
    %c2 = arith.constant 2 : index
    %c0_5 = arith.constant 0 : index
    %4 = vector.load %arg1[%c0_4, %c2, %c0_5] : memref<2x536x8xbf16, #tpu.memory_space<vmem>>, vector<1x480x8xbf16>
    %5 = vector.shape_cast %4 : vector<1x480x8xbf16> to vector<480x8xbf16>
    %c0_6 = arith.constant 0 : index
    %c24 = arith.constant 24 : index
    %c0_7 = arith.constant 0 : index
    %6 = vector.load %arg1[%c0_6, %c24, %c0_7] : memref<2x536x8xbf16, #tpu.memory_space<vmem>>, vector<1x480x8xbf16>
    %7 = vector.shape_cast %6 : vector<1x480x8xbf16> to vector<480x8xbf16>
    %c0_8 = arith.constant 0 : index
    %c25 = arith.constant 25 : index
    %c0_9 = arith.constant 0 : index
    %8 = vector.load %arg1[%c0_8, %c25, %c0_9] : memref<2x536x8xbf16, #tpu.memory_space<vmem>>, vector<1x480x8xbf16>
    %9 = vector.shape_cast %8 : vector<1x480x8xbf16> to vector<480x8xbf16>
    %c0_10 = arith.constant 0 : index
    %c26 = arith.constant 26 : index
    %c0_11 = arith.constant 0 : index
    %10 = vector.load %arg1[%c0_10, %c26, %c0_11] : memref<2x536x8xbf16, #tpu.memory_space<vmem>>, vector<1x480x8xbf16>
    %11 = vector.shape_cast %10 : vector<1x480x8xbf16> to vector<480x8xbf16>
    %c0_12 = arith.constant 0 : index
    %c48 = arith.constant 48 : index
    %c0_13 = arith.constant 0 : index
    %12 = vector.load %arg1[%c0_12, %c48, %c0_13] : memref<2x536x8xbf16, #tpu.memory_space<vmem>>, vector<1x480x8xbf16>
    %13 = vector.shape_cast %12 : vector<1x480x8xbf16> to vector<480x8xbf16>
    %c0_14 = arith.constant 0 : index
    %c49 = arith.constant 49 : index
    %c0_15 = arith.constant 0 : index
    %14 = vector.load %arg1[%c0_14, %c49, %c0_15] : memref<2x536x8xbf16, #tpu.memory_space<vmem>>, vector<1x480x8xbf16>
    %15 = vector.shape_cast %14 : vector<1x480x8xbf16> to vector<480x8xbf16>
    %c0_16 = arith.constant 0 : index
    %c50 = arith.constant 50 : index
    %c0_17 = arith.constant 0 : index
    %16 = vector.load %arg1[%c0_16, %c50, %c0_17] : memref<2x536x8xbf16, #tpu.memory_space<vmem>>, vector<1x480x8xbf16>
    %17 = vector.shape_cast %16 : vector<1x480x8xbf16> to vector<480x8xbf16>
    %18 = tpu.concatenate %1, %3, %5, %7, %9, %11, %13, %15, %17 in 1 : vector<480x8xbf16>, vector<480x8xbf16>, vector<480x8xbf16>, vector<480x8xbf16>, vector<480x8xbf16>, vector<480x8xbf16>, vector<480x8xbf16>, vector<480x8xbf16>, vector<480x8xbf16> -> vector<480x72xbf16>
    %c0_18 = arith.constant 0 : index
    %c0_19 = arith.constant 0 : index
    %19 = vector.load %arg2[%c0_18, %c0_19] : memref<72x64xbf16, #tpu.memory_space<vmem>>, vector<72x64xbf16>
    %cst = arith.constant dense<0.000000e+00> : vector<480x64xf32>
    %20 = tpu.matmul %18, %19, %cst {dimension_numbers = #tpu.dot_dimension_numbers<[1], [0], [0], [1], [0, 0, 1, 1], [], []>} : vector<480x72xbf16>, vector<72x64xbf16>, vector<480x64xf32> -> vector<480x64xf32>
    %c0_20 = arith.constant 0 : index
    %c0_21 = arith.constant 0 : index
    %c0_22 = arith.constant 0 : index
    %21 = vector.load %arg6[%c0_20, %c0_21, %c0_22] : memref<2x480x64xf32, #tpu.memory_space<vmem>>, vector<1x480x64xf32>
    %22 = vector.shape_cast %21 : vector<1x480x64xf32> to vector<480x64xf32>
    %23 = vector.shape_cast %20 : vector<480x64xf32> to vector<1x480x64xf32>
    tpu.vector_store %arg6[%c0_20, %c0_21, %c0_22], %23 {strides = array<i32>} : memref<2x480x64xf32, #tpu.memory_space<vmem>>, vector<1x480x64xf32>,
    %c0_23 = arith.constant 0 : index
    %c0_24 = arith.constant 0 : index
    %24 = vector.load %arg3[%c0_23, %c0_24] : memref<1x480xf32, #tpu.memory_space<vmem>>, vector<1x480xf32>
    %25 = arith.mulf %20, %20 : vector<480x64xf32>
    %26 = tpu.concatenate %20, %25 in 1 : vector<480x64xf32>, vector<480x64xf32> -> vector<480x128xf32>
    %cst_25 = arith.constant dense<0.000000e+00> : vector<1x128xf32>
    %27 = tpu.matmul %24, %26, %cst_25 {dimension_numbers = #tpu.dot_dimension_numbers<[1], [0], [0], [1], [0, 0, 1, 1], [], []>} : vector<1x480xf32>, vector<480x128xf32>, vector<1x128xf32> -> vector<1x128xf32>
    %c1_26 = arith.constant 1 : index
    %c0_27 = arith.constant 0 : index
    %c0_28 = arith.constant 0 : index
    %28 = vector.load %arg1[%c1_26, %c0_27, %c0_28] : memref<2x536x8xbf16, #tpu.memory_space<vmem>>, vector<1x480x8xbf16>
    %29 = vector.shape_cast %28 : vector<1x480x8xbf16> to vector<480x8xbf16>
    %c1_29 = arith.constant 1 : index
    %c1_30 = arith.constant 1 : index
    %c0_31 = arith.constant 0 : index
    %30 = vector.load %arg1[%c1_29, %c1_30, %c0_31] : memref<2x536x8xbf16, #tpu.memory_space<vmem>>, vector<1x480x8xbf16>
    %31 = vector.shape_cast %30 : vector<1x480x8xbf16> to vector<480x8xbf16>
    %c1_32 = arith.constant 1 : index
    %c2_33 = arith.constant 2 : index
    %c0_34 = arith.constant 0 : index
    %32 = vector.load %arg1[%c1_32, %c2_33, %c0_34] : memref<2x536x8xbf16, #tpu.memory_space<vmem>>, vector<1x480x8xbf16>
    %33 = vector.shape_cast %32 : vector<1x480x8xbf16> to vector<480x8xbf16>
    %c1_35 = arith.constant 1 : index
    %c24_36 = arith.constant 24 : index
    %c0_37 = arith.constant 0 : index
    %34 = vector.load %arg1[%c1_35, %c24_36, %c0_37] : memref<2x536x8xbf16, #tpu.memory_space<vmem>>, vector<1x480x8xbf16>
    %35 = vector.shape_cast %34 : vector<1x480x8xbf16> to vector<480x8xbf16>
    %c1_38 = arith.constant 1 : index
    %c25_39 = arith.constant 25 : index
    %c0_40 = arith.constant 0 : index
    %36 = vector.load %arg1[%c1_38, %c25_39, %c0_40] : memref<2x536x8xbf16, #tpu.memory_space<vmem>>, vector<1x480x8xbf16>
    %37 = vector.shape_cast %36 : vector<1x480x8xbf16> to vector<480x8xbf16>
    %c1_41 = arith.constant 1 : index
    %c26_42 = arith.constant 26 : index
    %c0_43 = arith.constant 0 : index
    %38 = vector.load %arg1[%c1_41, %c26_42, %c0_43] : memref<2x536x8xbf16, #tpu.memory_space<vmem>>, vector<1x480x8xbf16>
    %39 = vector.shape_cast %38 : vector<1x480x8xbf16> to vector<480x8xbf16>
    %c1_44 = arith.constant 1 : index
    %c48_45 = arith.constant 48 : index
    %c0_46 = arith.constant 0 : index
    %40 = vector.load %arg1[%c1_44, %c48_45, %c0_46] : memref<2x536x8xbf16, #tpu.memory_space<vmem>>, vector<1x480x8xbf16>
    %41 = vector.shape_cast %40 : vector<1x480x8xbf16> to vector<480x8xbf16>
    %c1_47 = arith.constant 1 : index
    %c49_48 = arith.constant 49 : index
    %c0_49 = arith.constant 0 : index
    %42 = vector.load %arg1[%c1_47, %c49_48, %c0_49] : memref<2x536x8xbf16, #tpu.memory_space<vmem>>, vector<1x480x8xbf16>
    %43 = vector.shape_cast %42 : vector<1x480x8xbf16> to vector<480x8xbf16>
    %c1_50 = arith.constant 1 : index
    %c50_51 = arith.constant 50 : index
    %c0_52 = arith.constant 0 : index
    %44 = vector.load %arg1[%c1_50, %c50_51, %c0_52] : memref<2x536x8xbf16, #tpu.memory_space<vmem>>, vector<1x480x8xbf16>
    %45 = vector.shape_cast %44 : vector<1x480x8xbf16> to vector<480x8xbf16>
    %46 = tpu.concatenate %29, %31, %33, %35, %37, %39, %41, %43, %45 in 1 : vector<480x8xbf16>, vector<480x8xbf16>, vector<480x8xbf16>, vector<480x8xbf16>, vector<480x8xbf16>, vector<480x8xbf16>, vector<480x8xbf16>, vector<480x8xbf16>, vector<480x8xbf16> -> vector<480x72xbf16>
    %c0_53 = arith.constant 0 : index
    %c0_54 = arith.constant 0 : index
    %47 = vector.load %arg2[%c0_53, %c0_54] : memref<72x64xbf16, #tpu.memory_space<vmem>>, vector<72x64xbf16>
    %cst_55 = arith.constant dense<0.000000e+00> : vector<480x64xf32>
    %48 = tpu.matmul %46, %47, %cst_55 {dimension_numbers = #tpu.dot_dimension_numbers<[1], [0], [0], [1], [0, 0, 1, 1], [], []>} : vector<480x72xbf16>, vector<72x64xbf16>, vector<480x64xf32> -> vector<480x64xf32>
    %c1_56 = arith.constant 1 : index
    %c0_57 = arith.constant 0 : index
    %c0_58 = arith.constant 0 : index
    %49 = vector.load %arg6[%c1_56, %c0_57, %c0_58] : memref<2x480x64xf32, #tpu.memory_space<vmem>>, vector<1x480x64xf32>
    %50 = vector.shape_cast %49 : vector<1x480x64xf32> to vector<480x64xf32>
    %51 = vector.shape_cast %48 : vector<480x64xf32> to vector<1x480x64xf32>
    tpu.vector_store %arg6[%c1_56, %c0_57, %c0_58], %51 {strides = array<i32>} : memref<2x480x64xf32, #tpu.memory_space<vmem>>, vector<1x480x64xf32>,
    %c0_59 = arith.constant 0 : index
    %c0_60 = arith.constant 0 : index
    %52 = vector.load %arg3[%c0_59, %c0_60] : memref<1x480xf32, #tpu.memory_space<vmem>>, vector<1x480xf32>
    %53 = arith.mulf %48, %48 : vector<480x64xf32>
    %54 = tpu.concatenate %48, %53 in 1 : vector<480x64xf32>, vector<480x64xf32> -> vector<480x128xf32>
    %cst_61 = arith.constant dense<0.000000e+00> : vector<1x128xf32>
    %55 = tpu.matmul %52, %54, %cst_61 {dimension_numbers = #tpu.dot_dimension_numbers<[1], [0], [0], [1], [0, 0, 1, 1], [], []>} : vector<1x480xf32>, vector<480x128xf32>, vector<1x128xf32> -> vector<1x128xf32>
    %56 = arith.addf %27, %55 : vector<1x128xf32>
    %57 = vector.extract_strided_slice %56 {offsets = [0, 0], sizes = [1, 64], strides = [1, 1]} : vector<1x128xf32> to vector<1x64xf32>
    %cst_62 = arith.constant 1.250000e-03 : f32
    %58 = vector.broadcast %cst_62 : f32 to vector<1x64xf32>
    %59 = arith.mulf %57, %58 : vector<1x64xf32>
    %60 = vector.extract_strided_slice %56 {offsets = [0, 64], sizes = [1, 64], strides = [1, 1]} : vector<1x128xf32> to vector<1x64xf32>
    %cst_63 = arith.constant 1.250000e-03 : f32
    %61 = vector.broadcast %cst_63 : f32 to vector<1x64xf32>
    %62 = arith.mulf %60, %61 : vector<1x64xf32>
    %63 = arith.mulf %59, %59 : vector<1x64xf32>
    %64 = arith.subf %62, %63 : vector<1x64xf32>
    %cst_64 = arith.constant 0.000000e+00 : f32
    %65 = vector.broadcast %cst_64 : f32 to vector<1x64xf32>
    %66 = arith.maximumf %64, %65 : vector<1x64xf32>
    %c0_65 = arith.constant 0 : index
    %c0_66 = arith.constant 0 : index
    %67 = vector.load %arg4[%c0_65, %c0_66] : memref<2x64xf32, #tpu.memory_space<vmem>>, vector<1x64xf32>
    %cst_67 = arith.constant 9.99999974E-6 : f32
    %68 = vector.broadcast %cst_67 : f32 to vector<1x64xf32>
    %69 = arith.addf %66, %68 : vector<1x64xf32>
    %70 = math.rsqrt %69 : vector<1x64xf32>
    %71 = arith.mulf %67, %70 : vector<1x64xf32>
    %c1_68 = arith.constant 1 : index
    %c0_69 = arith.constant 0 : index
    %72 = vector.load %arg4[%c1_68, %c0_69] : memref<2x64xf32, #tpu.memory_space<vmem>>, vector<1x64xf32>
    %73 = arith.mulf %59, %71 : vector<1x64xf32>
    %74 = arith.subf %72, %73 : vector<1x64xf32>
    %75 = vector.shape_cast %71 : vector<1x64xf32> to vector<1x64xf32>
    %76 = vector.broadcast %75 : vector<1x64xf32> to vector<24x64xf32>
    %77 = vector.shape_cast %74 : vector<1x64xf32> to vector<1x64xf32>
    %78 = vector.broadcast %77 : vector<1x64xf32> to vector<24x64xf32>
    %c0_70 = arith.constant 0 : index
    %c0_71 = arith.constant 0 : index
    %c0_72 = arith.constant 0 : index
    %79 = vector.load %arg6[%c0_70, %c0_71, %c0_72] : memref<2x480x64xf32, #tpu.memory_space<vmem>>, vector<1x24x64xf32>
    %80 = vector.shape_cast %79 : vector<1x24x64xf32> to vector<24x64xf32>
    %c0_73 = arith.constant 0 : index
    %c24_74 = arith.constant 24 : index
    %c0_75 = arith.constant 0 : index
    %81 = vector.load %arg6[%c0_73, %c24_74, %c0_75] : memref<2x480x64xf32, #tpu.memory_space<vmem>>, vector<1x24x64xf32>
    %82 = vector.shape_cast %81 : vector<1x24x64xf32> to vector<24x64xf32>
    %83 = arith.mulf %80, %76 : vector<24x64xf32>
    %84 = arith.addf %83, %78 : vector<24x64xf32>
    %85 = arith.mulf %82, %76 : vector<24x64xf32>
    %86 = arith.addf %85, %78 : vector<24x64xf32>
    %87 = arith.maximumf %84, %86 : vector<24x64xf32>
    %cst_76 = arith.constant 0.000000e+00 : f32
    %88 = vector.broadcast %cst_76 : f32 to vector<24x64xf32>
    %89 = arith.maximumf %87, %88 : vector<24x64xf32>
    %c0_77 = arith.constant 0 : index
    %c0_78 = arith.constant 0 : index
    %c0_79 = arith.constant 0 : index
    %90 = vector.load %arg7[%c0_77, %c0_78, %c0_79] : memref<10x24x64xf32, #tpu.memory_space<vmem>>, vector<1x24x64xf32>
    %91 = vector.shape_cast %90 : vector<1x24x64xf32> to vector<24x64xf32>
    %92 = vector.shape_cast %89 : vector<24x64xf32> to vector<1x24x64xf32>
    tpu.vector_store %arg7[%c0_77, %c0_78, %c0_79], %92 {strides = array<i32>} : memref<10x24x64xf32, #tpu.memory_space<vmem>>, vector<1x24x64xf32>,
    %c0_80 = arith.constant 0 : index
    %c48_81 = arith.constant 48 : index
    %c0_82 = arith.constant 0 : index
    %93 = vector.load %arg6[%c0_80, %c48_81, %c0_82] : memref<2x480x64xf32, #tpu.memory_space<vmem>>, vector<1x24x64xf32>
    %94 = vector.shape_cast %93 : vector<1x24x64xf32> to vector<24x64xf32>
    %c0_83 = arith.constant 0 : index
    %c72 = arith.constant 72 : index
    %c0_84 = arith.constant 0 : index
    %95 = vector.load %arg6[%c0_83, %c72, %c0_84] : memref<2x480x64xf32, #tpu.memory_space<vmem>>, vector<1x24x64xf32>
    %96 = vector.shape_cast %95 : vector<1x24x64xf32> to vector<24x64xf32>
    %97 = arith.mulf %94, %76 : vector<24x64xf32>
    %98 = arith.addf %97, %78 : vector<24x64xf32>
    %99 = arith.mulf %96, %76 : vector<24x64xf32>
    %100 = arith.addf %99, %78 : vector<24x64xf32>
    %101 = arith.maximumf %98, %100 : vector<24x64xf32>
    %cst_85 = arith.constant 0.000000e+00 : f32
    %102 = vector.broadcast %cst_85 : f32 to vector<24x64xf32>
    %103 = arith.maximumf %101, %102 : vector<24x64xf32>
    %c1_86 = arith.constant 1 : index
    %c0_87 = arith.constant 0 : index
    %c0_88 = arith.constant 0 : index
    %104 = vector.load %arg7[%c1_86, %c0_87, %c0_88] : memref<10x24x64xf32, #tpu.memory_space<vmem>>, vector<1x24x64xf32>
    %105 = vector.shape_cast %104 : vector<1x24x64xf32> to vector<24x64xf32>
    %106 = vector.shape_cast %103 : vector<24x64xf32> to vector<1x24x64xf32>
    tpu.vector_store %arg7[%c1_86, %c0_87, %c0_88], %106 {strides = array<i32>} : memref<10x24x64xf32, #tpu.memory_space<vmem>>, vector<1x24x64xf32>,
    %c0_89 = arith.constant 0 : index
    %c96 = arith.constant 96 : index
    %c0_90 = arith.constant 0 : index
    %107 = vector.load %arg6[%c0_89, %c96, %c0_90] : memref<2x480x64xf32, #tpu.memory_space<vmem>>, vector<1x24x64xf32>
    %108 = vector.shape_cast %107 : vector<1x24x64xf32> to vector<24x64xf32>
    %c0_91 = arith.constant 0 : index
    %c120 = arith.constant 120 : index
    %c0_92 = arith.constant 0 : index
    %109 = vector.load %arg6[%c0_91, %c120, %c0_92] : memref<2x480x64xf32, #tpu.memory_space<vmem>>, vector<1x24x64xf32>
    %110 = vector.shape_cast %109 : vector<1x24x64xf32> to vector<24x64xf32>
    %111 = arith.mulf %108, %76 : vector<24x64xf32>
    %112 = arith.addf %111, %78 : vector<24x64xf32>
    %113 = arith.mulf %110, %76 : vector<24x64xf32>
    %114 = arith.addf %113, %78 : vector<24x64xf32>
    %115 = arith.maximumf %112, %114 : vector<24x64xf32>
    %cst_93 = arith.constant 0.000000e+00 : f32
    %116 = vector.broadcast %cst_93 : f32 to vector<24x64xf32>
    %117 = arith.maximumf %115, %116 : vector<24x64xf32>
    %c2_94 = arith.constant 2 : index
    %c0_95 = arith.constant 0 : index
    %c0_96 = arith.constant 0 : index
    %118 = vector.load %arg7[%c2_94, %c0_95, %c0_96] : memref<10x24x64xf32, #tpu.memory_space<vmem>>, vector<1x24x64xf32>
    %119 = vector.shape_cast %118 : vector<1x24x64xf32> to vector<24x64xf32>
    %120 = vector.shape_cast %117 : vector<24x64xf32> to vector<1x24x64xf32>
    tpu.vector_store %arg7[%c2_94, %c0_95, %c0_96], %120 {strides = array<i32>} : memref<10x24x64xf32, #tpu.memory_space<vmem>>, vector<1x24x64xf32>,
    %c0_97 = arith.constant 0 : index
    %c144 = arith.constant 144 : index
    %c0_98 = arith.constant 0 : index
    %121 = vector.load %arg6[%c0_97, %c144, %c0_98] : memref<2x480x64xf32, #tpu.memory_space<vmem>>, vector<1x24x64xf32>
    %122 = vector.shape_cast %121 : vector<1x24x64xf32> to vector<24x64xf32>
    %c0_99 = arith.constant 0 : index
    %c168 = arith.constant 168 : index
    %c0_100 = arith.constant 0 : index
    %123 = vector.load %arg6[%c0_99, %c168, %c0_100] : memref<2x480x64xf32, #tpu.memory_space<vmem>>, vector<1x24x64xf32>
    %124 = vector.shape_cast %123 : vector<1x24x64xf32> to vector<24x64xf32>
    %125 = arith.mulf %122, %76 : vector<24x64xf32>
    %126 = arith.addf %125, %78 : vector<24x64xf32>
    %127 = arith.mulf %124, %76 : vector<24x64xf32>
    %128 = arith.addf %127, %78 : vector<24x64xf32>
    %129 = arith.maximumf %126, %128 : vector<24x64xf32>
    %cst_101 = arith.constant 0.000000e+00 : f32
    %130 = vector.broadcast %cst_101 : f32 to vector<24x64xf32>
    %131 = arith.maximumf %129, %130 : vector<24x64xf32>
    %c3 = arith.constant 3 : index
    %c0_102 = arith.constant 0 : index
    %c0_103 = arith.constant 0 : index
    %132 = vector.load %arg7[%c3, %c0_102, %c0_103] : memref<10x24x64xf32, #tpu.memory_space<vmem>>, vector<1x24x64xf32>
    %133 = vector.shape_cast %132 : vector<1x24x64xf32> to vector<24x64xf32>
    %134 = vector.shape_cast %131 : vector<24x64xf32> to vector<1x24x64xf32>
    tpu.vector_store %arg7[%c3, %c0_102, %c0_103], %134 {strides = array<i32>} : memref<10x24x64xf32, #tpu.memory_space<vmem>>, vector<1x24x64xf32>,
    %c0_104 = arith.constant 0 : index
    %c192 = arith.constant 192 : index
    %c0_105 = arith.constant 0 : index
    %135 = vector.load %arg6[%c0_104, %c192, %c0_105] : memref<2x480x64xf32, #tpu.memory_space<vmem>>, vector<1x24x64xf32>
    %136 = vector.shape_cast %135 : vector<1x24x64xf32> to vector<24x64xf32>
    %c0_106 = arith.constant 0 : index
    %c216 = arith.constant 216 : index
    %c0_107 = arith.constant 0 : index
    %137 = vector.load %arg6[%c0_106, %c216, %c0_107] : memref<2x480x64xf32, #tpu.memory_space<vmem>>, vector<1x24x64xf32>
    %138 = vector.shape_cast %137 : vector<1x24x64xf32> to vector<24x64xf32>
    %139 = arith.mulf %136, %76 : vector<24x64xf32>
    %140 = arith.addf %139, %78 : vector<24x64xf32>
    %141 = arith.mulf %138, %76 : vector<24x64xf32>
    %142 = arith.addf %141, %78 : vector<24x64xf32>
    %143 = arith.maximumf %140, %142 : vector<24x64xf32>
    %cst_108 = arith.constant 0.000000e+00 : f32
    %144 = vector.broadcast %cst_108 : f32 to vector<24x64xf32>
    %145 = arith.maximumf %143, %144 : vector<24x64xf32>
    %c4 = arith.constant 4 : index
    %c0_109 = arith.constant 0 : index
    %c0_110 = arith.constant 0 : index
    %146 = vector.load %arg7[%c4, %c0_109, %c0_110] : memref<10x24x64xf32, #tpu.memory_space<vmem>>, vector<1x24x64xf32>
    %147 = vector.shape_cast %146 : vector<1x24x64xf32> to vector<24x64xf32>
    %148 = vector.shape_cast %145 : vector<24x64xf32> to vector<1x24x64xf32>
    tpu.vector_store %arg7[%c4, %c0_109, %c0_110], %148 {strides = array<i32>} : memref<10x24x64xf32, #tpu.memory_space<vmem>>, vector<1x24x64xf32>,
    %c0_111 = arith.constant 0 : index
    %c240 = arith.constant 240 : index
    %c0_112 = arith.constant 0 : index
    %149 = vector.load %arg6[%c0_111, %c240, %c0_112] : memref<2x480x64xf32, #tpu.memory_space<vmem>>, vector<1x24x64xf32>
    %150 = vector.shape_cast %149 : vector<1x24x64xf32> to vector<24x64xf32>
    %c0_113 = arith.constant 0 : index
    %c264 = arith.constant 264 : index
    %c0_114 = arith.constant 0 : index
    %151 = vector.load %arg6[%c0_113, %c264, %c0_114] : memref<2x480x64xf32, #tpu.memory_space<vmem>>, vector<1x24x64xf32>
    %152 = vector.shape_cast %151 : vector<1x24x64xf32> to vector<24x64xf32>
    %153 = arith.mulf %150, %76 : vector<24x64xf32>
    %154 = arith.addf %153, %78 : vector<24x64xf32>
    %155 = arith.mulf %152, %76 : vector<24x64xf32>
    %156 = arith.addf %155, %78 : vector<24x64xf32>
    %157 = arith.maximumf %154, %156 : vector<24x64xf32>
    %cst_115 = arith.constant 0.000000e+00 : f32
    %158 = vector.broadcast %cst_115 : f32 to vector<24x64xf32>
    %159 = arith.maximumf %157, %158 : vector<24x64xf32>
    %c5 = arith.constant 5 : index
    %c0_116 = arith.constant 0 : index
    %c0_117 = arith.constant 0 : index
    %160 = vector.load %arg7[%c5, %c0_116, %c0_117] : memref<10x24x64xf32, #tpu.memory_space<vmem>>, vector<1x24x64xf32>
    %161 = vector.shape_cast %160 : vector<1x24x64xf32> to vector<24x64xf32>
    %162 = vector.shape_cast %159 : vector<24x64xf32> to vector<1x24x64xf32>
    tpu.vector_store %arg7[%c5, %c0_116, %c0_117], %162 {strides = array<i32>} : memref<10x24x64xf32, #tpu.memory_space<vmem>>, vector<1x24x64xf32>,
    %c0_118 = arith.constant 0 : index
    %c288 = arith.constant 288 : index
    %c0_119 = arith.constant 0 : index
    %163 = vector.load %arg6[%c0_118, %c288, %c0_119] : memref<2x480x64xf32, #tpu.memory_space<vmem>>, vector<1x24x64xf32>
    %164 = vector.shape_cast %163 : vector<1x24x64xf32> to vector<24x64xf32>
    %c0_120 = arith.constant 0 : index
    %c312 = arith.constant 312 : index
    %c0_121 = arith.constant 0 : index
    %165 = vector.load %arg6[%c0_120, %c312, %c0_121] : memref<2x480x64xf32, #tpu.memory_space<vmem>>, vector<1x24x64xf32>
    %166 = vector.shape_cast %165 : vector<1x24x64xf32> to vector<24x64xf32>
    %167 = arith.mulf %164, %76 : vector<24x64xf32>
    %168 = arith.addf %167, %78 : vector<24x64xf32>
    %169 = arith.mulf %166, %76 : vector<24x64xf32>
    %170 = arith.addf %169, %78 : vector<24x64xf32>
    %171 = arith.maximumf %168, %170 : vector<24x64xf32>
    %cst_122 = arith.constant 0.000000e+00 : f32
    %172 = vector.broadcast %cst_122 : f32 to vector<24x64xf32>
    %173 = arith.maximumf %171, %172 : vector<24x64xf32>
    %c6 = arith.constant 6 : index
    %c0_123 = arith.constant 0 : index
    %c0_124 = arith.constant 0 : index
    %174 = vector.load %arg7[%c6, %c0_123, %c0_124] : memref<10x24x64xf32, #tpu.memory_space<vmem>>, vector<1x24x64xf32>
    %175 = vector.shape_cast %174 : vector<1x24x64xf32> to vector<24x64xf32>
    %176 = vector.shape_cast %173 : vector<24x64xf32> to vector<1x24x64xf32>
    tpu.vector_store %arg7[%c6, %c0_123, %c0_124], %176 {strides = array<i32>} : memref<10x24x64xf32, #tpu.memory_space<vmem>>, vector<1x24x64xf32>,
    %c0_125 = arith.constant 0 : index
    %c336 = arith.constant 336 : index
    %c0_126 = arith.constant 0 : index
    %177 = vector.load %arg6[%c0_125, %c336, %c0_126] : memref<2x480x64xf32, #tpu.memory_space<vmem>>, vector<1x24x64xf32>
    %178 = vector.shape_cast %177 : vector<1x24x64xf32> to vector<24x64xf32>
    %c0_127 = arith.constant 0 : index
    %c360 = arith.constant 360 : index
    %c0_128 = arith.constant 0 : index
    %179 = vector.load %arg6[%c0_127, %c360, %c0_128] : memref<2x480x64xf32, #tpu.memory_space<vmem>>, vector<1x24x64xf32>
    %180 = vector.shape_cast %179 : vector<1x24x64xf32> to vector<24x64xf32>
    %181 = arith.mulf %178, %76 : vector<24x64xf32>
    %182 = arith.addf %181, %78 : vector<24x64xf32>
    %183 = arith.mulf %180, %76 : vector<24x64xf32>
    %184 = arith.addf %183, %78 : vector<24x64xf32>
    %185 = arith.maximumf %182, %184 : vector<24x64xf32>
    %cst_129 = arith.constant 0.000000e+00 : f32
    %186 = vector.broadcast %cst_129 : f32 to vector<24x64xf32>
    %187 = arith.maximumf %185, %186 : vector<24x64xf32>
    %c7 = arith.constant 7 : index
    %c0_130 = arith.constant 0 : index
    %c0_131 = arith.constant 0 : index
    %188 = vector.load %arg7[%c7, %c0_130, %c0_131] : memref<10x24x64xf32, #tpu.memory_space<vmem>>, vector<1x24x64xf32>
    %189 = vector.shape_cast %188 : vector<1x24x64xf32> to vector<24x64xf32>
    %190 = vector.shape_cast %187 : vector<24x64xf32> to vector<1x24x64xf32>
    tpu.vector_store %arg7[%c7, %c0_130, %c0_131], %190 {strides = array<i32>} : memref<10x24x64xf32, #tpu.memory_space<vmem>>, vector<1x24x64xf32>,
    %c0_132 = arith.constant 0 : index
    %c384 = arith.constant 384 : index
    %c0_133 = arith.constant 0 : index
    %191 = vector.load %arg6[%c0_132, %c384, %c0_133] : memref<2x480x64xf32, #tpu.memory_space<vmem>>, vector<1x24x64xf32>
    %192 = vector.shape_cast %191 : vector<1x24x64xf32> to vector<24x64xf32>
    %c0_134 = arith.constant 0 : index
    %c408 = arith.constant 408 : index
    %c0_135 = arith.constant 0 : index
    %193 = vector.load %arg6[%c0_134, %c408, %c0_135] : memref<2x480x64xf32, #tpu.memory_space<vmem>>, vector<1x24x64xf32>
    %194 = vector.shape_cast %193 : vector<1x24x64xf32> to vector<24x64xf32>
    %195 = arith.mulf %192, %76 : vector<24x64xf32>
    %196 = arith.addf %195, %78 : vector<24x64xf32>
    %197 = arith.mulf %194, %76 : vector<24x64xf32>
    %198 = arith.addf %197, %78 : vector<24x64xf32>
    %199 = arith.maximumf %196, %198 : vector<24x64xf32>
    %cst_136 = arith.constant 0.000000e+00 : f32
    %200 = vector.broadcast %cst_136 : f32 to vector<24x64xf32>
    %201 = arith.maximumf %199, %200 : vector<24x64xf32>
    %c8 = arith.constant 8 : index
    %c0_137 = arith.constant 0 : index
    %c0_138 = arith.constant 0 : index
    %202 = vector.load %arg7[%c8, %c0_137, %c0_138] : memref<10x24x64xf32, #tpu.memory_space<vmem>>, vector<1x24x64xf32>
    %203 = vector.shape_cast %202 : vector<1x24x64xf32> to vector<24x64xf32>
    %204 = vector.shape_cast %201 : vector<24x64xf32> to vector<1x24x64xf32>
    tpu.vector_store %arg7[%c8, %c0_137, %c0_138], %204 {strides = array<i32>} : memref<10x24x64xf32, #tpu.memory_space<vmem>>, vector<1x24x64xf32>,
    %c0_139 = arith.constant 0 : index
    %c432 = arith.constant 432 : index
    %c0_140 = arith.constant 0 : index
    %205 = vector.load %arg6[%c0_139, %c432, %c0_140] : memref<2x480x64xf32, #tpu.memory_space<vmem>>, vector<1x24x64xf32>
    %206 = vector.shape_cast %205 : vector<1x24x64xf32> to vector<24x64xf32>
    %c0_141 = arith.constant 0 : index
    %c456 = arith.constant 456 : index
    %c0_142 = arith.constant 0 : index
    %207 = vector.load %arg6[%c0_141, %c456, %c0_142] : memref<2x480x64xf32, #tpu.memory_space<vmem>>, vector<1x24x64xf32>
    %208 = vector.shape_cast %207 : vector<1x24x64xf32> to vector<24x64xf32>
    %209 = arith.mulf %206, %76 : vector<24x64xf32>
    %210 = arith.addf %209, %78 : vector<24x64xf32>
    %211 = arith.mulf %208, %76 : vector<24x64xf32>
    %212 = arith.addf %211, %78 : vector<24x64xf32>
    %213 = arith.maximumf %210, %212 : vector<24x64xf32>
    %cst_143 = arith.constant 0.000000e+00 : f32
    %214 = vector.broadcast %cst_143 : f32 to vector<24x64xf32>
    %215 = arith.maximumf %213, %214 : vector<24x64xf32>
    %c9 = arith.constant 9 : index
    %c0_144 = arith.constant 0 : index
    %c0_145 = arith.constant 0 : index
    %216 = vector.load %arg7[%c9, %c0_144, %c0_145] : memref<10x24x64xf32, #tpu.memory_space<vmem>>, vector<1x24x64xf32>
    %217 = vector.shape_cast %216 : vector<1x24x64xf32> to vector<24x64xf32>
    %218 = vector.shape_cast %215 : vector<24x64xf32> to vector<1x24x64xf32>
    tpu.vector_store %arg7[%c9, %c0_144, %c0_145], %218 {strides = array<i32>} : memref<10x24x64xf32, #tpu.memory_space<vmem>>, vector<1x24x64xf32>,
    %c0_146 = arith.constant 0 : index
    %c0_147 = arith.constant 0 : index
    %c0_148 = arith.constant 0 : index
    %219 = tpu.strided_load %arg7[%c0_146, %c0_147, %c0_148] {strides = array<i32: 1, 2, 1>} : memref<10x24x64xf32, #tpu.memory_space<vmem>>, vector<10x10x64xf32>
    %c0_149 = arith.constant 0 : index
    %c1_150 = arith.constant 1 : index
    %c0_151 = arith.constant 0 : index
    %220 = tpu.strided_load %arg7[%c0_149, %c1_150, %c0_151] {strides = array<i32: 1, 2, 1>} : memref<10x24x64xf32, #tpu.memory_space<vmem>>, vector<10x10x64xf32>
    %221 = arith.maximumf %219, %220 : vector<10x10x64xf32>
    %222 = arith.truncf %221 : vector<10x10x64xf32> to vector<10x10x64xbf16>
    %c0_152 = arith.constant 0 : index
    %c0_153 = arith.constant 0 : index
    %c0_154 = arith.constant 0 : index
    %c0_155 = arith.constant 0 : index
    %223 = vector.load %arg5[%c0_152, %c0_153, %c0_154, %c0_155] : memref<2x10x10x64xbf16, #tpu.memory_space<vmem>>, vector<1x10x10x64xbf16>
    %224 = vector.shape_cast %223 : vector<1x10x10x64xbf16> to vector<10x10x64xbf16>
    %225 = vector.shape_cast %222 : vector<10x10x64xbf16> to vector<1x10x10x64xbf16>
    tpu.vector_store %arg5[%c0_152, %c0_153, %c0_154, %c0_155], %225 {strides = array<i32>} : memref<2x10x10x64xbf16, #tpu.memory_space<vmem>>, vector<1x10x10x64xbf16>,
    %c1_156 = arith.constant 1 : index
    %c0_157 = arith.constant 0 : index
    %c0_158 = arith.constant 0 : index
    %226 = vector.load %arg6[%c1_156, %c0_157, %c0_158] : memref<2x480x64xf32, #tpu.memory_space<vmem>>, vector<1x24x64xf32>
    %227 = vector.shape_cast %226 : vector<1x24x64xf32> to vector<24x64xf32>
    %c1_159 = arith.constant 1 : index
    %c24_160 = arith.constant 24 : index
    %c0_161 = arith.constant 0 : index
    %228 = vector.load %arg6[%c1_159, %c24_160, %c0_161] : memref<2x480x64xf32, #tpu.memory_space<vmem>>, vector<1x24x64xf32>
    %229 = vector.shape_cast %228 : vector<1x24x64xf32> to vector<24x64xf32>
    %230 = arith.mulf %227, %76 : vector<24x64xf32>
    %231 = arith.addf %230, %78 : vector<24x64xf32>
    %232 = arith.mulf %229, %76 : vector<24x64xf32>
    %233 = arith.addf %232, %78 : vector<24x64xf32>
    %234 = arith.maximumf %231, %233 : vector<24x64xf32>
    %cst_162 = arith.constant 0.000000e+00 : f32
    %235 = vector.broadcast %cst_162 : f32 to vector<24x64xf32>
    %236 = arith.maximumf %234, %235 : vector<24x64xf32>
    %c0_163 = arith.constant 0 : index
    %c0_164 = arith.constant 0 : index
    %c0_165 = arith.constant 0 : index
    %237 = vector.load %arg7[%c0_163, %c0_164, %c0_165] : memref<10x24x64xf32, #tpu.memory_space<vmem>>, vector<1x24x64xf32>
    %238 = vector.shape_cast %237 : vector<1x24x64xf32> to vector<24x64xf32>
    %239 = vector.shape_cast %236 : vector<24x64xf32> to vector<1x24x64xf32>
    tpu.vector_store %arg7[%c0_163, %c0_164, %c0_165], %239 {strides = array<i32>} : memref<10x24x64xf32, #tpu.memory_space<vmem>>, vector<1x24x64xf32>,
    %c1_166 = arith.constant 1 : index
    %c48_167 = arith.constant 48 : index
    %c0_168 = arith.constant 0 : index
    %240 = vector.load %arg6[%c1_166, %c48_167, %c0_168] : memref<2x480x64xf32, #tpu.memory_space<vmem>>, vector<1x24x64xf32>
    %241 = vector.shape_cast %240 : vector<1x24x64xf32> to vector<24x64xf32>
    %c1_169 = arith.constant 1 : index
    %c72_170 = arith.constant 72 : index
    %c0_171 = arith.constant 0 : index
    %242 = vector.load %arg6[%c1_169, %c72_170, %c0_171] : memref<2x480x64xf32, #tpu.memory_space<vmem>>, vector<1x24x64xf32>
    %243 = vector.shape_cast %242 : vector<1x24x64xf32> to vector<24x64xf32>
    %244 = arith.mulf %241, %76 : vector<24x64xf32>
    %245 = arith.addf %244, %78 : vector<24x64xf32>
    %246 = arith.mulf %243, %76 : vector<24x64xf32>
    %247 = arith.addf %246, %78 : vector<24x64xf32>
    %248 = arith.maximumf %245, %247 : vector<24x64xf32>
    %cst_172 = arith.constant 0.000000e+00 : f32
    %249 = vector.broadcast %cst_172 : f32 to vector<24x64xf32>
    %250 = arith.maximumf %248, %249 : vector<24x64xf32>
    %c1_173 = arith.constant 1 : index
    %c0_174 = arith.constant 0 : index
    %c0_175 = arith.constant 0 : index
    %251 = vector.load %arg7[%c1_173, %c0_174, %c0_175] : memref<10x24x64xf32, #tpu.memory_space<vmem>>, vector<1x24x64xf32>
    %252 = vector.shape_cast %251 : vector<1x24x64xf32> to vector<24x64xf32>
    %253 = vector.shape_cast %250 : vector<24x64xf32> to vector<1x24x64xf32>
    tpu.vector_store %arg7[%c1_173, %c0_174, %c0_175], %253 {strides = array<i32>} : memref<10x24x64xf32, #tpu.memory_space<vmem>>, vector<1x24x64xf32>,
    %c1_176 = arith.constant 1 : index
    %c96_177 = arith.constant 96 : index
    %c0_178 = arith.constant 0 : index
    %254 = vector.load %arg6[%c1_176, %c96_177, %c0_178] : memref<2x480x64xf32, #tpu.memory_space<vmem>>, vector<1x24x64xf32>
    %255 = vector.shape_cast %254 : vector<1x24x64xf32> to vector<24x64xf32>
    %c1_179 = arith.constant 1 : index
    %c120_180 = arith.constant 120 : index
    %c0_181 = arith.constant 0 : index
    %256 = vector.load %arg6[%c1_179, %c120_180, %c0_181] : memref<2x480x64xf32, #tpu.memory_space<vmem>>, vector<1x24x64xf32>
    %257 = vector.shape_cast %256 : vector<1x24x64xf32> to vector<24x64xf32>
    %258 = arith.mulf %255, %76 : vector<24x64xf32>
    %259 = arith.addf %258, %78 : vector<24x64xf32>
    %260 = arith.mulf %257, %76 : vector<24x64xf32>
    %261 = arith.addf %260, %78 : vector<24x64xf32>
    %262 = arith.maximumf %259, %261 : vector<24x64xf32>
    %cst_182 = arith.constant 0.000000e+00 : f32
    %263 = vector.broadcast %cst_182 : f32 to vector<24x64xf32>
    %264 = arith.maximumf %262, %263 : vector<24x64xf32>
    %c2_183 = arith.constant 2 : index
    %c0_184 = arith.constant 0 : index
    %c0_185 = arith.constant 0 : index
    %265 = vector.load %arg7[%c2_183, %c0_184, %c0_185] : memref<10x24x64xf32, #tpu.memory_space<vmem>>, vector<1x24x64xf32>
    %266 = vector.shape_cast %265 : vector<1x24x64xf32> to vector<24x64xf32>
    %267 = vector.shape_cast %264 : vector<24x64xf32> to vector<1x24x64xf32>
    tpu.vector_store %arg7[%c2_183, %c0_184, %c0_185], %267 {strides = array<i32>} : memref<10x24x64xf32, #tpu.memory_space<vmem>>, vector<1x24x64xf32>,
    %c1_186 = arith.constant 1 : index
    %c144_187 = arith.constant 144 : index
    %c0_188 = arith.constant 0 : index
    %268 = vector.load %arg6[%c1_186, %c144_187, %c0_188] : memref<2x480x64xf32, #tpu.memory_space<vmem>>, vector<1x24x64xf32>
    %269 = vector.shape_cast %268 : vector<1x24x64xf32> to vector<24x64xf32>
    %c1_189 = arith.constant 1 : index
    %c168_190 = arith.constant 168 : index
    %c0_191 = arith.constant 0 : index
    %270 = vector.load %arg6[%c1_189, %c168_190, %c0_191] : memref<2x480x64xf32, #tpu.memory_space<vmem>>, vector<1x24x64xf32>
    %271 = vector.shape_cast %270 : vector<1x24x64xf32> to vector<24x64xf32>
    %272 = arith.mulf %269, %76 : vector<24x64xf32>
    %273 = arith.addf %272, %78 : vector<24x64xf32>
    %274 = arith.mulf %271, %76 : vector<24x64xf32>
    %275 = arith.addf %274, %78 : vector<24x64xf32>
    %276 = arith.maximumf %273, %275 : vector<24x64xf32>
    %cst_192 = arith.constant 0.000000e+00 : f32
    %277 = vector.broadcast %cst_192 : f32 to vector<24x64xf32>
    %278 = arith.maximumf %276, %277 : vector<24x64xf32>
    %c3_193 = arith.constant 3 : index
    %c0_194 = arith.constant 0 : index
    %c0_195 = arith.constant 0 : index
    %279 = vector.load %arg7[%c3_193, %c0_194, %c0_195] : memref<10x24x64xf32, #tpu.memory_space<vmem>>, vector<1x24x64xf32>
    %280 = vector.shape_cast %279 : vector<1x24x64xf32> to vector<24x64xf32>
    %281 = vector.shape_cast %278 : vector<24x64xf32> to vector<1x24x64xf32>
    tpu.vector_store %arg7[%c3_193, %c0_194, %c0_195], %281 {strides = array<i32>} : memref<10x24x64xf32, #tpu.memory_space<vmem>>, vector<1x24x64xf32>,
    %c1_196 = arith.constant 1 : index
    %c192_197 = arith.constant 192 : index
    %c0_198 = arith.constant 0 : index
    %282 = vector.load %arg6[%c1_196, %c192_197, %c0_198] : memref<2x480x64xf32, #tpu.memory_space<vmem>>, vector<1x24x64xf32>
    %283 = vector.shape_cast %282 : vector<1x24x64xf32> to vector<24x64xf32>
    %c1_199 = arith.constant 1 : index
    %c216_200 = arith.constant 216 : index
    %c0_201 = arith.constant 0 : index
    %284 = vector.load %arg6[%c1_199, %c216_200, %c0_201] : memref<2x480x64xf32, #tpu.memory_space<vmem>>, vector<1x24x64xf32>
    %285 = vector.shape_cast %284 : vector<1x24x64xf32> to vector<24x64xf32>
    %286 = arith.mulf %283, %76 : vector<24x64xf32>
    %287 = arith.addf %286, %78 : vector<24x64xf32>
    %288 = arith.mulf %285, %76 : vector<24x64xf32>
    %289 = arith.addf %288, %78 : vector<24x64xf32>
    %290 = arith.maximumf %287, %289 : vector<24x64xf32>
    %cst_202 = arith.constant 0.000000e+00 : f32
    %291 = vector.broadcast %cst_202 : f32 to vector<24x64xf32>
    %292 = arith.maximumf %290, %291 : vector<24x64xf32>
    %c4_203 = arith.constant 4 : index
    %c0_204 = arith.constant 0 : index
    %c0_205 = arith.constant 0 : index
    %293 = vector.load %arg7[%c4_203, %c0_204, %c0_205] : memref<10x24x64xf32, #tpu.memory_space<vmem>>, vector<1x24x64xf32>
    %294 = vector.shape_cast %293 : vector<1x24x64xf32> to vector<24x64xf32>
    %295 = vector.shape_cast %292 : vector<24x64xf32> to vector<1x24x64xf32>
    tpu.vector_store %arg7[%c4_203, %c0_204, %c0_205], %295 {strides = array<i32>} : memref<10x24x64xf32, #tpu.memory_space<vmem>>, vector<1x24x64xf32>,
    %c1_206 = arith.constant 1 : index
    %c240_207 = arith.constant 240 : index
    %c0_208 = arith.constant 0 : index
    %296 = vector.load %arg6[%c1_206, %c240_207, %c0_208] : memref<2x480x64xf32, #tpu.memory_space<vmem>>, vector<1x24x64xf32>
    %297 = vector.shape_cast %296 : vector<1x24x64xf32> to vector<24x64xf32>
    %c1_209 = arith.constant 1 : index
    %c264_210 = arith.constant 264 : index
    %c0_211 = arith.constant 0 : index
    %298 = vector.load %arg6[%c1_209, %c264_210, %c0_211] : memref<2x480x64xf32, #tpu.memory_space<vmem>>, vector<1x24x64xf32>
    %299 = vector.shape_cast %298 : vector<1x24x64xf32> to vector<24x64xf32>
    %300 = arith.mulf %297, %76 : vector<24x64xf32>
    %301 = arith.addf %300, %78 : vector<24x64xf32>
    %302 = arith.mulf %299, %76 : vector<24x64xf32>
    %303 = arith.addf %302, %78 : vector<24x64xf32>
    %304 = arith.maximumf %301, %303 : vector<24x64xf32>
    %cst_212 = arith.constant 0.000000e+00 : f32
    %305 = vector.broadcast %cst_212 : f32 to vector<24x64xf32>
    %306 = arith.maximumf %304, %305 : vector<24x64xf32>
    %c5_213 = arith.constant 5 : index
    %c0_214 = arith.constant 0 : index
    %c0_215 = arith.constant 0 : index
    %307 = vector.load %arg7[%c5_213, %c0_214, %c0_215] : memref<10x24x64xf32, #tpu.memory_space<vmem>>, vector<1x24x64xf32>
    %308 = vector.shape_cast %307 : vector<1x24x64xf32> to vector<24x64xf32>
    %309 = vector.shape_cast %306 : vector<24x64xf32> to vector<1x24x64xf32>
    tpu.vector_store %arg7[%c5_213, %c0_214, %c0_215], %309 {strides = array<i32>} : memref<10x24x64xf32, #tpu.memory_space<vmem>>, vector<1x24x64xf32>,
    %c1_216 = arith.constant 1 : index
    %c288_217 = arith.constant 288 : index
    %c0_218 = arith.constant 0 : index
    %310 = vector.load %arg6[%c1_216, %c288_217, %c0_218] : memref<2x480x64xf32, #tpu.memory_space<vmem>>, vector<1x24x64xf32>
    %311 = vector.shape_cast %310 : vector<1x24x64xf32> to vector<24x64xf32>
    %c1_219 = arith.constant 1 : index
    %c312_220 = arith.constant 312 : index
    %c0_221 = arith.constant 0 : index
    %312 = vector.load %arg6[%c1_219, %c312_220, %c0_221] : memref<2x480x64xf32, #tpu.memory_space<vmem>>, vector<1x24x64xf32>
    %313 = vector.shape_cast %312 : vector<1x24x64xf32> to vector<24x64xf32>
    %314 = arith.mulf %311, %76 : vector<24x64xf32>
    %315 = arith.addf %314, %78 : vector<24x64xf32>
    %316 = arith.mulf %313, %76 : vector<24x64xf32>
    %317 = arith.addf %316, %78 : vector<24x64xf32>
    %318 = arith.maximumf %315, %317 : vector<24x64xf32>
    %cst_222 = arith.constant 0.000000e+00 : f32
    %319 = vector.broadcast %cst_222 : f32 to vector<24x64xf32>
    %320 = arith.maximumf %318, %319 : vector<24x64xf32>
    %c6_223 = arith.constant 6 : index
    %c0_224 = arith.constant 0 : index
    %c0_225 = arith.constant 0 : index
    %321 = vector.load %arg7[%c6_223, %c0_224, %c0_225] : memref<10x24x64xf32, #tpu.memory_space<vmem>>, vector<1x24x64xf32>
    %322 = vector.shape_cast %321 : vector<1x24x64xf32> to vector<24x64xf32>
    %323 = vector.shape_cast %320 : vector<24x64xf32> to vector<1x24x64xf32>
    tpu.vector_store %arg7[%c6_223, %c0_224, %c0_225], %323 {strides = array<i32>} : memref<10x24x64xf32, #tpu.memory_space<vmem>>, vector<1x24x64xf32>,
    %c1_226 = arith.constant 1 : index
    %c336_227 = arith.constant 336 : index
    %c0_228 = arith.constant 0 : index
    %324 = vector.load %arg6[%c1_226, %c336_227, %c0_228] : memref<2x480x64xf32, #tpu.memory_space<vmem>>, vector<1x24x64xf32>
    %325 = vector.shape_cast %324 : vector<1x24x64xf32> to vector<24x64xf32>
    %c1_229 = arith.constant 1 : index
    %c360_230 = arith.constant 360 : index
    %c0_231 = arith.constant 0 : index
    %326 = vector.load %arg6[%c1_229, %c360_230, %c0_231] : memref<2x480x64xf32, #tpu.memory_space<vmem>>, vector<1x24x64xf32>
    %327 = vector.shape_cast %326 : vector<1x24x64xf32> to vector<24x64xf32>
    %328 = arith.mulf %325, %76 : vector<24x64xf32>
    %329 = arith.addf %328, %78 : vector<24x64xf32>
    %330 = arith.mulf %327, %76 : vector<24x64xf32>
    %331 = arith.addf %330, %78 : vector<24x64xf32>
    %332 = arith.maximumf %329, %331 : vector<24x64xf32>
    %cst_232 = arith.constant 0.000000e+00 : f32
    %333 = vector.broadcast %cst_232 : f32 to vector<24x64xf32>
    %334 = arith.maximumf %332, %333 : vector<24x64xf32>
    %c7_233 = arith.constant 7 : index
    %c0_234 = arith.constant 0 : index
    %c0_235 = arith.constant 0 : index
    %335 = vector.load %arg7[%c7_233, %c0_234, %c0_235] : memref<10x24x64xf32, #tpu.memory_space<vmem>>, vector<1x24x64xf32>
    %336 = vector.shape_cast %335 : vector<1x24x64xf32> to vector<24x64xf32>
    %337 = vector.shape_cast %334 : vector<24x64xf32> to vector<1x24x64xf32>
    tpu.vector_store %arg7[%c7_233, %c0_234, %c0_235], %337 {strides = array<i32>} : memref<10x24x64xf32, #tpu.memory_space<vmem>>, vector<1x24x64xf32>,
    %c1_236 = arith.constant 1 : index
    %c384_237 = arith.constant 384 : index
    %c0_238 = arith.constant 0 : index
    %338 = vector.load %arg6[%c1_236, %c384_237, %c0_238] : memref<2x480x64xf32, #tpu.memory_space<vmem>>, vector<1x24x64xf32>
    %339 = vector.shape_cast %338 : vector<1x24x64xf32> to vector<24x64xf32>
    %c1_239 = arith.constant 1 : index
    %c408_240 = arith.constant 408 : index
    %c0_241 = arith.constant 0 : index
    %340 = vector.load %arg6[%c1_239, %c408_240, %c0_241] : memref<2x480x64xf32, #tpu.memory_space<vmem>>, vector<1x24x64xf32>
    %341 = vector.shape_cast %340 : vector<1x24x64xf32> to vector<24x64xf32>
    %342 = arith.mulf %339, %76 : vector<24x64xf32>
    %343 = arith.addf %342, %78 : vector<24x64xf32>
    %344 = arith.mulf %341, %76 : vector<24x64xf32>
    %345 = arith.addf %344, %78 : vector<24x64xf32>
    %346 = arith.maximumf %343, %345 : vector<24x64xf32>
    %cst_242 = arith.constant 0.000000e+00 : f32
    %347 = vector.broadcast %cst_242 : f32 to vector<24x64xf32>
    %348 = arith.maximumf %346, %347 : vector<24x64xf32>
    %c8_243 = arith.constant 8 : index
    %c0_244 = arith.constant 0 : index
    %c0_245 = arith.constant 0 : index
    %349 = vector.load %arg7[%c8_243, %c0_244, %c0_245] : memref<10x24x64xf32, #tpu.memory_space<vmem>>, vector<1x24x64xf32>
    %350 = vector.shape_cast %349 : vector<1x24x64xf32> to vector<24x64xf32>
    %351 = vector.shape_cast %348 : vector<24x64xf32> to vector<1x24x64xf32>
    tpu.vector_store %arg7[%c8_243, %c0_244, %c0_245], %351 {strides = array<i32>} : memref<10x24x64xf32, #tpu.memory_space<vmem>>, vector<1x24x64xf32>,
    %c1_246 = arith.constant 1 : index
    %c432_247 = arith.constant 432 : index
    %c0_248 = arith.constant 0 : index
    %352 = vector.load %arg6[%c1_246, %c432_247, %c0_248] : memref<2x480x64xf32, #tpu.memory_space<vmem>>, vector<1x24x64xf32>
    %353 = vector.shape_cast %352 : vector<1x24x64xf32> to vector<24x64xf32>
    %c1_249 = arith.constant 1 : index
    %c456_250 = arith.constant 456 : index
    %c0_251 = arith.constant 0 : index
    %354 = vector.load %arg6[%c1_249, %c456_250, %c0_251] : memref<2x480x64xf32, #tpu.memory_space<vmem>>, vector<1x24x64xf32>
    %355 = vector.shape_cast %354 : vector<1x24x64xf32> to vector<24x64xf32>
    %356 = arith.mulf %353, %76 : vector<24x64xf32>
    %357 = arith.addf %356, %78 : vector<24x64xf32>
    %358 = arith.mulf %355, %76 : vector<24x64xf32>
    %359 = arith.addf %358, %78 : vector<24x64xf32>
    %360 = arith.maximumf %357, %359 : vector<24x64xf32>
    %cst_252 = arith.constant 0.000000e+00 : f32
    %361 = vector.broadcast %cst_252 : f32 to vector<24x64xf32>
    %362 = arith.maximumf %360, %361 : vector<24x64xf32>
    %c9_253 = arith.constant 9 : index
    %c0_254 = arith.constant 0 : index
    %c0_255 = arith.constant 0 : index
    %363 = vector.load %arg7[%c9_253, %c0_254, %c0_255] : memref<10x24x64xf32, #tpu.memory_space<vmem>>, vector<1x24x64xf32>
    %364 = vector.shape_cast %363 : vector<1x24x64xf32> to vector<24x64xf32>
    %365 = vector.shape_cast %362 : vector<24x64xf32> to vector<1x24x64xf32>
    tpu.vector_store %arg7[%c9_253, %c0_254, %c0_255], %365 {strides = array<i32>} : memref<10x24x64xf32, #tpu.memory_space<vmem>>, vector<1x24x64xf32>,
    %c0_256 = arith.constant 0 : index
    %c0_257 = arith.constant 0 : index
    %c0_258 = arith.constant 0 : index
    %366 = tpu.strided_load %arg7[%c0_256, %c0_257, %c0_258] {strides = array<i32: 1, 2, 1>} : memref<10x24x64xf32, #tpu.memory_space<vmem>>, vector<10x10x64xf32>
    %c0_259 = arith.constant 0 : index
    %c1_260 = arith.constant 1 : index
    %c0_261 = arith.constant 0 : index
    %367 = tpu.strided_load %arg7[%c0_259, %c1_260, %c0_261] {strides = array<i32: 1, 2, 1>} : memref<10x24x64xf32, #tpu.memory_space<vmem>>, vector<10x10x64xf32>
    %368 = arith.maximumf %366, %367 : vector<10x10x64xf32>
    %369 = arith.truncf %368 : vector<10x10x64xf32> to vector<10x10x64xbf16>
    %c1_262 = arith.constant 1 : index
    %c0_263 = arith.constant 0 : index
    %c0_264 = arith.constant 0 : index
    %c0_265 = arith.constant 0 : index
    %370 = vector.load %arg5[%c1_262, %c0_263, %c0_264, %c0_265] : memref<2x10x10x64xbf16, #tpu.memory_space<vmem>>, vector<1x10x10x64xbf16>
    %371 = vector.shape_cast %370 : vector<1x10x10x64xbf16> to vector<10x10x64xbf16>
    %372 = vector.shape_cast %369 : vector<10x10x64xbf16> to vector<1x10x10x64xbf16>
    tpu.vector_store %arg5[%c1_262, %c0_263, %c0_264, %c0_265], %372 {strides = array<i32>} : memref<2x10x10x64xbf16, #tpu.memory_space<vmem>>, vector<1x10x10x64xbf16>,
    return
  }
  func.func @transform_0(%arg0: i32) -> (i32, i32, i32) {
    %c0_i32 = arith.constant 0 : i32
    %c0_i32_0 = arith.constant 0 : i32
    %c0_i32_1 = arith.constant 0 : i32
    %c0_i32_2 = arith.constant 0 : i32
    return %c0_i32, %c0_i32_0, %c0_i32_1 : i32, i32, i32
  }
  func.func @transform_1(%arg0: i32) -> (i32, i32) {
    %c0_i32 = arith.constant 0 : i32
    %c0_i32_0 = arith.constant 0 : i32
    %c0_i32_1 = arith.constant 0 : i32
    return %c0_i32, %c0_i32_0 : i32, i32
  }
  func.func @transform_2(%arg0: i32) -> (i32, i32) {
    %c0_i32 = arith.constant 0 : i32
    %c0_i32_0 = arith.constant 0 : i32
    %c0_i32_1 = arith.constant 0 : i32
    return %c0_i32, %c0_i32_0 : i32, i32
  }
  func.func @transform_3(%arg0: i32) -> (i32, i32) {
    %c0_i32 = arith.constant 0 : i32
    %c0_i32_0 = arith.constant 0 : i32
    %c0_i32_1 = arith.constant 0 : i32
    return %c0_i32, %c0_i32_0 : i32, i32
  }
  func.func @transform_4(%arg0: i32) -> (i32, i32, i32, i32) {
    %c0_i32 = arith.constant 0 : i32
    %c0_i32_0 = arith.constant 0 : i32
    %c0_i32_1 = arith.constant 0 : i32
    %c0_i32_2 = arith.constant 0 : i32
    %c0_i32_3 = arith.constant 0 : i32
    return %c0_i32, %c0_i32_0, %c0_i32_1, %c0_i32_2 : i32, i32, i32, i32
  }
}

module attributes {stable_mosaic.version = 11 : i64} {
  func.func @fused_block_kernel(%arg0: i32, %arg1: memref<2x200x64xbf16, #tpu.memory_space<vmem>>, %arg2: memref<576x64xbf16, #tpu.memory_space<vmem>>, %arg3: memref<1x160xf32, #tpu.memory_space<vmem>>, %arg4: memref<2x64xf32, #tpu.memory_space<vmem>>, %arg5: memref<2x5x5x64xbf16, #tpu.memory_space<vmem>>, %arg6: memref<2x160x64xf32, #tpu.memory_space<vmem>>, %arg7: memref<5x16x64xf32, #tpu.memory_space<vmem>>) attributes {dimension_semantics = [#tpu.dimension_semantics<arbitrary>], iteration_bounds = array<i64: 1>, scalar_prefetch = 0 : i64, scratch_operands = 2 : i64, tpu.core_type = #tpu.core_type<tc>, window_params = [{pipeline_mode = #tpu.pipeline_mode<synchronous>, transform_indices = @transform_0, window_bounds = array<i64: 2, 200, 64>}, {pipeline_mode = #tpu.pipeline_mode<synchronous>, transform_indices = @transform_1, window_bounds = array<i64: 576, 64>}, {pipeline_mode = #tpu.pipeline_mode<synchronous>, transform_indices = @transform_2, window_bounds = array<i64: 1, 160>}, {pipeline_mode = #tpu.pipeline_mode<synchronous>, transform_indices = @transform_3, window_bounds = array<i64: 2, 64>}, {pipeline_mode = #tpu.pipeline_mode<synchronous>, transform_indices = @transform_4, window_bounds = array<i64: 2, 5, 5, 64>}]} {
    %c0 = arith.constant 0 : index
    %c0_0 = arith.constant 0 : index
    %c0_1 = arith.constant 0 : index
    %0 = vector.load %arg1[%c0, %c0_0, %c0_1] : memref<2x200x64xbf16, #tpu.memory_space<vmem>>, vector<1x160x64xbf16>
    %1 = vector.shape_cast %0 : vector<1x160x64xbf16> to vector<160x64xbf16>
    %c0_2 = arith.constant 0 : index
    %c1 = arith.constant 1 : index
    %c0_3 = arith.constant 0 : index
    %2 = vector.load %arg1[%c0_2, %c1, %c0_3] : memref<2x200x64xbf16, #tpu.memory_space<vmem>>, vector<1x160x64xbf16>
    %3 = vector.shape_cast %2 : vector<1x160x64xbf16> to vector<160x64xbf16>
    %c0_4 = arith.constant 0 : index
    %c2 = arith.constant 2 : index
    %c0_5 = arith.constant 0 : index
    %4 = vector.load %arg1[%c0_4, %c2, %c0_5] : memref<2x200x64xbf16, #tpu.memory_space<vmem>>, vector<1x160x64xbf16>
    %5 = vector.shape_cast %4 : vector<1x160x64xbf16> to vector<160x64xbf16>
    %c0_6 = arith.constant 0 : index
    %c16 = arith.constant 16 : index
    %c0_7 = arith.constant 0 : index
    %6 = vector.load %arg1[%c0_6, %c16, %c0_7] : memref<2x200x64xbf16, #tpu.memory_space<vmem>>, vector<1x160x64xbf16>
    %7 = vector.shape_cast %6 : vector<1x160x64xbf16> to vector<160x64xbf16>
    %c0_8 = arith.constant 0 : index
    %c17 = arith.constant 17 : index
    %c0_9 = arith.constant 0 : index
    %8 = vector.load %arg1[%c0_8, %c17, %c0_9] : memref<2x200x64xbf16, #tpu.memory_space<vmem>>, vector<1x160x64xbf16>
    %9 = vector.shape_cast %8 : vector<1x160x64xbf16> to vector<160x64xbf16>
    %c0_10 = arith.constant 0 : index
    %c18 = arith.constant 18 : index
    %c0_11 = arith.constant 0 : index
    %10 = vector.load %arg1[%c0_10, %c18, %c0_11] : memref<2x200x64xbf16, #tpu.memory_space<vmem>>, vector<1x160x64xbf16>
    %11 = vector.shape_cast %10 : vector<1x160x64xbf16> to vector<160x64xbf16>
    %c0_12 = arith.constant 0 : index
    %c32 = arith.constant 32 : index
    %c0_13 = arith.constant 0 : index
    %12 = vector.load %arg1[%c0_12, %c32, %c0_13] : memref<2x200x64xbf16, #tpu.memory_space<vmem>>, vector<1x160x64xbf16>
    %13 = vector.shape_cast %12 : vector<1x160x64xbf16> to vector<160x64xbf16>
    %c0_14 = arith.constant 0 : index
    %c33 = arith.constant 33 : index
    %c0_15 = arith.constant 0 : index
    %14 = vector.load %arg1[%c0_14, %c33, %c0_15] : memref<2x200x64xbf16, #tpu.memory_space<vmem>>, vector<1x160x64xbf16>
    %15 = vector.shape_cast %14 : vector<1x160x64xbf16> to vector<160x64xbf16>
    %c0_16 = arith.constant 0 : index
    %c34 = arith.constant 34 : index
    %c0_17 = arith.constant 0 : index
    %16 = vector.load %arg1[%c0_16, %c34, %c0_17] : memref<2x200x64xbf16, #tpu.memory_space<vmem>>, vector<1x160x64xbf16>
    %17 = vector.shape_cast %16 : vector<1x160x64xbf16> to vector<160x64xbf16>
    %18 = tpu.concatenate %1, %3, %5, %7, %9, %11, %13, %15, %17 in 1 : vector<160x64xbf16>, vector<160x64xbf16>, vector<160x64xbf16>, vector<160x64xbf16>, vector<160x64xbf16>, vector<160x64xbf16>, vector<160x64xbf16>, vector<160x64xbf16>, vector<160x64xbf16> -> vector<160x576xbf16>
    %c0_18 = arith.constant 0 : index
    %c0_19 = arith.constant 0 : index
    %19 = vector.load %arg2[%c0_18, %c0_19] : memref<576x64xbf16, #tpu.memory_space<vmem>>, vector<576x64xbf16>
    %cst = arith.constant dense<0.000000e+00> : vector<160x64xf32>
    %20 = tpu.matmul %18, %19, %cst {dimension_numbers = #tpu.dot_dimension_numbers<[1], [0], [0], [1], [0, 0, 1, 1], [], []>} : vector<160x576xbf16>, vector<576x64xbf16>, vector<160x64xf32> -> vector<160x64xf32>
    %c0_20 = arith.constant 0 : index
    %c0_21 = arith.constant 0 : index
    %c0_22 = arith.constant 0 : index
    %21 = vector.load %arg6[%c0_20, %c0_21, %c0_22] : memref<2x160x64xf32, #tpu.memory_space<vmem>>, vector<1x160x64xf32>
    %22 = vector.shape_cast %21 : vector<1x160x64xf32> to vector<160x64xf32>
    %23 = vector.shape_cast %20 : vector<160x64xf32> to vector<1x160x64xf32>
    tpu.vector_store %arg6[%c0_20, %c0_21, %c0_22], %23 {strides = array<i32>} : memref<2x160x64xf32, #tpu.memory_space<vmem>>, vector<1x160x64xf32>,
    %c0_23 = arith.constant 0 : index
    %c0_24 = arith.constant 0 : index
    %24 = vector.load %arg3[%c0_23, %c0_24] : memref<1x160xf32, #tpu.memory_space<vmem>>, vector<1x160xf32>
    %25 = arith.mulf %20, %20 : vector<160x64xf32>
    %26 = tpu.concatenate %20, %25 in 1 : vector<160x64xf32>, vector<160x64xf32> -> vector<160x128xf32>
    %cst_25 = arith.constant dense<0.000000e+00> : vector<1x128xf32>
    %27 = tpu.matmul %24, %26, %cst_25 {dimension_numbers = #tpu.dot_dimension_numbers<[1], [0], [0], [1], [0, 0, 1, 1], [], []>} : vector<1x160xf32>, vector<160x128xf32>, vector<1x128xf32> -> vector<1x128xf32>
    %c1_26 = arith.constant 1 : index
    %c0_27 = arith.constant 0 : index
    %c0_28 = arith.constant 0 : index
    %28 = vector.load %arg1[%c1_26, %c0_27, %c0_28] : memref<2x200x64xbf16, #tpu.memory_space<vmem>>, vector<1x160x64xbf16>
    %29 = vector.shape_cast %28 : vector<1x160x64xbf16> to vector<160x64xbf16>
    %c1_29 = arith.constant 1 : index
    %c1_30 = arith.constant 1 : index
    %c0_31 = arith.constant 0 : index
    %30 = vector.load %arg1[%c1_29, %c1_30, %c0_31] : memref<2x200x64xbf16, #tpu.memory_space<vmem>>, vector<1x160x64xbf16>
    %31 = vector.shape_cast %30 : vector<1x160x64xbf16> to vector<160x64xbf16>
    %c1_32 = arith.constant 1 : index
    %c2_33 = arith.constant 2 : index
    %c0_34 = arith.constant 0 : index
    %32 = vector.load %arg1[%c1_32, %c2_33, %c0_34] : memref<2x200x64xbf16, #tpu.memory_space<vmem>>, vector<1x160x64xbf16>
    %33 = vector.shape_cast %32 : vector<1x160x64xbf16> to vector<160x64xbf16>
    %c1_35 = arith.constant 1 : index
    %c16_36 = arith.constant 16 : index
    %c0_37 = arith.constant 0 : index
    %34 = vector.load %arg1[%c1_35, %c16_36, %c0_37] : memref<2x200x64xbf16, #tpu.memory_space<vmem>>, vector<1x160x64xbf16>
    %35 = vector.shape_cast %34 : vector<1x160x64xbf16> to vector<160x64xbf16>
    %c1_38 = arith.constant 1 : index
    %c17_39 = arith.constant 17 : index
    %c0_40 = arith.constant 0 : index
    %36 = vector.load %arg1[%c1_38, %c17_39, %c0_40] : memref<2x200x64xbf16, #tpu.memory_space<vmem>>, vector<1x160x64xbf16>
    %37 = vector.shape_cast %36 : vector<1x160x64xbf16> to vector<160x64xbf16>
    %c1_41 = arith.constant 1 : index
    %c18_42 = arith.constant 18 : index
    %c0_43 = arith.constant 0 : index
    %38 = vector.load %arg1[%c1_41, %c18_42, %c0_43] : memref<2x200x64xbf16, #tpu.memory_space<vmem>>, vector<1x160x64xbf16>
    %39 = vector.shape_cast %38 : vector<1x160x64xbf16> to vector<160x64xbf16>
    %c1_44 = arith.constant 1 : index
    %c32_45 = arith.constant 32 : index
    %c0_46 = arith.constant 0 : index
    %40 = vector.load %arg1[%c1_44, %c32_45, %c0_46] : memref<2x200x64xbf16, #tpu.memory_space<vmem>>, vector<1x160x64xbf16>
    %41 = vector.shape_cast %40 : vector<1x160x64xbf16> to vector<160x64xbf16>
    %c1_47 = arith.constant 1 : index
    %c33_48 = arith.constant 33 : index
    %c0_49 = arith.constant 0 : index
    %42 = vector.load %arg1[%c1_47, %c33_48, %c0_49] : memref<2x200x64xbf16, #tpu.memory_space<vmem>>, vector<1x160x64xbf16>
    %43 = vector.shape_cast %42 : vector<1x160x64xbf16> to vector<160x64xbf16>
    %c1_50 = arith.constant 1 : index
    %c34_51 = arith.constant 34 : index
    %c0_52 = arith.constant 0 : index
    %44 = vector.load %arg1[%c1_50, %c34_51, %c0_52] : memref<2x200x64xbf16, #tpu.memory_space<vmem>>, vector<1x160x64xbf16>
    %45 = vector.shape_cast %44 : vector<1x160x64xbf16> to vector<160x64xbf16>
    %46 = tpu.concatenate %29, %31, %33, %35, %37, %39, %41, %43, %45 in 1 : vector<160x64xbf16>, vector<160x64xbf16>, vector<160x64xbf16>, vector<160x64xbf16>, vector<160x64xbf16>, vector<160x64xbf16>, vector<160x64xbf16>, vector<160x64xbf16>, vector<160x64xbf16> -> vector<160x576xbf16>
    %c0_53 = arith.constant 0 : index
    %c0_54 = arith.constant 0 : index
    %47 = vector.load %arg2[%c0_53, %c0_54] : memref<576x64xbf16, #tpu.memory_space<vmem>>, vector<576x64xbf16>
    %cst_55 = arith.constant dense<0.000000e+00> : vector<160x64xf32>
    %48 = tpu.matmul %46, %47, %cst_55 {dimension_numbers = #tpu.dot_dimension_numbers<[1], [0], [0], [1], [0, 0, 1, 1], [], []>} : vector<160x576xbf16>, vector<576x64xbf16>, vector<160x64xf32> -> vector<160x64xf32>
    %c1_56 = arith.constant 1 : index
    %c0_57 = arith.constant 0 : index
    %c0_58 = arith.constant 0 : index
    %49 = vector.load %arg6[%c1_56, %c0_57, %c0_58] : memref<2x160x64xf32, #tpu.memory_space<vmem>>, vector<1x160x64xf32>
    %50 = vector.shape_cast %49 : vector<1x160x64xf32> to vector<160x64xf32>
    %51 = vector.shape_cast %48 : vector<160x64xf32> to vector<1x160x64xf32>
    tpu.vector_store %arg6[%c1_56, %c0_57, %c0_58], %51 {strides = array<i32>} : memref<2x160x64xf32, #tpu.memory_space<vmem>>, vector<1x160x64xf32>,
    %c0_59 = arith.constant 0 : index
    %c0_60 = arith.constant 0 : index
    %52 = vector.load %arg3[%c0_59, %c0_60] : memref<1x160xf32, #tpu.memory_space<vmem>>, vector<1x160xf32>
    %53 = arith.mulf %48, %48 : vector<160x64xf32>
    %54 = tpu.concatenate %48, %53 in 1 : vector<160x64xf32>, vector<160x64xf32> -> vector<160x128xf32>
    %cst_61 = arith.constant dense<0.000000e+00> : vector<1x128xf32>
    %55 = tpu.matmul %52, %54, %cst_61 {dimension_numbers = #tpu.dot_dimension_numbers<[1], [0], [0], [1], [0, 0, 1, 1], [], []>} : vector<1x160xf32>, vector<160x128xf32>, vector<1x128xf32> -> vector<1x128xf32>
    %56 = arith.addf %27, %55 : vector<1x128xf32>
    %57 = vector.extract_strided_slice %56 {offsets = [0, 0], sizes = [1, 64], strides = [1, 1]} : vector<1x128xf32> to vector<1x64xf32>
    %cst_62 = arith.constant 5.000000e-03 : f32
    %58 = vector.broadcast %cst_62 : f32 to vector<1x64xf32>
    %59 = arith.mulf %57, %58 : vector<1x64xf32>
    %60 = vector.extract_strided_slice %56 {offsets = [0, 64], sizes = [1, 64], strides = [1, 1]} : vector<1x128xf32> to vector<1x64xf32>
    %cst_63 = arith.constant 5.000000e-03 : f32
    %61 = vector.broadcast %cst_63 : f32 to vector<1x64xf32>
    %62 = arith.mulf %60, %61 : vector<1x64xf32>
    %63 = arith.mulf %59, %59 : vector<1x64xf32>
    %64 = arith.subf %62, %63 : vector<1x64xf32>
    %cst_64 = arith.constant 0.000000e+00 : f32
    %65 = vector.broadcast %cst_64 : f32 to vector<1x64xf32>
    %66 = arith.maximumf %64, %65 : vector<1x64xf32>
    %c0_65 = arith.constant 0 : index
    %c0_66 = arith.constant 0 : index
    %67 = vector.load %arg4[%c0_65, %c0_66] : memref<2x64xf32, #tpu.memory_space<vmem>>, vector<1x64xf32>
    %cst_67 = arith.constant 9.99999974E-6 : f32
    %68 = vector.broadcast %cst_67 : f32 to vector<1x64xf32>
    %69 = arith.addf %66, %68 : vector<1x64xf32>
    %70 = math.rsqrt %69 : vector<1x64xf32>
    %71 = arith.mulf %67, %70 : vector<1x64xf32>
    %c1_68 = arith.constant 1 : index
    %c0_69 = arith.constant 0 : index
    %72 = vector.load %arg4[%c1_68, %c0_69] : memref<2x64xf32, #tpu.memory_space<vmem>>, vector<1x64xf32>
    %73 = arith.mulf %59, %71 : vector<1x64xf32>
    %74 = arith.subf %72, %73 : vector<1x64xf32>
    %75 = vector.shape_cast %71 : vector<1x64xf32> to vector<1x64xf32>
    %76 = vector.broadcast %75 : vector<1x64xf32> to vector<16x64xf32>
    %77 = vector.shape_cast %74 : vector<1x64xf32> to vector<1x64xf32>
    %78 = vector.broadcast %77 : vector<1x64xf32> to vector<16x64xf32>
    %c0_70 = arith.constant 0 : index
    %c0_71 = arith.constant 0 : index
    %c0_72 = arith.constant 0 : index
    %79 = vector.load %arg6[%c0_70, %c0_71, %c0_72] : memref<2x160x64xf32, #tpu.memory_space<vmem>>, vector<1x16x64xf32>
    %80 = vector.shape_cast %79 : vector<1x16x64xf32> to vector<16x64xf32>
    %c0_73 = arith.constant 0 : index
    %c16_74 = arith.constant 16 : index
    %c0_75 = arith.constant 0 : index
    %81 = vector.load %arg6[%c0_73, %c16_74, %c0_75] : memref<2x160x64xf32, #tpu.memory_space<vmem>>, vector<1x16x64xf32>
    %82 = vector.shape_cast %81 : vector<1x16x64xf32> to vector<16x64xf32>
    %83 = arith.mulf %80, %76 : vector<16x64xf32>
    %84 = arith.addf %83, %78 : vector<16x64xf32>
    %85 = arith.mulf %82, %76 : vector<16x64xf32>
    %86 = arith.addf %85, %78 : vector<16x64xf32>
    %87 = arith.maximumf %84, %86 : vector<16x64xf32>
    %cst_76 = arith.constant 0.000000e+00 : f32
    %88 = vector.broadcast %cst_76 : f32 to vector<16x64xf32>
    %89 = arith.maximumf %87, %88 : vector<16x64xf32>
    %c0_77 = arith.constant 0 : index
    %c0_78 = arith.constant 0 : index
    %c0_79 = arith.constant 0 : index
    %90 = vector.load %arg7[%c0_77, %c0_78, %c0_79] : memref<5x16x64xf32, #tpu.memory_space<vmem>>, vector<1x16x64xf32>
    %91 = vector.shape_cast %90 : vector<1x16x64xf32> to vector<16x64xf32>
    %92 = vector.shape_cast %89 : vector<16x64xf32> to vector<1x16x64xf32>
    tpu.vector_store %arg7[%c0_77, %c0_78, %c0_79], %92 {strides = array<i32>} : memref<5x16x64xf32, #tpu.memory_space<vmem>>, vector<1x16x64xf32>,
    %c0_80 = arith.constant 0 : index
    %c32_81 = arith.constant 32 : index
    %c0_82 = arith.constant 0 : index
    %93 = vector.load %arg6[%c0_80, %c32_81, %c0_82] : memref<2x160x64xf32, #tpu.memory_space<vmem>>, vector<1x16x64xf32>
    %94 = vector.shape_cast %93 : vector<1x16x64xf32> to vector<16x64xf32>
    %c0_83 = arith.constant 0 : index
    %c48 = arith.constant 48 : index
    %c0_84 = arith.constant 0 : index
    %95 = vector.load %arg6[%c0_83, %c48, %c0_84] : memref<2x160x64xf32, #tpu.memory_space<vmem>>, vector<1x16x64xf32>
    %96 = vector.shape_cast %95 : vector<1x16x64xf32> to vector<16x64xf32>
    %97 = arith.mulf %94, %76 : vector<16x64xf32>
    %98 = arith.addf %97, %78 : vector<16x64xf32>
    %99 = arith.mulf %96, %76 : vector<16x64xf32>
    %100 = arith.addf %99, %78 : vector<16x64xf32>
    %101 = arith.maximumf %98, %100 : vector<16x64xf32>
    %cst_85 = arith.constant 0.000000e+00 : f32
    %102 = vector.broadcast %cst_85 : f32 to vector<16x64xf32>
    %103 = arith.maximumf %101, %102 : vector<16x64xf32>
    %c1_86 = arith.constant 1 : index
    %c0_87 = arith.constant 0 : index
    %c0_88 = arith.constant 0 : index
    %104 = vector.load %arg7[%c1_86, %c0_87, %c0_88] : memref<5x16x64xf32, #tpu.memory_space<vmem>>, vector<1x16x64xf32>
    %105 = vector.shape_cast %104 : vector<1x16x64xf32> to vector<16x64xf32>
    %106 = vector.shape_cast %103 : vector<16x64xf32> to vector<1x16x64xf32>
    tpu.vector_store %arg7[%c1_86, %c0_87, %c0_88], %106 {strides = array<i32>} : memref<5x16x64xf32, #tpu.memory_space<vmem>>, vector<1x16x64xf32>,
    %c0_89 = arith.constant 0 : index
    %c64 = arith.constant 64 : index
    %c0_90 = arith.constant 0 : index
    %107 = vector.load %arg6[%c0_89, %c64, %c0_90] : memref<2x160x64xf32, #tpu.memory_space<vmem>>, vector<1x16x64xf32>
    %108 = vector.shape_cast %107 : vector<1x16x64xf32> to vector<16x64xf32>
    %c0_91 = arith.constant 0 : index
    %c80 = arith.constant 80 : index
    %c0_92 = arith.constant 0 : index
    %109 = vector.load %arg6[%c0_91, %c80, %c0_92] : memref<2x160x64xf32, #tpu.memory_space<vmem>>, vector<1x16x64xf32>
    %110 = vector.shape_cast %109 : vector<1x16x64xf32> to vector<16x64xf32>
    %111 = arith.mulf %108, %76 : vector<16x64xf32>
    %112 = arith.addf %111, %78 : vector<16x64xf32>
    %113 = arith.mulf %110, %76 : vector<16x64xf32>
    %114 = arith.addf %113, %78 : vector<16x64xf32>
    %115 = arith.maximumf %112, %114 : vector<16x64xf32>
    %cst_93 = arith.constant 0.000000e+00 : f32
    %116 = vector.broadcast %cst_93 : f32 to vector<16x64xf32>
    %117 = arith.maximumf %115, %116 : vector<16x64xf32>
    %c2_94 = arith.constant 2 : index
    %c0_95 = arith.constant 0 : index
    %c0_96 = arith.constant 0 : index
    %118 = vector.load %arg7[%c2_94, %c0_95, %c0_96] : memref<5x16x64xf32, #tpu.memory_space<vmem>>, vector<1x16x64xf32>
    %119 = vector.shape_cast %118 : vector<1x16x64xf32> to vector<16x64xf32>
    %120 = vector.shape_cast %117 : vector<16x64xf32> to vector<1x16x64xf32>
    tpu.vector_store %arg7[%c2_94, %c0_95, %c0_96], %120 {strides = array<i32>} : memref<5x16x64xf32, #tpu.memory_space<vmem>>, vector<1x16x64xf32>,
    %c0_97 = arith.constant 0 : index
    %c96 = arith.constant 96 : index
    %c0_98 = arith.constant 0 : index
    %121 = vector.load %arg6[%c0_97, %c96, %c0_98] : memref<2x160x64xf32, #tpu.memory_space<vmem>>, vector<1x16x64xf32>
    %122 = vector.shape_cast %121 : vector<1x16x64xf32> to vector<16x64xf32>
    %c0_99 = arith.constant 0 : index
    %c112 = arith.constant 112 : index
    %c0_100 = arith.constant 0 : index
    %123 = vector.load %arg6[%c0_99, %c112, %c0_100] : memref<2x160x64xf32, #tpu.memory_space<vmem>>, vector<1x16x64xf32>
    %124 = vector.shape_cast %123 : vector<1x16x64xf32> to vector<16x64xf32>
    %125 = arith.mulf %122, %76 : vector<16x64xf32>
    %126 = arith.addf %125, %78 : vector<16x64xf32>
    %127 = arith.mulf %124, %76 : vector<16x64xf32>
    %128 = arith.addf %127, %78 : vector<16x64xf32>
    %129 = arith.maximumf %126, %128 : vector<16x64xf32>
    %cst_101 = arith.constant 0.000000e+00 : f32
    %130 = vector.broadcast %cst_101 : f32 to vector<16x64xf32>
    %131 = arith.maximumf %129, %130 : vector<16x64xf32>
    %c3 = arith.constant 3 : index
    %c0_102 = arith.constant 0 : index
    %c0_103 = arith.constant 0 : index
    %132 = vector.load %arg7[%c3, %c0_102, %c0_103] : memref<5x16x64xf32, #tpu.memory_space<vmem>>, vector<1x16x64xf32>
    %133 = vector.shape_cast %132 : vector<1x16x64xf32> to vector<16x64xf32>
    %134 = vector.shape_cast %131 : vector<16x64xf32> to vector<1x16x64xf32>
    tpu.vector_store %arg7[%c3, %c0_102, %c0_103], %134 {strides = array<i32>} : memref<5x16x64xf32, #tpu.memory_space<vmem>>, vector<1x16x64xf32>,
    %c0_104 = arith.constant 0 : index
    %c128 = arith.constant 128 : index
    %c0_105 = arith.constant 0 : index
    %135 = vector.load %arg6[%c0_104, %c128, %c0_105] : memref<2x160x64xf32, #tpu.memory_space<vmem>>, vector<1x16x64xf32>
    %136 = vector.shape_cast %135 : vector<1x16x64xf32> to vector<16x64xf32>
    %c0_106 = arith.constant 0 : index
    %c144 = arith.constant 144 : index
    %c0_107 = arith.constant 0 : index
    %137 = vector.load %arg6[%c0_106, %c144, %c0_107] : memref<2x160x64xf32, #tpu.memory_space<vmem>>, vector<1x16x64xf32>
    %138 = vector.shape_cast %137 : vector<1x16x64xf32> to vector<16x64xf32>
    %139 = arith.mulf %136, %76 : vector<16x64xf32>
    %140 = arith.addf %139, %78 : vector<16x64xf32>
    %141 = arith.mulf %138, %76 : vector<16x64xf32>
    %142 = arith.addf %141, %78 : vector<16x64xf32>
    %143 = arith.maximumf %140, %142 : vector<16x64xf32>
    %cst_108 = arith.constant 0.000000e+00 : f32
    %144 = vector.broadcast %cst_108 : f32 to vector<16x64xf32>
    %145 = arith.maximumf %143, %144 : vector<16x64xf32>
    %c4 = arith.constant 4 : index
    %c0_109 = arith.constant 0 : index
    %c0_110 = arith.constant 0 : index
    %146 = vector.load %arg7[%c4, %c0_109, %c0_110] : memref<5x16x64xf32, #tpu.memory_space<vmem>>, vector<1x16x64xf32>
    %147 = vector.shape_cast %146 : vector<1x16x64xf32> to vector<16x64xf32>
    %148 = vector.shape_cast %145 : vector<16x64xf32> to vector<1x16x64xf32>
    tpu.vector_store %arg7[%c4, %c0_109, %c0_110], %148 {strides = array<i32>} : memref<5x16x64xf32, #tpu.memory_space<vmem>>, vector<1x16x64xf32>,
    %c0_111 = arith.constant 0 : index
    %c0_112 = arith.constant 0 : index
    %c0_113 = arith.constant 0 : index
    %149 = tpu.strided_load %arg7[%c0_111, %c0_112, %c0_113] {strides = array<i32: 1, 2, 1>} : memref<5x16x64xf32, #tpu.memory_space<vmem>>, vector<5x5x64xf32>
    %c0_114 = arith.constant 0 : index
    %c1_115 = arith.constant 1 : index
    %c0_116 = arith.constant 0 : index
    %150 = tpu.strided_load %arg7[%c0_114, %c1_115, %c0_116] {strides = array<i32: 1, 2, 1>} : memref<5x16x64xf32, #tpu.memory_space<vmem>>, vector<5x5x64xf32>
    %151 = arith.maximumf %149, %150 : vector<5x5x64xf32>
    %152 = arith.truncf %151 : vector<5x5x64xf32> to vector<5x5x64xbf16>
    %c0_117 = arith.constant 0 : index
    %c0_118 = arith.constant 0 : index
    %c0_119 = arith.constant 0 : index
    %c0_120 = arith.constant 0 : index
    %153 = vector.load %arg5[%c0_117, %c0_118, %c0_119, %c0_120] : memref<2x5x5x64xbf16, #tpu.memory_space<vmem>>, vector<1x5x5x64xbf16>
    %154 = vector.shape_cast %153 : vector<1x5x5x64xbf16> to vector<5x5x64xbf16>
    %155 = vector.shape_cast %152 : vector<5x5x64xbf16> to vector<1x5x5x64xbf16>
    tpu.vector_store %arg5[%c0_117, %c0_118, %c0_119, %c0_120], %155 {strides = array<i32>} : memref<2x5x5x64xbf16, #tpu.memory_space<vmem>>, vector<1x5x5x64xbf16>,
    %c1_121 = arith.constant 1 : index
    %c0_122 = arith.constant 0 : index
    %c0_123 = arith.constant 0 : index
    %156 = vector.load %arg6[%c1_121, %c0_122, %c0_123] : memref<2x160x64xf32, #tpu.memory_space<vmem>>, vector<1x16x64xf32>
    %157 = vector.shape_cast %156 : vector<1x16x64xf32> to vector<16x64xf32>
    %c1_124 = arith.constant 1 : index
    %c16_125 = arith.constant 16 : index
    %c0_126 = arith.constant 0 : index
    %158 = vector.load %arg6[%c1_124, %c16_125, %c0_126] : memref<2x160x64xf32, #tpu.memory_space<vmem>>, vector<1x16x64xf32>
    %159 = vector.shape_cast %158 : vector<1x16x64xf32> to vector<16x64xf32>
    %160 = arith.mulf %157, %76 : vector<16x64xf32>
    %161 = arith.addf %160, %78 : vector<16x64xf32>
    %162 = arith.mulf %159, %76 : vector<16x64xf32>
    %163 = arith.addf %162, %78 : vector<16x64xf32>
    %164 = arith.maximumf %161, %163 : vector<16x64xf32>
    %cst_127 = arith.constant 0.000000e+00 : f32
    %165 = vector.broadcast %cst_127 : f32 to vector<16x64xf32>
    %166 = arith.maximumf %164, %165 : vector<16x64xf32>
    %c0_128 = arith.constant 0 : index
    %c0_129 = arith.constant 0 : index
    %c0_130 = arith.constant 0 : index
    %167 = vector.load %arg7[%c0_128, %c0_129, %c0_130] : memref<5x16x64xf32, #tpu.memory_space<vmem>>, vector<1x16x64xf32>
    %168 = vector.shape_cast %167 : vector<1x16x64xf32> to vector<16x64xf32>
    %169 = vector.shape_cast %166 : vector<16x64xf32> to vector<1x16x64xf32>
    tpu.vector_store %arg7[%c0_128, %c0_129, %c0_130], %169 {strides = array<i32>} : memref<5x16x64xf32, #tpu.memory_space<vmem>>, vector<1x16x64xf32>,
    %c1_131 = arith.constant 1 : index
    %c32_132 = arith.constant 32 : index
    %c0_133 = arith.constant 0 : index
    %170 = vector.load %arg6[%c1_131, %c32_132, %c0_133] : memref<2x160x64xf32, #tpu.memory_space<vmem>>, vector<1x16x64xf32>
    %171 = vector.shape_cast %170 : vector<1x16x64xf32> to vector<16x64xf32>
    %c1_134 = arith.constant 1 : index
    %c48_135 = arith.constant 48 : index
    %c0_136 = arith.constant 0 : index
    %172 = vector.load %arg6[%c1_134, %c48_135, %c0_136] : memref<2x160x64xf32, #tpu.memory_space<vmem>>, vector<1x16x64xf32>
    %173 = vector.shape_cast %172 : vector<1x16x64xf32> to vector<16x64xf32>
    %174 = arith.mulf %171, %76 : vector<16x64xf32>
    %175 = arith.addf %174, %78 : vector<16x64xf32>
    %176 = arith.mulf %173, %76 : vector<16x64xf32>
    %177 = arith.addf %176, %78 : vector<16x64xf32>
    %178 = arith.maximumf %175, %177 : vector<16x64xf32>
    %cst_137 = arith.constant 0.000000e+00 : f32
    %179 = vector.broadcast %cst_137 : f32 to vector<16x64xf32>
    %180 = arith.maximumf %178, %179 : vector<16x64xf32>
    %c1_138 = arith.constant 1 : index
    %c0_139 = arith.constant 0 : index
    %c0_140 = arith.constant 0 : index
    %181 = vector.load %arg7[%c1_138, %c0_139, %c0_140] : memref<5x16x64xf32, #tpu.memory_space<vmem>>, vector<1x16x64xf32>
    %182 = vector.shape_cast %181 : vector<1x16x64xf32> to vector<16x64xf32>
    %183 = vector.shape_cast %180 : vector<16x64xf32> to vector<1x16x64xf32>
    tpu.vector_store %arg7[%c1_138, %c0_139, %c0_140], %183 {strides = array<i32>} : memref<5x16x64xf32, #tpu.memory_space<vmem>>, vector<1x16x64xf32>,
    %c1_141 = arith.constant 1 : index
    %c64_142 = arith.constant 64 : index
    %c0_143 = arith.constant 0 : index
    %184 = vector.load %arg6[%c1_141, %c64_142, %c0_143] : memref<2x160x64xf32, #tpu.memory_space<vmem>>, vector<1x16x64xf32>
    %185 = vector.shape_cast %184 : vector<1x16x64xf32> to vector<16x64xf32>
    %c1_144 = arith.constant 1 : index
    %c80_145 = arith.constant 80 : index
    %c0_146 = arith.constant 0 : index
    %186 = vector.load %arg6[%c1_144, %c80_145, %c0_146] : memref<2x160x64xf32, #tpu.memory_space<vmem>>, vector<1x16x64xf32>
    %187 = vector.shape_cast %186 : vector<1x16x64xf32> to vector<16x64xf32>
    %188 = arith.mulf %185, %76 : vector<16x64xf32>
    %189 = arith.addf %188, %78 : vector<16x64xf32>
    %190 = arith.mulf %187, %76 : vector<16x64xf32>
    %191 = arith.addf %190, %78 : vector<16x64xf32>
    %192 = arith.maximumf %189, %191 : vector<16x64xf32>
    %cst_147 = arith.constant 0.000000e+00 : f32
    %193 = vector.broadcast %cst_147 : f32 to vector<16x64xf32>
    %194 = arith.maximumf %192, %193 : vector<16x64xf32>
    %c2_148 = arith.constant 2 : index
    %c0_149 = arith.constant 0 : index
    %c0_150 = arith.constant 0 : index
    %195 = vector.load %arg7[%c2_148, %c0_149, %c0_150] : memref<5x16x64xf32, #tpu.memory_space<vmem>>, vector<1x16x64xf32>
    %196 = vector.shape_cast %195 : vector<1x16x64xf32> to vector<16x64xf32>
    %197 = vector.shape_cast %194 : vector<16x64xf32> to vector<1x16x64xf32>
    tpu.vector_store %arg7[%c2_148, %c0_149, %c0_150], %197 {strides = array<i32>} : memref<5x16x64xf32, #tpu.memory_space<vmem>>, vector<1x16x64xf32>,
    %c1_151 = arith.constant 1 : index
    %c96_152 = arith.constant 96 : index
    %c0_153 = arith.constant 0 : index
    %198 = vector.load %arg6[%c1_151, %c96_152, %c0_153] : memref<2x160x64xf32, #tpu.memory_space<vmem>>, vector<1x16x64xf32>
    %199 = vector.shape_cast %198 : vector<1x16x64xf32> to vector<16x64xf32>
    %c1_154 = arith.constant 1 : index
    %c112_155 = arith.constant 112 : index
    %c0_156 = arith.constant 0 : index
    %200 = vector.load %arg6[%c1_154, %c112_155, %c0_156] : memref<2x160x64xf32, #tpu.memory_space<vmem>>, vector<1x16x64xf32>
    %201 = vector.shape_cast %200 : vector<1x16x64xf32> to vector<16x64xf32>
    %202 = arith.mulf %199, %76 : vector<16x64xf32>
    %203 = arith.addf %202, %78 : vector<16x64xf32>
    %204 = arith.mulf %201, %76 : vector<16x64xf32>
    %205 = arith.addf %204, %78 : vector<16x64xf32>
    %206 = arith.maximumf %203, %205 : vector<16x64xf32>
    %cst_157 = arith.constant 0.000000e+00 : f32
    %207 = vector.broadcast %cst_157 : f32 to vector<16x64xf32>
    %208 = arith.maximumf %206, %207 : vector<16x64xf32>
    %c3_158 = arith.constant 3 : index
    %c0_159 = arith.constant 0 : index
    %c0_160 = arith.constant 0 : index
    %209 = vector.load %arg7[%c3_158, %c0_159, %c0_160] : memref<5x16x64xf32, #tpu.memory_space<vmem>>, vector<1x16x64xf32>
    %210 = vector.shape_cast %209 : vector<1x16x64xf32> to vector<16x64xf32>
    %211 = vector.shape_cast %208 : vector<16x64xf32> to vector<1x16x64xf32>
    tpu.vector_store %arg7[%c3_158, %c0_159, %c0_160], %211 {strides = array<i32>} : memref<5x16x64xf32, #tpu.memory_space<vmem>>, vector<1x16x64xf32>,
    %c1_161 = arith.constant 1 : index
    %c128_162 = arith.constant 128 : index
    %c0_163 = arith.constant 0 : index
    %212 = vector.load %arg6[%c1_161, %c128_162, %c0_163] : memref<2x160x64xf32, #tpu.memory_space<vmem>>, vector<1x16x64xf32>
    %213 = vector.shape_cast %212 : vector<1x16x64xf32> to vector<16x64xf32>
    %c1_164 = arith.constant 1 : index
    %c144_165 = arith.constant 144 : index
    %c0_166 = arith.constant 0 : index
    %214 = vector.load %arg6[%c1_164, %c144_165, %c0_166] : memref<2x160x64xf32, #tpu.memory_space<vmem>>, vector<1x16x64xf32>
    %215 = vector.shape_cast %214 : vector<1x16x64xf32> to vector<16x64xf32>
    %216 = arith.mulf %213, %76 : vector<16x64xf32>
    %217 = arith.addf %216, %78 : vector<16x64xf32>
    %218 = arith.mulf %215, %76 : vector<16x64xf32>
    %219 = arith.addf %218, %78 : vector<16x64xf32>
    %220 = arith.maximumf %217, %219 : vector<16x64xf32>
    %cst_167 = arith.constant 0.000000e+00 : f32
    %221 = vector.broadcast %cst_167 : f32 to vector<16x64xf32>
    %222 = arith.maximumf %220, %221 : vector<16x64xf32>
    %c4_168 = arith.constant 4 : index
    %c0_169 = arith.constant 0 : index
    %c0_170 = arith.constant 0 : index
    %223 = vector.load %arg7[%c4_168, %c0_169, %c0_170] : memref<5x16x64xf32, #tpu.memory_space<vmem>>, vector<1x16x64xf32>
    %224 = vector.shape_cast %223 : vector<1x16x64xf32> to vector<16x64xf32>
    %225 = vector.shape_cast %222 : vector<16x64xf32> to vector<1x16x64xf32>
    tpu.vector_store %arg7[%c4_168, %c0_169, %c0_170], %225 {strides = array<i32>} : memref<5x16x64xf32, #tpu.memory_space<vmem>>, vector<1x16x64xf32>,
    %c0_171 = arith.constant 0 : index
    %c0_172 = arith.constant 0 : index
    %c0_173 = arith.constant 0 : index
    %226 = tpu.strided_load %arg7[%c0_171, %c0_172, %c0_173] {strides = array<i32: 1, 2, 1>} : memref<5x16x64xf32, #tpu.memory_space<vmem>>, vector<5x5x64xf32>
    %c0_174 = arith.constant 0 : index
    %c1_175 = arith.constant 1 : index
    %c0_176 = arith.constant 0 : index
    %227 = tpu.strided_load %arg7[%c0_174, %c1_175, %c0_176] {strides = array<i32: 1, 2, 1>} : memref<5x16x64xf32, #tpu.memory_space<vmem>>, vector<5x5x64xf32>
    %228 = arith.maximumf %226, %227 : vector<5x5x64xf32>
    %229 = arith.truncf %228 : vector<5x5x64xf32> to vector<5x5x64xbf16>
    %c1_177 = arith.constant 1 : index
    %c0_178 = arith.constant 0 : index
    %c0_179 = arith.constant 0 : index
    %c0_180 = arith.constant 0 : index
    %230 = vector.load %arg5[%c1_177, %c0_178, %c0_179, %c0_180] : memref<2x5x5x64xbf16, #tpu.memory_space<vmem>>, vector<1x5x5x64xbf16>
    %231 = vector.shape_cast %230 : vector<1x5x5x64xbf16> to vector<5x5x64xbf16>
    %232 = vector.shape_cast %229 : vector<5x5x64xbf16> to vector<1x5x5x64xbf16>
    tpu.vector_store %arg5[%c1_177, %c0_178, %c0_179, %c0_180], %232 {strides = array<i32>} : memref<2x5x5x64xbf16, #tpu.memory_space<vmem>>, vector<1x5x5x64xbf16>,
    return
  }
  func.func @transform_0(%arg0: i32) -> (i32, i32, i32) {
    %c0_i32 = arith.constant 0 : i32
    %c0_i32_0 = arith.constant 0 : i32
    %c0_i32_1 = arith.constant 0 : i32
    %c0_i32_2 = arith.constant 0 : i32
    return %c0_i32, %c0_i32_0, %c0_i32_1 : i32, i32, i32
  }
  func.func @transform_1(%arg0: i32) -> (i32, i32) {
    %c0_i32 = arith.constant 0 : i32
    %c0_i32_0 = arith.constant 0 : i32
    %c0_i32_1 = arith.constant 0 : i32
    return %c0_i32, %c0_i32_0 : i32, i32
  }
  func.func @transform_2(%arg0: i32) -> (i32, i32) {
    %c0_i32 = arith.constant 0 : i32
    %c0_i32_0 = arith.constant 0 : i32
    %c0_i32_1 = arith.constant 0 : i32
    return %c0_i32, %c0_i32_0 : i32, i32
  }
  func.func @transform_3(%arg0: i32) -> (i32, i32) {
    %c0_i32 = arith.constant 0 : i32
    %c0_i32_0 = arith.constant 0 : i32
    %c0_i32_1 = arith.constant 0 : i32
    return %c0_i32, %c0_i32_0 : i32, i32
  }
  func.func @transform_4(%arg0: i32) -> (i32, i32, i32, i32) {
    %c0_i32 = arith.constant 0 : i32
    %c0_i32_0 = arith.constant 0 : i32
    %c0_i32_1 = arith.constant 0 : i32
    %c0_i32_2 = arith.constant 0 : i32
    %c0_i32_3 = arith.constant 0 : i32
    return %c0_i32, %c0_i32_0, %c0_i32_1, %c0_i32_2 : i32, i32, i32, i32
  }
}

module attributes {stable_mosaic.version = 11 : i64} {
  func.func @linear_kernel(%arg0: i32, %arg1: memref<2x1600xbf16, #tpu.memory_space<vmem>>, %arg2: memref<1600x128xbf16, #tpu.memory_space<vmem>>, %arg3: memref<1x128xf32, #tpu.memory_space<vmem>>, %arg4: memref<2x128xf32, #tpu.memory_space<vmem>>) attributes {dimension_semantics = [#tpu.dimension_semantics<arbitrary>], iteration_bounds = array<i64: 1>, scalar_prefetch = 0 : i64, scratch_operands = 0 : i64, tpu.core_type = #tpu.core_type<tc>, window_params = [{pipeline_mode = #tpu.pipeline_mode<synchronous>, transform_indices = @transform_0, window_bounds = array<i64: 2, 1600>}, {pipeline_mode = #tpu.pipeline_mode<synchronous>, transform_indices = @transform_1, window_bounds = array<i64: 1600, 128>}, {pipeline_mode = #tpu.pipeline_mode<synchronous>, transform_indices = @transform_2, window_bounds = array<i64: 1, 128>}, {pipeline_mode = #tpu.pipeline_mode<synchronous>, transform_indices = @transform_3, window_bounds = array<i64: 2, 128>}]} {
    %c0 = arith.constant 0 : index
    %c0_0 = arith.constant 0 : index
    %0 = vector.load %arg1[%c0, %c0_0] : memref<2x1600xbf16, #tpu.memory_space<vmem>>, vector<2x1600xbf16>
    %c0_1 = arith.constant 0 : index
    %c0_2 = arith.constant 0 : index
    %1 = vector.load %arg2[%c0_1, %c0_2] : memref<1600x128xbf16, #tpu.memory_space<vmem>>, vector<1600x128xbf16>
    %cst = arith.constant dense<0.000000e+00> : vector<2x128xf32>
    %2 = tpu.matmul %0, %1, %cst {dimension_numbers = #tpu.dot_dimension_numbers<[1], [0], [0], [1], [0, 0, 1, 1], [], []>} : vector<2x1600xbf16>, vector<1600x128xbf16>, vector<2x128xf32> -> vector<2x128xf32>
    %c0_3 = arith.constant 0 : index
    %c0_4 = arith.constant 0 : index
    %3 = vector.load %arg3[%c0_3, %c0_4] : memref<1x128xf32, #tpu.memory_space<vmem>>, vector<1x128xf32>
    %4 = vector.broadcast %3 : vector<1x128xf32> to vector<2x128xf32>
    %5 = arith.addf %2, %4 : vector<2x128xf32>
    %c0_5 = arith.constant 0 : index
    %c0_6 = arith.constant 0 : index
    %6 = vector.load %arg4[%c0_5, %c0_6] : memref<2x128xf32, #tpu.memory_space<vmem>>, vector<2x128xf32>
    tpu.vector_store %arg4[%c0_5, %c0_6], %5 {strides = array<i32>} : memref<2x128xf32, #tpu.memory_space<vmem>>, vector<2x128xf32>,
    return
  }
  func.func @transform_0(%arg0: i32) -> (i32, i32) {
    %c0_i32 = arith.constant 0 : i32
    %c0_i32_0 = arith.constant 0 : i32
    %c0_i32_1 = arith.constant 0 : i32
    return %c0_i32, %c0_i32_0 : i32, i32
  }
  func.func @transform_1(%arg0: i32) -> (i32, i32) {
    %c0_i32 = arith.constant 0 : i32
    %c0_i32_0 = arith.constant 0 : i32
    %c0_i32_1 = arith.constant 0 : i32
    return %c0_i32, %c0_i32_0 : i32, i32
  }
  func.func @transform_2(%arg0: i32) -> (i32, i32) {
    %c0_i32 = arith.constant 0 : i32
    %c0_i32_0 = arith.constant 0 : i32
    %c0_i32_1 = arith.constant 0 : i32
    return %c0_i32, %c0_i32_0 : i32, i32
  }
  func.func @transform_3(%arg0: i32) -> (i32, i32) {
    %c0_i32 = arith.constant 0 : i32
    %c0_i32_0 = arith.constant 0 : i32
    %c0_i32_1 = arith.constant 0 : i32
    return %c0_i32, %c0_i32_0 : i32, i32
  }
}

</mosaic_0001>

<llo_original>
// kernel: convnet_forward.5
$region0: #{convnet_forward.5}
  #allocation0 [shape = 'u32[]', space=smem, size = 0x4, offset = 0x4, fixed_abs, tag = 'smem constant byte address 0x4 - core index']
  #allocation1 [shape = 'u32[144,128]{1,0:T(1,128)}', space=vmem, size = 0x12000, scoped, tag = 'internal scratch']
  %s0 = inlined_call_operand.vmem [shape: bf16[2,1600], index: 0, kind: input, shape index: {}]
  %s1 = inlined_call_operand.vmem [shape: bf16[1600,128], index: 1, kind: input, shape index: {}]
  %s2 = inlined_call_operand.vmem [shape: f32[1,128], index: 2, kind: input, shape index: {}]
  %s3 = inlined_call_operand.hbm [shape: f32[2,128], index: 3, kind: output, shape index: {}]
  %s4 = sld [smem:[#allocation0]]
  $region22: #{convnet_forward.5} parent=0
    _
  %s6 = ssub.s32 1, %s4
  %s7 = scalar_select 0, %s6, %s4
  $region1: #{convnet_forward.5} parent=0
    #allocation2 [shape = 'u8[1024]{0}', space=vmem, size = 0x400, scoped, tag = 'output window, operand 0, single buffered']
    #allocation3 [shape = 's32[1]{0}', space=sflag, size = 0x4, scoped, tag = 'scoped memory for convnet_forward.5']
    %8 = vsyncpa [#allocation3], 0
    // Predicated region
    $region2: #{convnet_forward.5} parent=1 // pred_check
      _
    $region3: #{convnet_forward.5} parent=1 // pred_check_branch
      %10 = sbr.rel (0) target = $region5
    $region4: #{convnet_forward.5} parent=1 // pred_region
      _
    $region5: #{convnet_forward.5} parent=1 // pred_fallthru
      _
    // Predicated region
    $region6: #{convnet_forward.5} parent=1 // pred_check
      _
    $region7: #{convnet_forward.5} parent=1 // pred_check_branch
      %12 = sbr.rel (0) target = $region9
    $region8: #{convnet_forward.5} parent=1 // pred_region
      _
    $region9: #{convnet_forward.5} parent=1 // pred_fallthru
      _
    // Predicated region
    $region10: #{convnet_forward.5} parent=1 // pred_check
      _
    $region11: #{convnet_forward.5} parent=1 // pred_check_branch
      %14 = sbr.rel (0) target = $region13
    $region12: #{convnet_forward.5} parent=1 // pred_region
      _
    $region13: #{convnet_forward.5} parent=1 // pred_fallthru
      _
    %v16 = vld [vmem:[%s0] sm:$0xff]
    %v17 = vld [vmem:[%s0 + $0x8] sm:$0x1f]
    %v18 = vld [vmem:[%s1] sm:$0xf]
    %v19 = vld [vmem:[%s1 + $0x4] sm:$0xf]
    %v20 = vld [vmem:[%s1 + $0x8] sm:$0xf]
    %v21 = vld [vmem:[%s1 + $0xc] sm:$0xf]
    %v22 = vld [vmem:[%s1 + $0x10] sm:$0xf]
    %v23 = vld [vmem:[%s1 + $0x14] sm:$0xf]
    %v24 = vld [vmem:[%s1 + $0x18] sm:$0xf]
    %v25 = vld [vmem:[%s1 + $0x1c] sm:$0xf]
    %v26 = vld [vmem:[%s1 + $0x20] sm:$0xf]
    %v27 = vld [vmem:[%s1 + $0x24] sm:$0xf]
    %v28 = vld [vmem:[%s1 + $0x28] sm:$0xf]
    %v29 = vld [vmem:[%s1 + $0x2c] sm:$0xf]
    %v30 = vld [vmem:[%s1 + $0x30] sm:$0xf]
    %v31 = vld [vmem:[%s1 + $0x34] sm:$0xf]
    %v32 = vld [vmem:[%s1 + $0x38] sm:$0xf]
    %v33 = vld [vmem:[%s1 + $0x3c] sm:$0xf]
    %v34 = vld [vmem:[%s1 + $0x40] sm:$0xf]
    %v35 = vld [vmem:[%s1 + $0x44] sm:$0xf]
    %v36 = vld [vmem:[%s1 + $0x48] sm:$0xf]
    %v37 = vld [vmem:[%s1 + $0x4c] sm:$0xf]
    %v38 = vld [vmem:[%s1 + $0x50] sm:$0xf]
    %v39 = vld [vmem:[%s1 + $0x54] sm:$0xf]
    %v40 = vld [vmem:[%s1 + $0x58] sm:$0xf]
    %v41 = vld [vmem:[%s1 + $0x5c] sm:$0xf]
    %v42 = vld [vmem:[%s1 + $0x60] sm:$0xf]
    %v43 = vld [vmem:[%s1 + $0x64] sm:$0xf]
    %v44 = vld [vmem:[%s1 + $0x68] sm:$0xf]
    %v45 = vld [vmem:[%s1 + $0x6c] sm:$0xf]
    %v46 = vld [vmem:[%s1 + $0x70] sm:$0xf]
    %v47 = vld [vmem:[%s1 + $0x74] sm:$0xf]
    %v48 = vld [vmem:[%s1 + $0x78] sm:$0xf]
    %v49 = vld [vmem:[%s1 + $0x7c] sm:$0xf]
    %v50 = vld [vmem:[%s1 + $0x80] sm:$0xf]
    %v51 = vld [vmem:[%s1 + $0x84] sm:$0xf]
    %v52 = vld [vmem:[%s1 + $0x88] sm:$0xf]
    %v53 = vld [vmem:[%s1 + $0x8c] sm:$0xf]
    %v54 = vld [vmem:[%s1 + $0x90] sm:$0xf]
    %v55 = vld [vmem:[%s1 + $0x94] sm:$0xf]
    %v56 = vld [vmem:[%s1 + $0x98] sm:$0xf]
    %v57 = vld [vmem:[%s1 + $0x9c] sm:$0xf]
    %v58 = vld [vmem:[%s1 + $0xa0] sm:$0xf]
    %v59 = vld [vmem:[%s1 + $0xa4] sm:$0xf]
    %v60 = vld [vmem:[%s1 + $0xa8] sm:$0xf]
    %v61 = vld [vmem:[%s1 + $0xac] sm:$0xf]
    %v62 = vld [vmem:[%s1 + $0xb0] sm:$0xf]
    %v63 = vld [vmem:[%s1 + $0xb4] sm:$0xf]
    %v64 = vld [vmem:[%s1 + $0xb8] sm:$0xf]
    %v65 = vld [vmem:[%s1 + $0xbc] sm:$0xf]
    %v66 = vld [vmem:[%s1 + $0xc0] sm:$0xf]
    %v67 = vld [vmem:[%s1 + $0xc4] sm:$0xf]
    %v68 = vld [vmem:[%s1 + $0xc8] sm:$0xf]
    %v69 = vld [vmem:[%s1 + $0xcc] sm:$0xf]
    %v70 = vld [vmem:[%s1 + $0xd0] sm:$0xf]
    %v71 = vld [vmem:[%s1 + $0xd4] sm:$0xf]
    %v72 = vld [vmem:[%s1 + $0xd8] sm:$0xf]
    %v73 = vld [vmem:[%s1 + $0xdc] sm:$0xf]
    %v74 = vld [vmem:[%s1 + $0xe0] sm:$0xf]
    %v75 = vld [vmem:[%s1 + $0xe4] sm:$0xf]
    %v76 = vld [vmem:[%s1 + $0xe8] sm:$0xf]
    %v77 = vld [vmem:[%s1 + $0xec] sm:$0xf]
    %v78 = vld [vmem:[%s1 + $0xf0] sm:$0xf]
    %v79 = vld [vmem:[%s1 + $0xf4] sm:$0xf]
    %v80 = vld [vmem:[%s1 + $0xf8] sm:$0xf]
    %v81 = vld [vmem:[%s1 + $0xfc] sm:$0xf]
    %v82 = vld [vmem:[%s1 + $0x100] sm:$0xf]
    %v83 = vld [vmem:[%s1 + $0x104] sm:$0xf]
    %v84 = vld [vmem:[%s1 + $0x108] sm:$0xf]
    %v85 = vld [vmem:[%s1 + $0x10c] sm:$0xf]
    %v86 = vld [vmem:[%s1 + $0x110] sm:$0xf]
    %v87 = vld [vmem:[%s1 + $0x114] sm:$0xf]
    %v88 = vld [vmem:[%s1 + $0x118] sm:$0xf]
    %v89 = vld [vmem:[%s1 + $0x11c] sm:$0xf]
    %v90 = vld [vmem:[%s1 + $0x120] sm:$0xf]
    %v91 = vld [vmem:[%s1 + $0x124] sm:$0xf]
    %v92 = vld [vmem:[%s1 + $0x128] sm:$0xf]
    %v93 = vld [vmem:[%s1 + $0x12c] sm:$0xf]
    %v94 = vld [vmem:[%s1 + $0x130] sm:$0xf]
    %v95 = vld [vmem:[%s1 + $0x134] sm:$0xf]
    %v96 = vld [vmem:[%s1 + $0x138] sm:$0xf]
    %v97 = vld [vmem:[%s1 + $0x13c] sm:$0xf]
    %v98 = vld [vmem:[%s1 + $0x140] sm:$0xf]
    %v99 = vld [vmem:[%s1 + $0x144] sm:$0xf]
    %v100 = vld [vmem:[%s1 + $0x148] sm:$0xf]
    %v101 = vld [vmem:[%s1 + $0x14c] sm:$0xf]
    %v102 = vld [vmem:[%s1 + $0x150] sm:$0xf]
    %v103 = vld [vmem:[%s1 + $0x154] sm:$0xf]
    %v104 = vld [vmem:[%s1 + $0x158] sm:$0xf]
    %v105 = vld [vmem:[%s1 + $0x15c] sm:$0xf]
    %v106 = vld [vmem:[%s1 + $0x160] sm:$0xf]
    %v107 = vld [vmem:[%s1 + $0x164] sm:$0xf]
    %v108 = vld [vmem:[%s1 + $0x168] sm:$0xf]
    %v109 = vld [vmem:[%s1 + $0x16c] sm:$0xf]
    %v110 = vld [vmem:[%s1 + $0x170] sm:$0xf]
    %v111 = vld [vmem:[%s1 + $0x174] sm:$0xf]
    %v112 = vld [vmem:[%s1 + $0x178] sm:$0xf]
    %v113 = vld [vmem:[%s1 + $0x17c] sm:$0xf]
    %v114 = vld [vmem:[%s1 + $0x180] sm:$0xf]
    %v115 = vld [vmem:[%s1 + $0x184] sm:$0xf]
    %v116 = vld [vmem:[%s1 + $0x188] sm:$0xf]
    %v117 = vld [vmem:[%s1 + $0x18c] sm:$0xf]
    %v118 = vld [vmem:[%s1 + $0x190] sm:$0xf]
    %v119 = vld [vmem:[%s1 + $0x194] sm:$0xf]
    %v120 = vld [vmem:[%s1 + $0x198] sm:$0xf]
    %v121 = vld [vmem:[%s1 + $0x19c] sm:$0xf]
    %v122 = vld [vmem:[%s1 + $0x1a0] sm:$0xf]
    %v123 = vld [vmem:[%s1 + $0x1a4] sm:$0xf]
    %v124 = vld [vmem:[%s1 + $0x1a8] sm:$0xf]
    %v125 = vld [vmem:[%s1 + $0x1ac] sm:$0xf]
    %v126 = vld [vmem:[%s1 + $0x1b0] sm:$0xf]
    %v127 = vld [vmem:[%s1 + $0x1b4] sm:$0xf]
    %v128 = vld [vmem:[%s1 + $0x1b8] sm:$0xf]
    %v129 = vld [vmem:[%s1 + $0x1bc] sm:$0xf]
    %v130 = vld [vmem:[%s1 + $0x1c0] sm:$0xf]
    %v131 = vld [vmem:[%s1 + $0x1c4] sm:$0xf]
    %v132 = vld [vmem:[%s1 + $0x1c8] sm:$0xf]
    %v133 = vld [vmem:[%s1 + $0x1cc] sm:$0xf]
    %v134 = vld [vmem:[%s1 + $0x1d0] sm:$0xf]
    %v135 = vld [vmem:[%s1 + $0x1d4] sm:$0xf]
    %v136 = vld [vmem:[%s1 + $0x1d8] sm:$0xf]
    %v137 = vld [vmem:[%s1 + $0x1dc] sm:$0xf]
    %v138 = vld [vmem:[%s1 + $0x1e0] sm:$0xf]
    %v139 = vld [vmem:[%s1 + $0x1e4] sm:$0xf]
    %v140 = vld [vmem:[%s1 + $0x1e8] sm:$0xf]
    %v141 = vld [vmem:[%s1 + $0x1ec] sm:$0xf]
    %v142 = vld [vmem:[%s1 + $0x1f0] sm:$0xf]
    %v143 = vld [vmem:[%s1 + $0x1f4] sm:$0xf]
    %v144 = vld [vmem:[%s1 + $0x1f8] sm:$0xf]
    %v145 = vld [vmem:[%s1 + $0x1fc] sm:$0xf]
    %v146 = vld [vmem:[%s1 + $0x200] sm:$0xf]
    %v147 = vld [vmem:[%s1 + $0x204] sm:$0xf]
    %v148 = vld [vmem:[%s1 + $0x208] sm:$0xf]
    %v149 = vld [vmem:[%s1 + $0x20c] sm:$0xf]
    %v150 = vld [vmem:[%s1 + $0x210] sm:$0xf]
    %v151 = vld [vmem:[%s1 + $0x214] sm:$0xf]
    %v152 = vld [vmem:[%s1 + $0x218] sm:$0xf]
    %v153 = vld [vmem:[%s1 + $0x21c] sm:$0xf]
    %v154 = vld [vmem:[%s1 + $0x220] sm:$0xf]
    %v155 = vld [vmem:[%s1 + $0x224] sm:$0xf]
    %v156 = vld [vmem:[%s1 + $0x228] sm:$0xf]
    %v157 = vld [vmem:[%s1 + $0x22c] sm:$0xf]
    %v158 = vld [vmem:[%s1 + $0x230] sm:$0xf]
    %v159 = vld [vmem:[%s1 + $0x234] sm:$0xf]
    %v160 = vld [vmem:[%s1 + $0x238] sm:$0xf]
    %v161 = vld [vmem:[%s1 + $0x23c] sm:$0xf]
    %v162 = vld [vmem:[%s1 + $0x240] sm:$0xf]
    %v163 = vld [vmem:[%s1 + $0x244] sm:$0xf]
    %v164 = vld [vmem:[%s1 + $0x248] sm:$0xf]
    %v165 = vld [vmem:[%s1 + $0x24c] sm:$0xf]
    %v166 = vld [vmem:[%s1 + $0x250] sm:$0xf]
    %v167 = vld [vmem:[%s1 + $0x254] sm:$0xf]
    %v168 = vld [vmem:[%s1 + $0x258] sm:$0xf]
    %v169 = vld [vmem:[%s1 + $0x25c] sm:$0xf]
    %v170 = vld [vmem:[%s1 + $0x260] sm:$0xf]
    %v171 = vld [vmem:[%s1 + $0x264] sm:$0xf]
    %v172 = vld [vmem:[%s1 + $0x268] sm:$0xf]
    %v173 = vld [vmem:[%s1 + $0x26c] sm:$0xf]
    %v174 = vld [vmem:[%s1 + $0x270] sm:$0xf]
    %v175 = vld [vmem:[%s1 + $0x274] sm:$0xf]
    %v176 = vld [vmem:[%s1 + $0x278] sm:$0xf]
    %v177 = vld [vmem:[%s1 + $0x27c] sm:$0xf]
    %v178 = vld [vmem:[%s1 + $0x280] sm:$0xf]
    %v179 = vld [vmem:[%s1 + $0x284] sm:$0xf]
    %v180 = vld [vmem:[%s1 + $0x288] sm:$0xf]
    %v181 = vld [vmem:[%s1 + $0x28c] sm:$0xf]
    %v182 = vld [vmem:[%s1 + $0x290] sm:$0xf]
    %v183 = vld [vmem:[%s1 + $0x294] sm:$0xf]
    %v184 = vld [vmem:[%s1 + $0x298] sm:$0xf]
    %v185 = vld [vmem:[%s1 + $0x29c] sm:$0xf]
    %v186 = vld [vmem:[%s1 + $0x2a0] sm:$0xf]
    %v187 = vld [vmem:[%s1 + $0x2a4] sm:$0xf]
    %v188 = vld [vmem:[%s1 + $0x2a8] sm:$0xf]
    %v189 = vld [vmem:[%s1 + $0x2ac] sm:$0xf]
    %v190 = vld [vmem:[%s1 + $0x2b0] sm:$0xf]
    %v191 = vld [vmem:[%s1 + $0x2b4] sm:$0xf]
    %v192 = vld [vmem:[%s1 + $0x2b8] sm:$0xf]
    %v193 = vld [vmem:[%s1 + $0x2bc] sm:$0xf]
    %v194 = vld [vmem:[%s1 + $0x2c0] sm:$0xf]
    %v195 = vld [vmem:[%s1 + $0x2c4] sm:$0xf]
    %v196 = vld [vmem:[%s1 + $0x2c8] sm:$0xf]
    %v197 = vld [vmem:[%s1 + $0x2cc] sm:$0xf]
    %v198 = vld [vmem:[%s1 + $0x2d0] sm:$0xf]
    %v199 = vld [vmem:[%s1 + $0x2d4] sm:$0xf]
    %v200 = vld [vmem:[%s1 + $0x2d8] sm:$0xf]
    %v201 = vld [vmem:[%s1 + $0x2dc] sm:$0xf]
    %v202 = vld [vmem:[%s1 + $0x2e0] sm:$0xf]
    %v203 = vld [vmem:[%s1 + $0x2e4] sm:$0xf]
    %v204 = vld [vmem:[%s1 + $0x2e8] sm:$0xf]
    %v205 = vld [vmem:[%s1 + $0x2ec] sm:$0xf]
    %v206 = vld [vmem:[%s1 + $0x2f0] sm:$0xf]
    %v207 = vld [vmem:[%s1 + $0x2f4] sm:$0xf]
    %v208 = vld [vmem:[%s1 + $0x2f8] sm:$0xf]
    %v209 = vld [vmem:[%s1 + $0x2fc] sm:$0xf]
    %v210 = vld [vmem:[%s1 + $0x300] sm:$0xf]
    %v211 = vld [vmem:[%s1 + $0x304] sm:$0xf]
    %v212 = vld [vmem:[%s1 + $0x308] sm:$0xf]
    %v213 = vld [vmem:[%s1 + $0x30c] sm:$0xf]
    %v214 = vld [vmem:[%s1 + $0x310] sm:$0xf]
    %v215 = vld [vmem:[%s1 + $0x314] sm:$0xf]
    %v216 = vld [vmem:[%s1 + $0x318] sm:$0xf]
    %v217 = vld [vmem:[%s1 + $0x31c] sm:$0xf]
    %v218 = vld [vmem:[%s2] sm:$0x1]
    %v220 = vlaneseq
    %v221 = vshrl.u32 %v220, 7
    %v222 = vsub.s32 0, %v221
    %v223 = vrot.slane %v218, %v222
    %v227 = vcombine.high %v16, %v16
    %v229 = vunpack.c.l.s4 1966171168
    %v230 = vunpack.c.0.s8 %v229
    %v231 = vlaneseq
    %v232 = vshrl.u32 %v231, 7
    %v233 = vsub.s32 %v230, %v232
    %v234 = vrot.slane %v16, %v233
    %v236 = vunpack.c.l.s4 1966171168
    %v237 = vunpack.c.0.s8 %v236
    %v238 = vlaneseq
    %v239 = vshrl.u32 %v238, 7
    %v240 = vsub.s32 %v237, %v239
    %v241 = vrot.slane %v227, %v240
    %v242 = vcombine.high %v234, %v234
    %v243 = vcombine.high %v241, %v241
    %v245 = vunpack.c.l.s4 1966171168
    %v246 = vunpack.c.0.s8 %v245
    %v247 = vlaneseq
    %v248 = vshrl.u32 %v247, 7
    %v249 = vsub.s32 %v246, %v248
    %v250 = vrot.slane %v234, %v249
    %v252 = vunpack.c.l.s4 1966171168
    %v253 = vunpack.c.0.s8 %v252
    %v254 = vlaneseq
    %v255 = vshrl.u32 %v254, 7
    %v256 = vsub.s32 %v253, %v255
    %v257 = vrot.slane %v241, %v256
    %v259 = vunpack.c.l.s4 1966171168
    %v260 = vunpack.c.0.s8 %v259
    %v261 = vlaneseq
    %v262 = vshrl.u32 %v261, 7
    %v263 = vsub.s32 %v260, %v262
    %v264 = vrot.slane %v242, %v263
    %v266 = vunpack.c.l.s4 1966171168
    %v267 = vunpack.c.0.s8 %v266
    %v268 = vlaneseq
    %v269 = vshrl.u32 %v268, 7
    %v270 = vsub.s32 %v267, %v269
    %v271 = vrot.slane %v243, %v270
    %v272 = vcombine.high %v250, %v250
    %v273 = vcombine.high %v257, %v257
    %v274 = vcombine.high %v264, %v264
    %v275 = vcombine.high %v271, %v271
    %v276 = vcombine.high %v17, %v17
    %v278 = vunpack.c.l.s4 1966171168
    %v279 = vunpack.c.0.s8 %v278
    %v280 = vlaneseq
    %v281 = vshrl.u32 %v280, 7
    %v282 = vsub.s32 %v279, %v281
    %v283 = vrot.slane %v17, %v282
    %v285 = vunpack.c.l.s4 1966171168
    %v286 = vunpack.c.0.s8 %v285
    %v287 = vlaneseq
    %v288 = vshrl.u32 %v287, 7
    %v289 = vsub.s32 %v286, %v288
    %v290 = vrot.slane %v276, %v289
    %v291 = vcombine.high %v283, %v283
    %v293 = vunpack.c.l.s4 1966171168
    %v294 = vunpack.c.0.s8 %v293
    %v295 = vlaneseq
    %v296 = vshrl.u32 %v295, 7
    %v297 = vsub.s32 %v294, %v296
    %v298 = vrot.slane %v283, %v297
    %v300 = vunpack.c.l.s4 1966171168
    %v301 = vunpack.c.0.s8 %v300
    %v302 = vlaneseq
    %v303 = vshrl.u32 %v302, 7
    %v304 = vsub.s32 %v301, %v303
    %v305 = vrot.slane %v290, %v304
    %v307 = vunpack.c.l.s4 1966171168
    %v308 = vunpack.c.0.s8 %v307
    %v309 = vlaneseq
    %v310 = vshrl.u32 %v309, 7
    %v311 = vsub.s32 %v308, %v310
    %v312 = vrot.slane %v291, %v311
    %v313 = vcombine.high %v298, %v298
    %v314 = vcombine.high %v312, %v312
    %v527 = vunpack.c.l.b16 %v18
    %v528 = vunpack.c.l.b16 %v19
    %v529 = vunpack.c.l.b16 %v20
    %v530 = vunpack.c.l.b16 %v21
    %v531 = vunpack.c.l.b16 %v22
    %v532 = vunpack.c.l.b16 %v23
    %v533 = vunpack.c.l.b16 %v24
    %v534 = vunpack.c.l.b16 %v25
    %v535 = vunpack.c.l.b16 %v26
    %v536 = vunpack.c.l.b16 %v27
    %v537 = vunpack.c.l.b16 %v28
    %v538 = vunpack.c.l.b16 %v29
    %v539 = vunpack.c.l.b16 %v30
    %v540 = vunpack.c.l.b16 %v31
    %v541 = vunpack.c.l.b16 %v32
    %v542 = vunpack.c.l.b16 %v33
    %v543 = vunpack.c.l.b16 %v34
    %v544 = vunpack.c.l.b16 %v35
    %v545 = vunpack.c.l.b16 %v36
    %v546 = vunpack.c.l.b16 %v37
    %v547 = vunpack.c.l.b16 %v38
    %v548 = vunpack.c.l.b16 %v39
    %v549 = vunpack.c.l.b16 %v40
    %v550 = vunpack.c.l.b16 %v41
    %v551 = vunpack.c.l.b16 %v42
    %v552 = vunpack.c.l.b16 %v43
    %v553 = vunpack.c.l.b16 %v44
    %v554 = vunpack.c.l.b16 %v45
    %v555 = vunpack.c.l.b16 %v46
    %v556 = vunpack.c.l.b16 %v47
    %v557 = vunpack.c.l.b16 %v48
    %v558 = vunpack.c.l.b16 %v49
    %v559 = vunpack.c.l.b16 %v50
    %v560 = vunpack.c.l.b16 %v51
    %v561 = vunpack.c.l.b16 %v52
    %v562 = vunpack.c.l.b16 %v53
    %v563 = vunpack.c.l.b16 %v54
    %v564 = vunpack.c.l.b16 %v55
    %v565 = vunpack.c.l.b16 %v56
    %v566 = vunpack.c.l.b16 %v57
    %v567 = vunpack.c.l.b16 %v58
    %v568 = vunpack.c.l.b16 %v59
    %v569 = vunpack.c.l.b16 %v60
    %v570 = vunpack.c.l.b16 %v61
    %v571 = vunpack.c.l.b16 %v62
    %v572 = vunpack.c.l.b16 %v63
    %v573 = vunpack.c.l.b16 %v64
    %v574 = vunpack.c.l.b16 %v65
    %v575 = vunpack.c.l.b16 %v66
    %v576 = vunpack.c.l.b16 %v67
    %v577 = vunpack.c.l.b16 %v68
    %v578 = vunpack.c.l.b16 %v69
    %v579 = vunpack.c.l.b16 %v70
    %v580 = vunpack.c.l.b16 %v71
    %v581 = vunpack.c.l.b16 %v72
    %v582 = vunpack.c.l.b16 %v73
    %v583 = vunpack.c.l.b16 %v74
    %v584 = vunpack.c.l.b16 %v75
    %v585 = vunpack.c.l.b16 %v76
    %v586 = vunpack.c.l.b16 %v77
    %v587 = vunpack.c.l.b16 %v78
    %v588 = vunpack.c.l.b16 %v79
    %v589 = vunpack.c.l.b16 %v80
    %v590 = vunpack.c.l.b16 %v81
    %v591 = vunpack.c.l.b16 %v82
    %v592 = vunpack.c.l.b16 %v83
    %v593 = vunpack.c.l.b16 %v84
    %v594 = vunpack.c.l.b16 %v85
    %v595 = vunpack.c.l.b16 %v86
    %v596 = vunpack.c.l.b16 %v87
    %v597 = vunpack.c.l.b16 %v88
    %v598 = vunpack.c.l.b16 %v89
    %v599 = vunpack.c.l.b16 %v90
    %v600 = vunpack.c.l.b16 %v91
    %v601 = vunpack.c.l.b16 %v92
    %v602 = vunpack.c.l.b16 %v93
    %v603 = vunpack.c.l.b16 %v94
    %v604 = vunpack.c.l.b16 %v95
    %v605 = vunpack.c.l.b16 %v96
    %v606 = vunpack.c.l.b16 %v97
    %v607 = vunpack.c.l.b16 %v98
    %v608 = vunpack.c.l.b16 %v99
    %v609 = vunpack.c.l.b16 %v100
    %v610 = vunpack.c.l.b16 %v101
    %v611 = vunpack.c.l.b16 %v102
    %v612 = vunpack.c.l.b16 %v103
    %v613 = vunpack.c.l.b16 %v104
    %v614 = vunpack.c.l.b16 %v105
    %v615 = vunpack.c.l.b16 %v106
    %v616 = vunpack.c.l.b16 %v107
    %v617 = vunpack.c.l.b16 %v108
    %v618 = vunpack.c.l.b16 %v109
    %v619 = vunpack.c.l.b16 %v110
    %v620 = vunpack.c.l.b16 %v111
    %v621 = vunpack.c.l.b16 %v112
    %v622 = vunpack.c.l.b16 %v113
    %v623 = vunpack.c.l.b16 %v114
    %v624 = vunpack.c.l.b16 %v115
    %v625 = vunpack.c.l.b16 %v116
    %v626 = vunpack.c.l.b16 %v117
    %v627 = vunpack.c.l.b16 %v118
    %v628 = vunpack.c.l.b16 %v119
    %v629 = vunpack.c.l.b16 %v120
    %v630 = vunpack.c.l.b16 %v121
    %v631 = vunpack.c.l.b16 %v122
    %v632 = vunpack.c.l.b16 %v123
    %v633 = vunpack.c.l.b16 %v124
    %v634 = vunpack.c.l.b16 %v125
    %v635 = vunpack.c.l.b16 %v126
    %v636 = vunpack.c.l.b16 %v127
    %v637 = vunpack.c.l.b16 %v128
    %v638 = vunpack.c.l.b16 %v129
    %v639 = vunpack.c.l.b16 %v130
    %v640 = vunpack.c.l.b16 %v131
    %v641 = vunpack.c.l.b16 %v132
    %v642 = vunpack.c.l.b16 %v133
    %v643 = vunpack.c.l.b16 %v134
    %v644 = vunpack.c.l.b16 %v135
    %v645 = vunpack.c.l.b16 %v136
    %v646 = vunpack.c.l.b16 %v137
    %v647 = vunpack.c.l.b16 %v138
    %v648 = vunpack.c.l.b16 %v139
    %v649 = vunpack.c.l.b16 %v140
    %v650 = vunpack.c.l.b16 %v141
    %v651 = vunpack.c.l.b16 %v142
    %v652 = vunpack.c.l.b16 %v143
    %v653 = vunpack.c.l.b16 %v144
    %v654 = vunpack.c.l.b16 %v145
    %v655 = vunpack.c.l.b16 %v146
    %v656 = vunpack.c.l.b16 %v147
    %v657 = vunpack.c.l.b16 %v148
    %v658 = vunpack.c.l.b16 %v149
    %v659 = vunpack.c.l.b16 %v150
    %v660 = vunpack.c.l.b16 %v151
    %v661 = vunpack.c.l.b16 %v152
    %v662 = vunpack.c.l.b16 %v153
    %v663 = vunpack.c.l.b16 %v154
    %v664 = vunpack.c.l.b16 %v155
    %v665 = vunpack.c.l.b16 %v156
    %v666 = vunpack.c.l.b16 %v157
    %v667 = vunpack.c.l.b16 %v158
    %v668 = vunpack.c.l.b16 %v159
    %v669 = vunpack.c.l.b16 %v160
    %v670 = vunpack.c.l.b16 %v161
    %v671 = vunpack.c.l.b16 %v162
    %v672 = vunpack.c.l.b16 %v163
    %v673 = vunpack.c.l.b16 %v164
    %v674 = vunpack.c.l.b16 %v165
    %v675 = vunpack.c.l.b16 %v166
    %v676 = vunpack.c.l.b16 %v167
    %v677 = vunpack.c.l.b16 %v168
    %v678 = vunpack.c.l.b16 %v169
    %v679 = vunpack.c.l.b16 %v170
    %v680 = vunpack.c.l.b16 %v171
    %v681 = vunpack.c.l.b16 %v172
    %v682 = vunpack.c.l.b16 %v173
    %v683 = vunpack.c.l.b16 %v174
    %v684 = vunpack.c.l.b16 %v175
    %v685 = vunpack.c.l.b16 %v176
    %v686 = vunpack.c.l.b16 %v177
    %v687 = vunpack.c.l.b16 %v178
    %v688 = vunpack.c.l.b16 %v179
    %v689 = vunpack.c.l.b16 %v180
    %v690 = vunpack.c.l.b16 %v181
    %v691 = vunpack.c.l.b16 %v182
    %v692 = vunpack.c.l.b16 %v183
    %v693 = vunpack.c.l.b16 %v184
    %v694 = vunpack.c.l.b16 %v185
    %v695 = vunpack.c.l.b16 %v186
    %v696 = vunpack.c.l.b16 %v187
    %v697 = vunpack.c.l.b16 %v188
    %v698 = vunpack.c.l.b16 %v189
    %v699 = vunpack.c.l.b16 %v190
    %v700 = vunpack.c.l.b16 %v191
    %v701 = vunpack.c.l.b16 %v192
    %v702 = vunpack.c.l.b16 %v193
    %v703 = vunpack.c.l.b16 %v194
    %v704 = vunpack.c.l.b16 %v195
    %v705 = vunpack.c.l.b16 %v196
    %v706 = vunpack.c.l.b16 %v197
    %v707 = vunpack.c.l.b16 %v198
    %v708 = vunpack.c.l.b16 %v199
    %v709 = vunpack.c.l.b16 %v200
    %v710 = vunpack.c.l.b16 %v201
    %v711 = vunpack.c.l.b16 %v202
    %v712 = vunpack.c.l.b16 %v203
    %v713 = vunpack.c.l.b16 %v204
    %v714 = vunpack.c.l.b16 %v205
    %v715 = vunpack.c.l.b16 %v206
    %v716 = vunpack.c.l.b16 %v207
    %v717 = vunpack.c.l.b16 %v208
    %v718 = vunpack.c.l.b16 %v209
    %v719 = vunpack.c.l.b16 %v210
    %v720 = vunpack.c.l.b16 %v211
    %v721 = vunpack.c.l.b16 %v212
    %v722 = vunpack.c.l.b16 %v213
    %v723 = vunpack.c.l.b16 %v214
    %v724 = vunpack.c.l.b16 %v215
    %v725 = vunpack.c.l.b16 %v216
    %v726 = vunpack.c.l.b16 %v217
    %v727 = vpack.c.b16 %v528, %v527
    %v728 = vpack.c.b16 %v530, %v529
    %v729 = vpack.c.b16 %v532, %v531
    %v730 = vpack.c.b16 %v534, %v533
    %v731 = vpack.c.b16 %v536, %v535
    %v732 = vpack.c.b16 %v538, %v537
    %v733 = vpack.c.b16 %v540, %v539
    %v734 = vpack.c.b16 %v542, %v541
    %v735 = vpack.c.b16 %v544, %v543
    %v736 = vpack.c.b16 %v546, %v545
    %v737 = vpack.c.b16 %v548, %v547
    %v738 = vpack.c.b16 %v550, %v549
    %v739 = vpack.c.b16 %v552, %v551
    %v740 = vpack.c.b16 %v554, %v553
    %v741 = vpack.c.b16 %v556, %v555
    %v742 = vpack.c.b16 %v558, %v557
    %v743 = vpack.c.b16 %v560, %v559
    %v744 = vpack.c.b16 %v562, %v561
    %v745 = vpack.c.b16 %v564, %v563
    %v746 = vpack.c.b16 %v566, %v565
    %v747 = vpack.c.b16 %v568, %v567
    %v748 = vpack.c.b16 %v570, %v569
    %v749 = vpack.c.b16 %v572, %v571
    %v750 = vpack.c.b16 %v574, %v573
    %v751 = vpack.c.b16 %v576, %v575
    %v752 = vpack.c.b16 %v578, %v577
    %v753 = vpack.c.b16 %v580, %v579
    %v754 = vpack.c.b16 %v582, %v581
    %v755 = vpack.c.b16 %v584, %v583
    %v756 = vpack.c.b16 %v586, %v585
    %v757 = vpack.c.b16 %v588, %v587
    %v758 = vpack.c.b16 %v590, %v589
    %v759 = vpack.c.b16 %v592, %v591
    %v760 = vpack.c.b16 %v594, %v593
    %v761 = vpack.c.b16 %v596, %v595
    %v762 = vpack.c.b16 %v598, %v597
    %v763 = vpack.c.b16 %v600, %v599
    %v764 = vpack.c.b16 %v602, %v601
    %v765 = vpack.c.b16 %v604, %v603
    %v766 = vpack.c.b16 %v606, %v605
    %v767 = vpack.c.b16 %v608, %v607
    %v768 = vpack.c.b16 %v610, %v609
    %v769 = vpack.c.b16 %v612, %v611
    %v770 = vpack.c.b16 %v614, %v613
    %v771 = vpack.c.b16 %v616, %v615
    %v772 = vpack.c.b16 %v618, %v617
    %v773 = vpack.c.b16 %v620, %v619
    %v774 = vpack.c.b16 %v622, %v621
    %v775 = vpack.c.b16 %v624, %v623
    %v776 = vpack.c.b16 %v626, %v625
    %v777 = vpack.c.b16 %v628, %v627
    %v778 = vpack.c.b16 %v630, %v629
    %v779 = vpack.c.b16 %v632, %v631
    %v780 = vpack.c.b16 %v634, %v633
    %v781 = vpack.c.b16 %v636, %v635
    %v782 = vpack.c.b16 %v638, %v637
    %v783 = vpack.c.b16 %v640, %v639
    %v784 = vpack.c.b16 %v642, %v641
    %v785 = vpack.c.b16 %v644, %v643
    %v786 = vpack.c.b16 %v646, %v645
    %v787 = vpack.c.b16 %v648, %v647
    %v788 = vpack.c.b16 %v650, %v649
    %v789 = vpack.c.b16 %v652, %v651
    %v790 = vpack.c.b16 %v654, %v653
    %v791 = vpack.c.b16 %v656, %v655
    %v792 = vpack.c.b16 %v658, %v657
    %v793 = vpack.c.b16 %v660, %v659
    %v794 = vpack.c.b16 %v662, %v661
    %v795 = vpack.c.b16 %v664, %v663
    %v796 = vpack.c.b16 %v666, %v665
    %v797 = vpack.c.b16 %v668, %v667
    %v798 = vpack.c.b16 %v670, %v669
    %v799 = vpack.c.b16 %v672, %v671
    %v800 = vpack.c.b16 %v674, %v673
    %v801 = vpack.c.b16 %v676, %v675
    %v802 = vpack.c.b16 %v678, %v677
    %v803 = vpack.c.b16 %v680, %v679
    %v804 = vpack.c.b16 %v682, %v681
    %v805 = vpack.c.b16 %v684, %v683
    %v806 = vpack.c.b16 %v686, %v685
    %v807 = vpack.c.b16 %v688, %v687
    %v808 = vpack.c.b16 %v690, %v689
    %v809 = vpack.c.b16 %v692, %v691
    %v810 = vpack.c.b16 %v694, %v693
    %v811 = vpack.c.b16 %v696, %v695
    %v812 = vpack.c.b16 %v698, %v697
    %v813 = vpack.c.b16 %v700, %v699
    %v814 = vpack.c.b16 %v702, %v701
    %v815 = vpack.c.b16 %v704, %v703
    %v816 = vpack.c.b16 %v706, %v705
    %v817 = vpack.c.b16 %v708, %v707
    %v818 = vpack.c.b16 %v710, %v709
    %v819 = vpack.c.b16 %v712, %v711
    %v820 = vpack.c.b16 %v714, %v713
    %v821 = vpack.c.b16 %v716, %v715
    %v822 = vpack.c.b16 %v718, %v717
    %v823 = vpack.c.b16 %v720, %v719
    %v824 = vpack.c.b16 %v722, %v721
    %v825 = vpack.c.b16 %v724, %v723
    %v826 = vpack.c.b16 %v726, %v725
    %vm927 = vcmask 523264
    %v929 = vsel %vm927, %v305, 0
    %931 = vmatprep.subr.bf16.mxu0 0
    %932 = vmatpush1.bf16.msra.mxu0 %v727
    %933 = vmatprep.subr.bf16.mxu0 0
    %934 = vmatpush1.bf16.msra.mxu0 %v728
    %935 = vmatprep.subr.bf16.mxu0 0
    %936 = vmatpush1.bf16.msra.mxu0 %v729
    %937 = vmatprep.subr.bf16.mxu0 0
    %938 = vmatpush1.bf16.msra.mxu0 %v730
    %939 = vmatprep.subr.bf16.mxu0 0
    %940 = vmatpush1.bf16.msra.mxu0 %v731
    %941 = vmatprep.subr.bf16.mxu0 0
    %942 = vmatpush1.bf16.msra.mxu0 %v732
    %943 = vmatprep.subr.bf16.mxu0 0
    %944 = vmatpush1.bf16.msra.mxu0 %v733
    %945 = vmatprep.subr.bf16.mxu0 0
    %946 = vmatpush1.bf16.msra.mxu0 %v734
    %947 = vmatprep.subr.bf16.mxu0 0
    %948 = vmatpush1.bf16.msra.mxu0 %v735
    %949 = vmatprep.subr.bf16.mxu0 0
    %950 = vmatpush1.bf16.msra.mxu0 %v736
    %951 = vmatprep.subr.bf16.mxu0 0
    %952 = vmatpush1.bf16.msra.mxu0 %v737
    %953 = vmatprep.subr.bf16.mxu0 0
    %954 = vmatpush1.bf16.msra.mxu0 %v738
    %955 = vmatprep.subr.bf16.mxu0 0
    %956 = vmatpush1.bf16.msra.mxu0 %v739
    %957 = vmatprep.subr.bf16.mxu0 0
    %958 = vmatpush1.bf16.msra.mxu0 %v740
    %959 = vmatprep.subr.bf16.mxu0 0
    %960 = vmatpush1.bf16.msra.mxu0 %v741
    %961 = vmatprep.subr.bf16.mxu0 0
    %962 = vmatpush1.bf16.msra.mxu0 %v742
    %963 = vmatprep.mubr.bf16.mxu0 %v264
    %964 = vmatmul.mubr.bf16.gmra.mrb[0].mxu0 %v250
    %v965 = vpop.f32.mrb[0].mxu0
    %v966 = vadd.f32 %v223, %v965
    %v967 = vpop.f32.mrb[0].mxu0
    %v968 = vpop.f32.mrb[0].mxu0
    %v969 = vpop.f32.mrb[0].mxu0
    %970 = vdwg.mxu0
    %971 = vmatprep.subr.bf16.mxu0 0
    %972 = vmatpush1.bf16.msra.mxu0 %v743
    %973 = vmatprep.subr.bf16.mxu0 0
    %974 = vmatpush1.bf16.msra.mxu0 %v744
    %975 = vmatprep.subr.bf16.mxu0 0
    %976 = vmatpush1.bf16.msra.mxu0 %v745
    %977 = vmatprep.subr.bf16.mxu0 0
    %978 = vmatpush1.bf16.msra.mxu0 %v746
    %979 = vmatprep.subr.bf16.mxu0 0
    %980 = vmatpush1.bf16.msra.mxu0 %v747
    %981 = vmatprep.subr.bf16.mxu0 0
    %982 = vmatpush1.bf16.msra.mxu0 %v748
    %983 = vmatprep.subr.bf16.mxu0 0
    %984 = vmatpush1.bf16.msra.mxu0 %v749
    %985 = vmatprep.subr.bf16.mxu0 0
    %986 = vmatpush1.bf16.msra.mxu0 %v750
    %987 = vmatprep.subr.bf16.mxu0 0
    %988 = vmatpush1.bf16.msra.mxu0 %v751
    %989 = vmatprep.subr.bf16.mxu0 0
    %990 = vmatpush1.bf16.msra.mxu0 %v752
    %991 = vmatprep.subr.bf16.mxu0 0
    %992 = vmatpush1.bf16.msra.mxu0 %v753
    %993 = vmatprep.subr.bf16.mxu0 0
    %994 = vmatpush1.bf16.msra.mxu0 %v754
    %995 = vmatprep.subr.bf16.mxu0 0
    %996 = vmatpush1.bf16.msra.mxu0 %v755
    %997 = vmatprep.subr.bf16.mxu0 0
    %998 = vmatpush1.bf16.msra.mxu0 %v756
    %999 = vmatprep.subr.bf16.mxu0 0
    %1000 = vmatpush1.bf16.msra.mxu0 %v757
    %1001 = vmatprep.subr.bf16.mxu0 0
    %1002 = vmatpush1.bf16.msra.mxu0 %v758
    %1003 = vmatprep.mubr.bf16.mxu0 %v274
    %1004 = vmatmul.mubr.bf16.gmra.mrb[0].mxu0 %v272
    %v1005 = vpop.f32.mrb[0].mxu0
    %v1006 = vadd.f32 %v966, %v1005
    %v1007 = vpop.f32.mrb[0].mxu0
    %v1008 = vpop.f32.mrb[0].mxu0
    %v1009 = vpop.f32.mrb[0].mxu0
    %1010 = vdwg.mxu0
    %1011 = vmatprep.subr.bf16.mxu0 0
    %1012 = vmatpush1.bf16.msra.mxu0 %v759
    %1013 = vmatprep.subr.bf16.mxu0 0
    %1014 = vmatpush1.bf16.msra.mxu0 %v760
    %1015 = vmatprep.subr.bf16.mxu0 0
    %1016 = vmatpush1.bf16.msra.mxu0 %v761
    %1017 = vmatprep.subr.bf16.mxu0 0
    %1018 = vmatpush1.bf16.msra.mxu0 %v762
    %1019 = vmatprep.subr.bf16.mxu0 0
    %1020 = vmatpush1.bf16.msra.mxu0 %v763
    %1021 = vmatprep.subr.bf16.mxu0 0
    %1022 = vmatpush1.bf16.msra.mxu0 %v764
    %1023 = vmatprep.subr.bf16.mxu0 0
    %1024 = vmatpush1.bf16.msra.mxu0 %v765
    %1025 = vmatprep.subr.bf16.mxu0 0
    %1026 = vmatpush1.bf16.msra.mxu0 %v766
    %1027 = vmatprep.subr.bf16.mxu0 0
    %1028 = vmatpush1.bf16.msra.mxu0 %v767
    %1029 = vmatprep.subr.bf16.mxu0 0
    %1030 = vmatpush1.bf16.msra.mxu0 %v768
    %1031 = vmatprep.subr.bf16.mxu0 0
    %1032 = vmatpush1.bf16.msra.mxu0 %v769
    %1033 = vmatprep.subr.bf16.mxu0 0
    %1034 = vmatpush1.bf16.msra.mxu0 %v770
    %1035 = vmatprep.subr.bf16.mxu0 0
    %1036 = vmatpush1.bf16.msra.mxu0 %v771
    %1037 = vmatprep.subr.bf16.mxu0 0
    %1038 = vmatpush1.bf16.msra.mxu0 %v772
    %1039 = vmatprep.subr.bf16.mxu0 0
    %1040 = vmatpush1.bf16.msra.mxu0 %v773
    %1041 = vmatprep.subr.bf16.mxu0 0
    %1042 = vmatpush1.bf16.msra.mxu0 %v774
    %1043 = vmatprep.mubr.bf16.mxu0 %v271
    %1044 = vmatmul.mubr.bf16.gmra.mrb[0].mxu0 %v257
    %v1045 = vpop.f32.mrb[0].mxu0
    %v1046 = vadd.f32 %v1006, %v1045
    %v1047 = vpop.f32.mrb[0].mxu0
    %v1048 = vpop.f32.mrb[0].mxu0
    %v1049 = vpop.f32.mrb[0].mxu0
    %1050 = vdwg.mxu0
    %1051 = vmatprep.subr.bf16.mxu0 0
    %1052 = vmatpush1.bf16.msra.mxu0 %v775
    %1053 = vmatprep.subr.bf16.mxu0 0
    %1054 = vmatpush1.bf16.msra.mxu0 %v776
    %1055 = vmatprep.subr.bf16.mxu0 0
    %1056 = vmatpush1.bf16.msra.mxu0 %v777
    %1057 = vmatprep.subr.bf16.mxu0 0
    %1058 = vmatpush1.bf16.msra.mxu0 %v778
    %1059 = vmatprep.subr.bf16.mxu0 0
    %1060 = vmatpush1.bf16.msra.mxu0 %v779
    %1061 = vmatprep.subr.bf16.mxu0 0
    %1062 = vmatpush1.bf16.msra.mxu0 %v780
    %1063 = vmatprep.subr.bf16.mxu0 0
    %1064 = vmatpush1.bf16.msra.mxu0 %v781
    %1065 = vmatprep.subr.bf16.mxu0 0
    %1066 = vmatpush1.bf16.msra.mxu0 %v782
    %1067 = vmatprep.subr.bf16.mxu0 0
    %1068 = vmatpush1.bf16.msra.mxu0 %v783
    %1069 = vmatprep.subr.bf16.mxu0 0
    %1070 = vmatpush1.bf16.msra.mxu0 %v784
    %1071 = vmatprep.subr.bf16.mxu0 0
    %1072 = vmatpush1.bf16.msra.mxu0 %v785
    %1073 = vmatprep.subr.bf16.mxu0 0
    %1074 = vmatpush1.bf16.msra.mxu0 %v786
    %1075 = vmatprep.subr.bf16.mxu0 0
    %1076 = vmatpush1.bf16.msra.mxu0 %v787
    %1077 = vmatprep.subr.bf16.mxu0 0
    %1078 = vmatpush1.bf16.msra.mxu0 %v788
    %1079 = vmatprep.subr.bf16.mxu0 0
    %1080 = vmatpush1.bf16.msra.mxu0 %v789
    %1081 = vmatprep.subr.bf16.mxu0 0
    %1082 = vmatpush1.bf16.msra.mxu0 %v790
    %1083 = vmatprep.mubr.bf16.mxu0 %v275
    %1084 = vmatmul.mubr.bf16.gmra.mrb[0].mxu0 %v273
    %v1085 = vpop.f32.mrb[0].mxu0
    %v1086 = vadd.f32 %v1046, %v1085
    %v1087 = vpop.f32.mrb[0].mxu0
    %v1088 = vpop.f32.mrb[0].mxu0
    %v1089 = vpop.f32.mrb[0].mxu0
    %1090 = vdwg.mxu0
    %1091 = vmatprep.subr.bf16.mxu0 0
    %1092 = vmatpush1.bf16.msra.mxu0 %v791
    %1093 = vmatprep.subr.bf16.mxu0 0
    %1094 = vmatpush1.bf16.msra.mxu0 %v792
    %1095 = vmatprep.subr.bf16.mxu0 0
    %1096 = vmatpush1.bf16.msra.mxu0 %v793
    %1097 = vmatprep.subr.bf16.mxu0 0
    %1098 = vmatpush1.bf16.msra.mxu0 %v794
    %1099 = vmatprep.subr.bf16.mxu0 0
    %1100 = vmatpush1.bf16.msra.mxu0 %v795
    %1101 = vmatprep.subr.bf16.mxu0 0
    %1102 = vmatpush1.bf16.msra.mxu0 %v796
    %1103 = vmatprep.subr.bf16.mxu0 0
    %1104 = vmatpush1.bf16.msra.mxu0 %v797
    %1105 = vmatprep.subr.bf16.mxu0 0
    %1106 = vmatpush1.bf16.msra.mxu0 %v798
    %1107 = vmatprep.subr.bf16.mxu0 0
    %1108 = vmatpush1.bf16.msra.mxu0 %v799
    %1109 = vmatprep.subr.bf16.mxu0 0
    %1110 = vmatpush1.bf16.msra.mxu0 %v800
    %1111 = vmatprep.subr.bf16.mxu0 0
    %1112 = vmatpush1.bf16.msra.mxu0 %v801
    %1113 = vmatprep.subr.bf16.mxu0 0
    %1114 = vmatpush1.bf16.msra.mxu0 %v802
    %1115 = vmatprep.subr.bf16.mxu0 0
    %1116 = vmatpush1.bf16.msra.mxu0 %v803
    %1117 = vmatprep.subr.bf16.mxu0 0
    %1118 = vmatpush1.bf16.msra.mxu0 %v804
    %1119 = vmatprep.subr.bf16.mxu0 0
    %1120 = vmatpush1.bf16.msra.mxu0 %v805
    %1121 = vmatprep.subr.bf16.mxu0 0
    %1122 = vmatpush1.bf16.msra.mxu0 %v806
    %1123 = vmatprep.mubr.bf16.mxu0 %v312
    %1124 = vmatmul.mubr.bf16.gmra.mrb[0].mxu0 %v298
    %v1125 = vpop.f32.mrb[0].mxu0
    %v1126 = vadd.f32 %v1086, %v1125
    %v1127 = vpop.f32.mrb[0].mxu0
    %v1128 = vpop.f32.mrb[0].mxu0
    %v1129 = vpop.f32.mrb[0].mxu0
    %1130 = vdwg.mxu0
    %1131 = vmatprep.subr.bf16.mxu0 0
    %1132 = vmatpush1.bf16.msra.mxu0 %v807
    %1133 = vmatprep.subr.bf16.mxu0 0
    %1134 = vmatpush1.bf16.msra.mxu0 %v808
    %1135 = vmatprep.subr.bf16.mxu0 0
    %1136 = vmatpush1.bf16.msra.mxu0 %v809
    %1137 = vmatprep.subr.bf16.mxu0 0
    %1138 = vmatpush1.bf16.msra.mxu0 %v810
    %1139 = vmatprep.subr.bf16.mxu0 0
    %1140 = vmatpush1.bf16.msra.mxu0 %v811
    %1141 = vmatprep.subr.bf16.mxu0 0
    %1142 = vmatpush1.bf16.msra.mxu0 %v812
    %1143 = vmatprep.subr.bf16.mxu0 0
    %1144 = vmatpush1.bf16.msra.mxu0 %v813
    %1145 = vmatprep.subr.bf16.mxu0 0
    %1146 = vmatpush1.bf16.msra.mxu0 %v814
    %1147 = vmatprep.subr.bf16.mxu0 0
    %1148 = vmatpush1.bf16.msra.mxu0 %v815
    %1149 = vmatprep.subr.bf16.mxu0 0
    %1150 = vmatpush1.bf16.msra.mxu0 %v816
    %1151 = vmatprep.subr.bf16.mxu0 0
    %1152 = vmatpush1.bf16.msra.mxu0 %v817
    %1153 = vmatprep.subr.bf16.mxu0 0
    %1154 = vmatpush1.bf16.msra.mxu0 %v818
    %1155 = vmatprep.subr.bf16.mxu0 0
    %1156 = vmatpush1.bf16.msra.mxu0 %v819
    %1157 = vmatprep.subr.bf16.mxu0 0
    %1158 = vmatpush1.bf16.msra.mxu0 %v820
    %1159 = vmatprep.subr.bf16.mxu0 0
    %1160 = vmatpush1.bf16.msra.mxu0 %v821
    %1161 = vmatprep.subr.bf16.mxu0 0
    %1162 = vmatpush1.bf16.msra.mxu0 %v822
    %1163 = vmatprep.mubr.bf16.mxu0 %v314
    %1164 = vmatmul.mubr.bf16.gmra.mrb[0].mxu0 %v313
    %v1165 = vpop.f32.mrb[0].mxu0
    %v1166 = vadd.f32 %v1126, %v1165
    %v1167 = vpop.f32.mrb[0].mxu0
    %v1168 = vpop.f32.mrb[0].mxu0
    %v1169 = vpop.f32.mrb[0].mxu0
    %1170 = vdwg.mxu0
    %1171 = vmatprep.subr.bf16.mxu0 0
    %1172 = vmatpush1.bf16.msra.mxu0 %v823
    %1173 = vmatprep.subr.bf16.mxu0 0
    %1174 = vmatpush1.bf16.msra.mxu0 %v824
    %1175 = vmatprep.subr.bf16.mxu0 0
    %1176 = vmatpush1.bf16.msra.mxu0 %v825
    %1177 = vmatprep.subr.bf16.mxu0 0
    %1178 = vmatpush1.bf16.msra.mxu0 %v826
    %1179 = vmatprep.subr.bf16.mxu0 0
    %1180 = vmatpush1.bf16.msra.mxu0 0
    %1181 = vmatprep.subr.bf16.mxu0 0
    %1182 = vmatpush1.bf16.msra.mxu0 0
    %1183 = vmatprep.subr.bf16.mxu0 0
    %1184 = vmatpush1.bf16.msra.mxu0 0
    %1185 = vmatprep.subr.bf16.mxu0 0
    %1186 = vmatpush1.bf16.msra.mxu0 0
    %1187 = vmatprep.subr.bf16.mxu0 0
    %1188 = vmatpush1.bf16.msra.mxu0 0
    %1189 = vmatprep.subr.bf16.mxu0 0
    %1190 = vmatpush1.bf16.msra.mxu0 0
    %1191 = vmatprep.subr.bf16.mxu0 0
    %1192 = vmatpush1.bf16.msra.mxu0 0
    %1193 = vmatprep.subr.bf16.mxu0 0
    %1194 = vmatpush1.bf16.msra.mxu0 0
    %1195 = vmatprep.subr.bf16.mxu0 0
    %1196 = vmatpush1.bf16.msra.mxu0 0
    %1197 = vmatprep.subr.bf16.mxu0 0
    %1198 = vmatpush1.bf16.msra.mxu0 0
    %1199 = vmatprep.subr.bf16.mxu0 0
    %1200 = vmatpush1.bf16.msra.mxu0 0
    %1201 = vmatprep.subr.bf16.mxu0 0
    %1202 = vmatpush1.bf16.msra.mxu0 0
    %1203 = vmatprep.mubr.bf16.mxu0 0
    %1204 = vmatmul.mubr.bf16.gmra.mrb[0].mxu0 %v929
    %v1205 = vpop.f32.mrb[0].mxu0
    %v1206 = vadd.f32 %v1166, %v1205
    %v1207 = vpop.f32.mrb[0].mxu0
    %v1208 = vpop.f32.mrb[0].mxu0
    %v1209 = vpop.f32.mrb[0].mxu0
    %1210 = vdwg.mxu0
    %1211 = vst [vmem:[#allocation2] sm:$0x3] %v1206
    // Predicated region
    $region14: #{convnet_forward.5} parent=1 // pred_check
      _
    $region15: #{convnet_forward.5} parent=1 // pred_check_branch
      %1213 = sbr.rel (0) target = $region17
    $region16: #{convnet_forward.5} parent=1 // pred_region
      %s1215 = ssub.s32 32, 32
      %1216 = vsyncadd [#allocation3], %s1215
      %s1218 = sshll.u32 [#allocation2], 4
      %s1219 = int_to_ptr.vmem [resolvable:$true] %s1218
      %1221 = dma.vmem_to_hbm [thread:$0]  %s1219, 32, %s3, [#allocation3]
    $region17: #{convnet_forward.5} parent=1 // pred_fallthru
      _
    // Predicated region
    $region18: #{convnet_forward.5} parent=1 // pred_check
      _
    $region19: #{convnet_forward.5} parent=1 // pred_check_branch
      %1223 = sbr.rel (0) target = $region21
    $region20: #{convnet_forward.5} parent=1 // pred_region
      %1224 = dma.done [#allocation3], 32
    $region21: #{convnet_forward.5} parent=1 // pred_fallthru
      _
    %1225 = vsyncpa [#allocation3], 1

// kernel: convnet_forward.4
$region0: #{convnet_forward.4}
  #allocation0 [shape = 'u32[]', space=smem, size = 0x4, offset = 0x4, fixed_abs, tag = 'smem constant byte address 0x4 - core index']
  #allocation1 [shape = 'u32[144,128]{1,0:T(1,128)}', space=vmem, size = 0x12000, scoped, tag = 'internal scratch']
  #allocation2 [shape = 'f32[2,160,64]{2,1,0:T(8,128)}', space=vmem, size = 0x28000, scoped, tag = 'scratch operand']
  #allocation3 [shape = 'f32[5,16,64]{2,1,0:T(8,128)}', space=vmem, size = 0xa000, scoped, tag = 'scratch operand']
  %s0 = inlined_call_operand.vmem [shape: bf16[2,200,64], index: 0, kind: input, shape index: {}]
  %s1 = inlined_call_operand.vmem [shape: bf16[576,64], index: 1, kind: input, shape index: {}]
  %s2 = inlined_call_operand.vmem [shape: f32[1,160], index: 2, kind: input, shape index: {}]
  %s3 = inlined_call_operand.vmem [shape: f32[2,64], index: 3, kind: input, shape index: {}]
  %s4 = inlined_call_operand.vmem [shape: bf16[2,5,5,64], index: 4, kind: output, shape index: {}]
  %s5 = sld [smem:[#allocation0]]
  $region26: #{convnet_forward.4} parent=0
    _
  %s7 = ssub.s32 1, %s5
  %s8 = scalar_select 0, %s7, %s5
  // Predicated region
  $region2: #{convnet_forward.4} parent=0 // pred_check
    _
  $region3: #{convnet_forward.4} parent=0 // pred_check_branch
    %10 = sbr.rel (0) target = $region5
  $region4: #{convnet_forward.4} parent=0 // pred_region
    _
  $region5: #{convnet_forward.4} parent=0 // pred_fallthru
    _
  // Predicated region
  $region6: #{convnet_forward.4} parent=0 // pred_check
    _
  $region7: #{convnet_forward.4} parent=0 // pred_check_branch
    %12 = sbr.rel (0) target = $region9
  $region8: #{convnet_forward.4} parent=0 // pred_region
    _
  $region9: #{convnet_forward.4} parent=0 // pred_fallthru
    _
  // Predicated region
  $region10: #{convnet_forward.4} parent=0 // pred_check
    _
  $region11: #{convnet_forward.4} parent=0 // pred_check_branch
    %14 = sbr.rel (0) target = $region13
  $region12: #{convnet_forward.4} parent=0 // pred_region
    _
  $region13: #{convnet_forward.4} parent=0 // pred_fallthru
    _
  // Predicated region
  $region14: #{convnet_forward.4} parent=0 // pred_check
    _
  $region15: #{convnet_forward.4} parent=0 // pred_check_branch
    %16 = sbr.rel (0) target = $region17
  $region16: #{convnet_forward.4} parent=0 // pred_region
    _
  $region17: #{convnet_forward.4} parent=0 // pred_fallthru
    _
  %v18 = vld [vmem:[%s0] sm:$0xf]
  %v19 = vld [vmem:[%s0 + $0x4] sm:$0xf]
  %v20 = vld [vmem:[%s0 + $0x8] sm:$0xf]
  %v21 = vld [vmem:[%s0 + $0xc] sm:$0xf]
  %v22 = vld [vmem:[%s0 + $0x10] sm:$0xf]
  %v23 = vld [vmem:[%s0 + $0x14] sm:$0xf]
  %v24 = vld [vmem:[%s0 + $0x18] sm:$0xf]
  %v25 = vld [vmem:[%s0 + $0x1c] sm:$0xf]
  %v26 = vld [vmem:[%s0 + $0x20] sm:$0xf]
  %v27 = vld [vmem:[%s0 + $0x24] sm:$0xf]
  %v28 = vld [vmem:[%s0 + $0x28] sm:$0xf]
  %v29 = vld [vmem:[%s0 + $0x2c] sm:$0xf]
  %v30 = vld [vmem:[%s0 + $0x30] sm:$0xf]
  %v31 = vld [vmem:[%s0 + $0x34] sm:$0xf]
  %v32 = vld [vmem:[%s0 + $0x38] sm:$0xf]
  %v33 = vld [vmem:[%s0 + $0x3c] sm:$0xf]
  %v34 = vld [vmem:[%s0 + $0x40] sm:$0xf]
  %v35 = vld [vmem:[%s0 + $0x44] sm:$0xf]
  %v36 = vld [vmem:[%s0 + $0x48] sm:$0xf]
  %v37 = vld [vmem:[%s0 + $0x4c] sm:$0xf]
  %v38 = vld [vmem:[%s0 + $0x50] sm:$0x1]
  %v39 = vld [vmem:[%s0] sm:$0xe]
  %v40 = vld [vmem:[%s0 + $0x50] sm:$0xf]
  %v41 = vld [vmem:[%s0 + $0x54] sm:$0xf]
  %v42 = vld [vmem:[%s0 + $0x58] sm:$0x1]
  %v43 = vld [vmem:[%s0 + $0x8] sm:$0xe]
  %v44 = vld [vmem:[%s0 + $0x58] sm:$0xf]
  %v45 = vld [vmem:[%s0 + $0x5c] sm:$0xf]
  %v46 = vld [vmem:[%s0 + $0x60] sm:$0x1]
  %v47 = vld [vmem:[%s0 + $0x10] sm:$0xe]
  %v68 = vunpack.c.l.b16 %v18
  %v69 = vunpack.c.l.b16 %v19
  %v70 = vunpack.c.l.b16 %v20
  %v71 = vunpack.c.l.b16 %v21
  %v72 = vunpack.c.l.b16 %v22
  %v73 = vunpack.c.l.b16 %v23
  %v74 = vunpack.c.l.b16 %v24
  %v75 = vunpack.c.l.b16 %v25
  %v76 = vunpack.c.l.b16 %v26
  %v77 = vunpack.c.l.b16 %v27
  %v78 = vunpack.c.l.b16 %v28
  %v79 = vunpack.c.l.b16 %v29
  %v80 = vunpack.c.l.b16 %v30
  %v81 = vunpack.c.l.b16 %v31
  %v82 = vunpack.c.l.b16 %v32
  %v83 = vunpack.c.l.b16 %v33
  %v84 = vunpack.c.l.b16 %v34
  %v85 = vunpack.c.l.b16 %v35
  %v86 = vunpack.c.l.b16 %v36
  %v87 = vunpack.c.l.b16 %v37
  %v88 = vpack.c.b16 %v69, %v68
  %v89 = vpack.c.b16 %v71, %v70
  %v90 = vpack.c.b16 %v73, %v72
  %v91 = vpack.c.b16 %v75, %v74
  %v92 = vpack.c.b16 %v77, %v76
  %v93 = vpack.c.b16 %v79, %v78
  %v94 = vpack.c.b16 %v81, %v80
  %v95 = vpack.c.b16 %v83, %v82
  %v96 = vpack.c.b16 %v85, %v84
  %v97 = vpack.c.b16 %v87, %v86
  %v99 = vunpack.c.l.b16 %v38
  %v100 = vpack.c.b16 %v99, %v99
  %vm101 = vsmask.f32 7424
  %v103 = vshrl.u32 %v88, 16
  %v105 = vshll.u32 %v88, 16
  %v107 = vrot.slane %v105, 1
  %v108 = vor.u32 %v103, %v107
  %v110 = vshll.u32 %v89, 16
  %v112 = vrot.slane %v110, 1
  %v113 = vsel %vm101, %v108, %v112
  %v114 = vshrl.u32 %v89, 16
  %v116 = vor.u32 %v114, %v112
  %v118 = vshll.u32 %v90, 16
  %v120 = vrot.slane %v118, 1
  %v121 = vsel %vm101, %v116, %v120
  %v122 = vshrl.u32 %v90, 16
  %v124 = vor.u32 %v122, %v120
  %v126 = vshll.u32 %v91, 16
  %v128 = vrot.slane %v126, 1
  %v129 = vsel %vm101, %v124, %v128
  %v130 = vshrl.u32 %v91, 16
  %v132 = vor.u32 %v130, %v128
  %v134 = vshll.u32 %v92, 16
  %v136 = vrot.slane %v134, 1
  %v137 = vsel %vm101, %v132, %v136
  %v138 = vshrl.u32 %v92, 16
  %v140 = vor.u32 %v138, %v136
  %v142 = vshll.u32 %v93, 16
  %v144 = vrot.slane %v142, 1
  %v145 = vsel %vm101, %v140, %v144
  %v146 = vshrl.u32 %v93, 16
  %v148 = vor.u32 %v146, %v144
  %v150 = vshll.u32 %v94, 16
  %v152 = vrot.slane %v150, 1
  %v153 = vsel %vm101, %v148, %v152
  %v154 = vshrl.u32 %v94, 16
  %v156 = vor.u32 %v154, %v152
  %v158 = vshll.u32 %v95, 16
  %v160 = vrot.slane %v158, 1
  %v161 = vsel %vm101, %v156, %v160
  %v162 = vshrl.u32 %v95, 16
  %v164 = vor.u32 %v162, %v160
  %v166 = vshll.u32 %v96, 16
  %v168 = vrot.slane %v166, 1
  %v169 = vsel %vm101, %v164, %v168
  %v170 = vshrl.u32 %v96, 16
  %v172 = vor.u32 %v170, %v168
  %v174 = vshll.u32 %v97, 16
  %v176 = vrot.slane %v174, 1
  %v177 = vsel %vm101, %v172, %v176
  %v178 = vshrl.u32 %v97, 16
  %v180 = vor.u32 %v178, %v176
  %v182 = vshll.u32 %v100, 16
  %v184 = vrot.slane %v182, 1
  %v185 = vsel %vm101, %v180, %v184
  %186 = vrot.lane.b32.xlu0 %v113, 64
  %v187 = vpop.permute.xlu0 %186
  %188 = vrot.lane.b32.xlu0 %v121, 64
  %v189 = vpop.permute.xlu0 %188
  %190 = vrot.lane.b32.xlu0 %v129, 64
  %v191 = vpop.permute.xlu0 %190
  %192 = vrot.lane.b32.xlu0 %v137, 64
  %v193 = vpop.permute.xlu0 %192
  %194 = vrot.lane.b32.xlu0 %v145, 64
  %v195 = vpop.permute.xlu0 %194
  %196 = vrot.lane.b32.xlu0 %v153, 64
  %v197 = vpop.permute.xlu0 %196
  %198 = vrot.lane.b32.xlu0 %v161, 64
  %v199 = vpop.permute.xlu0 %198
  %200 = vrot.lane.b32.xlu0 %v169, 64
  %v201 = vpop.permute.xlu0 %200
  %202 = vrot.lane.b32.xlu0 %v177, 64
  %v203 = vpop.permute.xlu0 %202
  %204 = vrot.lane.b32.xlu0 %v185, 64
  %v205 = vpop.permute.xlu0 %204
  %v207 = vunpack.c.l.b16 %v39
  %v208 = vpack.c.b16 %v69, %v207
  %vm209 = vcmask 1046528
  %v210 = vrot.slane %v208, 1
  %v211 = vrot.slane %v89, 1
  %v212 = vsel %vm209, %v210, %v211
  %v213 = vrot.slane %v90, 1
  %v214 = vsel %vm209, %v211, %v213
  %v215 = vrot.slane %v91, 1
  %v216 = vsel %vm209, %v213, %v215
  %v217 = vrot.slane %v92, 1
  %v218 = vsel %vm209, %v215, %v217
  %v219 = vrot.slane %v93, 1
  %v220 = vsel %vm209, %v217, %v219
  %v221 = vrot.slane %v94, 1
  %v222 = vsel %vm209, %v219, %v221
  %v223 = vrot.slane %v95, 1
  %v224 = vsel %vm209, %v221, %v223
  %v225 = vrot.slane %v96, 1
  %v226 = vsel %vm209, %v223, %v225
  %v227 = vrot.slane %v97, 1
  %v228 = vsel %vm209, %v225, %v227
  %v229 = vrot.slane %v100, 1
  %v230 = vsel %vm209, %v227, %v229
  %v233 = vunpack.c.l.b16 %v40
  %v234 = vunpack.c.l.b16 %v41
  %v235 = vpack.c.b16 %v234, %v233
  %236 = vrot.lane.b32.xlu0 %v89, 64
  %v237 = vpop.permute.xlu0 %236
  %238 = vrot.lane.b32.xlu0 %v90, 64
  %v239 = vpop.permute.xlu0 %238
  %240 = vrot.lane.b32.xlu0 %v91, 64
  %v241 = vpop.permute.xlu0 %240
  %242 = vrot.lane.b32.xlu0 %v92, 64
  %v243 = vpop.permute.xlu0 %242
  %244 = vrot.lane.b32.xlu0 %v93, 64
  %v245 = vpop.permute.xlu0 %244
  %246 = vrot.lane.b32.xlu0 %v94, 64
  %v247 = vpop.permute.xlu0 %246
  %248 = vrot.lane.b32.xlu0 %v95, 64
  %v249 = vpop.permute.xlu0 %248
  %250 = vrot.lane.b32.xlu0 %v96, 64
  %v251 = vpop.permute.xlu0 %250
  %252 = vrot.lane.b32.xlu0 %v97, 64
  %v253 = vpop.permute.xlu0 %252
  %254 = vrot.lane.b32.xlu0 %v235, 64
  %v255 = vpop.permute.xlu0 %254
  %v257 = vunpack.c.l.b16 %v42
  %v258 = vpack.c.b16 %v257, %v257
  %v260 = vshll.u32 %v235, 16
  %v262 = vrot.slane %v260, 1
  %v263 = vsel %vm101, %v180, %v262
  %v264 = vshrl.u32 %v235, 16
  %v266 = vor.u32 %v264, %v262
  %v268 = vshll.u32 %v258, 16
  %v270 = vrot.slane %v268, 1
  %v271 = vsel %vm101, %v266, %v270
  %v273 = vunpack.c.l.b16 %v43
  %v274 = vpack.c.b16 %v71, %v273
  %v275 = vrot.slane %v274, 1
  %v276 = vsel %vm209, %v275, %v213
  %v277 = vrot.slane %v235, 1
  %v278 = vsel %vm209, %v227, %v277
  %v279 = vrot.slane %v258, 1
  %v280 = vsel %vm209, %v277, %v279
  %281 = vrot.lane.b32.xlu0 %v276, 64
  %v282 = vpop.permute.xlu0 %281
  %283 = vrot.lane.b32.xlu0 %v216, 64
  %v284 = vpop.permute.xlu0 %283
  %285 = vrot.lane.b32.xlu0 %v218, 64
  %v286 = vpop.permute.xlu0 %285
  %287 = vrot.lane.b32.xlu0 %v220, 64
  %v288 = vpop.permute.xlu0 %287
  %289 = vrot.lane.b32.xlu0 %v222, 64
  %v290 = vpop.permute.xlu0 %289
  %291 = vrot.lane.b32.xlu0 %v224, 64
  %v292 = vpop.permute.xlu0 %291
  %293 = vrot.lane.b32.xlu0 %v226, 64
  %v294 = vpop.permute.xlu0 %293
  %295 = vrot.lane.b32.xlu0 %v228, 64
  %v296 = vpop.permute.xlu0 %295
  %297 = vrot.lane.b32.xlu0 %v278, 64
  %v298 = vpop.permute.xlu0 %297
  %299 = vrot.lane.b32.xlu0 %v280, 64
  %v300 = vpop.permute.xlu0 %299
  %v303 = vunpack.c.l.b16 %v44
  %v304 = vunpack.c.l.b16 %v45
  %v305 = vpack.c.b16 %v304, %v303
  %v307 = vunpack.c.l.b16 %v46
  %v308 = vpack.c.b16 %v307, %v307
  %v310 = vshll.u32 %v305, 16
  %v312 = vrot.slane %v310, 1
  %v313 = vsel %vm101, %v266, %v312
  %v314 = vshrl.u32 %v305, 16
  %v316 = vor.u32 %v314, %v312
  %v318 = vshll.u32 %v308, 16
  %v320 = vrot.slane %v318, 1
  %v321 = vsel %vm101, %v316, %v320
  %322 = vrot.lane.b32.xlu0 %v263, 64
  %v323 = vpop.permute.xlu0 %322
  %324 = vrot.lane.b32.xlu0 %v313, 64
  %v325 = vpop.permute.xlu0 %324
  %326 = vrot.lane.b32.xlu0 %v321, 64
  %v327 = vpop.permute.xlu0 %326
  %v329 = vunpack.c.l.b16 %v47
  %v330 = vpack.c.b16 %v73, %v329
  %v331 = vrot.slane %v330, 1
  %v332 = vsel %vm209, %v331, %v215
  %v333 = vrot.slane %v305, 1
  %v334 = vsel %vm209, %v277, %v333
  %v335 = vrot.slane %v308, 1
  %v336 = vsel %vm209, %v333, %v335
  %vm337 = vcmask 523264
  %v339 = vsel %vm337, %v88, %v187
  %v342 = vsel %vm337, %v89, %v189
  %v345 = vsel %vm337, %v90, %v191
  %v348 = vsel %vm337, %v91, %v193
  %v351 = vsel %vm337, %v92, %v195
  %v354 = vsel %vm337, %v93, %v197
  %v357 = vsel %vm337, %v94, %v199
  %v360 = vsel %vm337, %v95, %v201
  %v363 = vsel %vm337, %v96, %v203
  %v366 = vsel %vm337, %v97, %v205
  %v370 = vsel %vm337, %v212, %v237
  %v374 = vsel %vm337, %v214, %v239
  %v378 = vsel %vm337, %v216, %v241
  %v382 = vsel %vm337, %v218, %v243
  %v386 = vsel %vm337, %v220, %v245
  %v390 = vsel %vm337, %v222, %v247
  %v394 = vsel %vm337, %v224, %v249
  %v398 = vsel %vm337, %v226, %v251
  %v402 = vsel %vm337, %v228, %v253
  %v406 = vsel %vm337, %v230, %v255
  %v410 = vsel %vm337, %v121, %v282
  %v414 = vsel %vm337, %v129, %v284
  %v418 = vsel %vm337, %v137, %v286
  %v422 = vsel %vm337, %v145, %v288
  %v426 = vsel %vm337, %v153, %v290
  %v430 = vsel %vm337, %v161, %v292
  %v434 = vsel %vm337, %v169, %v294
  %v438 = vsel %vm337, %v177, %v296
  %v442 = vsel %vm337, %v263, %v298
  %v446 = vsel %vm337, %v271, %v300
  %v449 = vsel %vm337, %v97, %v323
  %v452 = vsel %vm337, %v235, %v325
  %v455 = vsel %vm337, %v305, %v327
  %v457 = vld [vmem:[%s1] sm:$0xf]
  %v458 = vld [vmem:[%s1 + $0x4] sm:$0xf]
  %v459 = vld [vmem:[%s1 + $0x8] sm:$0xf]
  %v460 = vld [vmem:[%s1 + $0xc] sm:$0xf]
  %v461 = vld [vmem:[%s1 + $0x10] sm:$0xf]
  %v462 = vld [vmem:[%s1 + $0x14] sm:$0xf]
  %v463 = vld [vmem:[%s1 + $0x18] sm:$0xf]
  %v464 = vld [vmem:[%s1 + $0x1c] sm:$0xf]
  %v465 = vld [vmem:[%s1 + $0x20] sm:$0xf]
  %v466 = vld [vmem:[%s1 + $0x24] sm:$0xf]
  %v467 = vld [vmem:[%s1 + $0x28] sm:$0xf]
  %v468 = vld [vmem:[%s1 + $0x2c] sm:$0xf]
  %v469 = vld [vmem:[%s1 + $0x30] sm:$0xf]
  %v470 = vld [vmem:[%s1 + $0x34] sm:$0xf]
  %v471 = vld [vmem:[%s1 + $0x38] sm:$0xf]
  %v472 = vld [vmem:[%s1 + $0x3c] sm:$0xf]
  %v473 = vld [vmem:[%s1 + $0x40] sm:$0xf]
  %v474 = vld [vmem:[%s1 + $0x44] sm:$0xf]
  %v475 = vld [vmem:[%s1 + $0x48] sm:$0xf]
  %v476 = vld [vmem:[%s1 + $0x4c] sm:$0xf]
  %v477 = vld [vmem:[%s1 + $0x50] sm:$0xf]
  %v478 = vld [vmem:[%s1 + $0x54] sm:$0xf]
  %v479 = vld [vmem:[%s1 + $0x58] sm:$0xf]
  %v480 = vld [vmem:[%s1 + $0x5c] sm:$0xf]
  %v481 = vld [vmem:[%s1 + $0x60] sm:$0xf]
  %v482 = vld [vmem:[%s1 + $0x64] sm:$0xf]
  %v483 = vld [vmem:[%s1 + $0x68] sm:$0xf]
  %v484 = vld [vmem:[%s1 + $0x6c] sm:$0xf]
  %v485 = vld [vmem:[%s1 + $0x70] sm:$0xf]
  %v486 = vld [vmem:[%s1 + $0x74] sm:$0xf]
  %v487 = vld [vmem:[%s1 + $0x78] sm:$0xf]
  %v488 = vld [vmem:[%s1 + $0x7c] sm:$0xf]
  %v489 = vld [vmem:[%s1 + $0x80] sm:$0xf]
  %v490 = vld [vmem:[%s1 + $0x84] sm:$0xf]
  %v491 = vld [vmem:[%s1 + $0x88] sm:$0xf]
  %v492 = vld [vmem:[%s1 + $0x8c] sm:$0xf]
  %v493 = vld [vmem:[%s1 + $0x90] sm:$0xf]
  %v494 = vld [vmem:[%s1 + $0x94] sm:$0xf]
  %v495 = vld [vmem:[%s1 + $0x98] sm:$0xf]
  %v496 = vld [vmem:[%s1 + $0x9c] sm:$0xf]
  %v497 = vld [vmem:[%s1 + $0xa0] sm:$0xf]
  %v498 = vld [vmem:[%s1 + $0xa4] sm:$0xf]
  %v499 = vld [vmem:[%s1 + $0xa8] sm:$0xf]
  %v500 = vld [vmem:[%s1 + $0xac] sm:$0xf]
  %v501 = vld [vmem:[%s1 + $0xb0] sm:$0xf]
  %v502 = vld [vmem:[%s1 + $0xb4] sm:$0xf]
  %v503 = vld [vmem:[%s1 + $0xb8] sm:$0xf]
  %v504 = vld [vmem:[%s1 + $0xbc] sm:$0xf]
  %v505 = vld [vmem:[%s1 + $0xc0] sm:$0xf]
  %v506 = vld [vmem:[%s1 + $0xc4] sm:$0xf]
  %v507 = vld [vmem:[%s1 + $0xc8] sm:$0xf]
  %v508 = vld [vmem:[%s1 + $0xcc] sm:$0xf]
  %v509 = vld [vmem:[%s1 + $0xd0] sm:$0xf]
  %v510 = vld [vmem:[%s1 + $0xd4] sm:$0xf]
  %v511 = vld [vmem:[%s1 + $0xd8] sm:$0xf]
  %v512 = vld [vmem:[%s1 + $0xdc] sm:$0xf]
  %v513 = vld [vmem:[%s1 + $0xe0] sm:$0xf]
  %v514 = vld [vmem:[%s1 + $0xe4] sm:$0xf]
  %v515 = vld [vmem:[%s1 + $0xe8] sm:$0xf]
  %v516 = vld [vmem:[%s1 + $0xec] sm:$0xf]
  %v517 = vld [vmem:[%s1 + $0xf0] sm:$0xf]
  %v518 = vld [vmem:[%s1 + $0xf4] sm:$0xf]
  %v519 = vld [vmem:[%s1 + $0xf8] sm:$0xf]
  %v520 = vld [vmem:[%s1 + $0xfc] sm:$0xf]
  %v521 = vld [vmem:[%s1 + $0x100] sm:$0xf]
  %v522 = vld [vmem:[%s1 + $0x104] sm:$0xf]
  %v523 = vld [vmem:[%s1 + $0x108] sm:$0xf]
  %v524 = vld [vmem:[%s1 + $0x10c] sm:$0xf]
  %v525 = vld [vmem:[%s1 + $0x110] sm:$0xf]
  %v526 = vld [vmem:[%s1 + $0x114] sm:$0xf]
  %v527 = vld [vmem:[%s1 + $0x118] sm:$0xf]
  %v528 = vld [vmem:[%s1 + $0x11c] sm:$0xf]
  %v601 = vunpack.c.l.b16 %v457
  %v602 = vunpack.c.l.b16 %v458
  %v603 = vunpack.c.l.b16 %v459
  %v604 = vunpack.c.l.b16 %v460
  %v605 = vunpack.c.l.b16 %v461
  %v606 = vunpack.c.l.b16 %v462
  %v607 = vunpack.c.l.b16 %v463
  %v608 = vunpack.c.l.b16 %v464
  %v609 = vunpack.c.l.b16 %v465
  %v610 = vunpack.c.l.b16 %v466
  %v611 = vunpack.c.l.b16 %v467
  %v612 = vunpack.c.l.b16 %v468
  %v613 = vunpack.c.l.b16 %v469
  %v614 = vunpack.c.l.b16 %v470
  %v615 = vunpack.c.l.b16 %v471
  %v616 = vunpack.c.l.b16 %v472
  %v617 = vunpack.c.l.b16 %v473
  %v618 = vunpack.c.l.b16 %v474
  %v619 = vunpack.c.l.b16 %v475
  %v620 = vunpack.c.l.b16 %v476
  %v621 = vunpack.c.l.b16 %v477
  %v622 = vunpack.c.l.b16 %v478
  %v623 = vunpack.c.l.b16 %v479
  %v624 = vunpack.c.l.b16 %v480
  %v625 = vunpack.c.l.b16 %v481
  %v626 = vunpack.c.l.b16 %v482
  %v627 = vunpack.c.l.b16 %v483
  %v628 = vunpack.c.l.b16 %v484
  %v629 = vunpack.c.l.b16 %v485
  %v630 = vunpack.c.l.b16 %v486
  %v631 = vunpack.c.l.b16 %v487
  %v632 = vunpack.c.l.b16 %v488
  %v633 = vunpack.c.l.b16 %v489
  %v634 = vunpack.c.l.b16 %v490
  %v635 = vunpack.c.l.b16 %v491
  %v636 = vunpack.c.l.b16 %v492
  %v637 = vunpack.c.l.b16 %v493
  %v638 = vunpack.c.l.b16 %v494
  %v639 = vunpack.c.l.b16 %v495
  %v640 = vunpack.c.l.b16 %v496
  %v641 = vunpack.c.l.b16 %v497
  %v642 = vunpack.c.l.b16 %v498
  %v643 = vunpack.c.l.b16 %v499
  %v644 = vunpack.c.l.b16 %v500
  %v645 = vunpack.c.l.b16 %v501
  %v646 = vunpack.c.l.b16 %v502
  %v647 = vunpack.c.l.b16 %v503
  %v648 = vunpack.c.l.b16 %v504
  %v649 = vunpack.c.l.b16 %v505
  %v650 = vunpack.c.l.b16 %v506
  %v651 = vunpack.c.l.b16 %v507
  %v652 = vunpack.c.l.b16 %v508
  %v653 = vunpack.c.l.b16 %v509
  %v654 = vunpack.c.l.b16 %v510
  %v655 = vunpack.c.l.b16 %v511
  %v656 = vunpack.c.l.b16 %v512
  %v657 = vunpack.c.l.b16 %v513
  %v658 = vunpack.c.l.b16 %v514
  %v659 = vunpack.c.l.b16 %v515
  %v660 = vunpack.c.l.b16 %v516
  %v661 = vunpack.c.l.b16 %v517
  %v662 = vunpack.c.l.b16 %v518
  %v663 = vunpack.c.l.b16 %v519
  %v664 = vunpack.c.l.b16 %v520
  %v665 = vunpack.c.l.b16 %v521
  %v666 = vunpack.c.l.b16 %v522
  %v667 = vunpack.c.l.b16 %v523
  %v668 = vunpack.c.l.b16 %v524
  %v669 = vunpack.c.l.b16 %v525
  %v670 = vunpack.c.l.b16 %v526
  %v671 = vunpack.c.l.b16 %v527
  %v672 = vunpack.c.l.b16 %v528
  %v673 = vpack.c.b16 %v602, %v601
  %v674 = vpack.c.b16 %v604, %v603
  %v675 = vpack.c.b16 %v606, %v605
  %v676 = vpack.c.b16 %v608, %v607
  %v677 = vpack.c.b16 %v610, %v609
  %v678 = vpack.c.b16 %v612, %v611
  %v679 = vpack.c.b16 %v614, %v613
  %v680 = vpack.c.b16 %v616, %v615
  %v681 = vpack.c.b16 %v618, %v617
  %v682 = vpack.c.b16 %v620, %v619
  %v683 = vpack.c.b16 %v622, %v621
  %v684 = vpack.c.b16 %v624, %v623
  %v685 = vpack.c.b16 %v626, %v625
  %v686 = vpack.c.b16 %v628, %v627
  %v687 = vpack.c.b16 %v630, %v629
  %v688 = vpack.c.b16 %v632, %v631
  %v689 = vpack.c.b16 %v634, %v633
  %v690 = vpack.c.b16 %v636, %v635
  %v691 = vpack.c.b16 %v638, %v637
  %v692 = vpack.c.b16 %v640, %v639
  %v693 = vpack.c.b16 %v642, %v641
  %v694 = vpack.c.b16 %v644, %v643
  %v695 = vpack.c.b16 %v646, %v645
  %v696 = vpack.c.b16 %v648, %v647
  %v697 = vpack.c.b16 %v650, %v649
  %v698 = vpack.c.b16 %v652, %v651
  %v699 = vpack.c.b16 %v654, %v653
  %v700 = vpack.c.b16 %v656, %v655
  %v701 = vpack.c.b16 %v658, %v657
  %v702 = vpack.c.b16 %v660, %v659
  %v703 = vpack.c.b16 %v662, %v661
  %v704 = vpack.c.b16 %v664, %v663
  %v705 = vpack.c.b16 %v666, %v665
  %v706 = vpack.c.b16 %v668, %v667
  %v707 = vpack.c.b16 %v670, %v669
  %v708 = vpack.c.b16 %v672, %v671
  %v746 = vsel %vm337, %v332, 0
  %v748 = vsel %vm337, %v218, 0
  %v750 = vsel %vm337, %v220, 0
  %v752 = vsel %vm337, %v222, 0
  %v754 = vsel %vm337, %v224, 0
  %v756 = vsel %vm337, %v226, 0
  %v758 = vsel %vm337, %v228, 0
  %v761 = vsel %vm337, %v278, 0
  %v764 = vsel %vm337, %v334, 0
  %v767 = vsel %vm337, %v336, 0
  %769 = vmatprep.subr.bf16.mxu0 0
  %770 = vmatpush1.bf16.msra.mxu0 %v673
  %771 = vmatprep.subr.bf16.mxu0 0
  %772 = vmatpush1.bf16.msra.mxu0 %v674
  %773 = vmatprep.subr.bf16.mxu0 0
  %774 = vmatpush1.bf16.msra.mxu0 %v675
  %775 = vmatprep.subr.bf16.mxu0 0
  %776 = vmatpush1.bf16.msra.mxu0 %v676
  %777 = vmatprep.subr.bf16.mxu0 0
  %778 = vmatpush1.bf16.msra.mxu0 %v677
  %779 = vmatprep.subr.bf16.mxu0 0
  %780 = vmatpush1.bf16.msra.mxu0 %v678
  %781 = vmatprep.subr.bf16.mxu0 0
  %782 = vmatpush1.bf16.msra.mxu0 %v679
  %783 = vmatprep.subr.bf16.mxu0 0
  %784 = vmatpush1.bf16.msra.mxu0 %v680
  %785 = vmatprep.subr.bf16.mxu0 0
  %786 = vmatpush1.bf16.msra.mxu0 %v681
  %787 = vmatprep.subr.bf16.mxu0 0
  %788 = vmatpush1.bf16.msra.mxu0 %v682
  %789 = vmatprep.subr.bf16.mxu0 0
  %790 = vmatpush1.bf16.msra.mxu0 %v683
  %791 = vmatprep.subr.bf16.mxu0 0
  %792 = vmatpush1.bf16.msra.mxu0 %v684
  %793 = vmatprep.subr.bf16.mxu0 0
  %794 = vmatpush1.bf16.msra.mxu0 %v685
  %795 = vmatprep.subr.bf16.mxu0 0
  %796 = vmatpush1.bf16.msra.mxu0 %v686
  %797 = vmatprep.subr.bf16.mxu0 0
  %798 = vmatpush1.bf16.msra.mxu0 %v687
  %799 = vmatprep.subr.bf16.mxu0 0
  %800 = vmatpush1.bf16.msra.mxu0 %v688
  %801 = vmatprep.mubr.bf16.mxu0 %v370
  %802 = vmatmul.mubr.bf16.gmra.mrb[0].mxu0 %v339
  %v803 = vpop.f32.mrb[0].mxu0
  %v804 = vadd.f32 0.0, %v803
  %v805 = vpop.f32.mrb[0].mxu0
  %v806 = vpop.f32.mrb[0].mxu0
  %v807 = vadd.f32 0.0, %v806
  %v808 = vpop.f32.mrb[0].mxu0
  %809 = vmatprep.mubr.bf16.mxu0 %v374
  %810 = vmatmul.mubr.bf16.gmra.mrb[0].mxu0 %v342
  %v811 = vpop.f32.mrb[0].mxu0
  %v812 = vadd.f32 0.0, %v811
  %v813 = vpop.f32.mrb[0].mxu0
  %v814 = vpop.f32.mrb[0].mxu0
  %v815 = vadd.f32 0.0, %v814
  %v816 = vpop.f32.mrb[0].mxu0
  %817 = vmatprep.mubr.bf16.mxu0 %v378
  %818 = vmatmul.mubr.bf16.gmra.mrb[0].mxu0 %v345
  %v819 = vpop.f32.mrb[0].mxu0
  %v820 = vadd.f32 0.0, %v819
  %v821 = vpop.f32.mrb[0].mxu0
  %v822 = vpop.f32.mrb[0].mxu0
  %v823 = vadd.f32 0.0, %v822
  %v824 = vpop.f32.mrb[0].mxu0
  %825 = vmatprep.mubr.bf16.mxu0 %v382
  %826 = vmatmul.mubr.bf16.gmra.mrb[0].mxu0 %v348
  %v827 = vpop.f32.mrb[0].mxu0
  %v828 = vadd.f32 0.0, %v827
  %v829 = vpop.f32.mrb[0].mxu0
  %v830 = vpop.f32.mrb[0].mxu0
  %v831 = vadd.f32 0.0, %v830
  %v832 = vpop.f32.mrb[0].mxu0
  %833 = vmatprep.mubr.bf16.mxu0 %v386
  %834 = vmatmul.mubr.bf16.gmra.mrb[0].mxu0 %v351
  %v835 = vpop.f32.mrb[0].mxu0
  %v836 = vadd.f32 0.0, %v835
  %v837 = vpop.f32.mrb[0].mxu0
  %v838 = vpop.f32.mrb[0].mxu0
  %v839 = vadd.f32 0.0, %v838
  %v840 = vpop.f32.mrb[0].mxu0
  %841 = vmatprep.mubr.bf16.mxu0 %v390
  %842 = vmatmul.mubr.bf16.gmra.mrb[0].mxu0 %v354
  %v843 = vpop.f32.mrb[0].mxu0
  %v844 = vadd.f32 0.0, %v843
  %v845 = vpop.f32.mrb[0].mxu0
  %v846 = vpop.f32.mrb[0].mxu0
  %v847 = vadd.f32 0.0, %v846
  %v848 = vpop.f32.mrb[0].mxu0
  %849 = vmatprep.mubr.bf16.mxu0 %v394
  %850 = vmatmul.mubr.bf16.gmra.mrb[0].mxu0 %v357
  %v851 = vpop.f32.mrb[0].mxu0
  %v852 = vadd.f32 0.0, %v851
  %v853 = vpop.f32.mrb[0].mxu0
  %v854 = vpop.f32.mrb[0].mxu0
  %v855 = vadd.f32 0.0, %v854
  %v856 = vpop.f32.mrb[0].mxu0
  %857 = vmatprep.mubr.bf16.mxu0 %v398
  %858 = vmatmul.mubr.bf16.gmra.mrb[0].mxu0 %v360
  %v859 = vpop.f32.mrb[0].mxu0
  %v860 = vadd.f32 0.0, %v859
  %v861 = vpop.f32.mrb[0].mxu0
  %v862 = vpop.f32.mrb[0].mxu0
  %v863 = vadd.f32 0.0, %v862
  %v864 = vpop.f32.mrb[0].mxu0
  %865 = vmatprep.mubr.bf16.mxu0 %v402
  %866 = vmatmul.mubr.bf16.gmra.mrb[0].mxu0 %v363
  %v867 = vpop.f32.mrb[0].mxu0
  %v868 = vadd.f32 0.0, %v867
  %v869 = vpop.f32.mrb[0].mxu0
  %v870 = vpop.f32.mrb[0].mxu0
  %v871 = vadd.f32 0.0, %v870
  %v872 = vpop.f32.mrb[0].mxu0
  %873 = vmatprep.mubr.bf16.mxu0 %v406
  %874 = vmatmul.mubr.bf16.gmra.mrb[0].mxu0 %v366
  %v875 = vpop.f32.mrb[0].mxu0
  %v876 = vadd.f32 0.0, %v875
  %v877 = vpop.f32.mrb[0].mxu0
  %v878 = vpop.f32.mrb[0].mxu0
  %v879 = vadd.f32 0.0, %v878
  %v880 = vpop.f32.mrb[0].mxu0
  %881 = vdwg.mxu0
  %882 = vmatprep.subr.bf16.mxu0 0
  %883 = vmatpush1.bf16.msra.mxu0 %v689
  %884 = vmatprep.subr.bf16.mxu0 0
  %885 = vmatpush1.bf16.msra.mxu0 %v690
  %886 = vmatprep.subr.bf16.mxu0 0
  %887 = vmatpush1.bf16.msra.mxu0 %v691
  %888 = vmatprep.subr.bf16.mxu0 0
  %889 = vmatpush1.bf16.msra.mxu0 %v692
  %890 = vmatprep.subr.bf16.mxu0 0
  %891 = vmatpush1.bf16.msra.mxu0 %v693
  %892 = vmatprep.subr.bf16.mxu0 0
  %893 = vmatpush1.bf16.msra.mxu0 %v694
  %894 = vmatprep.subr.bf16.mxu0 0
  %895 = vmatpush1.bf16.msra.mxu0 %v695
  %896 = vmatprep.subr.bf16.mxu0 0
  %897 = vmatpush1.bf16.msra.mxu0 %v696
  %898 = vmatprep.subr.bf16.mxu0 0
  %899 = vmatpush1.bf16.msra.mxu0 %v697
  %900 = vmatprep.subr.bf16.mxu0 0
  %901 = vmatpush1.bf16.msra.mxu0 %v698
  %902 = vmatprep.subr.bf16.mxu0 0
  %903 = vmatpush1.bf16.msra.mxu0 %v699
  %904 = vmatprep.subr.bf16.mxu0 0
  %905 = vmatpush1.bf16.msra.mxu0 %v700
  %906 = vmatprep.subr.bf16.mxu0 0
  %907 = vmatpush1.bf16.msra.mxu0 %v701
  %908 = vmatprep.subr.bf16.mxu0 0
  %909 = vmatpush1.bf16.msra.mxu0 %v702
  %910 = vmatprep.subr.bf16.mxu0 0
  %911 = vmatpush1.bf16.msra.mxu0 %v703
  %912 = vmatprep.subr.bf16.mxu0 0
  %913 = vmatpush1.bf16.msra.mxu0 %v704
  %914 = vmatprep.mubr.bf16.mxu0 %v345
  %915 = vmatmul.mubr.bf16.gmra.mrb[0].mxu0 %v410
  %v916 = vpop.f32.mrb[0].mxu0
  %v917 = vadd.f32 %v804, %v916
  %v918 = vpop.f32.mrb[0].mxu0
  %v919 = vpop.f32.mrb[0].mxu0
  %v920 = vadd.f32 %v807, %v919
  %v921 = vpop.f32.mrb[0].mxu0
  %922 = vmatprep.mubr.bf16.mxu0 %v348
  %923 = vmatmul.mubr.bf16.gmra.mrb[0].mxu0 %v414
  %v924 = vpop.f32.mrb[0].mxu0
  %v925 = vadd.f32 %v812, %v924
  %v926 = vpop.f32.mrb[0].mxu0
  %v927 = vpop.f32.mrb[0].mxu0
  %v928 = vadd.f32 %v815, %v927
  %v929 = vpop.f32.mrb[0].mxu0
  %930 = vmatprep.mubr.bf16.mxu0 %v351
  %931 = vmatmul.mubr.bf16.gmra.mrb[0].mxu0 %v418
  %v932 = vpop.f32.mrb[0].mxu0
  %v933 = vadd.f32 %v820, %v932
  %v934 = vpop.f32.mrb[0].mxu0
  %v935 = vpop.f32.mrb[0].mxu0
  %v936 = vadd.f32 %v823, %v935
  %v937 = vpop.f32.mrb[0].mxu0
  %938 = vmatprep.mubr.bf16.mxu0 %v354
  %939 = vmatmul.mubr.bf16.gmra.mrb[0].mxu0 %v422
  %v940 = vpop.f32.mrb[0].mxu0
  %v941 = vadd.f32 %v828, %v940
  %v942 = vpop.f32.mrb[0].mxu0
  %v943 = vpop.f32.mrb[0].mxu0
  %v944 = vadd.f32 %v831, %v943
  %v945 = vpop.f32.mrb[0].mxu0
  %946 = vmatprep.mubr.bf16.mxu0 %v357
  %947 = vmatmul.mubr.bf16.gmra.mrb[0].mxu0 %v426
  %v948 = vpop.f32.mrb[0].mxu0
  %v949 = vadd.f32 %v836, %v948
  %v950 = vpop.f32.mrb[0].mxu0
  %v951 = vpop.f32.mrb[0].mxu0
  %v952 = vadd.f32 %v839, %v951
  %v953 = vpop.f32.mrb[0].mxu0
  %954 = vmatprep.mubr.bf16.mxu0 %v360
  %955 = vmatmul.mubr.bf16.gmra.mrb[0].mxu0 %v430
  %v956 = vpop.f32.mrb[0].mxu0
  %v957 = vadd.f32 %v844, %v956
  %v958 = vpop.f32.mrb[0].mxu0
  %v959 = vpop.f32.mrb[0].mxu0
  %v960 = vadd.f32 %v847, %v959
  %v961 = vpop.f32.mrb[0].mxu0
  %962 = vmatprep.mubr.bf16.mxu0 %v363
  %963 = vmatmul.mubr.bf16.gmra.mrb[0].mxu0 %v434
  %v964 = vpop.f32.mrb[0].mxu0
  %v965 = vadd.f32 %v852, %v964
  %v966 = vpop.f32.mrb[0].mxu0
  %v967 = vpop.f32.mrb[0].mxu0
  %v968 = vadd.f32 %v855, %v967
  %v969 = vpop.f32.mrb[0].mxu0
  %970 = vmatprep.mubr.bf16.mxu0 %v449
  %971 = vmatmul.mubr.bf16.gmra.mrb[0].mxu0 %v438
  %v972 = vpop.f32.mrb[0].mxu0
  %v973 = vadd.f32 %v860, %v972
  %v974 = vpop.f32.mrb[0].mxu0
  %v975 = vpop.f32.mrb[0].mxu0
  %v976 = vadd.f32 %v863, %v975
  %v977 = vpop.f32.mrb[0].mxu0
  %978 = vmatprep.mubr.bf16.mxu0 %v452
  %979 = vmatmul.mubr.bf16.gmra.mrb[0].mxu0 %v442
  %v980 = vpop.f32.mrb[0].mxu0
  %v981 = vadd.f32 %v868, %v980
  %v982 = vpop.f32.mrb[0].mxu0
  %v983 = vpop.f32.mrb[0].mxu0
  %v984 = vadd.f32 %v871, %v983
  %v985 = vpop.f32.mrb[0].mxu0
  %986 = vmatprep.mubr.bf16.mxu0 %v455
  %987 = vmatmul.mubr.bf16.gmra.mrb[0].mxu0 %v446
  %v988 = vpop.f32.mrb[0].mxu0
  %v989 = vadd.f32 %v876, %v988
  %v990 = vpop.f32.mrb[0].mxu0
  %v991 = vpop.f32.mrb[0].mxu0
  %v992 = vadd.f32 %v879, %v991
  %v993 = vpop.f32.mrb[0].mxu0
  %994 = vdwg.mxu0
  %995 = vmatprep.subr.bf16.mxu0 0
  %996 = vmatpush1.bf16.msra.mxu0 %v705
  %997 = vmatprep.subr.bf16.mxu0 0
  %998 = vmatpush1.bf16.msra.mxu0 %v706
  %999 = vmatprep.subr.bf16.mxu0 0
  %1000 = vmatpush1.bf16.msra.mxu0 %v707
  %1001 = vmatprep.subr.bf16.mxu0 0
  %1002 = vmatpush1.bf16.msra.mxu0 %v708
  %1003 = vmatprep.subr.bf16.mxu0 0
  %1004 = vmatpush1.bf16.msra.mxu0 0
  %1005 = vmatprep.subr.bf16.mxu0 0
  %1006 = vmatpush1.bf16.msra.mxu0 0
  %1007 = vmatprep.subr.bf16.mxu0 0
  %1008 = vmatpush1.bf16.msra.mxu0 0
  %1009 = vmatprep.subr.bf16.mxu0 0
  %1010 = vmatpush1.bf16.msra.mxu0 0
  %1011 = vmatprep.subr.bf16.mxu0 0
  %1012 = vmatpush1.bf16.msra.mxu0 0
  %1013 = vmatprep.subr.bf16.mxu0 0
  %1014 = vmatpush1.bf16.msra.mxu0 0
  %1015 = vmatprep.subr.bf16.mxu0 0
  %1016 = vmatpush1.bf16.msra.mxu0 0
  %1017 = vmatprep.subr.bf16.mxu0 0
  %1018 = vmatpush1.bf16.msra.mxu0 0
  %1019 = vmatprep.subr.bf16.mxu0 0
  %1020 = vmatpush1.bf16.msra.mxu0 0
  %1021 = vmatprep.subr.bf16.mxu0 0
  %1022 = vmatpush1.bf16.msra.mxu0 0
  %1023 = vmatprep.subr.bf16.mxu0 0
  %1024 = vmatpush1.bf16.msra.mxu0 0
  %1025 = vmatprep.subr.bf16.mxu0 0
  %1026 = vmatpush1.bf16.msra.mxu0 0
  %1027 = vmatprep.mubr.bf16.mxu0 0
  %1028 = vmatmul.mubr.bf16.gmra.mrb[0].mxu0 %v746
  %v1029 = vpop.f32.mrb[0].mxu0
  %v1030 = vadd.f32 %v917, %v1029
  %v1031 = vpop.f32.mrb[0].mxu0
  %v1032 = vpop.f32.mrb[0].mxu0
  %v1033 = vadd.f32 %v920, %v1032
  %v1034 = vpop.f32.mrb[0].mxu0
  %1035 = vmatprep.mubr.bf16.mxu0 0
  %1036 = vmatmul.mubr.bf16.gmra.mrb[0].mxu0 %v748
  %v1037 = vpop.f32.mrb[0].mxu0
  %v1038 = vadd.f32 %v925, %v1037
  %v1039 = vpop.f32.mrb[0].mxu0
  %v1040 = vpop.f32.mrb[0].mxu0
  %v1041 = vadd.f32 %v928, %v1040
  %v1042 = vpop.f32.mrb[0].mxu0
  %1043 = vmatprep.mubr.bf16.mxu0 0
  %1044 = vmatmul.mubr.bf16.gmra.mrb[0].mxu0 %v750
  %v1045 = vpop.f32.mrb[0].mxu0
  %v1046 = vadd.f32 %v933, %v1045
  %v1047 = vpop.f32.mrb[0].mxu0
  %v1048 = vpop.f32.mrb[0].mxu0
  %v1049 = vadd.f32 %v936, %v1048
  %v1050 = vpop.f32.mrb[0].mxu0
  %1051 = vmatprep.mubr.bf16.mxu0 0
  %1052 = vmatmul.mubr.bf16.gmra.mrb[0].mxu0 %v752
  %v1053 = vpop.f32.mrb[0].mxu0
  %v1054 = vadd.f32 %v941, %v1053
  %v1055 = vpop.f32.mrb[0].mxu0
  %v1056 = vpop.f32.mrb[0].mxu0
  %v1057 = vadd.f32 %v944, %v1056
  %v1058 = vpop.f32.mrb[0].mxu0
  %1059 = vmatprep.mubr.bf16.mxu0 0
  %1060 = vmatmul.mubr.bf16.gmra.mrb[0].mxu0 %v754
  %v1061 = vpop.f32.mrb[0].mxu0
  %v1062 = vadd.f32 %v949, %v1061
  %v1063 = vpop.f32.mrb[0].mxu0
  %v1064 = vpop.f32.mrb[0].mxu0
  %v1065 = vadd.f32 %v952, %v1064
  %v1066 = vpop.f32.mrb[0].mxu0
  %1067 = vmatprep.mubr.bf16.mxu0 0
  %1068 = vmatmul.mubr.bf16.gmra.mrb[0].mxu0 %v756
  %v1069 = vpop.f32.mrb[0].mxu0
  %v1070 = vadd.f32 %v957, %v1069
  %v1071 = vpop.f32.mrb[0].mxu0
  %v1072 = vpop.f32.mrb[0].mxu0
  %v1073 = vadd.f32 %v960, %v1072
  %v1074 = vpop.f32.mrb[0].mxu0
  %1075 = vmatprep.mubr.bf16.mxu0 0
  %1076 = vmatmul.mubr.bf16.gmra.mrb[0].mxu0 %v758
  %v1077 = vpop.f32.mrb[0].mxu0
  %v1078 = vadd.f32 %v965, %v1077
  %v1079 = vpop.f32.mrb[0].mxu0
  %v1080 = vpop.f32.mrb[0].mxu0
  %v1081 = vadd.f32 %v968, %v1080
  %v1082 = vpop.f32.mrb[0].mxu0
  %1083 = vmatprep.mubr.bf16.mxu0 0
  %1084 = vmatmul.mubr.bf16.gmra.mrb[0].mxu0 %v761
  %v1085 = vpop.f32.mrb[0].mxu0
  %v1086 = vadd.f32 %v973, %v1085
  %v1087 = vpop.f32.mrb[0].mxu0
  %v1088 = vpop.f32.mrb[0].mxu0
  %v1089 = vadd.f32 %v976, %v1088
  %v1090 = vpop.f32.mrb[0].mxu0
  %1091 = vmatprep.mubr.bf16.mxu0 0
  %1092 = vmatmul.mubr.bf16.gmra.mrb[0].mxu0 %v764
  %v1093 = vpop.f32.mrb[0].mxu0
  %v1094 = vadd.f32 %v981, %v1093
  %v1095 = vpop.f32.mrb[0].mxu0
  %v1096 = vpop.f32.mrb[0].mxu0
  %v1097 = vadd.f32 %v984, %v1096
  %v1098 = vpop.f32.mrb[0].mxu0
  %1099 = vmatprep.mubr.bf16.mxu0 0
  %1100 = vmatmul.mubr.bf16.gmra.mrb[0].mxu0 %v767
  %v1101 = vpop.f32.mrb[0].mxu0
  %v1102 = vadd.f32 %v989, %v1101
  %v1103 = vpop.f32.mrb[0].mxu0
  %v1104 = vpop.f32.mrb[0].mxu0
  %v1105 = vadd.f32 %v992, %v1104
  %v1106 = vpop.f32.mrb[0].mxu0
  %1107 = vdwg.mxu0
  %1108 = vst.msk [vmem:[#allocation2] sm:$0xff] %vm337, %v1030
  %1109 = vst.msk [vmem:[#allocation2 + $0x8] sm:$0xff] %vm337, %v1033
  %1110 = vst.msk [vmem:[#allocation2 + $0x10] sm:$0xff] %vm337, %v1038
  %1111 = vst.msk [vmem:[#allocation2 + $0x18] sm:$0xff] %vm337, %v1041
  %1112 = vst.msk [vmem:[#allocation2 + $0x20] sm:$0xff] %vm337, %v1046
  %1113 = vst.msk [vmem:[#allocation2 + $0x28] sm:$0xff] %vm337, %v1049
  %1114 = vst.msk [vmem:[#allocation2 + $0x30] sm:$0xff] %vm337, %v1054
  %1115 = vst.msk [vmem:[#allocation2 + $0x38] sm:$0xff] %vm337, %v1057
  %1116 = vst.msk [vmem:[#allocation2 + $0x40] sm:$0xff] %vm337, %v1062
  %1117 = vst.msk [vmem:[#allocation2 + $0x48] sm:$0xff] %vm337, %v1065
  %1118 = vst.msk [vmem:[#allocation2 + $0x50] sm:$0xff] %vm337, %v1070
  %1119 = vst.msk [vmem:[#allocation2 + $0x58] sm:$0xff] %vm337, %v1073
  %1120 = vst.msk [vmem:[#allocation2 + $0x60] sm:$0xff] %vm337, %v1078
  %1121 = vst.msk [vmem:[#allocation2 + $0x68] sm:$0xff] %vm337, %v1081
  %1122 = vst.msk [vmem:[#allocation2 + $0x70] sm:$0xff] %vm337, %v1086
  %1123 = vst.msk [vmem:[#allocation2 + $0x78] sm:$0xff] %vm337, %v1089
  %1124 = vst.msk [vmem:[#allocation2 + $0x80] sm:$0xff] %vm337, %v1094
  %1125 = vst.msk [vmem:[#allocation2 + $0x88] sm:$0xff] %vm337, %v1097
  %1126 = vst.msk [vmem:[#allocation2 + $0x90] sm:$0xff] %vm337, %v1102
  %1127 = vst.msk [vmem:[#allocation2 + $0x98] sm:$0xff] %vm337, %v1105
  %v1128 = vld [vmem:[%s2] sm:$0x3]
  %v1129 = vmul.f32 %v1030, %v1030
  %v1130 = vmul.f32 %v1033, %v1033
  %v1131 = vmul.f32 %v1038, %v1038
  %v1132 = vmul.f32 %v1041, %v1041
  %v1133 = vmul.f32 %v1046, %v1046
  %v1134 = vmul.f32 %v1049, %v1049
  %v1135 = vmul.f32 %v1054, %v1054
  %v1136 = vmul.f32 %v1057, %v1057
  %v1137 = vmul.f32 %v1062, %v1062
  %v1138 = vmul.f32 %v1065, %v1065
  %v1139 = vmul.f32 %v1070, %v1070
  %v1140 = vmul.f32 %v1073, %v1073
  %v1141 = vmul.f32 %v1078, %v1078
  %v1142 = vmul.f32 %v1081, %v1081
  %v1143 = vmul.f32 %v1086, %v1086
  %v1144 = vmul.f32 %v1089, %v1089
  %v1145 = vmul.f32 %v1094, %v1094
  %v1146 = vmul.f32 %v1097, %v1097
  %v1147 = vmul.f32 %v1102, %v1102
  %v1148 = vmul.f32 %v1105, %v1105
  %1169 = vrot.lane.b32.xlu0 %v1129, 64
  %v1170 = vpop.permute.xlu0 %1169
  %1171 = vrot.lane.b32.xlu0 %v1130, 64
  %v1172 = vpop.permute.xlu0 %1171
  %1173 = vrot.lane.b32.xlu0 %v1131, 64
  %v1174 = vpop.permute.xlu0 %1173
  %1175 = vrot.lane.b32.xlu0 %v1132, 64
  %v1176 = vpop.permute.xlu0 %1175
  %1177 = vrot.lane.b32.xlu0 %v1133, 64
  %v1178 = vpop.permute.xlu0 %1177
  %1179 = vrot.lane.b32.xlu0 %v1134, 64
  %v1180 = vpop.permute.xlu0 %1179
  %1181 = vrot.lane.b32.xlu0 %v1135, 64
  %v1182 = vpop.permute.xlu0 %1181
  %1183 = vrot.lane.b32.xlu0 %v1136, 64
  %v1184 = vpop.permute.xlu0 %1183
  %1185 = vrot.lane.b32.xlu0 %v1137, 64
  %v1186 = vpop.permute.xlu0 %1185
  %1187 = vrot.lane.b32.xlu0 %v1138, 64
  %v1188 = vpop.permute.xlu0 %1187
  %1189 = vrot.lane.b32.xlu0 %v1139, 64
  %v1190 = vpop.permute.xlu0 %1189
  %1191 = vrot.lane.b32.xlu0 %v1140, 64
  %v1192 = vpop.permute.xlu0 %1191
  %1193 = vrot.lane.b32.xlu0 %v1141, 64
  %v1194 = vpop.permute.xlu0 %1193
  %1195 = vrot.lane.b32.xlu0 %v1142, 64
  %v1196 = vpop.permute.xlu0 %1195
  %1197 = vrot.lane.b32.xlu0 %v1143, 64
  %v1198 = vpop.permute.xlu0 %1197
  %1199 = vrot.lane.b32.xlu0 %v1144, 64
  %v1200 = vpop.permute.xlu0 %1199
  %1201 = vrot.lane.b32.xlu0 %v1145, 64
  %v1202 = vpop.permute.xlu0 %1201
  %1203 = vrot.lane.b32.xlu0 %v1146, 64
  %v1204 = vpop.permute.xlu0 %1203
  %1205 = vrot.lane.b32.xlu0 %v1147, 64
  %v1206 = vpop.permute.xlu0 %1205
  %1207 = vrot.lane.b32.xlu0 %v1148, 64
  %v1208 = vpop.permute.xlu0 %1207
  %v1229 = vsel %vm337, %v1030, %v1170
  %v1230 = vsel %vm337, %v1033, %v1172
  %v1231 = vsel %vm337, %v1038, %v1174
  %v1232 = vsel %vm337, %v1041, %v1176
  %v1233 = vsel %vm337, %v1046, %v1178
  %v1234 = vsel %vm337, %v1049, %v1180
  %v1235 = vsel %vm337, %v1054, %v1182
  %v1236 = vsel %vm337, %v1057, %v1184
  %v1237 = vsel %vm337, %v1062, %v1186
  %v1238 = vsel %vm337, %v1065, %v1188
  %v1239 = vsel %vm337, %v1070, %v1190
  %v1240 = vsel %vm337, %v1073, %v1192
  %v1241 = vsel %vm337, %v1078, %v1194
  %v1242 = vsel %vm337, %v1081, %v1196
  %v1243 = vsel %vm337, %v1086, %v1198
  %v1244 = vsel %vm337, %v1089, %v1200
  %v1245 = vsel %vm337, %v1094, %v1202
  %v1246 = vsel %vm337, %v1097, %v1204
  %v1247 = vsel %vm337, %v1102, %v1206
  %v1248 = vsel %vm337, %v1105, %v1208
  %s1249 = scalar_lea.vmem %s0, 100
  %v1250 = vld [vmem:[%s1249] sm:$0xf]
  %v1251 = vld [vmem:[%s1249 + $0x4] sm:$0xf]
  %v1252 = vld [vmem:[%s1249 + $0x8] sm:$0xf]
  %v1253 = vld [vmem:[%s1249 + $0xc] sm:$0xf]
  %v1254 = vld [vmem:[%s1249 + $0x10] sm:$0xf]
  %v1255 = vld [vmem:[%s1249 + $0x14] sm:$0xf]
  %v1256 = vld [vmem:[%s1249 + $0x18] sm:$0xf]
  %v1257 = vld [vmem:[%s1249 + $0x1c] sm:$0xf]
  %v1258 = vld [vmem:[%s1249 + $0x20] sm:$0xf]
  %v1259 = vld [vmem:[%s1249 + $0x24] sm:$0xf]
  %v1260 = vld [vmem:[%s1249 + $0x28] sm:$0xf]
  %v1261 = vld [vmem:[%s1249 + $0x2c] sm:$0xf]
  %v1262 = vld [vmem:[%s1249 + $0x30] sm:$0xf]
  %v1263 = vld [vmem:[%s1249 + $0x34] sm:$0xf]
  %v1264 = vld [vmem:[%s1249 + $0x38] sm:$0xf]
  %v1265 = vld [vmem:[%s1249 + $0x3c] sm:$0xf]
  %v1266 = vld [vmem:[%s1249 + $0x40] sm:$0xf]
  %v1267 = vld [vmem:[%s1249 + $0x44] sm:$0xf]
  %v1268 = vld [vmem:[%s1249 + $0x48] sm:$0xf]
  %v1269 = vld [vmem:[%s1249 + $0x4c] sm:$0xf]
  %v1270 = vld [vmem:[%s1249 + $0x50] sm:$0x1]
  %v1271 = vld [vmem:[%s1249] sm:$0xe]
  %v1272 = vld [vmem:[%s1249 + $0x50] sm:$0xf]
  %v1273 = vld [vmem:[%s1249 + $0x54] sm:$0xf]
  %v1274 = vld [vmem:[%s1249 + $0x58] sm:$0x1]
  %v1275 = vld [vmem:[%s1249 + $0x8] sm:$0xe]
  %v1276 = vld [vmem:[%s1249 + $0x58] sm:$0xf]
  %v1277 = vld [vmem:[%s1249 + $0x5c] sm:$0xf]
  %v1278 = vld [vmem:[%s1249 + $0x60] sm:$0x1]
  %v1279 = vld [vmem:[%s1249 + $0x10] sm:$0xe]
  %v1300 = vunpack.c.l.b16 %v1250
  %v1301 = vunpack.c.l.b16 %v1251
  %v1302 = vunpack.c.l.b16 %v1252
  %v1303 = vunpack.c.l.b16 %v1253
  %v1304 = vunpack.c.l.b16 %v1254
  %v1305 = vunpack.c.l.b16 %v1255
  %v1306 = vunpack.c.l.b16 %v1256
  %v1307 = vunpack.c.l.b16 %v1257
  %v1308 = vunpack.c.l.b16 %v1258
  %v1309 = vunpack.c.l.b16 %v1259
  %v1310 = vunpack.c.l.b16 %v1260
  %v1311 = vunpack.c.l.b16 %v1261
  %v1312 = vunpack.c.l.b16 %v1262
  %v1313 = vunpack.c.l.b16 %v1263
  %v1314 = vunpack.c.l.b16 %v1264
  %v1315 = vunpack.c.l.b16 %v1265
  %v1316 = vunpack.c.l.b16 %v1266
  %v1317 = vunpack.c.l.b16 %v1267
  %v1318 = vunpack.c.l.b16 %v1268
  %v1319 = vunpack.c.l.b16 %v1269
  %v1320 = vpack.c.b16 %v1301, %v1300
  %v1321 = vpack.c.b16 %v1303, %v1302
  %v1322 = vpack.c.b16 %v1305, %v1304
  %v1323 = vpack.c.b16 %v1307, %v1306
  %v1324 = vpack.c.b16 %v1309, %v1308
  %v1325 = vpack.c.b16 %v1311, %v1310
  %v1326 = vpack.c.b16 %v1313, %v1312
  %v1327 = vpack.c.b16 %v1315, %v1314
  %v1328 = vpack.c.b16 %v1317, %v1316
  %v1329 = vpack.c.b16 %v1319, %v1318
  %v1331 = vunpack.c.l.b16 %v1270
  %v1332 = vpack.c.b16 %v1331, %v1331
  %v1334 = vshrl.u32 %v1320, 16
  %v1336 = vshll.u32 %v1320, 16
  %v1338 = vrot.slane %v1336, 1
  %v1339 = vor.u32 %v1334, %v1338
  %v1341 = vshll.u32 %v1321, 16
  %v1343 = vrot.slane %v1341, 1
  %v1344 = vsel %vm101, %v1339, %v1343
  %v1345 = vshrl.u32 %v1321, 16
  %v1347 = vor.u32 %v1345, %v1343
  %v1349 = vshll.u32 %v1322, 16
  %v1351 = vrot.slane %v1349, 1
  %v1352 = vsel %vm101, %v1347, %v1351
  %v1353 = vshrl.u32 %v1322, 16
  %v1355 = vor.u32 %v1353, %v1351
  %v1357 = vshll.u32 %v1323, 16
  %v1359 = vrot.slane %v1357, 1
  %v1360 = vsel %vm101, %v1355, %v1359
  %v1361 = vshrl.u32 %v1323, 16
  %v1363 = vor.u32 %v1361, %v1359
  %v1365 = vshll.u32 %v1324, 16
  %v1367 = vrot.slane %v1365, 1
  %v1368 = vsel %vm101, %v1363, %v1367
  %v1369 = vshrl.u32 %v1324, 16
  %v1371 = vor.u32 %v1369, %v1367
  %v1373 = vshll.u32 %v1325, 16
  %v1375 = vrot.slane %v1373, 1
  %v1376 = vsel %vm101, %v1371, %v1375
  %v1377 = vshrl.u32 %v1325, 16
  %v1379 = vor.u32 %v1377, %v1375
  %v1381 = vshll.u32 %v1326, 16
  %v1383 = vrot.slane %v1381, 1
  %v1384 = vsel %vm101, %v1379, %v1383
  %v1385 = vshrl.u32 %v1326, 16
  %v1387 = vor.u32 %v1385, %v1383
  %v1389 = vshll.u32 %v1327, 16
  %v1391 = vrot.slane %v1389, 1
  %v1392 = vsel %vm101, %v1387, %v1391
  %v1393 = vshrl.u32 %v1327, 16
  %v1395 = vor.u32 %v1393, %v1391
  %v1397 = vshll.u32 %v1328, 16
  %v1399 = vrot.slane %v1397, 1
  %v1400 = vsel %vm101, %v1395, %v1399
  %v1401 = vshrl.u32 %v1328, 16
  %v1403 = vor.u32 %v1401, %v1399
  %v1405 = vshll.u32 %v1329, 16
  %v1407 = vrot.slane %v1405, 1
  %v1408 = vsel %vm101, %v1403, %v1407
  %v1409 = vshrl.u32 %v1329, 16
  %v1411 = vor.u32 %v1409, %v1407
  %v1413 = vshll.u32 %v1332, 16
  %v1415 = vrot.slane %v1413, 1
  %v1416 = vsel %vm101, %v1411, %v1415
  %1417 = vrot.lane.b32.xlu0 %v1344, 64
  %v1418 = vpop.permute.xlu0 %1417
  %1419 = vrot.lane.b32.xlu0 %v1352, 64
  %v1420 = vpop.permute.xlu0 %1419
  %1421 = vrot.lane.b32.xlu0 %v1360, 64
  %v1422 = vpop.permute.xlu0 %1421
  %1423 = vrot.lane.b32.xlu0 %v1368, 64
  %v1424 = vpop.permute.xlu0 %1423
  %1425 = vrot.lane.b32.xlu0 %v1376, 64
  %v1426 = vpop.permute.xlu0 %1425
  %1427 = vrot.lane.b32.xlu0 %v1384, 64
  %v1428 = vpop.permute.xlu0 %1427
  %1429 = vrot.lane.b32.xlu0 %v1392, 64
  %v1430 = vpop.permute.xlu0 %1429
  %1431 = vrot.lane.b32.xlu0 %v1400, 64
  %v1432 = vpop.permute.xlu0 %1431
  %1433 = vrot.lane.b32.xlu0 %v1408, 64
  %v1434 = vpop.permute.xlu0 %1433
  %1435 = vrot.lane.b32.xlu0 %v1416, 64
  %v1436 = vpop.permute.xlu0 %1435
  %v1438 = vunpack.c.l.b16 %v1271
  %v1439 = vpack.c.b16 %v1301, %v1438
  %v1440 = vrot.slane %v1439, 1
  %v1441 = vrot.slane %v1321, 1
  %v1442 = vsel %vm209, %v1440, %v1441
  %v1443 = vrot.slane %v1322, 1
  %v1444 = vsel %vm209, %v1441, %v1443
  %v1445 = vrot.slane %v1323, 1
  %v1446 = vsel %vm209, %v1443, %v1445
  %v1447 = vrot.slane %v1324, 1
  %v1448 = vsel %vm209, %v1445, %v1447
  %v1449 = vrot.slane %v1325, 1
  %v1450 = vsel %vm209, %v1447, %v1449
  %v1451 = vrot.slane %v1326, 1
  %v1452 = vsel %vm209, %v1449, %v1451
  %v1453 = vrot.slane %v1327, 1
  %v1454 = vsel %vm209, %v1451, %v1453
  %v1455 = vrot.slane %v1328, 1
  %v1456 = vsel %vm209, %v1453, %v1455
  %v1457 = vrot.slane %v1329, 1
  %v1458 = vsel %vm209, %v1455, %v1457
  %v1459 = vrot.slane %v1332, 1
  %v1460 = vsel %vm209, %v1457, %v1459
  %v1463 = vunpack.c.l.b16 %v1272
  %v1464 = vunpack.c.l.b16 %v1273
  %v1465 = vpack.c.b16 %v1464, %v1463
  %1466 = vrot.lane.b32.xlu0 %v1321, 64
  %v1467 = vpop.permute.xlu0 %1466
  %1468 = vrot.lane.b32.xlu0 %v1322, 64
  %v1469 = vpop.permute.xlu0 %1468
  %1470 = vrot.lane.b32.xlu0 %v1323, 64
  %v1471 = vpop.permute.xlu0 %1470
  %1472 = vrot.lane.b32.xlu0 %v1324, 64
  %v1473 = vpop.permute.xlu0 %1472
  %1474 = vrot.lane.b32.xlu0 %v1325, 64
  %v1475 = vpop.permute.xlu0 %1474
  %1476 = vrot.lane.b32.xlu0 %v1326, 64
  %v1477 = vpop.permute.xlu0 %1476
  %1478 = vrot.lane.b32.xlu0 %v1327, 64
  %v1479 = vpop.permute.xlu0 %1478
  %1480 = vrot.lane.b32.xlu0 %v1328, 64
  %v1481 = vpop.permute.xlu0 %1480
  %1482 = vrot.lane.b32.xlu0 %v1329, 64
  %v1483 = vpop.permute.xlu0 %1482
  %1484 = vrot.lane.b32.xlu0 %v1465, 64
  %v1485 = vpop.permute.xlu0 %1484
  %v1487 = vunpack.c.l.b16 %v1274
  %v1488 = vpack.c.b16 %v1487, %v1487
  %v1490 = vshll.u32 %v1465, 16
  %v1492 = vrot.slane %v1490, 1
  %v1493 = vsel %vm101, %v1411, %v1492
  %v1494 = vshrl.u32 %v1465, 16
  %v1496 = vor.u32 %v1494, %v1492
  %v1498 = vshll.u32 %v1488, 16
  %v1500 = vrot.slane %v1498, 1
  %v1501 = vsel %vm101, %v1496, %v1500
  %v1503 = vunpack.c.l.b16 %v1275
  %v1504 = vpack.c.b16 %v1303, %v1503
  %v1505 = vrot.slane %v1504, 1
  %v1506 = vsel %vm209, %v1505, %v1443
  %v1507 = vrot.slane %v1465, 1
  %v1508 = vsel %vm209, %v1457, %v1507
  %v1509 = vrot.slane %v1488, 1
  %v1510 = vsel %vm209, %v1507, %v1509
  %1511 = vrot.lane.b32.xlu0 %v1506, 64
  %v1512 = vpop.permute.xlu0 %1511
  %1513 = vrot.lane.b32.xlu0 %v1446, 64
  %v1514 = vpop.permute.xlu0 %1513
  %1515 = vrot.lane.b32.xlu0 %v1448, 64
  %v1516 = vpop.permute.xlu0 %1515
  %1517 = vrot.lane.b32.xlu0 %v1450, 64
  %v1518 = vpop.permute.xlu0 %1517
  %1519 = vrot.lane.b32.xlu0 %v1452, 64
  %v1520 = vpop.permute.xlu0 %1519
  %1521 = vrot.lane.b32.xlu0 %v1454, 64
  %v1522 = vpop.permute.xlu0 %1521
  %1523 = vrot.lane.b32.xlu0 %v1456, 64
  %v1524 = vpop.permute.xlu0 %1523
  %1525 = vrot.lane.b32.xlu0 %v1458, 64
  %v1526 = vpop.permute.xlu0 %1525
  %1527 = vrot.lane.b32.xlu0 %v1508, 64
  %v1528 = vpop.permute.xlu0 %1527
  %1529 = vrot.lane.b32.xlu0 %v1510, 64
  %v1530 = vpop.permute.xlu0 %1529
  %v1533 = vunpack.c.l.b16 %v1276
  %v1534 = vunpack.c.l.b16 %v1277
  %v1535 = vpack.c.b16 %v1534, %v1533
  %v1537 = vunpack.c.l.b16 %v1278
  %v1538 = vpack.c.b16 %v1537, %v1537
  %v1540 = vshll.u32 %v1535, 16
  %v1542 = vrot.slane %v1540, 1
  %v1543 = vsel %vm101, %v1496, %v1542
  %v1544 = vshrl.u32 %v1535, 16
  %v1546 = vor.u32 %v1544, %v1542
  %v1548 = vshll.u32 %v1538, 16
  %v1550 = vrot.slane %v1548, 1
  %v1551 = vsel %vm101, %v1546, %v1550
  %1552 = vrot.lane.b32.xlu0 %v1493, 64
  %v1553 = vpop.permute.xlu0 %1552
  %1554 = vrot.lane.b32.xlu0 %v1543, 64
  %v1555 = vpop.permute.xlu0 %1554
  %1556 = vrot.lane.b32.xlu0 %v1551, 64
  %v1557 = vpop.permute.xlu0 %1556
  %v1559 = vunpack.c.l.b16 %v1279
  %v1560 = vpack.c.b16 %v1305, %v1559
  %v1561 = vrot.slane %v1560, 1
  %v1562 = vsel %vm209, %v1561, %v1445
  %v1563 = vrot.slane %v1535, 1
  %v1564 = vsel %vm209, %v1507, %v1563
  %v1565 = vrot.slane %v1538, 1
  %v1566 = vsel %vm209, %v1563, %v1565
  %v1568 = vsel %vm337, %v1320, %v1418
  %v1571 = vsel %vm337, %v1321, %v1420
  %v1574 = vsel %vm337, %v1322, %v1422
  %v1577 = vsel %vm337, %v1323, %v1424
  %v1580 = vsel %vm337, %v1324, %v1426
  %v1583 = vsel %vm337, %v1325, %v1428
  %v1586 = vsel %vm337, %v1326, %v1430
  %v1589 = vsel %vm337, %v1327, %v1432
  %v1592 = vsel %vm337, %v1328, %v1434
  %v1595 = vsel %vm337, %v1329, %v1436
  %v1599 = vsel %vm337, %v1442, %v1467
  %v1603 = vsel %vm337, %v1444, %v1469
  %v1607 = vsel %vm337, %v1446, %v1471
  %v1611 = vsel %vm337, %v1448, %v1473
  %v1615 = vsel %vm337, %v1450, %v1475
  %v1619 = vsel %vm337, %v1452, %v1477
  %v1623 = vsel %vm337, %v1454, %v1479
  %v1627 = vsel %vm337, %v1456, %v1481
  %v1631 = vsel %vm337, %v1458, %v1483
  %v1635 = vsel %vm337, %v1460, %v1485
  %v1639 = vsel %vm337, %v1352, %v1512
  %v1643 = vsel %vm337, %v1360, %v1514
  %v1647 = vsel %vm337, %v1368, %v1516
  %v1651 = vsel %vm337, %v1376, %v1518
  %v1655 = vsel %vm337, %v1384, %v1520
  %v1659 = vsel %vm337, %v1392, %v1522
  %v1663 = vsel %vm337, %v1400, %v1524
  %v1667 = vsel %vm337, %v1408, %v1526
  %v1671 = vsel %vm337, %v1493, %v1528
  %v1675 = vsel %vm337, %v1501, %v1530
  %v1678 = vsel %vm337, %v1329, %v1553
  %v1681 = vsel %vm337, %v1465, %v1555
  %v1684 = vsel %vm337, %v1535, %v1557
  %v1686 = vld [vmem:[%s1] sm:$0xf]
  %v1687 = vld [vmem:[%s1 + $0x4] sm:$0xf]
  %v1688 = vld [vmem:[%s1 + $0x8] sm:$0xf]
  %v1689 = vld [vmem:[%s1 + $0xc] sm:$0xf]
  %v1690 = vld [vmem:[%s1 + $0x10] sm:$0xf]
  %v1691 = vld [vmem:[%s1 + $0x14] sm:$0xf]
  %v1692 = vld [vmem:[%s1 + $0x18] sm:$0xf]
  %v1693 = vld [vmem:[%s1 + $0x1c] sm:$0xf]
  %v1694 = vld [vmem:[%s1 + $0x20] sm:$0xf]
  %v1695 = vld [vmem:[%s1 + $0x24] sm:$0xf]
  %v1696 = vld [vmem:[%s1 + $0x28] sm:$0xf]
  %v1697 = vld [vmem:[%s1 + $0x2c] sm:$0xf]
  %v1698 = vld [vmem:[%s1 + $0x30] sm:$0xf]
  %v1699 = vld [vmem:[%s1 + $0x34] sm:$0xf]
  %v1700 = vld [vmem:[%s1 + $0x38] sm:$0xf]
  %v1701 = vld [vmem:[%s1 + $0x3c] sm:$0xf]
  %v1702 = vld [vmem:[%s1 + $0x40] sm:$0xf]
  %v1703 = vld [vmem:[%s1 + $0x44] sm:$0xf]
  %v1704 = vld [vmem:[%s1 + $0x48] sm:$0xf]
  %v1705 = vld [vmem:[%s1 + $0x4c] sm:$0xf]
  %v1706 = vld [vmem:[%s1 + $0x50] sm:$0xf]
  %v1707 = vld [vmem:[%s1 + $0x54] sm:$0xf]
  %v1708 = vld [vmem:[%s1 + $0x58] sm:$0xf]
  %v1709 = vld [vmem:[%s1 + $0x5c] sm:$0xf]
  %v1710 = vld [vmem:[%s1 + $0x60] sm:$0xf]
  %v1711 = vld [vmem:[%s1 + $0x64] sm:$0xf]
  %v1712 = vld [vmem:[%s1 + $0x68] sm:$0xf]
  %v1713 = vld [vmem:[%s1 + $0x6c] sm:$0xf]
  %v1714 = vld [vmem:[%s1 + $0x70] sm:$0xf]
  %v1715 = vld [vmem:[%s1 + $0x74] sm:$0xf]
  %v1716 = vld [vmem:[%s1 + $0x78] sm:$0xf]
  %v1717 = vld [vmem:[%s1 + $0x7c] sm:$0xf]
  %v1718 = vld [vmem:[%s1 + $0x80] sm:$0xf]
  %v1719 = vld [vmem:[%s1 + $0x84] sm:$0xf]
  %v1720 = vld [vmem:[%s1 + $0x88] sm:$0xf]
  %v1721 = vld [vmem:[%s1 + $0x8c] sm:$0xf]
  %v1722 = vld [vmem:[%s1 + $0x90] sm:$0xf]
  %v1723 = vld [vmem:[%s1 + $0x94] sm:$0xf]
  %v1724 = vld [vmem:[%s1 + $0x98] sm:$0xf]
  %v1725 = vld [vmem:[%s1 + $0x9c] sm:$0xf]
  %v1726 = vld [vmem:[%s1 + $0xa0] sm:$0xf]
  %v1727 = vld [vmem:[%s1 + $0xa4] sm:$0xf]
  %v1728 = vld [vmem:[%s1 + $0xa8] sm:$0xf]
  %v1729 = vld [vmem:[%s1 + $0xac] sm:$0xf]
  %v1730 = vld [vmem:[%s1 + $0xb0] sm:$0xf]
  %v1731 = vld [vmem:[%s1 + $0xb4] sm:$0xf]
  %v1732 = vld [vmem:[%s1 + $0xb8] sm:$0xf]
  %v1733 = vld [vmem:[%s1 + $0xbc] sm:$0xf]
  %v1734 = vld [vmem:[%s1 + $0xc0] sm:$0xf]
  %v1735 = vld [vmem:[%s1 + $0xc4] sm:$0xf]
  %v1736 = vld [vmem:[%s1 + $0xc8] sm:$0xf]
  %v1737 = vld [vmem:[%s1 + $0xcc] sm:$0xf]
  %v1738 = vld [vmem:[%s1 + $0xd0] sm:$0xf]
  %v1739 = vld [vmem:[%s1 + $0xd4] sm:$0xf]
  %v1740 = vld [vmem:[%s1 + $0xd8] sm:$0xf]
  %v1741 = vld [vmem:[%s1 + $0xdc] sm:$0xf]
  %v1742 = vld [vmem:[%s1 + $0xe0] sm:$0xf]
  %v1743 = vld [vmem:[%s1 + $0xe4] sm:$0xf]
  %v1744 = vld [vmem:[%s1 + $0xe8] sm:$0xf]
  %v1745 = vld [vmem:[%s1 + $0xec] sm:$0xf]
  %v1746 = vld [vmem:[%s1 + $0xf0] sm:$0xf]
  %v1747 = vld [vmem:[%s1 + $0xf4] sm:$0xf]
  %v1748 = vld [vmem:[%s1 + $0xf8] sm:$0xf]
  %v1749 = vld [vmem:[%s1 + $0xfc] sm:$0xf]
  %v1750 = vld [vmem:[%s1 + $0x100] sm:$0xf]
  %v1751 = vld [vmem:[%s1 + $0x104] sm:$0xf]
  %v1752 = vld [vmem:[%s1 + $0x108] sm:$0xf]
  %v1753 = vld [vmem:[%s1 + $0x10c] sm:$0xf]
  %v1754 = vld [vmem:[%s1 + $0x110] sm:$0xf]
  %v1755 = vld [vmem:[%s1 + $0x114] sm:$0xf]
  %v1756 = vld [vmem:[%s1 + $0x118] sm:$0xf]
  %v1757 = vld [vmem:[%s1 + $0x11c] sm:$0xf]
  %v1830 = vunpack.c.l.b16 %v1686
  %v1831 = vunpack.c.l.b16 %v1687
  %v1832 = vunpack.c.l.b16 %v1688
  %v1833 = vunpack.c.l.b16 %v1689
  %v1834 = vunpack.c.l.b16 %v1690
  %v1835 = vunpack.c.l.b16 %v1691
  %v1836 = vunpack.c.l.b16 %v1692
  %v1837 = vunpack.c.l.b16 %v1693
  %v1838 = vunpack.c.l.b16 %v1694
  %v1839 = vunpack.c.l.b16 %v1695
  %v1840 = vunpack.c.l.b16 %v1696
  %v1841 = vunpack.c.l.b16 %v1697
  %v1842 = vunpack.c.l.b16 %v1698
  %v1843 = vunpack.c.l.b16 %v1699
  %v1844 = vunpack.c.l.b16 %v1700
  %v1845 = vunpack.c.l.b16 %v1701
  %v1846 = vunpack.c.l.b16 %v1702
  %v1847 = vunpack.c.l.b16 %v1703
  %v1848 = vunpack.c.l.b16 %v1704
  %v1849 = vunpack.c.l.b16 %v1705
  %v1850 = vunpack.c.l.b16 %v1706
  %v1851 = vunpack.c.l.b16 %v1707
  %v1852 = vunpack.c.l.b16 %v1708
  %v1853 = vunpack.c.l.b16 %v1709
  %v1854 = vunpack.c.l.b16 %v1710
  %v1855 = vunpack.c.l.b16 %v1711
  %v1856 = vunpack.c.l.b16 %v1712
  %v1857 = vunpack.c.l.b16 %v1713
  %v1858 = vunpack.c.l.b16 %v1714
  %v1859 = vunpack.c.l.b16 %v1715
  %v1860 = vunpack.c.l.b16 %v1716
  %v1861 = vunpack.c.l.b16 %v1717
  %v1862 = vunpack.c.l.b16 %v1718
  %v1863 = vunpack.c.l.b16 %v1719
  %v1864 = vunpack.c.l.b16 %v1720
  %v1865 = vunpack.c.l.b16 %v1721
  %v1866 = vunpack.c.l.b16 %v1722
  %v1867 = vunpack.c.l.b16 %v1723
  %v1868 = vunpack.c.l.b16 %v1724
  %v1869 = vunpack.c.l.b16 %v1725
  %v1870 = vunpack.c.l.b16 %v1726
  %v1871 = vunpack.c.l.b16 %v1727
  %v1872 = vunpack.c.l.b16 %v1728
  %v1873 = vunpack.c.l.b16 %v1729
  %v1874 = vunpack.c.l.b16 %v1730
  %v1875 = vunpack.c.l.b16 %v1731
  %v1876 = vunpack.c.l.b16 %v1732
  %v1877 = vunpack.c.l.b16 %v1733
  %v1878 = vunpack.c.l.b16 %v1734
  %v1879 = vunpack.c.l.b16 %v1735
  %v1880 = vunpack.c.l.b16 %v1736
  %v1881 = vunpack.c.l.b16 %v1737
  %v1882 = vunpack.c.l.b16 %v1738
  %v1883 = vunpack.c.l.b16 %v1739
  %v1884 = vunpack.c.l.b16 %v1740
  %v1885 = vunpack.c.l.b16 %v1741
  %v1886 = vunpack.c.l.b16 %v1742
  %v1887 = vunpack.c.l.b16 %v1743
  %v1888 = vunpack.c.l.b16 %v1744
  %v1889 = vunpack.c.l.b16 %v1745
  %v1890 = vunpack.c.l.b16 %v1746
  %v1891 = vunpack.c.l.b16 %v1747
  %v1892 = vunpack.c.l.b16 %v1748
  %v1893 = vunpack.c.l.b16 %v1749
  %v1894 = vunpack.c.l.b16 %v1750
  %v1895 = vunpack.c.l.b16 %v1751
  %v1896 = vunpack.c.l.b16 %v1752
  %v1897 = vunpack.c.l.b16 %v1753
  %v1898 = vunpack.c.l.b16 %v1754
  %v1899 = vunpack.c.l.b16 %v1755
  %v1900 = vunpack.c.l.b16 %v1756
  %v1901 = vunpack.c.l.b16 %v1757
  %v1902 = vpack.c.b16 %v1831, %v1830
  %v1903 = vpack.c.b16 %v1833, %v1832
  %v1904 = vpack.c.b16 %v1835, %v1834
  %v1905 = vpack.c.b16 %v1837, %v1836
  %v1906 = vpack.c.b16 %v1839, %v1838
  %v1907 = vpack.c.b16 %v1841, %v1840
  %v1908 = vpack.c.b16 %v1843, %v1842
  %v1909 = vpack.c.b16 %v1845, %v1844
  %v1910 = vpack.c.b16 %v1847, %v1846
  %v1911 = vpack.c.b16 %v1849, %v1848
  %v1912 = vpack.c.b16 %v1851, %v1850
  %v1913 = vpack.c.b16 %v1853, %v1852
  %v1914 = vpack.c.b16 %v1855, %v1854
  %v1915 = vpack.c.b16 %v1857, %v1856
  %v1916 = vpack.c.b16 %v1859, %v1858
  %v1917 = vpack.c.b16 %v1861, %v1860
  %v1918 = vpack.c.b16 %v1863, %v1862
  %v1919 = vpack.c.b16 %v1865, %v1864
  %v1920 = vpack.c.b16 %v1867, %v1866
  %v1921 = vpack.c.b16 %v1869, %v1868
  %v1922 = vpack.c.b16 %v1871, %v1870
  %v1923 = vpack.c.b16 %v1873, %v1872
  %v1924 = vpack.c.b16 %v1875, %v1874
  %v1925 = vpack.c.b16 %v1877, %v1876
  %v1926 = vpack.c.b16 %v1879, %v1878
  %v1927 = vpack.c.b16 %v1881, %v1880
  %v1928 = vpack.c.b16 %v1883, %v1882
  %v1929 = vpack.c.b16 %v1885, %v1884
  %v1930 = vpack.c.b16 %v1887, %v1886
  %v1931 = vpack.c.b16 %v1889, %v1888
  %v1932 = vpack.c.b16 %v1891, %v1890
  %v1933 = vpack.c.b16 %v1893, %v1892
  %v1934 = vpack.c.b16 %v1895, %v1894
  %v1935 = vpack.c.b16 %v1897, %v1896
  %v1936 = vpack.c.b16 %v1899, %v1898
  %v1937 = vpack.c.b16 %v1901, %v1900
  %v1975 = vsel %vm337, %v1562, 0
  %v1977 = vsel %vm337, %v1448, 0
  %v1979 = vsel %vm337, %v1450, 0
  %v1981 = vsel %vm337, %v1452, 0
  %v1983 = vsel %vm337, %v1454, 0
  %v1985 = vsel %vm337, %v1456, 0
  %v1987 = vsel %vm337, %v1458, 0
  %v1990 = vsel %vm337, %v1508, 0
  %v1993 = vsel %vm337, %v1564, 0
  %v1996 = vsel %vm337, %v1566, 0
  %1998 = vmatprep.subr.bf16.mxu0 0
  %1999 = vmatpush1.bf16.msra.mxu0 %v1902
  %2000 = vmatprep.subr.bf16.mxu0 0
  %2001 = vmatpush1.bf16.msra.mxu0 %v1903
  %2002 = vmatprep.subr.bf16.mxu0 0
  %2003 = vmatpush1.bf16.msra.mxu0 %v1904
  %2004 = vmatprep.subr.bf16.mxu0 0
  %2005 = vmatpush1.bf16.msra.mxu0 %v1905
  %2006 = vmatprep.subr.bf16.mxu0 0
  %2007 = vmatpush1.bf16.msra.mxu0 %v1906
  %2008 = vmatprep.subr.bf16.mxu0 0
  %2009 = vmatpush1.bf16.msra.mxu0 %v1907
  %2010 = vmatprep.subr.bf16.mxu0 0
  %2011 = vmatpush1.bf16.msra.mxu0 %v1908
  %2012 = vmatprep.subr.bf16.mxu0 0
  %2013 = vmatpush1.bf16.msra.mxu0 %v1909
  %2014 = vmatprep.subr.bf16.mxu0 0
  %2015 = vmatpush1.bf16.msra.mxu0 %v1910
  %2016 = vmatprep.subr.bf16.mxu0 0
  %2017 = vmatpush1.bf16.msra.mxu0 %v1911
  %2018 = vmatprep.subr.bf16.mxu0 0
  %2019 = vmatpush1.bf16.msra.mxu0 %v1912
  %2020 = vmatprep.subr.bf16.mxu0 0
  %2021 = vmatpush1.bf16.msra.mxu0 %v1913
  %2022 = vmatprep.subr.bf16.mxu0 0
  %2023 = vmatpush1.bf16.msra.mxu0 %v1914
  %2024 = vmatprep.subr.bf16.mxu0 0
  %2025 = vmatpush1.bf16.msra.mxu0 %v1915
  %2026 = vmatprep.subr.bf16.mxu0 0
  %2027 = vmatpush1.bf16.msra.mxu0 %v1916
  %2028 = vmatprep.subr.bf16.mxu0 0
  %2029 = vmatpush1.bf16.msra.mxu0 %v1917
  %2030 = vmatprep.mubr.bf16.mxu0 %v1599
  %2031 = vmatmul.mubr.bf16.gmra.mrb[0].mxu0 %v1568
  %v2032 = vpop.f32.mrb[0].mxu0
  %v2033 = vadd.f32 0.0, %v2032
  %v2034 = vpop.f32.mrb[0].mxu0
  %v2035 = vpop.f32.mrb[0].mxu0
  %v2036 = vadd.f32 0.0, %v2035
  %v2037 = vpop.f32.mrb[0].mxu0
  %2038 = vmatprep.mubr.bf16.mxu0 %v1603
  %2039 = vmatmul.mubr.bf16.gmra.mrb[0].mxu0 %v1571
  %v2040 = vpop.f32.mrb[0].mxu0
  %v2041 = vadd.f32 0.0, %v2040
  %v2042 = vpop.f32.mrb[0].mxu0
  %v2043 = vpop.f32.mrb[0].mxu0
  %v2044 = vadd.f32 0.0, %v2043
  %v2045 = vpop.f32.mrb[0].mxu0
  %2046 = vmatprep.mubr.bf16.mxu0 %v1607
  %2047 = vmatmul.mubr.bf16.gmra.mrb[0].mxu0 %v1574
  %v2048 = vpop.f32.mrb[0].mxu0
  %v2049 = vadd.f32 0.0, %v2048
  %v2050 = vpop.f32.mrb[0].mxu0
  %v2051 = vpop.f32.mrb[0].mxu0
  %v2052 = vadd.f32 0.0, %v2051
  %v2053 = vpop.f32.mrb[0].mxu0
  %2054 = vmatprep.mubr.bf16.mxu0 %v1611
  %2055 = vmatmul.mubr.bf16.gmra.mrb[0].mxu0 %v1577
  %v2056 = vpop.f32.mrb[0].mxu0
  %v2057 = vadd.f32 0.0, %v2056
  %v2058 = vpop.f32.mrb[0].mxu0
  %v2059 = vpop.f32.mrb[0].mxu0
  %v2060 = vadd.f32 0.0, %v2059
  %v2061 = vpop.f32.mrb[0].mxu0
  %2062 = vmatprep.mubr.bf16.mxu0 %v1615
  %2063 = vmatmul.mubr.bf16.gmra.mrb[0].mxu0 %v1580
  %v2064 = vpop.f32.mrb[0].mxu0
  %v2065 = vadd.f32 0.0, %v2064
  %v2066 = vpop.f32.mrb[0].mxu0
  %v2067 = vpop.f32.mrb[0].mxu0
  %v2068 = vadd.f32 0.0, %v2067
  %v2069 = vpop.f32.mrb[0].mxu0
  %2070 = vmatprep.mubr.bf16.mxu0 %v1619
  %2071 = vmatmul.mubr.bf16.gmra.mrb[0].mxu0 %v1583
  %v2072 = vpop.f32.mrb[0].mxu0
  %v2073 = vadd.f32 0.0, %v2072
  %v2074 = vpop.f32.mrb[0].mxu0
  %v2075 = vpop.f32.mrb[0].mxu0
  %v2076 = vadd.f32 0.0, %v2075
  %v2077 = vpop.f32.mrb[0].mxu0
  %2078 = vmatprep.mubr.bf16.mxu0 %v1623
  %2079 = vmatmul.mubr.bf16.gmra.mrb[0].mxu0 %v1586
  %v2080 = vpop.f32.mrb[0].mxu0
  %v2081 = vadd.f32 0.0, %v2080
  %v2082 = vpop.f32.mrb[0].mxu0
  %v2083 = vpop.f32.mrb[0].mxu0
  %v2084 = vadd.f32 0.0, %v2083
  %v2085 = vpop.f32.mrb[0].mxu0
  %2086 = vmatprep.mubr.bf16.mxu0 %v1627
  %2087 = vmatmul.mubr.bf16.gmra.mrb[0].mxu0 %v1589
  %v2088 = vpop.f32.mrb[0].mxu0
  %v2089 = vadd.f32 0.0, %v2088
  %v2090 = vpop.f32.mrb[0].mxu0
  %v2091 = vpop.f32.mrb[0].mxu0
  %v2092 = vadd.f32 0.0, %v2091
  %v2093 = vpop.f32.mrb[0].mxu0
  %2094 = vmatprep.mubr.bf16.mxu0 %v1631
  %2095 = vmatmul.mubr.bf16.gmra.mrb[0].mxu0 %v1592
  %v2096 = vpop.f32.mrb[0].mxu0
  %v2097 = vadd.f32 0.0, %v2096
  %v2098 = vpop.f32.mrb[0].mxu0
  %v2099 = vpop.f32.mrb[0].mxu0
  %v2100 = vadd.f32 0.0, %v2099
  %v2101 = vpop.f32.mrb[0].mxu0
  %2102 = vmatprep.mubr.bf16.mxu0 %v1635
  %2103 = vmatmul.mubr.bf16.gmra.mrb[0].mxu0 %v1595
  %v2104 = vpop.f32.mrb[0].mxu0
  %v2105 = vadd.f32 0.0, %v2104
  %v2106 = vpop.f32.mrb[0].mxu0
  %v2107 = vpop.f32.mrb[0].mxu0
  %v2108 = vadd.f32 0.0, %v2107
  %v2109 = vpop.f32.mrb[0].mxu0
  %2110 = vdwg.mxu0
  %2111 = vmatprep.subr.bf16.mxu0 0
  %2112 = vmatpush1.bf16.msra.mxu0 %v1918
  %2113 = vmatprep.subr.bf16.mxu0 0
  %2114 = vmatpush1.bf16.msra.mxu0 %v1919
  %2115 = vmatprep.subr.bf16.mxu0 0
  %2116 = vmatpush1.bf16.msra.mxu0 %v1920
  %2117 = vmatprep.subr.bf16.mxu0 0
  %2118 = vmatpush1.bf16.msra.mxu0 %v1921
  %2119 = vmatprep.subr.bf16.mxu0 0
  %2120 = vmatpush1.bf16.msra.mxu0 %v1922
  %2121 = vmatprep.subr.bf16.mxu0 0
  %2122 = vmatpush1.bf16.msra.mxu0 %v1923
  %2123 = vmatprep.subr.bf16.mxu0 0
  %2124 = vmatpush1.bf16.msra.mxu0 %v1924
  %2125 = vmatprep.subr.bf16.mxu0 0
  %2126 = vmatpush1.bf16.msra.mxu0 %v1925
  %2127 = vmatprep.subr.bf16.mxu0 0
  %2128 = vmatpush1.bf16.msra.mxu0 %v1926
  %2129 = vmatprep.subr.bf16.mxu0 0
  %2130 = vmatpush1.bf16.msra.mxu0 %v1927
  %2131 = vmatprep.subr.bf16.mxu0 0
  %2132 = vmatpush1.bf16.msra.mxu0 %v1928
  %2133 = vmatprep.subr.bf16.mxu0 0
  %2134 = vmatpush1.bf16.msra.mxu0 %v1929
  %2135 = vmatprep.subr.bf16.mxu0 0
  %2136 = vmatpush1.bf16.msra.mxu0 %v1930
  %2137 = vmatprep.subr.bf16.mxu0 0
  %2138 = vmatpush1.bf16.msra.mxu0 %v1931
  %2139 = vmatprep.subr.bf16.mxu0 0
  %2140 = vmatpush1.bf16.msra.mxu0 %v1932
  %2141 = vmatprep.subr.bf16.mxu0 0
  %2142 = vmatpush1.bf16.msra.mxu0 %v1933
  %2143 = vmatprep.mubr.bf16.mxu0 %v1574
  %2144 = vmatmul.mubr.bf16.gmra.mrb[0].mxu0 %v1639
  %v2145 = vpop.f32.mrb[0].mxu0
  %v2146 = vadd.f32 %v2033, %v2145
  %v2147 = vpop.f32.mrb[0].mxu0
  %v2148 = vpop.f32.mrb[0].mxu0
  %v2149 = vadd.f32 %v2036, %v2148
  %v2150 = vpop.f32.mrb[0].mxu0
  %2151 = vmatprep.mubr.bf16.mxu0 %v1577
  %2152 = vmatmul.mubr.bf16.gmra.mrb[0].mxu0 %v1643
  %v2153 = vpop.f32.mrb[0].mxu0
  %v2154 = vadd.f32 %v2041, %v2153
  %v2155 = vpop.f32.mrb[0].mxu0
  %v2156 = vpop.f32.mrb[0].mxu0
  %v2157 = vadd.f32 %v2044, %v2156
  %v2158 = vpop.f32.mrb[0].mxu0
  %2159 = vmatprep.mubr.bf16.mxu0 %v1580
  %2160 = vmatmul.mubr.bf16.gmra.mrb[0].mxu0 %v1647
  %v2161 = vpop.f32.mrb[0].mxu0
  %v2162 = vadd.f32 %v2049, %v2161
  %v2163 = vpop.f32.mrb[0].mxu0
  %v2164 = vpop.f32.mrb[0].mxu0
  %v2165 = vadd.f32 %v2052, %v2164
  %v2166 = vpop.f32.mrb[0].mxu0
  %2167 = vmatprep.mubr.bf16.mxu0 %v1583
  %2168 = vmatmul.mubr.bf16.gmra.mrb[0].mxu0 %v1651
  %v2169 = vpop.f32.mrb[0].mxu0
  %v2170 = vadd.f32 %v2057, %v2169
  %v2171 = vpop.f32.mrb[0].mxu0
  %v2172 = vpop.f32.mrb[0].mxu0
  %v2173 = vadd.f32 %v2060, %v2172
  %v2174 = vpop.f32.mrb[0].mxu0
  %2175 = vmatprep.mubr.bf16.mxu0 %v1586
  %2176 = vmatmul.mubr.bf16.gmra.mrb[0].mxu0 %v1655
  %v2177 = vpop.f32.mrb[0].mxu0
  %v2178 = vadd.f32 %v2065, %v2177
  %v2179 = vpop.f32.mrb[0].mxu0
  %v2180 = vpop.f32.mrb[0].mxu0
  %v2181 = vadd.f32 %v2068, %v2180
  %v2182 = vpop.f32.mrb[0].mxu0
  %2183 = vmatprep.mubr.bf16.mxu0 %v1589
  %2184 = vmatmul.mubr.bf16.gmra.mrb[0].mxu0 %v1659
  %v2185 = vpop.f32.mrb[0].mxu0
  %v2186 = vadd.f32 %v2073, %v2185
  %v2187 = vpop.f32.mrb[0].mxu0
  %v2188 = vpop.f32.mrb[0].mxu0
  %v2189 = vadd.f32 %v2076, %v2188
  %v2190 = vpop.f32.mrb[0].mxu0
  %2191 = vmatprep.mubr.bf16.mxu0 %v1592
  %2192 = vmatmul.mubr.bf16.gmra.mrb[0].mxu0 %v1663
  %v2193 = vpop.f32.mrb[0].mxu0
  %v2194 = vadd.f32 %v2081, %v2193
  %v2195 = vpop.f32.mrb[0].mxu0
  %v2196 = vpop.f32.mrb[0].mxu0
  %v2197 = vadd.f32 %v2084, %v2196
  %v2198 = vpop.f32.mrb[0].mxu0
  %2199 = vmatprep.mubr.bf16.mxu0 %v1678
  %2200 = vmatmul.mubr.bf16.gmra.mrb[0].mxu0 %v1667
  %v2201 = vpop.f32.mrb[0].mxu0
  %v2202 = vadd.f32 %v2089, %v2201
  %v2203 = vpop.f32.mrb[0].mxu0
  %v2204 = vpop.f32.mrb[0].mxu0
  %v2205 = vadd.f32 %v2092, %v2204
  %v2206 = vpop.f32.mrb[0].mxu0
  %2207 = vmatprep.mubr.bf16.mxu0 %v1681
  %2208 = vmatmul.mubr.bf16.gmra.mrb[0].mxu0 %v1671
  %v2209 = vpop.f32.mrb[0].mxu0
  %v2210 = vadd.f32 %v2097, %v2209
  %v2211 = vpop.f32.mrb[0].mxu0
  %v2212 = vpop.f32.mrb[0].mxu0
  %v2213 = vadd.f32 %v2100, %v2212
  %v2214 = vpop.f32.mrb[0].mxu0
  %2215 = vmatprep.mubr.bf16.mxu0 %v1684
  %2216 = vmatmul.mubr.bf16.gmra.mrb[0].mxu0 %v1675
  %v2217 = vpop.f32.mrb[0].mxu0
  %v2218 = vadd.f32 %v2105, %v2217
  %v2219 = vpop.f32.mrb[0].mxu0
  %v2220 = vpop.f32.mrb[0].mxu0
  %v2221 = vadd.f32 %v2108, %v2220
  %v2222 = vpop.f32.mrb[0].mxu0
  %2223 = vdwg.mxu0
  %2224 = vmatprep.subr.bf16.mxu0 0
  %2225 = vmatpush1.bf16.msra.mxu0 %v1934
  %2226 = vmatprep.subr.bf16.mxu0 0
  %2227 = vmatpush1.bf16.msra.mxu0 %v1935
  %2228 = vmatprep.subr.bf16.mxu0 0
  %2229 = vmatpush1.bf16.msra.mxu0 %v1936
  %2230 = vmatprep.subr.bf16.mxu0 0
  %2231 = vmatpush1.bf16.msra.mxu0 %v1937
  %2232 = vmatprep.subr.bf16.mxu0 0
  %2233 = vmatpush1.bf16.msra.mxu0 0
  %2234 = vmatprep.subr.bf16.mxu0 0
  %2235 = vmatpush1.bf16.msra.mxu0 0
  %2236 = vmatprep.subr.bf16.mxu0 0
  %2237 = vmatpush1.bf16.msra.mxu0 0
  %2238 = vmatprep.subr.bf16.mxu0 0
  %2239 = vmatpush1.bf16.msra.mxu0 0
  %2240 = vmatprep.subr.bf16.mxu0 0
  %2241 = vmatpush1.bf16.msra.mxu0 0
  %2242 = vmatprep.subr.bf16.mxu0 0
  %2243 = vmatpush1.bf16.msra.mxu0 0
  %2244 = vmatprep.subr.bf16.mxu0 0
  %2245 = vmatpush1.bf16.msra.mxu0 0
  %2246 = vmatprep.subr.bf16.mxu0 0
  %2247 = vmatpush1.bf16.msra.mxu0 0
  %2248 = vmatprep.subr.bf16.mxu0 0
  %2249 = vmatpush1.bf16.msra.mxu0 0
  %2250 = vmatprep.subr.bf16.mxu0 0
  %2251 = vmatpush1.bf16.msra.mxu0 0
  %2252 = vmatprep.subr.bf16.mxu0 0
  %2253 = vmatpush1.bf16.msra.mxu0 0
  %2254 = vmatprep.subr.bf16.mxu0 0
  %2255 = vmatpush1.bf16.msra.mxu0 0
  %2256 = vmatprep.mubr.bf16.mxu0 0
  %2257 = vmatmul.mubr.bf16.gmra.mrb[0].mxu0 %v1975
  %v2258 = vpop.f32.mrb[0].mxu0
  %v2259 = vadd.f32 %v2146, %v2258
  %v2260 = vpop.f32.mrb[0].mxu0
  %v2261 = vpop.f32.mrb[0].mxu0
  %v2262 = vadd.f32 %v2149, %v2261
  %v2263 = vpop.f32.mrb[0].mxu0
  %2264 = vmatprep.mubr.bf16.mxu0 0
  %2265 = vmatmul.mubr.bf16.gmra.mrb[0].mxu0 %v1977
  %v2266 = vpop.f32.mrb[0].mxu0
  %v2267 = vadd.f32 %v2154, %v2266
  %v2268 = vpop.f32.mrb[0].mxu0
  %v2269 = vpop.f32.mrb[0].mxu0
  %v2270 = vadd.f32 %v2157, %v2269
  %v2271 = vpop.f32.mrb[0].mxu0
  %2272 = vmatprep.mubr.bf16.mxu0 0
  %2273 = vmatmul.mubr.bf16.gmra.mrb[0].mxu0 %v1979
  %v2274 = vpop.f32.mrb[0].mxu0
  %v2275 = vadd.f32 %v2162, %v2274
  %v2276 = vpop.f32.mrb[0].mxu0
  %v2277 = vpop.f32.mrb[0].mxu0
  %v2278 = vadd.f32 %v2165, %v2277
  %v2279 = vpop.f32.mrb[0].mxu0
  %2280 = vmatprep.mubr.bf16.mxu0 0
  %2281 = vmatmul.mubr.bf16.gmra.mrb[0].mxu0 %v1981
  %v2282 = vpop.f32.mrb[0].mxu0
  %v2283 = vadd.f32 %v2170, %v2282
  %v2284 = vpop.f32.mrb[0].mxu0
  %v2285 = vpop.f32.mrb[0].mxu0
  %v2286 = vadd.f32 %v2173, %v2285
  %v2287 = vpop.f32.mrb[0].mxu0
  %2288 = vmatprep.mubr.bf16.mxu0 0
  %2289 = vmatmul.mubr.bf16.gmra.mrb[0].mxu0 %v1983
  %v2290 = vpop.f32.mrb[0].mxu0
  %v2291 = vadd.f32 %v2178, %v2290
  %v2292 = vpop.f32.mrb[0].mxu0
  %v2293 = vpop.f32.mrb[0].mxu0
  %v2294 = vadd.f32 %v2181, %v2293
  %v2295 = vpop.f32.mrb[0].mxu0
  %2296 = vmatprep.mubr.bf16.mxu0 0
  %2297 = vmatmul.mubr.bf16.gmra.mrb[0].mxu0 %v1985
  %v2298 = vpop.f32.mrb[0].mxu0
  %v2299 = vadd.f32 %v2186, %v2298
  %v2300 = vpop.f32.mrb[0].mxu0
  %v2301 = vpop.f32.mrb[0].mxu0
  %v2302 = vadd.f32 %v2189, %v2301
  %v2303 = vpop.f32.mrb[0].mxu0
  %2304 = vmatprep.mubr.bf16.mxu0 0
  %2305 = vmatmul.mubr.bf16.gmra.mrb[0].mxu0 %v1987
  %v2306 = vpop.f32.mrb[0].mxu0
  %v2307 = vadd.f32 %v2194, %v2306
  %v2308 = vpop.f32.mrb[0].mxu0
  %v2309 = vpop.f32.mrb[0].mxu0
  %v2310 = vadd.f32 %v2197, %v2309
  %v2311 = vpop.f32.mrb[0].mxu0
  %2312 = vmatprep.mubr.bf16.mxu0 0
  %2313 = vmatmul.mubr.bf16.gmra.mrb[0].mxu0 %v1990
  %v2314 = vpop.f32.mrb[0].mxu0
  %v2315 = vadd.f32 %v2202, %v2314
  %v2316 = vpop.f32.mrb[0].mxu0
  %v2317 = vpop.f32.mrb[0].mxu0
  %v2318 = vadd.f32 %v2205, %v2317
  %v2319 = vpop.f32.mrb[0].mxu0
  %2320 = vmatprep.mubr.bf16.mxu0 0
  %2321 = vmatmul.mubr.bf16.gmra.mrb[0].mxu0 %v1993
  %v2322 = vpop.f32.mrb[0].mxu0
  %v2323 = vadd.f32 %v2210, %v2322
  %v2324 = vpop.f32.mrb[0].mxu0
  %v2325 = vpop.f32.mrb[0].mxu0
  %v2326 = vadd.f32 %v2213, %v2325
  %v2327 = vpop.f32.mrb[0].mxu0
  %2328 = vmatprep.mubr.bf16.mxu0 0
  %2329 = vmatmul.mubr.bf16.gmra.mrb[0].mxu0 %v1996
  %v2330 = vpop.f32.mrb[0].mxu0
  %v2331 = vadd.f32 %v2218, %v2330
  %v2332 = vpop.f32.mrb[0].mxu0
  %v2333 = vpop.f32.mrb[0].mxu0
  %v2334 = vadd.f32 %v2221, %v2333
  %v2335 = vpop.f32.mrb[0].mxu0
  %2336 = vdwg.mxu0
  %s2337 = scalar_lea.vmem [#allocation2], 160
  %2338 = vst.msk [vmem:[%s2337] sm:$0xff] %vm337, %v2259
  %2339 = vst.msk [vmem:[%s2337 + $0x8] sm:$0xff] %vm337, %v2262
  %2340 = vst.msk [vmem:[%s2337 + $0x10] sm:$0xff] %vm337, %v2267
  %2341 = vst.msk [vmem:[%s2337 + $0x18] sm:$0xff] %vm337, %v2270
  %2342 = vst.msk [vmem:[%s2337 + $0x20] sm:$0xff] %vm337, %v2275
  %2343 = vst.msk [vmem:[%s2337 + $0x28] sm:$0xff] %vm337, %v2278
  %2344 = vst.msk [vmem:[%s2337 + $0x30] sm:$0xff] %vm337, %v2283
  %2345 = vst.msk [vmem:[%s2337 + $0x38] sm:$0xff] %vm337, %v2286
  %2346 = vst.msk [vmem:[%s2337 + $0x40] sm:$0xff] %vm337, %v2291
  %2347 = vst.msk [vmem:[%s2337 + $0x48] sm:$0xff] %vm337, %v2294
  %2348 = vst.msk [vmem:[%s2337 + $0x50] sm:$0xff] %vm337, %v2299
  %2349 = vst.msk [vmem:[%s2337 + $0x58] sm:$0xff] %vm337, %v2302
  %2350 = vst.msk [vmem:[%s2337 + $0x60] sm:$0xff] %vm337, %v2307
  %2351 = vst.msk [vmem:[%s2337 + $0x68] sm:$0xff] %vm337, %v2310
  %2352 = vst.msk [vmem:[%s2337 + $0x70] sm:$0xff] %vm337, %v2315
  %2353 = vst.msk [vmem:[%s2337 + $0x78] sm:$0xff] %vm337, %v2318
  %2354 = vst.msk [vmem:[%s2337 + $0x80] sm:$0xff] %vm337, %v2323
  %2355 = vst.msk [vmem:[%s2337 + $0x88] sm:$0xff] %vm337, %v2326
  %2356 = vst.msk [vmem:[%s2337 + $0x90] sm:$0xff] %vm337, %v2331
  %2357 = vst.msk [vmem:[%s2337 + $0x98] sm:$0xff] %vm337, %v2334
  %v2358 = vld [vmem:[%s2] sm:$0x3]
  %v2359 = vmul.f32 %v2259, %v2259
  %v2360 = vmul.f32 %v2262, %v2262
  %v2361 = vmul.f32 %v2267, %v2267
  %v2362 = vmul.f32 %v2270, %v2270
  %v2363 = vmul.f32 %v2275, %v2275
  %v2364 = vmul.f32 %v2278, %v2278
  %v2365 = vmul.f32 %v2283, %v2283
  %v2366 = vmul.f32 %v2286, %v2286
  %v2367 = vmul.f32 %v2291, %v2291
  %v2368 = vmul.f32 %v2294, %v2294
  %v2369 = vmul.f32 %v2299, %v2299
  %v2370 = vmul.f32 %v2302, %v2302
  %v2371 = vmul.f32 %v2307, %v2307
  %v2372 = vmul.f32 %v2310, %v2310
  %v2373 = vmul.f32 %v2315, %v2315
  %v2374 = vmul.f32 %v2318, %v2318
  %v2375 = vmul.f32 %v2323, %v2323
  %v2376 = vmul.f32 %v2326, %v2326
  %v2377 = vmul.f32 %v2331, %v2331
  %v2378 = vmul.f32 %v2334, %v2334
  %2399 = vrot.lane.b32.xlu0 %v2359, 64
  %v2400 = vpop.permute.xlu0 %2399
  %2401 = vrot.lane.b32.xlu0 %v2360, 64
  %v2402 = vpop.permute.xlu0 %2401
  %2403 = vrot.lane.b32.xlu0 %v2361, 64
  %v2404 = vpop.permute.xlu0 %2403
  %2405 = vrot.lane.b32.xlu0 %v2362, 64
  %v2406 = vpop.permute.xlu0 %2405
  %2407 = vrot.lane.b32.xlu0 %v2363, 64
  %v2408 = vpop.permute.xlu0 %2407
  %2409 = vrot.lane.b32.xlu0 %v2364, 64
  %v2410 = vpop.permute.xlu0 %2409
  %2411 = vrot.lane.b32.xlu0 %v2365, 64
  %v2412 = vpop.permute.xlu0 %2411
  %2413 = vrot.lane.b32.xlu0 %v2366, 64
  %v2414 = vpop.permute.xlu0 %2413
  %2415 = vrot.lane.b32.xlu0 %v2367, 64
  %v2416 = vpop.permute.xlu0 %2415
  %2417 = vrot.lane.b32.xlu0 %v2368, 64
  %v2418 = vpop.permute.xlu0 %2417
  %2419 = vrot.lane.b32.xlu0 %v2369, 64
  %v2420 = vpop.permute.xlu0 %2419
  %2421 = vrot.lane.b32.xlu0 %v2370, 64
  %v2422 = vpop.permute.xlu0 %2421
  %2423 = vrot.lane.b32.xlu0 %v2371, 64
  %v2424 = vpop.permute.xlu0 %2423
  %2425 = vrot.lane.b32.xlu0 %v2372, 64
  %v2426 = vpop.permute.xlu0 %2425
  %2427 = vrot.lane.b32.xlu0 %v2373, 64
  %v2428 = vpop.permute.xlu0 %2427
  %2429 = vrot.lane.b32.xlu0 %v2374, 64
  %v2430 = vpop.permute.xlu0 %2429
  %2431 = vrot.lane.b32.xlu0 %v2375, 64
  %v2432 = vpop.permute.xlu0 %2431
  %2433 = vrot.lane.b32.xlu0 %v2376, 64
  %v2434 = vpop.permute.xlu0 %2433
  %2435 = vrot.lane.b32.xlu0 %v2377, 64
  %v2436 = vpop.permute.xlu0 %2435
  %2437 = vrot.lane.b32.xlu0 %v2378, 64
  %v2438 = vpop.permute.xlu0 %2437
  %v2459 = vsel %vm337, %v2259, %v2400
  %v2460 = vsel %vm337, %v2262, %v2402
  %v2461 = vsel %vm337, %v2267, %v2404
  %v2462 = vsel %vm337, %v2270, %v2406
  %v2463 = vsel %vm337, %v2275, %v2408
  %v2464 = vsel %vm337, %v2278, %v2410
  %v2465 = vsel %vm337, %v2283, %v2412
  %v2466 = vsel %vm337, %v2286, %v2414
  %v2467 = vsel %vm337, %v2291, %v2416
  %v2468 = vsel %vm337, %v2294, %v2418
  %v2469 = vsel %vm337, %v2299, %v2420
  %v2470 = vsel %vm337, %v2302, %v2422
  %v2471 = vsel %vm337, %v2307, %v2424
  %v2472 = vsel %vm337, %v2310, %v2426
  %v2473 = vsel %vm337, %v2315, %v2428
  %v2474 = vsel %vm337, %v2318, %v2430
  %v2475 = vsel %vm337, %v2323, %v2432
  %v2476 = vsel %vm337, %v2326, %v2434
  %v2477 = vsel %vm337, %v2331, %v2436
  %v2478 = vsel %vm337, %v2334, %v2438
  %v2480 = vlaneseq
  %v2481 = vshrl.u32 %v2480, 7
  %v2482 = vsub.s32 0, %v2481
  %v2483 = vrot.slane %v2358, %v2482
  %v2484 = vlaneseq
  %v2485 = vshrl.u32 %v2484, 7
  %v2486 = vsub.s32 1, %v2485
  %v2487 = vrot.slane %v2358, %v2486
  %vm2489 = vcmask 261120
  %v2490 = vsel %vm2489, %v2487, 0
  %2492 = vmatprep.subr.mxu0 0.0
  %2493 = vmatpush1.msra.mxu0 %v2459
  %2494 = vmatprep.subr.mxu0 0.0
  %2495 = vmatpush1.msra.mxu0 %v2460
  %2496 = vmatprep.subr.mxu0 0.0
  %2497 = vmatpush1.msra.mxu0 %v2461
  %2498 = vmatprep.subr.mxu0 0.0
  %2499 = vmatpush1.msra.mxu0 %v2462
  %2500 = vmatprep.subr.mxu0 0.0
  %2501 = vmatpush1.msra.mxu0 %v2463
  %2502 = vmatprep.subr.mxu0 0.0
  %2503 = vmatpush1.msra.mxu0 %v2464
  %2504 = vmatprep.subr.mxu0 0.0
  %2505 = vmatpush1.msra.mxu0 %v2465
  %2506 = vmatprep.subr.mxu0 0.0
  %2507 = vmatpush1.msra.mxu0 %v2466
  %2508 = vmatprep.subr.mxu0 0.0
  %2509 = vmatpush1.msra.mxu0 %v2467
  %2510 = vmatprep.subr.mxu0 0.0
  %2511 = vmatpush1.msra.mxu0 %v2468
  %2512 = vmatprep.subr.mxu0 0.0
  %2513 = vmatpush1.msra.mxu0 %v2469
  %2514 = vmatprep.subr.mxu0 0.0
  %2515 = vmatpush1.msra.mxu0 %v2470
  %2516 = vmatprep.subr.mxu0 0.0
  %2517 = vmatpush1.msra.mxu0 %v2471
  %2518 = vmatprep.subr.mxu0 0.0
  %2519 = vmatpush1.msra.mxu0 %v2472
  %2520 = vmatprep.subr.mxu0 0.0
  %2521 = vmatpush1.msra.mxu0 %v2473
  %2522 = vmatprep.subr.mxu0 0.0
  %2523 = vmatpush1.msra.mxu0 %v2474
  %2524 = vmatprep.subr.mxu0 0.0
  %2525 = vmatpush1.msra.mxu0 %v2475
  %2526 = vmatprep.subr.mxu0 0.0
  %2527 = vmatpush1.msra.mxu0 %v2476
  %2528 = vmatprep.subr.mxu0 0.0
  %2529 = vmatpush1.msra.mxu0 %v2477
  %2530 = vmatprep.subr.mxu0 0.0
  %2531 = vmatpush1.msra.mxu0 %v2478
  %2532 = vmatprep.subr.mxu0 0.0
  %2533 = vmatpush1.msra.mxu0 0.0
  %2534 = vmatprep.subr.mxu0 0.0
  %2535 = vmatpush1.msra.mxu0 0.0
  %2536 = vmatprep.subr.mxu0 0.0
  %2537 = vmatpush1.msra.mxu0 0.0
  %2538 = vmatprep.subr.mxu0 0.0
  %2539 = vmatpush1.msra.mxu0 0.0
  %2540 = vmatprep.subr.mxu0 0.0
  %2541 = vmatpush1.msra.mxu0 0.0
  %2542 = vmatprep.subr.mxu0 0.0
  %2543 = vmatpush1.msra.mxu0 0.0
  %2544 = vmatprep.subr.mxu0 0.0
  %2545 = vmatpush1.msra.mxu0 0.0
  %2546 = vmatprep.subr.mxu0 0.0
  %2547 = vmatpush1.msra.mxu0 0.0
  %2548 = vmatprep.subr.mxu0 0.0
  %2549 = vmatpush1.msra.mxu0 0.0
  %2550 = vmatprep.subr.mxu0 0.0
  %2551 = vmatpush1.msra.mxu0 0.0
  %2552 = vmatprep.subr.mxu0 0.0
  %2553 = vmatpush1.msra.mxu0 0.0
  %2554 = vmatprep.subr.mxu0 0.0
  %2555 = vmatpush1.msra.mxu0 0.0
  %2556 = vmatprep.mubr.f32.mxu0 %v2490
  %2557 = vmatmul.mubr.f32.gmra.mrb[0].mxu0 %v2483
  %v2558 = vpop.f32.mrb[0].mxu0
  %v2559 = vadd.f32 0.0, %v2558
  %v2560 = vpop.f32.mrb[0].mxu0
  %2561 = vdwg.mxu0
  %v2563 = vlaneseq
  %v2564 = vshrl.u32 %v2563, 7
  %v2565 = vsub.s32 0, %v2564
  %v2566 = vrot.slane %v1128, %v2565
  %v2567 = vlaneseq
  %v2568 = vshrl.u32 %v2567, 7
  %v2569 = vsub.s32 1, %v2568
  %v2570 = vrot.slane %v1128, %v2569
  %v2572 = vsel %vm2489, %v2570, 0
  %2574 = vmatprep.subr.mxu0 0.0
  %2575 = vmatpush1.msra.mxu0 %v1229
  %2576 = vmatprep.subr.mxu0 0.0
  %2577 = vmatpush1.msra.mxu0 %v1230
  %2578 = vmatprep.subr.mxu0 0.0
  %2579 = vmatpush1.msra.mxu0 %v1231
  %2580 = vmatprep.subr.mxu0 0.0
  %2581 = vmatpush1.msra.mxu0 %v1232
  %2582 = vmatprep.subr.mxu0 0.0
  %2583 = vmatpush1.msra.mxu0 %v1233
  %2584 = vmatprep.subr.mxu0 0.0
  %2585 = vmatpush1.msra.mxu0 %v1234
  %2586 = vmatprep.subr.mxu0 0.0
  %2587 = vmatpush1.msra.mxu0 %v1235
  %2588 = vmatprep.subr.mxu0 0.0
  %2589 = vmatpush1.msra.mxu0 %v1236
  %2590 = vmatprep.subr.mxu0 0.0
  %2591 = vmatpush1.msra.mxu0 %v1237
  %2592 = vmatprep.subr.mxu0 0.0
  %2593 = vmatpush1.msra.mxu0 %v1238
  %2594 = vmatprep.subr.mxu0 0.0
  %2595 = vmatpush1.msra.mxu0 %v1239
  %2596 = vmatprep.subr.mxu0 0.0
  %2597 = vmatpush1.msra.mxu0 %v1240
  %2598 = vmatprep.subr.mxu0 0.0
  %2599 = vmatpush1.msra.mxu0 %v1241
  %2600 = vmatprep.subr.mxu0 0.0
  %2601 = vmatpush1.msra.mxu0 %v1242
  %2602 = vmatprep.subr.mxu0 0.0
  %2603 = vmatpush1.msra.mxu0 %v1243
  %2604 = vmatprep.subr.mxu0 0.0
  %2605 = vmatpush1.msra.mxu0 %v1244
  %2606 = vmatprep.subr.mxu0 0.0
  %2607 = vmatpush1.msra.mxu0 %v1245
  %2608 = vmatprep.subr.mxu0 0.0
  %2609 = vmatpush1.msra.mxu0 %v1246
  %2610 = vmatprep.subr.mxu0 0.0
  %2611 = vmatpush1.msra.mxu0 %v1247
  %2612 = vmatprep.subr.mxu0 0.0
  %2613 = vmatpush1.msra.mxu0 %v1248
  %2614 = vmatprep.subr.mxu0 0.0
  %2615 = vmatpush1.msra.mxu0 0.0
  %2616 = vmatprep.subr.mxu0 0.0
  %2617 = vmatpush1.msra.mxu0 0.0
  %2618 = vmatprep.subr.mxu0 0.0
  %2619 = vmatpush1.msra.mxu0 0.0
  %2620 = vmatprep.subr.mxu0 0.0
  %2621 = vmatpush1.msra.mxu0 0.0
  %2622 = vmatprep.subr.mxu0 0.0
  %2623 = vmatpush1.msra.mxu0 0.0
  %2624 = vmatprep.subr.mxu0 0.0
  %2625 = vmatpush1.msra.mxu0 0.0
  %2626 = vmatprep.subr.mxu0 0.0
  %2627 = vmatpush1.msra.mxu0 0.0
  %2628 = vmatprep.subr.mxu0 0.0
  %2629 = vmatpush1.msra.mxu0 0.0
  %2630 = vmatprep.subr.mxu0 0.0
  %2631 = vmatpush1.msra.mxu0 0.0
  %2632 = vmatprep.subr.mxu0 0.0
  %2633 = vmatpush1.msra.mxu0 0.0
  %2634 = vmatprep.subr.mxu0 0.0
  %2635 = vmatpush1.msra.mxu0 0.0
  %2636 = vmatprep.subr.mxu0 0.0
  %2637 = vmatpush1.msra.mxu0 0.0
  %2638 = vmatprep.mubr.f32.mxu0 %v2572
  %2639 = vmatmul.mubr.f32.gmra.mrb[0].mxu0 %v2566
  %v2640 = vpop.f32.mrb[0].mxu0
  %v2641 = vadd.f32 %v2559, %v2640
  %v2642 = vpop.f32.mrb[0].mxu0
  %2643 = vdwg.mxu0
  %v2644 = vmul.f32 %v2641, 0.005
  %v2645 = vmul.f32 %v2644, %v2644
  %2647 = vrot.lane.b32.xlu0 %v2645, 64
  %v2648 = vpop.permute.xlu0 %2647
  %v2650 = vsub.f32 %v2644, %v2648
  %v2651 = vmax.f32 %v2650, 0.0
  %v2652 = vld [vmem:[%s3] sm:$0x1]
  %v2653 = vadd.f32 %v2651, 1e-05
  %v2654 = vrsqrt.pop %v2653
  %2656 = vrot.lane.b32.xlu0 %v2654, 64
  %v2657 = vpop.permute.xlu0 %2656
  %v2659 = vmul.f32 %v2652, %v2657
  %v2660 = vld [vmem:[%s3 + $0x1] sm:$0x1]
  %v2661 = vmul.f32 %v2644, %v2659
  %v2662 = vsub.f32 %v2660, %v2661
  %v2663 = vlaneseq
  %v2664 = vshrl.u32 %v2663, 7
  %v2665 = vsub.s32 0, %v2664
  %v2666 = vrot.slane %v2659, %v2665
  %v2667 = vlaneseq
  %v2668 = vshrl.u32 %v2667, 7
  %v2669 = vsub.s32 0, %v2668
  %v2670 = vrot.slane %v2662, %v2669
  %v2671 = vld [vmem:[#allocation2] sm:$0xff]
  %v2672 = vld [vmem:[#allocation2 + $0x8] sm:$0xff]
  %v2673 = vld [vmem:[#allocation2 + $0x10] sm:$0xff]
  %v2674 = vld [vmem:[#allocation2 + $0x18] sm:$0xff]
  %v2675 = vmul.f32 %v2671, %v2666
  %v2676 = vmul.f32 %v2672, %v2666
  %v2677 = vadd.f32 %v2675, %v2670
  %v2678 = vadd.f32 %v2676, %v2670
  %v2679 = vmul.f32 %v2673, %v2666
  %v2680 = vmul.f32 %v2674, %v2666
  %v2681 = vadd.f32 %v2679, %v2670
  %v2682 = vadd.f32 %v2680, %v2670
  %v2683 = vmax.f32 %v2677, %v2681
  %v2684 = vmax.f32 %v2678, %v2682
  %v2685 = vmax.f32 %v2683, 0.0
  %v2686 = vmax.f32 %v2684, 0.0
  %2687 = vst.msk [vmem:[#allocation3] sm:$0xff] %vm337, %v2685
  %2688 = vst.msk [vmem:[#allocation3 + $0x8] sm:$0xff] %vm337, %v2686
  %v2689 = vld [vmem:[#allocation2 + $0x20] sm:$0xff]
  %v2690 = vld [vmem:[#allocation2 + $0x28] sm:$0xff]
  %v2691 = vld [vmem:[#allocation2 + $0x30] sm:$0xff]
  %v2692 = vld [vmem:[#allocation2 + $0x38] sm:$0xff]
  %v2693 = vmul.f32 %v2689, %v2666
  %v2694 = vmul.f32 %v2690, %v2666
  %v2695 = vadd.f32 %v2693, %v2670
  %v2696 = vadd.f32 %v2694, %v2670
  %v2697 = vmul.f32 %v2691, %v2666
  %v2698 = vmul.f32 %v2692, %v2666
  %v2699 = vadd.f32 %v2697, %v2670
  %v2700 = vadd.f32 %v2698, %v2670
  %v2701 = vmax.f32 %v2695, %v2699
  %v2702 = vmax.f32 %v2696, %v2700
  %v2703 = vmax.f32 %v2701, 0.0
  %v2704 = vmax.f32 %v2702, 0.0
  %s2705 = scalar_lea.vmem [#allocation3], 16
  %2706 = vst.msk [vmem:[%s2705] sm:$0xff] %vm337, %v2703
  %2707 = vst.msk [vmem:[%s2705 + $0x8] sm:$0xff] %vm337, %v2704
  %v2708 = vld [vmem:[#allocation2 + $0x40] sm:$0xff]
  %v2709 = vld [vmem:[#allocation2 + $0x48] sm:$0xff]
  %v2710 = vld [vmem:[#allocation2 + $0x50] sm:$0xff]
  %v2711 = vld [vmem:[#allocation2 + $0x58] sm:$0xff]
  %v2712 = vmul.f32 %v2708, %v2666
  %v2713 = vmul.f32 %v2709, %v2666
  %v2714 = vadd.f32 %v2712, %v2670
  %v2715 = vadd.f32 %v2713, %v2670
  %v2716 = vmul.f32 %v2710, %v2666
  %v2717 = vmul.f32 %v2711, %v2666
  %v2718 = vadd.f32 %v2716, %v2670
  %v2719 = vadd.f32 %v2717, %v2670
  %v2720 = vmax.f32 %v2714, %v2718
  %v2721 = vmax.f32 %v2715, %v2719
  %v2722 = vmax.f32 %v2720, 0.0
  %v2723 = vmax.f32 %v2721, 0.0
  %s2724 = scalar_lea.vmem [#allocation3], 32
  %2725 = vst.msk [vmem:[%s2724] sm:$0xff] %vm337, %v2722
  %2726 = vst.msk [vmem:[%s2724 + $0x8] sm:$0xff] %vm337, %v2723
  %v2727 = vld [vmem:[#allocation2 + $0x60] sm:$0xff]
  %v2728 = vld [vmem:[#allocation2 + $0x68] sm:$0xff]
  %v2729 = vld [vmem:[#allocation2 + $0x70] sm:$0xff]
  %v2730 = vld [vmem:[#allocation2 + $0x78] sm:$0xff]
  %v2731 = vmul.f32 %v2727, %v2666
  %v2732 = vmul.f32 %v2728, %v2666
  %v2733 = vadd.f32 %v2731, %v2670
  %v2734 = vadd.f32 %v2732, %v2670
  %v2735 = vmul.f32 %v2729, %v2666
  %v2736 = vmul.f32 %v2730, %v2666
  %v2737 = vadd.f32 %v2735, %v2670
  %v2738 = vadd.f32 %v2736, %v2670
  %v2739 = vmax.f32 %v2733, %v2737
  %v2740 = vmax.f32 %v2734, %v2738
  %v2741 = vmax.f32 %v2739, 0.0
  %v2742 = vmax.f32 %v2740, 0.0
  %s2743 = scalar_lea.vmem [#allocation3], 48
  %2744 = vst.msk [vmem:[%s2743] sm:$0xff] %vm337, %v2741
  %2745 = vst.msk [vmem:[%s2743 + $0x8] sm:$0xff] %vm337, %v2742
  %v2746 = vld [vmem:[#allocation2 + $0x80] sm:$0xff]
  %v2747 = vld [vmem:[#allocation2 + $0x88] sm:$0xff]
  %v2748 = vld [vmem:[#allocation2 + $0x90] sm:$0xff]
  %v2749 = vld [vmem:[#allocation2 + $0x98] sm:$0xff]
  %v2750 = vmul.f32 %v2746, %v2666
  %v2751 = vmul.f32 %v2747, %v2666
  %v2752 = vadd.f32 %v2750, %v2670
  %v2753 = vadd.f32 %v2751, %v2670
  %v2754 = vmul.f32 %v2748, %v2666
  %v2755 = vmul.f32 %v2749, %v2666
  %v2756 = vadd.f32 %v2754, %v2670
  %v2757 = vadd.f32 %v2755, %v2670
  %v2758 = vmax.f32 %v2752, %v2756
  %v2759 = vmax.f32 %v2753, %v2757
  %v2760 = vmax.f32 %v2758, 0.0
  %v2761 = vmax.f32 %v2759, 0.0
  %s2762 = scalar_lea.vmem [#allocation3], 64
  %2763 = vst.msk [vmem:[%s2762] sm:$0xff] %vm337, %v2760
  %2764 = vst.msk [vmem:[%s2762 + $0x8] sm:$0xff] %vm337, %v2761
  %v2765 = vld [vmem:[#allocation3] ss:$2 sm:$0x1f]
  %s2766 = scalar_lea.vmem [#allocation3], 16
  %v2767 = vld [vmem:[%s2766] ss:$2 sm:$0x1f]
  %s2768 = scalar_lea.vmem [#allocation3], 32
  %v2769 = vld [vmem:[%s2768] ss:$2 sm:$0x1f]
  %s2770 = scalar_lea.vmem [#allocation3], 48
  %v2771 = vld [vmem:[%s2770] ss:$2 sm:$0x1f]
  %s2772 = scalar_lea.vmem [#allocation3], 64
  %v2773 = vld [vmem:[%s2772] ss:$2 sm:$0x1f]
  %s2774 = scalar_lea.vmem [#allocation3], 1
  %v2775 = vld [vmem:[%s2774] ss:$2 sm:$0x1f]
  %s2776 = scalar_lea.vmem [#allocation3], 17
  %v2777 = vld [vmem:[%s2776] ss:$2 sm:$0x1f]
  %s2778 = scalar_lea.vmem [#allocation3], 33
  %v2779 = vld [vmem:[%s2778] ss:$2 sm:$0x1f]
  %s2780 = scalar_lea.vmem [#allocation3], 49
  %v2781 = vld [vmem:[%s2780] ss:$2 sm:$0x1f]
  %s2782 = scalar_lea.vmem [#allocation3], 65
  %v2783 = vld [vmem:[%s2782] ss:$2 sm:$0x1f]
  %v2784 = vmax.f32 %v2765, %v2775
  %v2785 = vmax.f32 %v2767, %v2777
  %v2786 = vmax.f32 %v2769, %v2779
  %v2787 = vmax.f32 %v2771, %v2781
  %v2788 = vmax.f32 %v2773, %v2783
  %v2789 = vpack.c.bf16 %v2784, %v2784
  %v2790 = vpack.c.bf16 %v2785, %v2785
  %v2791 = vpack.c.bf16 %v2786, %v2786
  %v2792 = vpack.c.bf16 %v2787, %v2787
  %v2793 = vpack.c.bf16 %v2788, %v2788
  %vm2794 = vcmask 518144
  %vm2795 = vsmask.f32 2304
  %vm2796 = vmand %vm2794, %vm2795
  %v2797 = vld [vmem:[%s4] sm:$0x7]
  %v2798 = vsel %vm2796, %v2789, %v2797
  %2799 = vst [vmem:[%s4] sm:$0x7] %v2798
  %v2800 = vld [vmem:[%s4 + $0x4] sm:$0x7]
  %v2801 = vsel %vm2796, %v2790, %v2800
  %2802 = vst [vmem:[%s4 + $0x4] sm:$0x7] %v2801
  %v2803 = vld [vmem:[%s4 + $0x8] sm:$0x7]
  %v2804 = vsel %vm2796, %v2791, %v2803
  %2805 = vst [vmem:[%s4 + $0x8] sm:$0x7] %v2804
  %v2806 = vld [vmem:[%s4 + $0xc] sm:$0x7]
  %v2807 = vsel %vm2796, %v2792, %v2806
  %2808 = vst [vmem:[%s4 + $0xc] sm:$0x7] %v2807
  %v2809 = vld [vmem:[%s4 + $0x10] sm:$0x7]
  %v2810 = vsel %vm2796, %v2793, %v2809
  %2811 = vst [vmem:[%s4 + $0x10] sm:$0x7] %v2810
  %v2812 = vld [vmem:[%s2337] sm:$0xff]
  %v2813 = vld [vmem:[%s2337 + $0x8] sm:$0xff]
  %v2814 = vld [vmem:[%s2337 + $0x10] sm:$0xff]
  %v2815 = vld [vmem:[%s2337 + $0x18] sm:$0xff]
  %v2816 = vmul.f32 %v2812, %v2666
  %v2817 = vmul.f32 %v2813, %v2666
  %v2818 = vadd.f32 %v2816, %v2670
  %v2819 = vadd.f32 %v2817, %v2670
  %v2820 = vmul.f32 %v2814, %v2666
  %v2821 = vmul.f32 %v2815, %v2666
  %v2822 = vadd.f32 %v2820, %v2670
  %v2823 = vadd.f32 %v2821, %v2670
  %v2824 = vmax.f32 %v2818, %v2822
  %v2825 = vmax.f32 %v2819, %v2823
  %v2826 = vmax.f32 %v2824, 0.0
  %v2827 = vmax.f32 %v2825, 0.0
  %2828 = vst.msk [vmem:[#allocation3] sm:$0xff] %vm337, %v2826
  %2829 = vst.msk [vmem:[#allocation3 + $0x8] sm:$0xff] %vm337, %v2827
  %v2830 = vld [vmem:[%s2337 + $0x20] sm:$0xff]
  %v2831 = vld [vmem:[%s2337 + $0x28] sm:$0xff]
  %v2832 = vld [vmem:[%s2337 + $0x30] sm:$0xff]
  %v2833 = vld [vmem:[%s2337 + $0x38] sm:$0xff]
  %v2834 = vmul.f32 %v2830, %v2666
  %v2835 = vmul.f32 %v2831, %v2666
  %v2836 = vadd.f32 %v2834, %v2670
  %v2837 = vadd.f32 %v2835, %v2670
  %v2838 = vmul.f32 %v2832, %v2666
  %v2839 = vmul.f32 %v2833, %v2666
  %v2840 = vadd.f32 %v2838, %v2670
  %v2841 = vadd.f32 %v2839, %v2670
  %v2842 = vmax.f32 %v2836, %v2840
  %v2843 = vmax.f32 %v2837, %v2841
  %v2844 = vmax.f32 %v2842, 0.0
  %v2845 = vmax.f32 %v2843, 0.0
  %2846 = vst.msk [vmem:[%s2705] sm:$0xff] %vm337, %v2844
  %2847 = vst.msk [vmem:[%s2705 + $0x8] sm:$0xff] %vm337, %v2845
  %v2848 = vld [vmem:[%s2337 + $0x40] sm:$0xff]
  %v2849 = vld [vmem:[%s2337 + $0x48] sm:$0xff]
  %v2850 = vld [vmem:[%s2337 + $0x50] sm:$0xff]
  %v2851 = vld [vmem:[%s2337 + $0x58] sm:$0xff]
  %v2852 = vmul.f32 %v2848, %v2666
  %v2853 = vmul.f32 %v2849, %v2666
  %v2854 = vadd.f32 %v2852, %v2670
  %v2855 = vadd.f32 %v2853, %v2670
  %v2856 = vmul.f32 %v2850, %v2666
  %v2857 = vmul.f32 %v2851, %v2666
  %v2858 = vadd.f32 %v2856, %v2670
  %v2859 = vadd.f32 %v2857, %v2670
  %v2860 = vmax.f32 %v2854, %v2858
  %v2861 = vmax.f32 %v2855, %v2859
  %v2862 = vmax.f32 %v2860, 0.0
  %v2863 = vmax.f32 %v2861, 0.0
  %2864 = vst.msk [vmem:[%s2724] sm:$0xff] %vm337, %v2862
  %2865 = vst.msk [vmem:[%s2724 + $0x8] sm:$0xff] %vm337, %v2863
  %v2866 = vld [vmem:[%s2337 + $0x60] sm:$0xff]
  %v2867 = vld [vmem:[%s2337 + $0x68] sm:$0xff]
  %v2868 = vld [vmem:[%s2337 + $0x70] sm:$0xff]
  %v2869 = vld [vmem:[%s2337 + $0x78] sm:$0xff]
  %v2870 = vmul.f32 %v2866, %v2666
  %v2871 = vmul.f32 %v2867, %v2666
  %v2872 = vadd.f32 %v2870, %v2670
  %v2873 = vadd.f32 %v2871, %v2670
  %v2874 = vmul.f32 %v2868, %v2666
  %v2875 = vmul.f32 %v2869, %v2666
  %v2876 = vadd.f32 %v2874, %v2670
  %v2877 = vadd.f32 %v2875, %v2670
  %v2878 = vmax.f32 %v2872, %v2876
  %v2879 = vmax.f32 %v2873, %v2877
  %v2880 = vmax.f32 %v2878, 0.0
  %v2881 = vmax.f32 %v2879, 0.0
  %2882 = vst.msk [vmem:[%s2743] sm:$0xff] %vm337, %v2880
  %2883 = vst.msk [vmem:[%s2743 + $0x8] sm:$0xff] %vm337, %v2881
  %v2884 = vld [vmem:[%s2337 + $0x80] sm:$0xff]
  %v2885 = vld [vmem:[%s2337 + $0x88] sm:$0xff]
  %v2886 = vld [vmem:[%s2337 + $0x90] sm:$0xff]
  %v2887 = vld [vmem:[%s2337 + $0x98] sm:$0xff]
  %v2888 = vmul.f32 %v2884, %v2666
  %v2889 = vmul.f32 %v2885, %v2666
  %v2890 = vadd.f32 %v2888, %v2670
  %v2891 = vadd.f32 %v2889, %v2670
  %v2892 = vmul.f32 %v2886, %v2666
  %v2893 = vmul.f32 %v2887, %v2666
  %v2894 = vadd.f32 %v2892, %v2670
  %v2895 = vadd.f32 %v2893, %v2670
  %v2896 = vmax.f32 %v2890, %v2894
  %v2897 = vmax.f32 %v2891, %v2895
  %v2898 = vmax.f32 %v2896, 0.0
  %v2899 = vmax.f32 %v2897, 0.0
  %2900 = vst.msk [vmem:[%s2762] sm:$0xff] %vm337, %v2898
  %2901 = vst.msk [vmem:[%s2762 + $0x8] sm:$0xff] %vm337, %v2899
  %v2902 = vld [vmem:[#allocation3] ss:$2 sm:$0x1f]
  %v2903 = vld [vmem:[%s2766] ss:$2 sm:$0x1f]
  %v2904 = vld [vmem:[%s2768] ss:$2 sm:$0x1f]
  %v2905 = vld [vmem:[%s2770] ss:$2 sm:$0x1f]
  %v2906 = vld [vmem:[%s2772] ss:$2 sm:$0x1f]
  %v2907 = vld [vmem:[%s2774] ss:$2 sm:$0x1f]
  %v2908 = vld [vmem:[%s2776] ss:$2 sm:$0x1f]
  %v2909 = vld [vmem:[%s2778] ss:$2 sm:$0x1f]
  %v2910 = vld [vmem:[%s2780] ss:$2 sm:$0x1f]
  %v2911 = vld [vmem:[%s2782] ss:$2 sm:$0x1f]
  %v2912 = vmax.f32 %v2902, %v2907
  %v2913 = vmax.f32 %v2903, %v2908
  %v2914 = vmax.f32 %v2904, %v2909
  %v2915 = vmax.f32 %v2905, %v2910
  %v2916 = vmax.f32 %v2906, %v2911
  %v2917 = vpack.c.bf16 %v2912, %v2912
  %v2918 = vpack.c.bf16 %v2913, %v2913
  %v2919 = vpack.c.bf16 %v2914, %v2914
  %v2920 = vpack.c.bf16 %v2915, %v2915
  %v2921 = vpack.c.bf16 %v2916, %v2916
  %s2922 = scalar_lea.vmem %s4, 20
  %v2923 = vld [vmem:[%s2922] sm:$0x7]
  %v2924 = vsel %vm2796, %v2917, %v2923
  %2925 = vst [vmem:[%s2922] sm:$0x7] %v2924
  %v2926 = vld [vmem:[%s2922 + $0x4] sm:$0x7]
  %v2927 = vsel %vm2796, %v2918, %v2926
  %2928 = vst [vmem:[%s2922 + $0x4] sm:$0x7] %v2927
  %v2929 = vld [vmem:[%s2922 + $0x8] sm:$0x7]
  %v2930 = vsel %vm2796, %v2919, %v2929
  %2931 = vst [vmem:[%s2922 + $0x8] sm:$0x7] %v2930
  %v2932 = vld [vmem:[%s2922 + $0xc] sm:$0x7]
  %v2933 = vsel %vm2796, %v2920, %v2932
  %2934 = vst [vmem:[%s2922 + $0xc] sm:$0x7] %v2933
  %v2935 = vld [vmem:[%s2922 + $0x10] sm:$0x7]
  %v2936 = vsel %vm2796, %v2921, %v2935
  %2937 = vst [vmem:[%s2922 + $0x10] sm:$0x7] %v2936
  // Predicated region
  $region18: #{convnet_forward.4} parent=0 // pred_check
    _
  $region19: #{convnet_forward.4} parent=0 // pred_check_branch
    %2939 = sbr.rel (0) target = $region21
  $region20: #{convnet_forward.4} parent=0 // pred_region
    _
  $region21: #{convnet_forward.4} parent=0 // pred_fallthru
    _
  // Predicated region
  $region22: #{convnet_forward.4} parent=0 // pred_check
    _
  $region23: #{convnet_forward.4} parent=0 // pred_check_branch
    %2941 = sbr.rel (0) target = $region25
  $region24: #{convnet_forward.4} parent=0 // pred_region
    _
  $region25: #{convnet_forward.4} parent=0 // pred_fallthru
    _

// kernel: convnet_forward.3
$region0: #{convnet_forward.3}
  #allocation0 [shape = 'u32[]', space=smem, size = 0x4, offset = 0x4, fixed_abs, tag = 'smem constant byte address 0x4 - core index']
  #allocation1 [shape = 'u32[144,128]{1,0:T(1,128)}', space=vmem, size = 0x12000, scoped, tag = 'internal scratch']
  #allocation2 [shape = 'f32[2,480,64]{2,1,0:T(8,128)}', space=vmem, size = 0x78000, scoped, tag = 'scratch operand']
  #allocation3 [shape = 'f32[10,24,64]{2,1,0:T(8,128)}', space=vmem, size = 0x1e000, scoped, tag = 'scratch operand']
  %s0 = inlined_call_operand.vmem [shape: bf16[2,536,8], index: 0, kind: input, shape index: {}]
  %s1 = inlined_call_operand.vmem [shape: bf16[72,64], index: 1, kind: input, shape index: {}]
  %s2 = inlined_call_operand.vmem [shape: f32[1,480], index: 2, kind: input, shape index: {}]
  %s3 = inlined_call_operand.vmem [shape: f32[2,64], index: 3, kind: input, shape index: {}]
  %s4 = inlined_call_operand.vmem [shape: bf16[2,10,10,64], index: 4, kind: output, shape index: {}]
  %s5 = sld [smem:[#allocation0]]
  $region26: #{convnet_forward.3} parent=0
    _
  %s7 = ssub.s32 1, %s5
  %s8 = scalar_select 0, %s7, %s5
  // Predicated region
  $region2: #{convnet_forward.3} parent=0 // pred_check
    _
  $region3: #{convnet_forward.3} parent=0 // pred_check_branch
    %10 = sbr.rel (0) target = $region5
  $region4: #{convnet_forward.3} parent=0 // pred_region
    _
  $region5: #{convnet_forward.3} parent=0 // pred_fallthru
    _
  // Predicated region
  $region6: #{convnet_forward.3} parent=0 // pred_check
    _
  $region7: #{convnet_forward.3} parent=0 // pred_check_branch
    %12 = sbr.rel (0) target = $region9
  $region8: #{convnet_forward.3} parent=0 // pred_region
    _
  $region9: #{convnet_forward.3} parent=0 // pred_fallthru
    _
  // Predicated region
  $region10: #{convnet_forward.3} parent=0 // pred_check
    _
  $region11: #{convnet_forward.3} parent=0 // pred_check_branch
    %14 = sbr.rel (0) target = $region13
  $region12: #{convnet_forward.3} parent=0 // pred_region
    _
  $region13: #{convnet_forward.3} parent=0 // pred_fallthru
    _
  // Predicated region
  $region14: #{convnet_forward.3} parent=0 // pred_check
    _
  $region15: #{convnet_forward.3} parent=0 // pred_check_branch
    %16 = sbr.rel (0) target = $region17
  $region16: #{convnet_forward.3} parent=0 // pred_region
    _
  $region17: #{convnet_forward.3} parent=0 // pred_fallthru
    _
  %v18 = vld [vmem:[%s0] sm:$0xf]
  %v19 = vld [vmem:[%s0 + $0x4] sm:$0xf]
  %v20 = vld [vmem:[%s0 + $0x8] sm:$0xf]
  %v21 = vld [vmem:[%s0 + $0xc] sm:$0xf]
  %v22 = vld [vmem:[%s0 + $0x10] sm:$0xf]
  %v23 = vld [vmem:[%s0 + $0x14] sm:$0xf]
  %v24 = vld [vmem:[%s0 + $0x18] sm:$0xf]
  %v25 = vld [vmem:[%s0 + $0x1c] sm:$0xf]
  %v26 = vld [vmem:[%s0 + $0x20] sm:$0xf]
  %v27 = vld [vmem:[%s0 + $0x24] sm:$0xf]
  %v28 = vld [vmem:[%s0 + $0x28] sm:$0xf]
  %v29 = vld [vmem:[%s0 + $0x2c] sm:$0xf]
  %v30 = vld [vmem:[%s0 + $0x30] sm:$0xf]
  %v31 = vld [vmem:[%s0 + $0x34] sm:$0xf]
  %v32 = vld [vmem:[%s0 + $0x38] sm:$0xf]
  %v33 = vld [vmem:[%s0 + $0x3c] sm:$0xf]
  %v34 = vld [vmem:[%s0 + $0x40] sm:$0xf]
  %v35 = vld [vmem:[%s0 + $0x44] sm:$0xf]
  %v36 = vld [vmem:[%s0 + $0x48] sm:$0xf]
  %v37 = vld [vmem:[%s0 + $0x4c] sm:$0xf]
  %v38 = vld [vmem:[%s0 + $0x50] sm:$0xf]
  %v39 = vld [vmem:[%s0 + $0x54] sm:$0xf]
  %v40 = vld [vmem:[%s0 + $0x58] sm:$0xf]
  %v41 = vld [vmem:[%s0 + $0x5c] sm:$0xf]
  %v42 = vld [vmem:[%s0 + $0x60] sm:$0xf]
  %v43 = vld [vmem:[%s0 + $0x64] sm:$0xf]
  %v44 = vld [vmem:[%s0 + $0x68] sm:$0xf]
  %v45 = vld [vmem:[%s0 + $0x6c] sm:$0xf]
  %v46 = vld [vmem:[%s0 + $0x70] sm:$0xf]
  %v47 = vld [vmem:[%s0 + $0x74] sm:$0xf]
  %v48 = vld [vmem:[%s0 + $0x78] sm:$0xf]
  %v49 = vld [vmem:[%s0 + $0x7c] sm:$0xf]
  %v50 = vld [vmem:[%s0 + $0x80] sm:$0xf]
  %v51 = vld [vmem:[%s0 + $0x84] sm:$0xf]
  %v52 = vld [vmem:[%s0 + $0x88] sm:$0xf]
  %v53 = vld [vmem:[%s0 + $0x8c] sm:$0xf]
  %v54 = vld [vmem:[%s0 + $0x90] sm:$0xf]
  %v55 = vld [vmem:[%s0 + $0x94] sm:$0xf]
  %v56 = vld [vmem:[%s0 + $0x98] sm:$0xf]
  %v57 = vld [vmem:[%s0 + $0x9c] sm:$0xf]
  %v58 = vld [vmem:[%s0 + $0xa0] sm:$0xf]
  %v59 = vld [vmem:[%s0 + $0xa4] sm:$0xf]
  %v60 = vld [vmem:[%s0 + $0xa8] sm:$0xf]
  %v61 = vld [vmem:[%s0 + $0xac] sm:$0xf]
  %v62 = vld [vmem:[%s0 + $0xb0] sm:$0xf]
  %v63 = vld [vmem:[%s0 + $0xb4] sm:$0xf]
  %v64 = vld [vmem:[%s0 + $0xb8] sm:$0xf]
  %v65 = vld [vmem:[%s0 + $0xbc] sm:$0xf]
  %v66 = vld [vmem:[%s0 + $0xc0] sm:$0xf]
  %v67 = vld [vmem:[%s0 + $0xc4] sm:$0xf]
  %v68 = vld [vmem:[%s0 + $0xc8] sm:$0xf]
  %v69 = vld [vmem:[%s0 + $0xcc] sm:$0xf]
  %v70 = vld [vmem:[%s0 + $0xd0] sm:$0xf]
  %v71 = vld [vmem:[%s0 + $0xd4] sm:$0xf]
  %v72 = vld [vmem:[%s0 + $0xd8] sm:$0xf]
  %v73 = vld [vmem:[%s0 + $0xdc] sm:$0xf]
  %v74 = vld [vmem:[%s0 + $0xe0] sm:$0xf]
  %v75 = vld [vmem:[%s0 + $0xe4] sm:$0xf]
  %v76 = vld [vmem:[%s0 + $0xe8] sm:$0xf]
  %v77 = vld [vmem:[%s0 + $0xec] sm:$0xf]
  %v78 = vld [vmem:[%s0 + $0xf0] sm:$0x1]
  %v79 = vld [vmem:[%s0] sm:$0xe]
  %v80 = vld [vmem:[%s0 + $0xf0] sm:$0xf]
  %v81 = vld [vmem:[%s0 + $0xf4] sm:$0xf]
  %v82 = vld [vmem:[%s0 + $0xf8] sm:$0xf]
  %v83 = vld [vmem:[%s0 + $0xfc] sm:$0x1]
  %v84 = vld [vmem:[%s0 + $0xc] sm:$0xe]
  %v85 = vld [vmem:[%s0 + $0xfc] sm:$0xf]
  %v86 = vld [vmem:[%s0 + $0x100] sm:$0xf]
  %v87 = vld [vmem:[%s0 + $0x104] sm:$0xf]
  %v88 = vld [vmem:[%s0 + $0x108] sm:$0x1]
  %v89 = vld [vmem:[%s0 + $0x18] sm:$0xe]
  %v150 = vunpack.c.l.b16 %v18
  %v151 = vunpack.c.l.b16 %v19
  %v152 = vunpack.c.l.b16 %v20
  %v153 = vunpack.c.l.b16 %v21
  %v154 = vunpack.c.l.b16 %v22
  %v155 = vunpack.c.l.b16 %v23
  %v156 = vunpack.c.l.b16 %v24
  %v157 = vunpack.c.l.b16 %v25
  %v158 = vunpack.c.l.b16 %v26
  %v159 = vunpack.c.l.b16 %v27
  %v160 = vunpack.c.l.b16 %v28
  %v161 = vunpack.c.l.b16 %v29
  %v162 = vunpack.c.l.b16 %v30
  %v163 = vunpack.c.l.b16 %v31
  %v164 = vunpack.c.l.b16 %v32
  %v165 = vunpack.c.l.b16 %v33
  %v166 = vunpack.c.l.b16 %v34
  %v167 = vunpack.c.l.b16 %v35
  %v168 = vunpack.c.l.b16 %v36
  %v169 = vunpack.c.l.b16 %v37
  %v170 = vunpack.c.l.b16 %v38
  %v171 = vunpack.c.l.b16 %v39
  %v172 = vunpack.c.l.b16 %v40
  %v173 = vunpack.c.l.b16 %v41
  %v174 = vunpack.c.l.b16 %v42
  %v175 = vunpack.c.l.b16 %v43
  %v176 = vunpack.c.l.b16 %v44
  %v177 = vunpack.c.l.b16 %v45
  %v178 = vunpack.c.l.b16 %v46
  %v179 = vunpack.c.l.b16 %v47
  %v180 = vunpack.c.l.b16 %v48
  %v181 = vunpack.c.l.b16 %v49
  %v182 = vunpack.c.l.b16 %v50
  %v183 = vunpack.c.l.b16 %v51
  %v184 = vunpack.c.l.b16 %v52
  %v185 = vunpack.c.l.b16 %v53
  %v186 = vunpack.c.l.b16 %v54
  %v187 = vunpack.c.l.b16 %v55
  %v188 = vunpack.c.l.b16 %v56
  %v189 = vunpack.c.l.b16 %v57
  %v190 = vunpack.c.l.b16 %v58
  %v191 = vunpack.c.l.b16 %v59
  %v192 = vunpack.c.l.b16 %v60
  %v193 = vunpack.c.l.b16 %v61
  %v194 = vunpack.c.l.b16 %v62
  %v195 = vunpack.c.l.b16 %v63
  %v196 = vunpack.c.l.b16 %v64
  %v197 = vunpack.c.l.b16 %v65
  %v198 = vunpack.c.l.b16 %v66
  %v199 = vunpack.c.l.b16 %v67
  %v200 = vunpack.c.l.b16 %v68
  %v201 = vunpack.c.l.b16 %v69
  %v202 = vunpack.c.l.b16 %v70
  %v203 = vunpack.c.l.b16 %v71
  %v204 = vunpack.c.l.b16 %v72
  %v205 = vunpack.c.l.b16 %v73
  %v206 = vunpack.c.l.b16 %v74
  %v207 = vunpack.c.l.b16 %v75
  %v208 = vunpack.c.l.b16 %v76
  %v209 = vunpack.c.l.b16 %v77
  %v210 = vpack.c.b16 %v151, %v150
  %v211 = vpack.c.b16 %v153, %v152
  %v212 = vpack.c.b16 %v155, %v154
  %v213 = vpack.c.b16 %v157, %v156
  %v214 = vpack.c.b16 %v159, %v158
  %v215 = vpack.c.b16 %v161, %v160
  %v216 = vpack.c.b16 %v163, %v162
  %v217 = vpack.c.b16 %v165, %v164
  %v218 = vpack.c.b16 %v167, %v166
  %v219 = vpack.c.b16 %v169, %v168
  %v220 = vpack.c.b16 %v171, %v170
  %v221 = vpack.c.b16 %v173, %v172
  %v222 = vpack.c.b16 %v175, %v174
  %v223 = vpack.c.b16 %v177, %v176
  %v224 = vpack.c.b16 %v179, %v178
  %v225 = vpack.c.b16 %v181, %v180
  %v226 = vpack.c.b16 %v183, %v182
  %v227 = vpack.c.b16 %v185, %v184
  %v228 = vpack.c.b16 %v187, %v186
  %v229 = vpack.c.b16 %v189, %v188
  %v230 = vpack.c.b16 %v191, %v190
  %v231 = vpack.c.b16 %v193, %v192
  %v232 = vpack.c.b16 %v195, %v194
  %v233 = vpack.c.b16 %v197, %v196
  %v234 = vpack.c.b16 %v199, %v198
  %v235 = vpack.c.b16 %v201, %v200
  %v236 = vpack.c.b16 %v203, %v202
  %v237 = vpack.c.b16 %v205, %v204
  %v238 = vpack.c.b16 %v207, %v206
  %v239 = vpack.c.b16 %v209, %v208
  %v241 = vunpack.c.l.b16 %v78
  %v242 = vpack.c.b16 %v241, %v241
  %vm243 = vsmask.f32 7424
  %v245 = vshrl.u32 %v210, 16
  %v247 = vshll.u32 %v210, 16
  %v249 = vrot.slane %v247, 1
  %v250 = vor.u32 %v245, %v249
  %v252 = vshll.u32 %v211, 16
  %v254 = vrot.slane %v252, 1
  %v255 = vsel %vm243, %v250, %v254
  %v256 = vshrl.u32 %v211, 16
  %v258 = vor.u32 %v256, %v254
  %v260 = vshll.u32 %v212, 16
  %v262 = vrot.slane %v260, 1
  %v263 = vsel %vm243, %v258, %v262
  %v264 = vshrl.u32 %v212, 16
  %v266 = vor.u32 %v264, %v262
  %v268 = vshll.u32 %v213, 16
  %v270 = vrot.slane %v268, 1
  %v271 = vsel %vm243, %v266, %v270
  %v272 = vshrl.u32 %v213, 16
  %v274 = vor.u32 %v272, %v270
  %v276 = vshll.u32 %v214, 16
  %v278 = vrot.slane %v276, 1
  %v279 = vsel %vm243, %v274, %v278
  %v280 = vshrl.u32 %v214, 16
  %v282 = vor.u32 %v280, %v278
  %v284 = vshll.u32 %v215, 16
  %v286 = vrot.slane %v284, 1
  %v287 = vsel %vm243, %v282, %v286
  %v288 = vshrl.u32 %v215, 16
  %v290 = vor.u32 %v288, %v286
  %v292 = vshll.u32 %v216, 16
  %v294 = vrot.slane %v292, 1
  %v295 = vsel %vm243, %v290, %v294
  %v296 = vshrl.u32 %v216, 16
  %v298 = vor.u32 %v296, %v294
  %v300 = vshll.u32 %v217, 16
  %v302 = vrot.slane %v300, 1
  %v303 = vsel %vm243, %v298, %v302
  %v304 = vshrl.u32 %v217, 16
  %v306 = vor.u32 %v304, %v302
  %v308 = vshll.u32 %v218, 16
  %v310 = vrot.slane %v308, 1
  %v311 = vsel %vm243, %v306, %v310
  %v312 = vshrl.u32 %v218, 16
  %v314 = vor.u32 %v312, %v310
  %v316 = vshll.u32 %v219, 16
  %v318 = vrot.slane %v316, 1
  %v319 = vsel %vm243, %v314, %v318
  %v320 = vshrl.u32 %v219, 16
  %v322 = vor.u32 %v320, %v318
  %v324 = vshll.u32 %v220, 16
  %v326 = vrot.slane %v324, 1
  %v327 = vsel %vm243, %v322, %v326
  %v328 = vshrl.u32 %v220, 16
  %v330 = vor.u32 %v328, %v326
  %v332 = vshll.u32 %v221, 16
  %v334 = vrot.slane %v332, 1
  %v335 = vsel %vm243, %v330, %v334
  %v336 = vshrl.u32 %v221, 16
  %v338 = vor.u32 %v336, %v334
  %v340 = vshll.u32 %v222, 16
  %v342 = vrot.slane %v340, 1
  %v343 = vsel %vm243, %v338, %v342
  %v344 = vshrl.u32 %v222, 16
  %v346 = vor.u32 %v344, %v342
  %v348 = vshll.u32 %v223, 16
  %v350 = vrot.slane %v348, 1
  %v351 = vsel %vm243, %v346, %v350
  %v352 = vshrl.u32 %v223, 16
  %v354 = vor.u32 %v352, %v350
  %v356 = vshll.u32 %v224, 16
  %v358 = vrot.slane %v356, 1
  %v359 = vsel %vm243, %v354, %v358
  %v360 = vshrl.u32 %v224, 16
  %v362 = vor.u32 %v360, %v358
  %v364 = vshll.u32 %v225, 16
  %v366 = vrot.slane %v364, 1
  %v367 = vsel %vm243, %v362, %v366
  %v368 = vshrl.u32 %v225, 16
  %v370 = vor.u32 %v368, %v366
  %v372 = vshll.u32 %v226, 16
  %v374 = vrot.slane %v372, 1
  %v375 = vsel %vm243, %v370, %v374
  %v376 = vshrl.u32 %v226, 16
  %v378 = vor.u32 %v376, %v374
  %v380 = vshll.u32 %v227, 16
  %v382 = vrot.slane %v380, 1
  %v383 = vsel %vm243, %v378, %v382
  %v384 = vshrl.u32 %v227, 16
  %v386 = vor.u32 %v384, %v382
  %v388 = vshll.u32 %v228, 16
  %v390 = vrot.slane %v388, 1
  %v391 = vsel %vm243, %v386, %v390
  %v392 = vshrl.u32 %v228, 16
  %v394 = vor.u32 %v392, %v390
  %v396 = vshll.u32 %v229, 16
  %v398 = vrot.slane %v396, 1
  %v399 = vsel %vm243, %v394, %v398
  %v400 = vshrl.u32 %v229, 16
  %v402 = vor.u32 %v400, %v398
  %v404 = vshll.u32 %v230, 16
  %v406 = vrot.slane %v404, 1
  %v407 = vsel %vm243, %v402, %v406
  %v408 = vshrl.u32 %v230, 16
  %v410 = vor.u32 %v408, %v406
  %v412 = vshll.u32 %v231, 16
  %v414 = vrot.slane %v412, 1
  %v415 = vsel %vm243, %v410, %v414
  %v416 = vshrl.u32 %v231, 16
  %v418 = vor.u32 %v416, %v414
  %v420 = vshll.u32 %v232, 16
  %v422 = vrot.slane %v420, 1
  %v423 = vsel %vm243, %v418, %v422
  %v424 = vshrl.u32 %v232, 16
  %v426 = vor.u32 %v424, %v422
  %v428 = vshll.u32 %v233, 16
  %v430 = vrot.slane %v428, 1
  %v431 = vsel %vm243, %v426, %v430
  %v432 = vshrl.u32 %v233, 16
  %v434 = vor.u32 %v432, %v430
  %v436 = vshll.u32 %v234, 16
  %v438 = vrot.slane %v436, 1
  %v439 = vsel %vm243, %v434, %v438
  %v440 = vshrl.u32 %v234, 16
  %v442 = vor.u32 %v440, %v438
  %v444 = vshll.u32 %v235, 16
  %v446 = vrot.slane %v444, 1
  %v447 = vsel %vm243, %v442, %v446
  %v448 = vshrl.u32 %v235, 16
  %v450 = vor.u32 %v448, %v446
  %v452 = vshll.u32 %v236, 16
  %v454 = vrot.slane %v452, 1
  %v455 = vsel %vm243, %v450, %v454
  %v456 = vshrl.u32 %v236, 16
  %v458 = vor.u32 %v456, %v454
  %v460 = vshll.u32 %v237, 16
  %v462 = vrot.slane %v460, 1
  %v463 = vsel %vm243, %v458, %v462
  %v464 = vshrl.u32 %v237, 16
  %v466 = vor.u32 %v464, %v462
  %v468 = vshll.u32 %v238, 16
  %v470 = vrot.slane %v468, 1
  %v471 = vsel %vm243, %v466, %v470
  %v472 = vshrl.u32 %v238, 16
  %v474 = vor.u32 %v472, %v470
  %v476 = vshll.u32 %v239, 16
  %v478 = vrot.slane %v476, 1
  %v479 = vsel %vm243, %v474, %v478
  %v480 = vshrl.u32 %v239, 16
  %v482 = vor.u32 %v480, %v478
  %v484 = vshll.u32 %v242, 16
  %v486 = vrot.slane %v484, 1
  %v487 = vsel %vm243, %v482, %v486
  %488 = vrot.lane.b32.xlu0 %v255, 8
  %v489 = vpop.permute.xlu0 %488
  %490 = vrot.lane.b32.xlu0 %v263, 8
  %v491 = vpop.permute.xlu0 %490
  %492 = vrot.lane.b32.xlu0 %v271, 8
  %v493 = vpop.permute.xlu0 %492
  %494 = vrot.lane.b32.xlu0 %v279, 8
  %v495 = vpop.permute.xlu0 %494
  %496 = vrot.lane.b32.xlu0 %v287, 8
  %v497 = vpop.permute.xlu0 %496
  %498 = vrot.lane.b32.xlu0 %v295, 8
  %v499 = vpop.permute.xlu0 %498
  %500 = vrot.lane.b32.xlu0 %v303, 8
  %v501 = vpop.permute.xlu0 %500
  %502 = vrot.lane.b32.xlu0 %v311, 8
  %v503 = vpop.permute.xlu0 %502
  %504 = vrot.lane.b32.xlu0 %v319, 8
  %v505 = vpop.permute.xlu0 %504
  %506 = vrot.lane.b32.xlu0 %v327, 8
  %v507 = vpop.permute.xlu0 %506
  %508 = vrot.lane.b32.xlu0 %v335, 8
  %v509 = vpop.permute.xlu0 %508
  %510 = vrot.lane.b32.xlu0 %v343, 8
  %v511 = vpop.permute.xlu0 %510
  %512 = vrot.lane.b32.xlu0 %v351, 8
  %v513 = vpop.permute.xlu0 %512
  %514 = vrot.lane.b32.xlu0 %v359, 8
  %v515 = vpop.permute.xlu0 %514
  %516 = vrot.lane.b32.xlu0 %v367, 8
  %v517 = vpop.permute.xlu0 %516
  %518 = vrot.lane.b32.xlu0 %v375, 8
  %v519 = vpop.permute.xlu0 %518
  %520 = vrot.lane.b32.xlu0 %v383, 8
  %v521 = vpop.permute.xlu0 %520
  %522 = vrot.lane.b32.xlu0 %v391, 8
  %v523 = vpop.permute.xlu0 %522
  %524 = vrot.lane.b32.xlu0 %v399, 8
  %v525 = vpop.permute.xlu0 %524
  %526 = vrot.lane.b32.xlu0 %v407, 8
  %v527 = vpop.permute.xlu0 %526
  %528 = vrot.lane.b32.xlu0 %v415, 8
  %v529 = vpop.permute.xlu0 %528
  %530 = vrot.lane.b32.xlu0 %v423, 8
  %v531 = vpop.permute.xlu0 %530
  %532 = vrot.lane.b32.xlu0 %v431, 8
  %v533 = vpop.permute.xlu0 %532
  %534 = vrot.lane.b32.xlu0 %v439, 8
  %v535 = vpop.permute.xlu0 %534
  %536 = vrot.lane.b32.xlu0 %v447, 8
  %v537 = vpop.permute.xlu0 %536
  %538 = vrot.lane.b32.xlu0 %v455, 8
  %v539 = vpop.permute.xlu0 %538
  %540 = vrot.lane.b32.xlu0 %v463, 8
  %v541 = vpop.permute.xlu0 %540
  %542 = vrot.lane.b32.xlu0 %v471, 8
  %v543 = vpop.permute.xlu0 %542
  %544 = vrot.lane.b32.xlu0 %v479, 8
  %v545 = vpop.permute.xlu0 %544
  %546 = vrot.lane.b32.xlu0 %v487, 8
  %v547 = vpop.permute.xlu0 %546
  %v549 = vunpack.c.l.b16 %v79
  %v550 = vpack.c.b16 %v151, %v549
  %vm551 = vcmask 1046528
  %v552 = vrot.slane %v550, 1
  %v553 = vrot.slane %v211, 1
  %v554 = vsel %vm551, %v552, %v553
  %v555 = vrot.slane %v212, 1
  %v556 = vsel %vm551, %v553, %v555
  %v557 = vrot.slane %v213, 1
  %v558 = vsel %vm551, %v555, %v557
  %v559 = vrot.slane %v214, 1
  %v560 = vsel %vm551, %v557, %v559
  %v561 = vrot.slane %v215, 1
  %v562 = vsel %vm551, %v559, %v561
  %v563 = vrot.slane %v216, 1
  %v564 = vsel %vm551, %v561, %v563
  %v565 = vrot.slane %v217, 1
  %v566 = vsel %vm551, %v563, %v565
  %v567 = vrot.slane %v218, 1
  %v568 = vsel %vm551, %v565, %v567
  %v569 = vrot.slane %v219, 1
  %v570 = vsel %vm551, %v567, %v569
  %v571 = vrot.slane %v220, 1
  %v572 = vsel %vm551, %v569, %v571
  %v573 = vrot.slane %v221, 1
  %v574 = vsel %vm551, %v571, %v573
  %v575 = vrot.slane %v222, 1
  %v576 = vsel %vm551, %v573, %v575
  %v577 = vrot.slane %v223, 1
  %v578 = vsel %vm551, %v575, %v577
  %v579 = vrot.slane %v224, 1
  %v580 = vsel %vm551, %v577, %v579
  %v581 = vrot.slane %v225, 1
  %v582 = vsel %vm551, %v579, %v581
  %v583 = vrot.slane %v226, 1
  %v584 = vsel %vm551, %v581, %v583
  %v585 = vrot.slane %v227, 1
  %v586 = vsel %vm551, %v583, %v585
  %v587 = vrot.slane %v228, 1
  %v588 = vsel %vm551, %v585, %v587
  %v589 = vrot.slane %v229, 1
  %v590 = vsel %vm551, %v587, %v589
  %v591 = vrot.slane %v230, 1
  %v592 = vsel %vm551, %v589, %v591
  %v593 = vrot.slane %v231, 1
  %v594 = vsel %vm551, %v591, %v593
  %v595 = vrot.slane %v232, 1
  %v596 = vsel %vm551, %v593, %v595
  %v597 = vrot.slane %v233, 1
  %v598 = vsel %vm551, %v595, %v597
  %v599 = vrot.slane %v234, 1
  %v600 = vsel %vm551, %v597, %v599
  %v601 = vrot.slane %v235, 1
  %v602 = vsel %vm551, %v599, %v601
  %v603 = vrot.slane %v236, 1
  %v604 = vsel %vm551, %v601, %v603
  %v605 = vrot.slane %v237, 1
  %v606 = vsel %vm551, %v603, %v605
  %v607 = vrot.slane %v238, 1
  %v608 = vsel %vm551, %v605, %v607
  %v609 = vrot.slane %v239, 1
  %v610 = vsel %vm551, %v607, %v609
  %v611 = vrot.slane %v242, 1
  %v612 = vsel %vm551, %v609, %v611
  %613 = vrot.lane.b32.xlu0 %v554, 16
  %v614 = vpop.permute.xlu0 %613
  %615 = vrot.lane.b32.xlu0 %v556, 16
  %v616 = vpop.permute.xlu0 %615
  %617 = vrot.lane.b32.xlu0 %v558, 16
  %v618 = vpop.permute.xlu0 %617
  %619 = vrot.lane.b32.xlu0 %v560, 16
  %v620 = vpop.permute.xlu0 %619
  %621 = vrot.lane.b32.xlu0 %v562, 16
  %v622 = vpop.permute.xlu0 %621
  %623 = vrot.lane.b32.xlu0 %v564, 16
  %v624 = vpop.permute.xlu0 %623
  %625 = vrot.lane.b32.xlu0 %v566, 16
  %v626 = vpop.permute.xlu0 %625
  %627 = vrot.lane.b32.xlu0 %v568, 16
  %v628 = vpop.permute.xlu0 %627
  %629 = vrot.lane.b32.xlu0 %v570, 16
  %v630 = vpop.permute.xlu0 %629
  %631 = vrot.lane.b32.xlu0 %v572, 16
  %v632 = vpop.permute.xlu0 %631
  %633 = vrot.lane.b32.xlu0 %v574, 16
  %v634 = vpop.permute.xlu0 %633
  %635 = vrot.lane.b32.xlu0 %v576, 16
  %v636 = vpop.permute.xlu0 %635
  %637 = vrot.lane.b32.xlu0 %v578, 16
  %v638 = vpop.permute.xlu0 %637
  %639 = vrot.lane.b32.xlu0 %v580, 16
  %v640 = vpop.permute.xlu0 %639
  %641 = vrot.lane.b32.xlu0 %v582, 16
  %v642 = vpop.permute.xlu0 %641
  %643 = vrot.lane.b32.xlu0 %v584, 16
  %v644 = vpop.permute.xlu0 %643
  %645 = vrot.lane.b32.xlu0 %v586, 16
  %v646 = vpop.permute.xlu0 %645
  %647 = vrot.lane.b32.xlu0 %v588, 16
  %v648 = vpop.permute.xlu0 %647
  %649 = vrot.lane.b32.xlu0 %v590, 16
  %v650 = vpop.permute.xlu0 %649
  %651 = vrot.lane.b32.xlu0 %v592, 16
  %v652 = vpop.permute.xlu0 %651
  %653 = vrot.lane.b32.xlu0 %v594, 16
  %v654 = vpop.permute.xlu0 %653
  %655 = vrot.lane.b32.xlu0 %v596, 16
  %v656 = vpop.permute.xlu0 %655
  %657 = vrot.lane.b32.xlu0 %v598, 16
  %v658 = vpop.permute.xlu0 %657
  %659 = vrot.lane.b32.xlu0 %v600, 16
  %v660 = vpop.permute.xlu0 %659
  %661 = vrot.lane.b32.xlu0 %v602, 16
  %v662 = vpop.permute.xlu0 %661
  %663 = vrot.lane.b32.xlu0 %v604, 16
  %v664 = vpop.permute.xlu0 %663
  %665 = vrot.lane.b32.xlu0 %v606, 16
  %v666 = vpop.permute.xlu0 %665
  %667 = vrot.lane.b32.xlu0 %v608, 16
  %v668 = vpop.permute.xlu0 %667
  %669 = vrot.lane.b32.xlu0 %v610, 16
  %v670 = vpop.permute.xlu0 %669
  %671 = vrot.lane.b32.xlu0 %v612, 16
  %v672 = vpop.permute.xlu0 %671
  %v676 = vunpack.c.l.b16 %v80
  %v677 = vunpack.c.l.b16 %v81
  %v678 = vunpack.c.l.b16 %v82
  %v679 = vpack.c.b16 %v154, %v153
  %v680 = vpack.c.b16 %v156, %v155
  %v681 = vpack.c.b16 %v158, %v157
  %v682 = vpack.c.b16 %v160, %v159
  %v683 = vpack.c.b16 %v162, %v161
  %v684 = vpack.c.b16 %v164, %v163
  %v685 = vpack.c.b16 %v166, %v165
  %v686 = vpack.c.b16 %v168, %v167
  %v687 = vpack.c.b16 %v170, %v169
  %v688 = vpack.c.b16 %v172, %v171
  %v689 = vpack.c.b16 %v174, %v173
  %v690 = vpack.c.b16 %v176, %v175
  %v691 = vpack.c.b16 %v178, %v177
  %v692 = vpack.c.b16 %v180, %v179
  %v693 = vpack.c.b16 %v182, %v181
  %v694 = vpack.c.b16 %v184, %v183
  %v695 = vpack.c.b16 %v186, %v185
  %v696 = vpack.c.b16 %v188, %v187
  %v697 = vpack.c.b16 %v190, %v189
  %v698 = vpack.c.b16 %v192, %v191
  %v699 = vpack.c.b16 %v194, %v193
  %v700 = vpack.c.b16 %v196, %v195
  %v701 = vpack.c.b16 %v198, %v197
  %v702 = vpack.c.b16 %v200, %v199
  %v703 = vpack.c.b16 %v202, %v201
  %v704 = vpack.c.b16 %v204, %v203
  %v705 = vpack.c.b16 %v206, %v205
  %v706 = vpack.c.b16 %v208, %v207
  %v707 = vpack.c.b16 %v676, %v209
  %v708 = vpack.c.b16 %v678, %v677
  %709 = vrot.lane.b32.xlu0 %v679, 24
  %v710 = vpop.permute.xlu0 %709
  %711 = vrot.lane.b32.xlu0 %v680, 24
  %v712 = vpop.permute.xlu0 %711
  %713 = vrot.lane.b32.xlu0 %v681, 24
  %v714 = vpop.permute.xlu0 %713
  %715 = vrot.lane.b32.xlu0 %v682, 24
  %v716 = vpop.permute.xlu0 %715
  %717 = vrot.lane.b32.xlu0 %v683, 24
  %v718 = vpop.permute.xlu0 %717
  %719 = vrot.lane.b32.xlu0 %v684, 24
  %v720 = vpop.permute.xlu0 %719
  %721 = vrot.lane.b32.xlu0 %v685, 24
  %v722 = vpop.permute.xlu0 %721
  %723 = vrot.lane.b32.xlu0 %v686, 24
  %v724 = vpop.permute.xlu0 %723
  %725 = vrot.lane.b32.xlu0 %v687, 24
  %v726 = vpop.permute.xlu0 %725
  %727 = vrot.lane.b32.xlu0 %v688, 24
  %v728 = vpop.permute.xlu0 %727
  %729 = vrot.lane.b32.xlu0 %v689, 24
  %v730 = vpop.permute.xlu0 %729
  %731 = vrot.lane.b32.xlu0 %v690, 24
  %v732 = vpop.permute.xlu0 %731
  %733 = vrot.lane.b32.xlu0 %v691, 24
  %v734 = vpop.permute.xlu0 %733
  %735 = vrot.lane.b32.xlu0 %v692, 24
  %v736 = vpop.permute.xlu0 %735
  %737 = vrot.lane.b32.xlu0 %v693, 24
  %v738 = vpop.permute.xlu0 %737
  %739 = vrot.lane.b32.xlu0 %v694, 24
  %v740 = vpop.permute.xlu0 %739
  %741 = vrot.lane.b32.xlu0 %v695, 24
  %v742 = vpop.permute.xlu0 %741
  %743 = vrot.lane.b32.xlu0 %v696, 24
  %v744 = vpop.permute.xlu0 %743
  %745 = vrot.lane.b32.xlu0 %v697, 24
  %v746 = vpop.permute.xlu0 %745
  %747 = vrot.lane.b32.xlu0 %v698, 24
  %v748 = vpop.permute.xlu0 %747
  %749 = vrot.lane.b32.xlu0 %v699, 24
  %v750 = vpop.permute.xlu0 %749
  %751 = vrot.lane.b32.xlu0 %v700, 24
  %v752 = vpop.permute.xlu0 %751
  %753 = vrot.lane.b32.xlu0 %v701, 24
  %v754 = vpop.permute.xlu0 %753
  %755 = vrot.lane.b32.xlu0 %v702, 24
  %v756 = vpop.permute.xlu0 %755
  %757 = vrot.lane.b32.xlu0 %v703, 24
  %v758 = vpop.permute.xlu0 %757
  %759 = vrot.lane.b32.xlu0 %v704, 24
  %v760 = vpop.permute.xlu0 %759
  %761 = vrot.lane.b32.xlu0 %v705, 24
  %v762 = vpop.permute.xlu0 %761
  %763 = vrot.lane.b32.xlu0 %v706, 24
  %v764 = vpop.permute.xlu0 %763
  %765 = vrot.lane.b32.xlu0 %v707, 24
  %v766 = vpop.permute.xlu0 %765
  %767 = vrot.lane.b32.xlu0 %v708, 24
  %v768 = vpop.permute.xlu0 %767
  %v770 = vunpack.c.l.b16 %v83
  %v771 = vpack.c.b16 %v770, %v770
  %v773 = vshrl.u32 %v679, 16
  %v775 = vshll.u32 %v679, 16
  %v777 = vrot.slane %v775, 1
  %v778 = vor.u32 %v773, %v777
  %v780 = vshll.u32 %v680, 16
  %v782 = vrot.slane %v780, 1
  %v783 = vsel %vm243, %v778, %v782
  %v784 = vshrl.u32 %v680, 16
  %v786 = vor.u32 %v784, %v782
  %v788 = vshll.u32 %v681, 16
  %v790 = vrot.slane %v788, 1
  %v791 = vsel %vm243, %v786, %v790
  %v792 = vshrl.u32 %v681, 16
  %v794 = vor.u32 %v792, %v790
  %v796 = vshll.u32 %v682, 16
  %v798 = vrot.slane %v796, 1
  %v799 = vsel %vm243, %v794, %v798
  %v800 = vshrl.u32 %v682, 16
  %v802 = vor.u32 %v800, %v798
  %v804 = vshll.u32 %v683, 16
  %v806 = vrot.slane %v804, 1
  %v807 = vsel %vm243, %v802, %v806
  %v808 = vshrl.u32 %v683, 16
  %v810 = vor.u32 %v808, %v806
  %v812 = vshll.u32 %v684, 16
  %v814 = vrot.slane %v812, 1
  %v815 = vsel %vm243, %v810, %v814
  %v816 = vshrl.u32 %v684, 16
  %v818 = vor.u32 %v816, %v814
  %v820 = vshll.u32 %v685, 16
  %v822 = vrot.slane %v820, 1
  %v823 = vsel %vm243, %v818, %v822
  %v824 = vshrl.u32 %v685, 16
  %v826 = vor.u32 %v824, %v822
  %v828 = vshll.u32 %v686, 16
  %v830 = vrot.slane %v828, 1
  %v831 = vsel %vm243, %v826, %v830
  %v832 = vshrl.u32 %v686, 16
  %v834 = vor.u32 %v832, %v830
  %v836 = vshll.u32 %v687, 16
  %v838 = vrot.slane %v836, 1
  %v839 = vsel %vm243, %v834, %v838
  %v840 = vshrl.u32 %v687, 16
  %v842 = vor.u32 %v840, %v838
  %v844 = vshll.u32 %v688, 16
  %v846 = vrot.slane %v844, 1
  %v847 = vsel %vm243, %v842, %v846
  %v848 = vshrl.u32 %v688, 16
  %v850 = vor.u32 %v848, %v846
  %v852 = vshll.u32 %v689, 16
  %v854 = vrot.slane %v852, 1
  %v855 = vsel %vm243, %v850, %v854
  %v856 = vshrl.u32 %v689, 16
  %v858 = vor.u32 %v856, %v854
  %v860 = vshll.u32 %v690, 16
  %v862 = vrot.slane %v860, 1
  %v863 = vsel %vm243, %v858, %v862
  %v864 = vshrl.u32 %v690, 16
  %v866 = vor.u32 %v864, %v862
  %v868 = vshll.u32 %v691, 16
  %v870 = vrot.slane %v868, 1
  %v871 = vsel %vm243, %v866, %v870
  %v872 = vshrl.u32 %v691, 16
  %v874 = vor.u32 %v872, %v870
  %v876 = vshll.u32 %v692, 16
  %v878 = vrot.slane %v876, 1
  %v879 = vsel %vm243, %v874, %v878
  %v880 = vshrl.u32 %v692, 16
  %v882 = vor.u32 %v880, %v878
  %v884 = vshll.u32 %v693, 16
  %v886 = vrot.slane %v884, 1
  %v887 = vsel %vm243, %v882, %v886
  %v888 = vshrl.u32 %v693, 16
  %v890 = vor.u32 %v888, %v886
  %v892 = vshll.u32 %v694, 16
  %v894 = vrot.slane %v892, 1
  %v895 = vsel %vm243, %v890, %v894
  %v896 = vshrl.u32 %v694, 16
  %v898 = vor.u32 %v896, %v894
  %v900 = vshll.u32 %v695, 16
  %v902 = vrot.slane %v900, 1
  %v903 = vsel %vm243, %v898, %v902
  %v904 = vshrl.u32 %v695, 16
  %v906 = vor.u32 %v904, %v902
  %v908 = vshll.u32 %v696, 16
  %v910 = vrot.slane %v908, 1
  %v911 = vsel %vm243, %v906, %v910
  %v912 = vshrl.u32 %v696, 16
  %v914 = vor.u32 %v912, %v910
  %v916 = vshll.u32 %v697, 16
  %v918 = vrot.slane %v916, 1
  %v919 = vsel %vm243, %v914, %v918
  %v920 = vshrl.u32 %v697, 16
  %v922 = vor.u32 %v920, %v918
  %v924 = vshll.u32 %v698, 16
  %v926 = vrot.slane %v924, 1
  %v927 = vsel %vm243, %v922, %v926
  %v928 = vshrl.u32 %v698, 16
  %v930 = vor.u32 %v928, %v926
  %v932 = vshll.u32 %v699, 16
  %v934 = vrot.slane %v932, 1
  %v935 = vsel %vm243, %v930, %v934
  %v936 = vshrl.u32 %v699, 16
  %v938 = vor.u32 %v936, %v934
  %v940 = vshll.u32 %v700, 16
  %v942 = vrot.slane %v940, 1
  %v943 = vsel %vm243, %v938, %v942
  %v944 = vshrl.u32 %v700, 16
  %v946 = vor.u32 %v944, %v942
  %v948 = vshll.u32 %v701, 16
  %v950 = vrot.slane %v948, 1
  %v951 = vsel %vm243, %v946, %v950
  %v952 = vshrl.u32 %v701, 16
  %v954 = vor.u32 %v952, %v950
  %v956 = vshll.u32 %v702, 16
  %v958 = vrot.slane %v956, 1
  %v959 = vsel %vm243, %v954, %v958
  %v960 = vshrl.u32 %v702, 16
  %v962 = vor.u32 %v960, %v958
  %v964 = vshll.u32 %v703, 16
  %v966 = vrot.slane %v964, 1
  %v967 = vsel %vm243, %v962, %v966
  %v968 = vshrl.u32 %v703, 16
  %v970 = vor.u32 %v968, %v966
  %v972 = vshll.u32 %v704, 16
  %v974 = vrot.slane %v972, 1
  %v975 = vsel %vm243, %v970, %v974
  %v976 = vshrl.u32 %v704, 16
  %v978 = vor.u32 %v976, %v974
  %v980 = vshll.u32 %v705, 16
  %v982 = vrot.slane %v980, 1
  %v983 = vsel %vm243, %v978, %v982
  %v984 = vshrl.u32 %v705, 16
  %v986 = vor.u32 %v984, %v982
  %v988 = vshll.u32 %v706, 16
  %v990 = vrot.slane %v988, 1
  %v991 = vsel %vm243, %v986, %v990
  %v992 = vshrl.u32 %v706, 16
  %v994 = vor.u32 %v992, %v990
  %v996 = vshll.u32 %v707, 16
  %v998 = vrot.slane %v996, 1
  %v999 = vsel %vm243, %v994, %v998
  %v1000 = vshrl.u32 %v707, 16
  %v1002 = vor.u32 %v1000, %v998
  %v1004 = vshll.u32 %v708, 16
  %v1006 = vrot.slane %v1004, 1
  %v1007 = vsel %vm243, %v1002, %v1006
  %v1008 = vshrl.u32 %v708, 16
  %v1010 = vor.u32 %v1008, %v1006
  %v1012 = vshll.u32 %v771, 16
  %v1014 = vrot.slane %v1012, 1
  %v1015 = vsel %vm243, %v1010, %v1014
  %1016 = vrot.lane.b32.xlu0 %v783, 32
  %v1017 = vpop.permute.xlu0 %1016
  %1018 = vrot.lane.b32.xlu0 %v791, 32
  %v1019 = vpop.permute.xlu0 %1018
  %1020 = vrot.lane.b32.xlu0 %v799, 32
  %v1021 = vpop.permute.xlu0 %1020
  %1022 = vrot.lane.b32.xlu0 %v807, 32
  %v1023 = vpop.permute.xlu0 %1022
  %1024 = vrot.lane.b32.xlu0 %v815, 32
  %v1025 = vpop.permute.xlu0 %1024
  %1026 = vrot.lane.b32.xlu0 %v823, 32
  %v1027 = vpop.permute.xlu0 %1026
  %1028 = vrot.lane.b32.xlu0 %v831, 32
  %v1029 = vpop.permute.xlu0 %1028
  %1030 = vrot.lane.b32.xlu0 %v839, 32
  %v1031 = vpop.permute.xlu0 %1030
  %1032 = vrot.lane.b32.xlu0 %v847, 32
  %v1033 = vpop.permute.xlu0 %1032
  %1034 = vrot.lane.b32.xlu0 %v855, 32
  %v1035 = vpop.permute.xlu0 %1034
  %1036 = vrot.lane.b32.xlu0 %v863, 32
  %v1037 = vpop.permute.xlu0 %1036
  %1038 = vrot.lane.b32.xlu0 %v871, 32
  %v1039 = vpop.permute.xlu0 %1038
  %1040 = vrot.lane.b32.xlu0 %v879, 32
  %v1041 = vpop.permute.xlu0 %1040
  %1042 = vrot.lane.b32.xlu0 %v887, 32
  %v1043 = vpop.permute.xlu0 %1042
  %1044 = vrot.lane.b32.xlu0 %v895, 32
  %v1045 = vpop.permute.xlu0 %1044
  %1046 = vrot.lane.b32.xlu0 %v903, 32
  %v1047 = vpop.permute.xlu0 %1046
  %1048 = vrot.lane.b32.xlu0 %v911, 32
  %v1049 = vpop.permute.xlu0 %1048
  %1050 = vrot.lane.b32.xlu0 %v919, 32
  %v1051 = vpop.permute.xlu0 %1050
  %1052 = vrot.lane.b32.xlu0 %v927, 32
  %v1053 = vpop.permute.xlu0 %1052
  %1054 = vrot.lane.b32.xlu0 %v935, 32
  %v1055 = vpop.permute.xlu0 %1054
  %1056 = vrot.lane.b32.xlu0 %v943, 32
  %v1057 = vpop.permute.xlu0 %1056
  %1058 = vrot.lane.b32.xlu0 %v951, 32
  %v1059 = vpop.permute.xlu0 %1058
  %1060 = vrot.lane.b32.xlu0 %v959, 32
  %v1061 = vpop.permute.xlu0 %1060
  %1062 = vrot.lane.b32.xlu0 %v967, 32
  %v1063 = vpop.permute.xlu0 %1062
  %1064 = vrot.lane.b32.xlu0 %v975, 32
  %v1065 = vpop.permute.xlu0 %1064
  %1066 = vrot.lane.b32.xlu0 %v983, 32
  %v1067 = vpop.permute.xlu0 %1066
  %1068 = vrot.lane.b32.xlu0 %v991, 32
  %v1069 = vpop.permute.xlu0 %1068
  %1070 = vrot.lane.b32.xlu0 %v999, 32
  %v1071 = vpop.permute.xlu0 %1070
  %1072 = vrot.lane.b32.xlu0 %v1007, 32
  %v1073 = vpop.permute.xlu0 %1072
  %1074 = vrot.lane.b32.xlu0 %v1015, 32
  %v1075 = vpop.permute.xlu0 %1074
  %v1077 = vunpack.c.l.b16 %v84
  %v1078 = vpack.c.b16 %v154, %v1077
  %v1079 = vrot.slane %v1078, 1
  %v1080 = vrot.slane %v680, 1
  %v1081 = vsel %vm551, %v1079, %v1080
  %v1082 = vrot.slane %v681, 1
  %v1083 = vsel %vm551, %v1080, %v1082
  %v1084 = vrot.slane %v682, 1
  %v1085 = vsel %vm551, %v1082, %v1084
  %v1086 = vrot.slane %v683, 1
  %v1087 = vsel %vm551, %v1084, %v1086
  %v1088 = vrot.slane %v684, 1
  %v1089 = vsel %vm551, %v1086, %v1088
  %v1090 = vrot.slane %v685, 1
  %v1091 = vsel %vm551, %v1088, %v1090
  %v1092 = vrot.slane %v686, 1
  %v1093 = vsel %vm551, %v1090, %v1092
  %v1094 = vrot.slane %v687, 1
  %v1095 = vsel %vm551, %v1092, %v1094
  %v1096 = vrot.slane %v688, 1
  %v1097 = vsel %vm551, %v1094, %v1096
  %v1098 = vrot.slane %v689, 1
  %v1099 = vsel %vm551, %v1096, %v1098
  %v1100 = vrot.slane %v690, 1
  %v1101 = vsel %vm551, %v1098, %v1100
  %v1102 = vrot.slane %v691, 1
  %v1103 = vsel %vm551, %v1100, %v1102
  %v1104 = vrot.slane %v692, 1
  %v1105 = vsel %vm551, %v1102, %v1104
  %v1106 = vrot.slane %v693, 1
  %v1107 = vsel %vm551, %v1104, %v1106
  %v1108 = vrot.slane %v694, 1
  %v1109 = vsel %vm551, %v1106, %v1108
  %v1110 = vrot.slane %v695, 1
  %v1111 = vsel %vm551, %v1108, %v1110
  %v1112 = vrot.slane %v696, 1
  %v1113 = vsel %vm551, %v1110, %v1112
  %v1114 = vrot.slane %v697, 1
  %v1115 = vsel %vm551, %v1112, %v1114
  %v1116 = vrot.slane %v698, 1
  %v1117 = vsel %vm551, %v1114, %v1116
  %v1118 = vrot.slane %v699, 1
  %v1119 = vsel %vm551, %v1116, %v1118
  %v1120 = vrot.slane %v700, 1
  %v1121 = vsel %vm551, %v1118, %v1120
  %v1122 = vrot.slane %v701, 1
  %v1123 = vsel %vm551, %v1120, %v1122
  %v1124 = vrot.slane %v702, 1
  %v1125 = vsel %vm551, %v1122, %v1124
  %v1126 = vrot.slane %v703, 1
  %v1127 = vsel %vm551, %v1124, %v1126
  %v1128 = vrot.slane %v704, 1
  %v1129 = vsel %vm551, %v1126, %v1128
  %v1130 = vrot.slane %v705, 1
  %v1131 = vsel %vm551, %v1128, %v1130
  %v1132 = vrot.slane %v706, 1
  %v1133 = vsel %vm551, %v1130, %v1132
  %v1134 = vrot.slane %v707, 1
  %v1135 = vsel %vm551, %v1132, %v1134
  %v1136 = vrot.slane %v708, 1
  %v1137 = vsel %vm551, %v1134, %v1136
  %v1138 = vrot.slane %v771, 1
  %v1139 = vsel %vm551, %v1136, %v1138
  %1140 = vrot.lane.b32.xlu0 %v1081, 40
  %v1141 = vpop.permute.xlu0 %1140
  %1142 = vrot.lane.b32.xlu0 %v1083, 40
  %v1143 = vpop.permute.xlu0 %1142
  %1144 = vrot.lane.b32.xlu0 %v1085, 40
  %v1145 = vpop.permute.xlu0 %1144
  %1146 = vrot.lane.b32.xlu0 %v1087, 40
  %v1147 = vpop.permute.xlu0 %1146
  %1148 = vrot.lane.b32.xlu0 %v1089, 40
  %v1149 = vpop.permute.xlu0 %1148
  %1150 = vrot.lane.b32.xlu0 %v1091, 40
  %v1151 = vpop.permute.xlu0 %1150
  %1152 = vrot.lane.b32.xlu0 %v1093, 40
  %v1153 = vpop.permute.xlu0 %1152
  %1154 = vrot.lane.b32.xlu0 %v1095, 40
  %v1155 = vpop.permute.xlu0 %1154
  %1156 = vrot.lane.b32.xlu0 %v1097, 40
  %v1157 = vpop.permute.xlu0 %1156
  %1158 = vrot.lane.b32.xlu0 %v1099, 40
  %v1159 = vpop.permute.xlu0 %1158
  %1160 = vrot.lane.b32.xlu0 %v1101, 40
  %v1161 = vpop.permute.xlu0 %1160
  %1162 = vrot.lane.b32.xlu0 %v1103, 40
  %v1163 = vpop.permute.xlu0 %1162
  %1164 = vrot.lane.b32.xlu0 %v1105, 40
  %v1165 = vpop.permute.xlu0 %1164
  %1166 = vrot.lane.b32.xlu0 %v1107, 40
  %v1167 = vpop.permute.xlu0 %1166
  %1168 = vrot.lane.b32.xlu0 %v1109, 40
  %v1169 = vpop.permute.xlu0 %1168
  %1170 = vrot.lane.b32.xlu0 %v1111, 40
  %v1171 = vpop.permute.xlu0 %1170
  %1172 = vrot.lane.b32.xlu0 %v1113, 40
  %v1173 = vpop.permute.xlu0 %1172
  %1174 = vrot.lane.b32.xlu0 %v1115, 40
  %v1175 = vpop.permute.xlu0 %1174
  %1176 = vrot.lane.b32.xlu0 %v1117, 40
  %v1177 = vpop.permute.xlu0 %1176
  %1178 = vrot.lane.b32.xlu0 %v1119, 40
  %v1179 = vpop.permute.xlu0 %1178
  %1180 = vrot.lane.b32.xlu0 %v1121, 40
  %v1181 = vpop.permute.xlu0 %1180
  %1182 = vrot.lane.b32.xlu0 %v1123, 40
  %v1183 = vpop.permute.xlu0 %1182
  %1184 = vrot.lane.b32.xlu0 %v1125, 40
  %v1185 = vpop.permute.xlu0 %1184
  %1186 = vrot.lane.b32.xlu0 %v1127, 40
  %v1187 = vpop.permute.xlu0 %1186
  %1188 = vrot.lane.b32.xlu0 %v1129, 40
  %v1189 = vpop.permute.xlu0 %1188
  %1190 = vrot.lane.b32.xlu0 %v1131, 40
  %v1191 = vpop.permute.xlu0 %1190
  %1192 = vrot.lane.b32.xlu0 %v1133, 40
  %v1193 = vpop.permute.xlu0 %1192
  %1194 = vrot.lane.b32.xlu0 %v1135, 40
  %v1195 = vpop.permute.xlu0 %1194
  %1196 = vrot.lane.b32.xlu0 %v1137, 40
  %v1197 = vpop.permute.xlu0 %1196
  %1198 = vrot.lane.b32.xlu0 %v1139, 40
  %v1199 = vpop.permute.xlu0 %1198
  %v1203 = vunpack.c.l.b16 %v85
  %v1204 = vunpack.c.l.b16 %v86
  %v1205 = vunpack.c.l.b16 %v87
  %v1206 = vpack.c.b16 %v677, %v676
  %v1207 = vpack.c.b16 %v1203, %v678
  %v1208 = vpack.c.b16 %v1205, %v1204
  %1209 = vrot.lane.b32.xlu0 %v213, 48
  %v1210 = vpop.permute.xlu0 %1209
  %1211 = vrot.lane.b32.xlu0 %v214, 48
  %v1212 = vpop.permute.xlu0 %1211
  %1213 = vrot.lane.b32.xlu0 %v215, 48
  %v1214 = vpop.permute.xlu0 %1213
  %1215 = vrot.lane.b32.xlu0 %v216, 48
  %v1216 = vpop.permute.xlu0 %1215
  %1217 = vrot.lane.b32.xlu0 %v217, 48
  %v1218 = vpop.permute.xlu0 %1217
  %1219 = vrot.lane.b32.xlu0 %v218, 48
  %v1220 = vpop.permute.xlu0 %1219
  %1221 = vrot.lane.b32.xlu0 %v219, 48
  %v1222 = vpop.permute.xlu0 %1221
  %1223 = vrot.lane.b32.xlu0 %v220, 48
  %v1224 = vpop.permute.xlu0 %1223
  %1225 = vrot.lane.b32.xlu0 %v221, 48
  %v1226 = vpop.permute.xlu0 %1225
  %1227 = vrot.lane.b32.xlu0 %v222, 48
  %v1228 = vpop.permute.xlu0 %1227
  %1229 = vrot.lane.b32.xlu0 %v223, 48
  %v1230 = vpop.permute.xlu0 %1229
  %1231 = vrot.lane.b32.xlu0 %v224, 48
  %v1232 = vpop.permute.xlu0 %1231
  %1233 = vrot.lane.b32.xlu0 %v225, 48
  %v1234 = vpop.permute.xlu0 %1233
  %1235 = vrot.lane.b32.xlu0 %v226, 48
  %v1236 = vpop.permute.xlu0 %1235
  %1237 = vrot.lane.b32.xlu0 %v227, 48
  %v1238 = vpop.permute.xlu0 %1237
  %1239 = vrot.lane.b32.xlu0 %v228, 48
  %v1240 = vpop.permute.xlu0 %1239
  %1241 = vrot.lane.b32.xlu0 %v229, 48
  %v1242 = vpop.permute.xlu0 %1241
  %1243 = vrot.lane.b32.xlu0 %v230, 48
  %v1244 = vpop.permute.xlu0 %1243
  %1245 = vrot.lane.b32.xlu0 %v231, 48
  %v1246 = vpop.permute.xlu0 %1245
  %1247 = vrot.lane.b32.xlu0 %v232, 48
  %v1248 = vpop.permute.xlu0 %1247
  %1249 = vrot.lane.b32.xlu0 %v233, 48
  %v1250 = vpop.permute.xlu0 %1249
  %1251 = vrot.lane.b32.xlu0 %v234, 48
  %v1252 = vpop.permute.xlu0 %1251
  %1253 = vrot.lane.b32.xlu0 %v235, 48
  %v1254 = vpop.permute.xlu0 %1253
  %1255 = vrot.lane.b32.xlu0 %v236, 48
  %v1256 = vpop.permute.xlu0 %1255
  %1257 = vrot.lane.b32.xlu0 %v237, 48
  %v1258 = vpop.permute.xlu0 %1257
  %1259 = vrot.lane.b32.xlu0 %v238, 48
  %v1260 = vpop.permute.xlu0 %1259
  %1261 = vrot.lane.b32.xlu0 %v239, 48
  %v1262 = vpop.permute.xlu0 %1261
  %1263 = vrot.lane.b32.xlu0 %v1206, 48
  %v1264 = vpop.permute.xlu0 %1263
  %1265 = vrot.lane.b32.xlu0 %v1207, 48
  %v1266 = vpop.permute.xlu0 %1265
  %1267 = vrot.lane.b32.xlu0 %v1208, 48
  %v1268 = vpop.permute.xlu0 %1267
  %v1270 = vunpack.c.l.b16 %v88
  %v1271 = vpack.c.b16 %v1270, %v1270
  %v1273 = vshll.u32 %v1206, 16
  %v1275 = vrot.slane %v1273, 1
  %v1276 = vsel %vm243, %v482, %v1275
  %v1277 = vshrl.u32 %v1206, 16
  %v1279 = vor.u32 %v1277, %v1275
  %v1281 = vshll.u32 %v1207, 16
  %v1283 = vrot.slane %v1281, 1
  %v1284 = vsel %vm243, %v1279, %v1283
  %v1285 = vshrl.u32 %v1207, 16
  %v1287 = vor.u32 %v1285, %v1283
  %v1289 = vshll.u32 %v1208, 16
  %v1291 = vrot.slane %v1289, 1
  %v1292 = vsel %vm243, %v1287, %v1291
  %v1293 = vshrl.u32 %v1208, 16
  %v1295 = vor.u32 %v1293, %v1291
  %v1297 = vshll.u32 %v1271, 16
  %v1299 = vrot.slane %v1297, 1
  %v1300 = vsel %vm243, %v1295, %v1299
  %1301 = vrot.lane.b32.xlu0 %v279, 56
  %v1302 = vpop.permute.xlu0 %1301
  %1303 = vrot.lane.b32.xlu0 %v287, 56
  %v1304 = vpop.permute.xlu0 %1303
  %1305 = vrot.lane.b32.xlu0 %v295, 56
  %v1306 = vpop.permute.xlu0 %1305
  %1307 = vrot.lane.b32.xlu0 %v303, 56
  %v1308 = vpop.permute.xlu0 %1307
  %1309 = vrot.lane.b32.xlu0 %v311, 56
  %v1310 = vpop.permute.xlu0 %1309
  %1311 = vrot.lane.b32.xlu0 %v319, 56
  %v1312 = vpop.permute.xlu0 %1311
  %1313 = vrot.lane.b32.xlu0 %v327, 56
  %v1314 = vpop.permute.xlu0 %1313
  %1315 = vrot.lane.b32.xlu0 %v335, 56
  %v1316 = vpop.permute.xlu0 %1315
  %1317 = vrot.lane.b32.xlu0 %v343, 56
  %v1318 = vpop.permute.xlu0 %1317
  %1319 = vrot.lane.b32.xlu0 %v351, 56
  %v1320 = vpop.permute.xlu0 %1319
  %1321 = vrot.lane.b32.xlu0 %v359, 56
  %v1322 = vpop.permute.xlu0 %1321
  %1323 = vrot.lane.b32.xlu0 %v367, 56
  %v1324 = vpop.permute.xlu0 %1323
  %1325 = vrot.lane.b32.xlu0 %v375, 56
  %v1326 = vpop.permute.xlu0 %1325
  %1327 = vrot.lane.b32.xlu0 %v383, 56
  %v1328 = vpop.permute.xlu0 %1327
  %1329 = vrot.lane.b32.xlu0 %v391, 56
  %v1330 = vpop.permute.xlu0 %1329
  %1331 = vrot.lane.b32.xlu0 %v399, 56
  %v1332 = vpop.permute.xlu0 %1331
  %1333 = vrot.lane.b32.xlu0 %v407, 56
  %v1334 = vpop.permute.xlu0 %1333
  %1335 = vrot.lane.b32.xlu0 %v415, 56
  %v1336 = vpop.permute.xlu0 %1335
  %1337 = vrot.lane.b32.xlu0 %v423, 56
  %v1338 = vpop.permute.xlu0 %1337
  %1339 = vrot.lane.b32.xlu0 %v431, 56
  %v1340 = vpop.permute.xlu0 %1339
  %1341 = vrot.lane.b32.xlu0 %v439, 56
  %v1342 = vpop.permute.xlu0 %1341
  %1343 = vrot.lane.b32.xlu0 %v447, 56
  %v1344 = vpop.permute.xlu0 %1343
  %1345 = vrot.lane.b32.xlu0 %v455, 56
  %v1346 = vpop.permute.xlu0 %1345
  %1347 = vrot.lane.b32.xlu0 %v463, 56
  %v1348 = vpop.permute.xlu0 %1347
  %1349 = vrot.lane.b32.xlu0 %v471, 56
  %v1350 = vpop.permute.xlu0 %1349
  %1351 = vrot.lane.b32.xlu0 %v479, 56
  %v1352 = vpop.permute.xlu0 %1351
  %1353 = vrot.lane.b32.xlu0 %v1276, 56
  %v1354 = vpop.permute.xlu0 %1353
  %1355 = vrot.lane.b32.xlu0 %v1284, 56
  %v1356 = vpop.permute.xlu0 %1355
  %1357 = vrot.lane.b32.xlu0 %v1292, 56
  %v1358 = vpop.permute.xlu0 %1357
  %1359 = vrot.lane.b32.xlu0 %v1300, 56
  %v1360 = vpop.permute.xlu0 %1359
  %v1362 = vunpack.c.l.b16 %v89
  %v1363 = vpack.c.b16 %v157, %v1362
  %v1364 = vrot.slane %v1363, 1
  %v1365 = vsel %vm551, %v1364, %v559
  %v1366 = vrot.slane %v1206, 1
  %v1367 = vsel %vm551, %v609, %v1366
  %v1368 = vrot.slane %v1207, 1
  %v1369 = vsel %vm551, %v1366, %v1368
  %v1370 = vrot.slane %v1208, 1
  %v1371 = vsel %vm551, %v1368, %v1370
  %v1372 = vrot.slane %v1271, 1
  %v1373 = vsel %vm551, %v1370, %v1372
  %1374 = vrot.lane.b32.xlu0 %v1365, 64
  %v1375 = vpop.permute.xlu0 %1374
  %1376 = vrot.lane.b32.xlu0 %v562, 64
  %v1377 = vpop.permute.xlu0 %1376
  %1378 = vrot.lane.b32.xlu0 %v564, 64
  %v1379 = vpop.permute.xlu0 %1378
  %1380 = vrot.lane.b32.xlu0 %v566, 64
  %v1381 = vpop.permute.xlu0 %1380
  %1382 = vrot.lane.b32.xlu0 %v568, 64
  %v1383 = vpop.permute.xlu0 %1382
  %1384 = vrot.lane.b32.xlu0 %v570, 64
  %v1385 = vpop.permute.xlu0 %1384
  %1386 = vrot.lane.b32.xlu0 %v572, 64
  %v1387 = vpop.permute.xlu0 %1386
  %1388 = vrot.lane.b32.xlu0 %v574, 64
  %v1389 = vpop.permute.xlu0 %1388
  %1390 = vrot.lane.b32.xlu0 %v576, 64
  %v1391 = vpop.permute.xlu0 %1390
  %1392 = vrot.lane.b32.xlu0 %v578, 64
  %v1393 = vpop.permute.xlu0 %1392
  %1394 = vrot.lane.b32.xlu0 %v580, 64
  %v1395 = vpop.permute.xlu0 %1394
  %1396 = vrot.lane.b32.xlu0 %v582, 64
  %v1397 = vpop.permute.xlu0 %1396
  %1398 = vrot.lane.b32.xlu0 %v584, 64
  %v1399 = vpop.permute.xlu0 %1398
  %1400 = vrot.lane.b32.xlu0 %v586, 64
  %v1401 = vpop.permute.xlu0 %1400
  %1402 = vrot.lane.b32.xlu0 %v588, 64
  %v1403 = vpop.permute.xlu0 %1402
  %1404 = vrot.lane.b32.xlu0 %v590, 64
  %v1405 = vpop.permute.xlu0 %1404
  %1406 = vrot.lane.b32.xlu0 %v592, 64
  %v1407 = vpop.permute.xlu0 %1406
  %1408 = vrot.lane.b32.xlu0 %v594, 64
  %v1409 = vpop.permute.xlu0 %1408
  %1410 = vrot.lane.b32.xlu0 %v596, 64
  %v1411 = vpop.permute.xlu0 %1410
  %1412 = vrot.lane.b32.xlu0 %v598, 64
  %v1413 = vpop.permute.xlu0 %1412
  %1414 = vrot.lane.b32.xlu0 %v600, 64
  %v1415 = vpop.permute.xlu0 %1414
  %1416 = vrot.lane.b32.xlu0 %v602, 64
  %v1417 = vpop.permute.xlu0 %1416
  %1418 = vrot.lane.b32.xlu0 %v604, 64
  %v1419 = vpop.permute.xlu0 %1418
  %1420 = vrot.lane.b32.xlu0 %v606, 64
  %v1421 = vpop.permute.xlu0 %1420
  %1422 = vrot.lane.b32.xlu0 %v608, 64
  %v1423 = vpop.permute.xlu0 %1422
  %1424 = vrot.lane.b32.xlu0 %v610, 64
  %v1425 = vpop.permute.xlu0 %1424
  %1426 = vrot.lane.b32.xlu0 %v1367, 64
  %v1427 = vpop.permute.xlu0 %1426
  %1428 = vrot.lane.b32.xlu0 %v1369, 64
  %v1429 = vpop.permute.xlu0 %1428
  %1430 = vrot.lane.b32.xlu0 %v1371, 64
  %v1431 = vpop.permute.xlu0 %1430
  %1432 = vrot.lane.b32.xlu0 %v1373, 64
  %v1433 = vpop.permute.xlu0 %1432
  %vm1434 = vcmask 64512
  %v1436 = vsel %vm1434, %v210, %v489
  %v1438 = vsel %vm1434, %v211, %v491
  %v1440 = vsel %vm1434, %v212, %v493
  %v1442 = vsel %vm1434, %v213, %v495
  %v1444 = vsel %vm1434, %v214, %v497
  %v1446 = vsel %vm1434, %v215, %v499
  %v1448 = vsel %vm1434, %v216, %v501
  %v1450 = vsel %vm1434, %v217, %v503
  %v1452 = vsel %vm1434, %v218, %v505
  %v1454 = vsel %vm1434, %v219, %v507
  %v1456 = vsel %vm1434, %v220, %v509
  %v1458 = vsel %vm1434, %v221, %v511
  %v1460 = vsel %vm1434, %v222, %v513
  %v1462 = vsel %vm1434, %v223, %v515
  %v1464 = vsel %vm1434, %v224, %v517
  %v1466 = vsel %vm1434, %v225, %v519
  %v1468 = vsel %vm1434, %v226, %v521
  %v1470 = vsel %vm1434, %v227, %v523
  %v1472 = vsel %vm1434, %v228, %v525
  %v1474 = vsel %vm1434, %v229, %v527
  %v1476 = vsel %vm1434, %v230, %v529
  %v1478 = vsel %vm1434, %v231, %v531
  %v1480 = vsel %vm1434, %v232, %v533
  %v1482 = vsel %vm1434, %v233, %v535
  %v1484 = vsel %vm1434, %v234, %v537
  %v1486 = vsel %vm1434, %v235, %v539
  %v1488 = vsel %vm1434, %v236, %v541
  %v1490 = vsel %vm1434, %v237, %v543
  %v1492 = vsel %vm1434, %v238, %v545
  %v1494 = vsel %vm1434, %v239, %v547
  %vm1495 = vcmask 130048
  %v1497 = vsel %vm1495, %v1436, %v614
  %v1499 = vsel %vm1495, %v1438, %v616
  %v1501 = vsel %vm1495, %v1440, %v618
  %v1503 = vsel %vm1495, %v1442, %v620
  %v1505 = vsel %vm1495, %v1444, %v622
  %v1507 = vsel %vm1495, %v1446, %v624
  %v1509 = vsel %vm1495, %v1448, %v626
  %v1511 = vsel %vm1495, %v1450, %v628
  %v1513 = vsel %vm1495, %v1452, %v630
  %v1515 = vsel %vm1495, %v1454, %v632
  %v1517 = vsel %vm1495, %v1456, %v634
  %v1519 = vsel %vm1495, %v1458, %v636
  %v1521 = vsel %vm1495, %v1460, %v638
  %v1523 = vsel %vm1495, %v1462, %v640
  %v1525 = vsel %vm1495, %v1464, %v642
  %v1527 = vsel %vm1495, %v1466, %v644
  %v1529 = vsel %vm1495, %v1468, %v646
  %v1531 = vsel %vm1495, %v1470, %v648
  %v1533 = vsel %vm1495, %v1472, %v650
  %v1535 = vsel %vm1495, %v1474, %v652
  %v1537 = vsel %vm1495, %v1476, %v654
  %v1539 = vsel %vm1495, %v1478, %v656
  %v1541 = vsel %vm1495, %v1480, %v658
  %v1543 = vsel %vm1495, %v1482, %v660
  %v1545 = vsel %vm1495, %v1484, %v662
  %v1547 = vsel %vm1495, %v1486, %v664
  %v1549 = vsel %vm1495, %v1488, %v666
  %v1551 = vsel %vm1495, %v1490, %v668
  %v1553 = vsel %vm1495, %v1492, %v670
  %v1555 = vsel %vm1495, %v1494, %v672
  %vm1556 = vcmask 195584
  %v1558 = vsel %vm1556, %v1497, %v710
  %v1560 = vsel %vm1556, %v1499, %v712
  %v1562 = vsel %vm1556, %v1501, %v714
  %v1564 = vsel %vm1556, %v1503, %v716
  %v1566 = vsel %vm1556, %v1505, %v718
  %v1568 = vsel %vm1556, %v1507, %v720
  %v1570 = vsel %vm1556, %v1509, %v722
  %v1572 = vsel %vm1556, %v1511, %v724
  %v1574 = vsel %vm1556, %v1513, %v726
  %v1576 = vsel %vm1556, %v1515, %v728
  %v1578 = vsel %vm1556, %v1517, %v730
  %v1580 = vsel %vm1556, %v1519, %v732
  %v1582 = vsel %vm1556, %v1521, %v734
  %v1584 = vsel %vm1556, %v1523, %v736
  %v1586 = vsel %vm1556, %v1525, %v738
  %v1588 = vsel %vm1556, %v1527, %v740
  %v1590 = vsel %vm1556, %v1529, %v742
  %v1592 = vsel %vm1556, %v1531, %v744
  %v1594 = vsel %vm1556, %v1533, %v746
  %v1596 = vsel %vm1556, %v1535, %v748
  %v1598 = vsel %vm1556, %v1537, %v750
  %v1600 = vsel %vm1556, %v1539, %v752
  %v1602 = vsel %vm1556, %v1541, %v754
  %v1604 = vsel %vm1556, %v1543, %v756
  %v1606 = vsel %vm1556, %v1545, %v758
  %v1608 = vsel %vm1556, %v1547, %v760
  %v1610 = vsel %vm1556, %v1549, %v762
  %v1612 = vsel %vm1556, %v1551, %v764
  %v1614 = vsel %vm1556, %v1553, %v766
  %v1616 = vsel %vm1556, %v1555, %v768
  %vm1617 = vcmask 261120
  %v1619 = vsel %vm1617, %v1558, %v1017
  %v1621 = vsel %vm1617, %v1560, %v1019
  %v1623 = vsel %vm1617, %v1562, %v1021
  %v1625 = vsel %vm1617, %v1564, %v1023
  %v1627 = vsel %vm1617, %v1566, %v1025
  %v1629 = vsel %vm1617, %v1568, %v1027
  %v1631 = vsel %vm1617, %v1570, %v1029
  %v1633 = vsel %vm1617, %v1572, %v1031
  %v1635 = vsel %vm1617, %v1574, %v1033
  %v1637 = vsel %vm1617, %v1576, %v1035
  %v1639 = vsel %vm1617, %v1578, %v1037
  %v1641 = vsel %vm1617, %v1580, %v1039
  %v1643 = vsel %vm1617, %v1582, %v1041
  %v1645 = vsel %vm1617, %v1584, %v1043
  %v1647 = vsel %vm1617, %v1586, %v1045
  %v1649 = vsel %vm1617, %v1588, %v1047
  %v1651 = vsel %vm1617, %v1590, %v1049
  %v1653 = vsel %vm1617, %v1592, %v1051
  %v1655 = vsel %vm1617, %v1594, %v1053
  %v1657 = vsel %vm1617, %v1596, %v1055
  %v1659 = vsel %vm1617, %v1598, %v1057
  %v1661 = vsel %vm1617, %v1600, %v1059
  %v1663 = vsel %vm1617, %v1602, %v1061
  %v1665 = vsel %vm1617, %v1604, %v1063
  %v1667 = vsel %vm1617, %v1606, %v1065
  %v1669 = vsel %vm1617, %v1608, %v1067
  %v1671 = vsel %vm1617, %v1610, %v1069
  %v1673 = vsel %vm1617, %v1612, %v1071
  %v1675 = vsel %vm1617, %v1614, %v1073
  %v1677 = vsel %vm1617, %v1616, %v1075
  %vm1678 = vcmask 326656
  %v1680 = vsel %vm1678, %v1619, %v1141
  %v1682 = vsel %vm1678, %v1621, %v1143
  %v1684 = vsel %vm1678, %v1623, %v1145
  %v1686 = vsel %vm1678, %v1625, %v1147
  %v1688 = vsel %vm1678, %v1627, %v1149
  %v1690 = vsel %vm1678, %v1629, %v1151
  %v1692 = vsel %vm1678, %v1631, %v1153
  %v1694 = vsel %vm1678, %v1633, %v1155
  %v1696 = vsel %vm1678, %v1635, %v1157
  %v1698 = vsel %vm1678, %v1637, %v1159
  %v1700 = vsel %vm1678, %v1639, %v1161
  %v1702 = vsel %vm1678, %v1641, %v1163
  %v1704 = vsel %vm1678, %v1643, %v1165
  %v1706 = vsel %vm1678, %v1645, %v1167
  %v1708 = vsel %vm1678, %v1647, %v1169
  %v1710 = vsel %vm1678, %v1649, %v1171
  %v1712 = vsel %vm1678, %v1651, %v1173
  %v1714 = vsel %vm1678, %v1653, %v1175
  %v1716 = vsel %vm1678, %v1655, %v1177
  %v1718 = vsel %vm1678, %v1657, %v1179
  %v1720 = vsel %vm1678, %v1659, %v1181
  %v1722 = vsel %vm1678, %v1661, %v1183
  %v1724 = vsel %vm1678, %v1663, %v1185
  %v1726 = vsel %vm1678, %v1665, %v1187
  %v1728 = vsel %vm1678, %v1667, %v1189
  %v1730 = vsel %vm1678, %v1669, %v1191
  %v1732 = vsel %vm1678, %v1671, %v1193
  %v1734 = vsel %vm1678, %v1673, %v1195
  %v1736 = vsel %vm1678, %v1675, %v1197
  %v1738 = vsel %vm1678, %v1677, %v1199
  %vm1739 = vcmask 392192
  %v1741 = vsel %vm1739, %v1680, %v1210
  %v1743 = vsel %vm1739, %v1682, %v1212
  %v1745 = vsel %vm1739, %v1684, %v1214
  %v1747 = vsel %vm1739, %v1686, %v1216
  %v1749 = vsel %vm1739, %v1688, %v1218
  %v1751 = vsel %vm1739, %v1690, %v1220
  %v1753 = vsel %vm1739, %v1692, %v1222
  %v1755 = vsel %vm1739, %v1694, %v1224
  %v1757 = vsel %vm1739, %v1696, %v1226
  %v1759 = vsel %vm1739, %v1698, %v1228
  %v1761 = vsel %vm1739, %v1700, %v1230
  %v1763 = vsel %vm1739, %v1702, %v1232
  %v1765 = vsel %vm1739, %v1704, %v1234
  %v1767 = vsel %vm1739, %v1706, %v1236
  %v1769 = vsel %vm1739, %v1708, %v1238
  %v1771 = vsel %vm1739, %v1710, %v1240
  %v1773 = vsel %vm1739, %v1712, %v1242
  %v1775 = vsel %vm1739, %v1714, %v1244
  %v1777 = vsel %vm1739, %v1716, %v1246
  %v1779 = vsel %vm1739, %v1718, %v1248
  %v1781 = vsel %vm1739, %v1720, %v1250
  %v1783 = vsel %vm1739, %v1722, %v1252
  %v1785 = vsel %vm1739, %v1724, %v1254
  %v1787 = vsel %vm1739, %v1726, %v1256
  %v1789 = vsel %vm1739, %v1728, %v1258
  %v1791 = vsel %vm1739, %v1730, %v1260
  %v1793 = vsel %vm1739, %v1732, %v1262
  %v1795 = vsel %vm1739, %v1734, %v1264
  %v1797 = vsel %vm1739, %v1736, %v1266
  %v1799 = vsel %vm1739, %v1738, %v1268
  %vm1800 = vcmask 457728
  %v1802 = vsel %vm1800, %v1741, %v1302
  %v1804 = vsel %vm1800, %v1743, %v1304
  %v1806 = vsel %vm1800, %v1745, %v1306
  %v1808 = vsel %vm1800, %v1747, %v1308
  %v1810 = vsel %vm1800, %v1749, %v1310
  %v1812 = vsel %vm1800, %v1751, %v1312
  %v1814 = vsel %vm1800, %v1753, %v1314
  %v1816 = vsel %vm1800, %v1755, %v1316
  %v1818 = vsel %vm1800, %v1757, %v1318
  %v1820 = vsel %vm1800, %v1759, %v1320
  %v1822 = vsel %vm1800, %v1761, %v1322
  %v1824 = vsel %vm1800, %v1763, %v1324
  %v1826 = vsel %vm1800, %v1765, %v1326
  %v1828 = vsel %vm1800, %v1767, %v1328
  %v1830 = vsel %vm1800, %v1769, %v1330
  %v1832 = vsel %vm1800, %v1771, %v1332
  %v1834 = vsel %vm1800, %v1773, %v1334
  %v1836 = vsel %vm1800, %v1775, %v1336
  %v1838 = vsel %vm1800, %v1777, %v1338
  %v1840 = vsel %vm1800, %v1779, %v1340
  %v1842 = vsel %vm1800, %v1781, %v1342
  %v1844 = vsel %vm1800, %v1783, %v1344
  %v1846 = vsel %vm1800, %v1785, %v1346
  %v1848 = vsel %vm1800, %v1787, %v1348
  %v1850 = vsel %vm1800, %v1789, %v1350
  %v1852 = vsel %vm1800, %v1791, %v1352
  %v1854 = vsel %vm1800, %v1793, %v1354
  %v1856 = vsel %vm1800, %v1795, %v1356
  %v1858 = vsel %vm1800, %v1797, %v1358
  %v1860 = vsel %vm1800, %v1799, %v1360
  %vm1861 = vcmask 523264
  %v1863 = vsel %vm1861, %v1802, %v1375
  %v1865 = vsel %vm1861, %v1804, %v1377
  %v1867 = vsel %vm1861, %v1806, %v1379
  %v1869 = vsel %vm1861, %v1808, %v1381
  %v1871 = vsel %vm1861, %v1810, %v1383
  %v1873 = vsel %vm1861, %v1812, %v1385
  %v1875 = vsel %vm1861, %v1814, %v1387
  %v1877 = vsel %vm1861, %v1816, %v1389
  %v1879 = vsel %vm1861, %v1818, %v1391
  %v1881 = vsel %vm1861, %v1820, %v1393
  %v1883 = vsel %vm1861, %v1822, %v1395
  %v1885 = vsel %vm1861, %v1824, %v1397
  %v1887 = vsel %vm1861, %v1826, %v1399
  %v1889 = vsel %vm1861, %v1828, %v1401
  %v1891 = vsel %vm1861, %v1830, %v1403
  %v1893 = vsel %vm1861, %v1832, %v1405
  %v1895 = vsel %vm1861, %v1834, %v1407
  %v1897 = vsel %vm1861, %v1836, %v1409
  %v1899 = vsel %vm1861, %v1838, %v1411
  %v1901 = vsel %vm1861, %v1840, %v1413
  %v1903 = vsel %vm1861, %v1842, %v1415
  %v1905 = vsel %vm1861, %v1844, %v1417
  %v1907 = vsel %vm1861, %v1846, %v1419
  %v1909 = vsel %vm1861, %v1848, %v1421
  %v1911 = vsel %vm1861, %v1850, %v1423
  %v1913 = vsel %vm1861, %v1852, %v1425
  %v1915 = vsel %vm1861, %v1854, %v1427
  %v1917 = vsel %vm1861, %v1856, %v1429
  %v1919 = vsel %vm1861, %v1858, %v1431
  %v1921 = vsel %vm1861, %v1860, %v1433
  %v1922 = vld [vmem:[%s1] sm:$0xf]
  %v1923 = vld [vmem:[%s1 + $0x4] sm:$0xf]
  %v1924 = vld [vmem:[%s1 + $0x8] sm:$0xf]
  %v1925 = vld [vmem:[%s1 + $0xc] sm:$0xf]
  %v1926 = vld [vmem:[%s1 + $0x10] sm:$0xf]
  %v1927 = vld [vmem:[%s1 + $0x14] sm:$0xf]
  %v1928 = vld [vmem:[%s1 + $0x18] sm:$0xf]
  %v1929 = vld [vmem:[%s1 + $0x1c] sm:$0xf]
  %v1930 = vld [vmem:[%s1 + $0x20] sm:$0xf]
  %v1940 = vunpack.c.l.b16 %v1922
  %v1941 = vunpack.c.l.b16 %v1923
  %v1942 = vunpack.c.l.b16 %v1924
  %v1943 = vunpack.c.l.b16 %v1925
  %v1944 = vunpack.c.l.b16 %v1926
  %v1945 = vunpack.c.l.b16 %v1927
  %v1946 = vunpack.c.l.b16 %v1928
  %v1947 = vunpack.c.l.b16 %v1929
  %v1948 = vunpack.c.l.b16 %v1930
  %v1949 = vpack.c.b16 %v1941, %v1940
  %v1950 = vpack.c.b16 %v1943, %v1942
  %v1951 = vpack.c.b16 %v1945, %v1944
  %v1952 = vpack.c.b16 %v1947, %v1946
  %v1953 = vpack.c.b16 %v1948, %v1948
  %vm1958 = vcmask 588800
  %v1959 = vsel %vm1958, %v1863, 0
  %v1961 = vsel %vm1958, %v1865, 0
  %v1963 = vsel %vm1958, %v1867, 0
  %v1965 = vsel %vm1958, %v1869, 0
  %v1967 = vsel %vm1958, %v1871, 0
  %v1969 = vsel %vm1958, %v1873, 0
  %v1971 = vsel %vm1958, %v1875, 0
  %v1973 = vsel %vm1958, %v1877, 0
  %v1975 = vsel %vm1958, %v1879, 0
  %v1977 = vsel %vm1958, %v1881, 0
  %v1979 = vsel %vm1958, %v1883, 0
  %v1981 = vsel %vm1958, %v1885, 0
  %v1983 = vsel %vm1958, %v1887, 0
  %v1985 = vsel %vm1958, %v1889, 0
  %v1987 = vsel %vm1958, %v1891, 0
  %v1989 = vsel %vm1958, %v1893, 0
  %v1991 = vsel %vm1958, %v1895, 0
  %v1993 = vsel %vm1958, %v1897, 0
  %v1995 = vsel %vm1958, %v1899, 0
  %v1997 = vsel %vm1958, %v1901, 0
  %v1999 = vsel %vm1958, %v1903, 0
  %v2001 = vsel %vm1958, %v1905, 0
  %v2003 = vsel %vm1958, %v1907, 0
  %v2005 = vsel %vm1958, %v1909, 0
  %v2007 = vsel %vm1958, %v1911, 0
  %v2009 = vsel %vm1958, %v1913, 0
  %v2011 = vsel %vm1958, %v1915, 0
  %v2013 = vsel %vm1958, %v1917, 0
  %v2015 = vsel %vm1958, %v1919, 0
  %v2017 = vsel %vm1958, %v1921, 0
  %vm2019 = vcmask 1043456
  %v2021 = vsel %vm2019, %v1953, 0
  %2023 = vmatprep.subr.bf16.mxu0 0
  %2024 = vmatpush1.bf16.msra.mxu0 %v1949
  %2025 = vmatprep.subr.bf16.mxu0 0
  %2026 = vmatpush1.bf16.msra.mxu0 %v1950
  %2027 = vmatprep.subr.bf16.mxu0 0
  %2028 = vmatpush1.bf16.msra.mxu0 %v1951
  %2029 = vmatprep.subr.bf16.mxu0 0
  %2030 = vmatpush1.bf16.msra.mxu0 %v1952
  %2031 = vmatprep.subr.bf16.mxu0 0
  %2032 = vmatpush1.bf16.msra.mxu0 %v2021
  %2033 = vmatprep.subr.bf16.mxu0 0
  %2034 = vmatpush1.bf16.msra.mxu0 0
  %2035 = vmatprep.subr.bf16.mxu0 0
  %2036 = vmatpush1.bf16.msra.mxu0 0
  %2037 = vmatprep.subr.bf16.mxu0 0
  %2038 = vmatpush1.bf16.msra.mxu0 0
  %2039 = vmatprep.subr.bf16.mxu0 0
  %2040 = vmatpush1.bf16.msra.mxu0 0
  %2041 = vmatprep.subr.bf16.mxu0 0
  %2042 = vmatpush1.bf16.msra.mxu0 0
  %2043 = vmatprep.subr.bf16.mxu0 0
  %2044 = vmatpush1.bf16.msra.mxu0 0
  %2045 = vmatprep.subr.bf16.mxu0 0
  %2046 = vmatpush1.bf16.msra.mxu0 0
  %2047 = vmatprep.subr.bf16.mxu0 0
  %2048 = vmatpush1.bf16.msra.mxu0 0
  %2049 = vmatprep.subr.bf16.mxu0 0
  %2050 = vmatpush1.bf16.msra.mxu0 0
  %2051 = vmatprep.subr.bf16.mxu0 0
  %2052 = vmatpush1.bf16.msra.mxu0 0
  %2053 = vmatprep.subr.bf16.mxu0 0
  %2054 = vmatpush1.bf16.msra.mxu0 0
  %2055 = vmatprep.mubr.bf16.mxu0 0
  %2056 = vmatmul.mubr.bf16.gmra.mrb[0].mxu0 %v1959
  %v2057 = vpop.f32.mrb[0].mxu0
  %v2058 = vadd.f32 0.0, %v2057
  %v2059 = vpop.f32.mrb[0].mxu0
  %v2060 = vpop.f32.mrb[0].mxu0
  %v2061 = vadd.f32 0.0, %v2060
  %v2062 = vpop.f32.mrb[0].mxu0
  %2063 = vmatprep.mubr.bf16.mxu0 0
  %2064 = vmatmul.mubr.bf16.gmra.mrb[0].mxu0 %v1961
  %v2065 = vpop.f32.mrb[0].mxu0
  %v2066 = vadd.f32 0.0, %v2065
  %v2067 = vpop.f32.mrb[0].mxu0
  %v2068 = vpop.f32.mrb[0].mxu0
  %v2069 = vadd.f32 0.0, %v2068
  %v2070 = vpop.f32.mrb[0].mxu0
  %2071 = vmatprep.mubr.bf16.mxu0 0
  %2072 = vmatmul.mubr.bf16.gmra.mrb[0].mxu0 %v1963
  %v2073 = vpop.f32.mrb[0].mxu0
  %v2074 = vadd.f32 0.0, %v2073
  %v2075 = vpop.f32.mrb[0].mxu0
  %v2076 = vpop.f32.mrb[0].mxu0
  %v2077 = vadd.f32 0.0, %v2076
  %v2078 = vpop.f32.mrb[0].mxu0
  %2079 = vmatprep.mubr.bf16.mxu0 0
  %2080 = vmatmul.mubr.bf16.gmra.mrb[0].mxu0 %v1965
  %v2081 = vpop.f32.mrb[0].mxu0
  %v2082 = vadd.f32 0.0, %v2081
  %v2083 = vpop.f32.mrb[0].mxu0
  %v2084 = vpop.f32.mrb[0].mxu0
  %v2085 = vadd.f32 0.0, %v2084
  %v2086 = vpop.f32.mrb[0].mxu0
  %2087 = vmatprep.mubr.bf16.mxu0 0
  %2088 = vmatmul.mubr.bf16.gmra.mrb[0].mxu0 %v1967
  %v2089 = vpop.f32.mrb[0].mxu0
  %v2090 = vadd.f32 0.0, %v2089
  %v2091 = vpop.f32.mrb[0].mxu0
  %v2092 = vpop.f32.mrb[0].mxu0
  %v2093 = vadd.f32 0.0, %v2092
  %v2094 = vpop.f32.mrb[0].mxu0
  %2095 = vmatprep.mubr.bf16.mxu0 0
  %2096 = vmatmul.mubr.bf16.gmra.mrb[0].mxu0 %v1969
  %v2097 = vpop.f32.mrb[0].mxu0
  %v2098 = vadd.f32 0.0, %v2097
  %v2099 = vpop.f32.mrb[0].mxu0
  %v2100 = vpop.f32.mrb[0].mxu0
  %v2101 = vadd.f32 0.0, %v2100
  %v2102 = vpop.f32.mrb[0].mxu0
  %2103 = vmatprep.mubr.bf16.mxu0 0
  %2104 = vmatmul.mubr.bf16.gmra.mrb[0].mxu0 %v1971
  %v2105 = vpop.f32.mrb[0].mxu0
  %v2106 = vadd.f32 0.0, %v2105
  %v2107 = vpop.f32.mrb[0].mxu0
  %v2108 = vpop.f32.mrb[0].mxu0
  %v2109 = vadd.f32 0.0, %v2108
  %v2110 = vpop.f32.mrb[0].mxu0
  %2111 = vmatprep.mubr.bf16.mxu0 0
  %2112 = vmatmul.mubr.bf16.gmra.mrb[0].mxu0 %v1973
  %v2113 = vpop.f32.mrb[0].mxu0
  %v2114 = vadd.f32 0.0, %v2113
  %v2115 = vpop.f32.mrb[0].mxu0
  %v2116 = vpop.f32.mrb[0].mxu0
  %v2117 = vadd.f32 0.0, %v2116
  %v2118 = vpop.f32.mrb[0].mxu0
  %2119 = vmatprep.mubr.bf16.mxu0 0
  %2120 = vmatmul.mubr.bf16.gmra.mrb[0].mxu0 %v1975
  %v2121 = vpop.f32.mrb[0].mxu0
  %v2122 = vadd.f32 0.0, %v2121
  %v2123 = vpop.f32.mrb[0].mxu0
  %v2124 = vpop.f32.mrb[0].mxu0
  %v2125 = vadd.f32 0.0, %v2124
  %v2126 = vpop.f32.mrb[0].mxu0
  %2127 = vmatprep.mubr.bf16.mxu0 0
  %2128 = vmatmul.mubr.bf16.gmra.mrb[0].mxu0 %v1977
  %v2129 = vpop.f32.mrb[0].mxu0
  %v2130 = vadd.f32 0.0, %v2129
  %v2131 = vpop.f32.mrb[0].mxu0
  %v2132 = vpop.f32.mrb[0].mxu0
  %v2133 = vadd.f32 0.0, %v2132
  %v2134 = vpop.f32.mrb[0].mxu0
  %2135 = vmatprep.mubr.bf16.mxu0 0
  %2136 = vmatmul.mubr.bf16.gmra.mrb[0].mxu0 %v1979
  %v2137 = vpop.f32.mrb[0].mxu0
  %v2138 = vadd.f32 0.0, %v2137
  %v2139 = vpop.f32.mrb[0].mxu0
  %v2140 = vpop.f32.mrb[0].mxu0
  %v2141 = vadd.f32 0.0, %v2140
  %v2142 = vpop.f32.mrb[0].mxu0
  %2143 = vmatprep.mubr.bf16.mxu0 0
  %2144 = vmatmul.mubr.bf16.gmra.mrb[0].mxu0 %v1981
  %v2145 = vpop.f32.mrb[0].mxu0
  %v2146 = vadd.f32 0.0, %v2145
  %v2147 = vpop.f32.mrb[0].mxu0
  %v2148 = vpop.f32.mrb[0].mxu0
  %v2149 = vadd.f32 0.0, %v2148
  %v2150 = vpop.f32.mrb[0].mxu0
  %2151 = vmatprep.mubr.bf16.mxu0 0
  %2152 = vmatmul.mubr.bf16.gmra.mrb[0].mxu0 %v1983
  %v2153 = vpop.f32.mrb[0].mxu0
  %v2154 = vadd.f32 0.0, %v2153
  %v2155 = vpop.f32.mrb[0].mxu0
  %v2156 = vpop.f32.mrb[0].mxu0
  %v2157 = vadd.f32 0.0, %v2156
  %v2158 = vpop.f32.mrb[0].mxu0
  %2159 = vmatprep.mubr.bf16.mxu0 0
  %2160 = vmatmul.mubr.bf16.gmra.mrb[0].mxu0 %v1985
  %v2161 = vpop.f32.mrb[0].mxu0
  %v2162 = vadd.f32 0.0, %v2161
  %v2163 = vpop.f32.mrb[0].mxu0
  %v2164 = vpop.f32.mrb[0].mxu0
  %v2165 = vadd.f32 0.0, %v2164
  %v2166 = vpop.f32.mrb[0].mxu0
  %2167 = vmatprep.mubr.bf16.mxu0 0
  %2168 = vmatmul.mubr.bf16.gmra.mrb[0].mxu0 %v1987
  %v2169 = vpop.f32.mrb[0].mxu0
  %v2170 = vadd.f32 0.0, %v2169
  %v2171 = vpop.f32.mrb[0].mxu0
  %v2172 = vpop.f32.mrb[0].mxu0
  %v2173 = vadd.f32 0.0, %v2172
  %v2174 = vpop.f32.mrb[0].mxu0
  %2175 = vmatprep.mubr.bf16.mxu0 0
  %2176 = vmatmul.mubr.bf16.gmra.mrb[0].mxu0 %v1989
  %v2177 = vpop.f32.mrb[0].mxu0
  %v2178 = vadd.f32 0.0, %v2177
  %v2179 = vpop.f32.mrb[0].mxu0
  %v2180 = vpop.f32.mrb[0].mxu0
  %v2181 = vadd.f32 0.0, %v2180
  %v2182 = vpop.f32.mrb[0].mxu0
  %2183 = vmatprep.mubr.bf16.mxu0 0
  %2184 = vmatmul.mubr.bf16.gmra.mrb[0].mxu0 %v1991
  %v2185 = vpop.f32.mrb[0].mxu0
  %v2186 = vadd.f32 0.0, %v2185
  %v2187 = vpop.f32.mrb[0].mxu0
  %v2188 = vpop.f32.mrb[0].mxu0
  %v2189 = vadd.f32 0.0, %v2188
  %v2190 = vpop.f32.mrb[0].mxu0
  %2191 = vmatprep.mubr.bf16.mxu0 0
  %2192 = vmatmul.mubr.bf16.gmra.mrb[0].mxu0 %v1993
  %v2193 = vpop.f32.mrb[0].mxu0
  %v2194 = vadd.f32 0.0, %v2193
  %v2195 = vpop.f32.mrb[0].mxu0
  %v2196 = vpop.f32.mrb[0].mxu0
  %v2197 = vadd.f32 0.0, %v2196
  %v2198 = vpop.f32.mrb[0].mxu0
  %2199 = vmatprep.mubr.bf16.mxu0 0
  %2200 = vmatmul.mubr.bf16.gmra.mrb[0].mxu0 %v1995
  %v2201 = vpop.f32.mrb[0].mxu0
  %v2202 = vadd.f32 0.0, %v2201
  %v2203 = vpop.f32.mrb[0].mxu0
  %v2204 = vpop.f32.mrb[0].mxu0
  %v2205 = vadd.f32 0.0, %v2204
  %v2206 = vpop.f32.mrb[0].mxu0
  %2207 = vmatprep.mubr.bf16.mxu0 0
  %2208 = vmatmul.mubr.bf16.gmra.mrb[0].mxu0 %v1997
  %v2209 = vpop.f32.mrb[0].mxu0
  %v2210 = vadd.f32 0.0, %v2209
  %v2211 = vpop.f32.mrb[0].mxu0
  %v2212 = vpop.f32.mrb[0].mxu0
  %v2213 = vadd.f32 0.0, %v2212
  %v2214 = vpop.f32.mrb[0].mxu0
  %2215 = vmatprep.mubr.bf16.mxu0 0
  %2216 = vmatmul.mubr.bf16.gmra.mrb[0].mxu0 %v1999
  %v2217 = vpop.f32.mrb[0].mxu0
  %v2218 = vadd.f32 0.0, %v2217
  %v2219 = vpop.f32.mrb[0].mxu0
  %v2220 = vpop.f32.mrb[0].mxu0
  %v2221 = vadd.f32 0.0, %v2220
  %v2222 = vpop.f32.mrb[0].mxu0
  %2223 = vmatprep.mubr.bf16.mxu0 0
  %2224 = vmatmul.mubr.bf16.gmra.mrb[0].mxu0 %v2001
  %v2225 = vpop.f32.mrb[0].mxu0
  %v2226 = vadd.f32 0.0, %v2225
  %v2227 = vpop.f32.mrb[0].mxu0
  %v2228 = vpop.f32.mrb[0].mxu0
  %v2229 = vadd.f32 0.0, %v2228
  %v2230 = vpop.f32.mrb[0].mxu0
  %2231 = vmatprep.mubr.bf16.mxu0 0
  %2232 = vmatmul.mubr.bf16.gmra.mrb[0].mxu0 %v2003
  %v2233 = vpop.f32.mrb[0].mxu0
  %v2234 = vadd.f32 0.0, %v2233
  %v2235 = vpop.f32.mrb[0].mxu0
  %v2236 = vpop.f32.mrb[0].mxu0
  %v2237 = vadd.f32 0.0, %v2236
  %v2238 = vpop.f32.mrb[0].mxu0
  %2239 = vmatprep.mubr.bf16.mxu0 0
  %2240 = vmatmul.mubr.bf16.gmra.mrb[0].mxu0 %v2005
  %v2241 = vpop.f32.mrb[0].mxu0
  %v2242 = vadd.f32 0.0, %v2241
  %v2243 = vpop.f32.mrb[0].mxu0
  %v2244 = vpop.f32.mrb[0].mxu0
  %v2245 = vadd.f32 0.0, %v2244
  %v2246 = vpop.f32.mrb[0].mxu0
  %2247 = vmatprep.mubr.bf16.mxu0 0
  %2248 = vmatmul.mubr.bf16.gmra.mrb[0].mxu0 %v2007
  %v2249 = vpop.f32.mrb[0].mxu0
  %v2250 = vadd.f32 0.0, %v2249
  %v2251 = vpop.f32.mrb[0].mxu0
  %v2252 = vpop.f32.mrb[0].mxu0
  %v2253 = vadd.f32 0.0, %v2252
  %v2254 = vpop.f32.mrb[0].mxu0
  %2255 = vmatprep.mubr.bf16.mxu0 0
  %2256 = vmatmul.mubr.bf16.gmra.mrb[0].mxu0 %v2009
  %v2257 = vpop.f32.mrb[0].mxu0
  %v2258 = vadd.f32 0.0, %v2257
  %v2259 = vpop.f32.mrb[0].mxu0
  %v2260 = vpop.f32.mrb[0].mxu0
  %v2261 = vadd.f32 0.0, %v2260
  %v2262 = vpop.f32.mrb[0].mxu0
  %2263 = vmatprep.mubr.bf16.mxu0 0
  %2264 = vmatmul.mubr.bf16.gmra.mrb[0].mxu0 %v2011
  %v2265 = vpop.f32.mrb[0].mxu0
  %v2266 = vadd.f32 0.0, %v2265
  %v2267 = vpop.f32.mrb[0].mxu0
  %v2268 = vpop.f32.mrb[0].mxu0
  %v2269 = vadd.f32 0.0, %v2268
  %v2270 = vpop.f32.mrb[0].mxu0
  %2271 = vmatprep.mubr.bf16.mxu0 0
  %2272 = vmatmul.mubr.bf16.gmra.mrb[0].mxu0 %v2013
  %v2273 = vpop.f32.mrb[0].mxu0
  %v2274 = vadd.f32 0.0, %v2273
  %v2275 = vpop.f32.mrb[0].mxu0
  %v2276 = vpop.f32.mrb[0].mxu0
  %v2277 = vadd.f32 0.0, %v2276
  %v2278 = vpop.f32.mrb[0].mxu0
  %2279 = vmatprep.mubr.bf16.mxu0 0
  %2280 = vmatmul.mubr.bf16.gmra.mrb[0].mxu0 %v2015
  %v2281 = vpop.f32.mrb[0].mxu0
  %v2282 = vadd.f32 0.0, %v2281
  %v2283 = vpop.f32.mrb[0].mxu0
  %v2284 = vpop.f32.mrb[0].mxu0
  %v2285 = vadd.f32 0.0, %v2284
  %v2286 = vpop.f32.mrb[0].mxu0
  %2287 = vmatprep.mubr.bf16.mxu0 0
  %2288 = vmatmul.mubr.bf16.gmra.mrb[0].mxu0 %v2017
  %v2289 = vpop.f32.mrb[0].mxu0
  %v2290 = vadd.f32 0.0, %v2289
  %v2291 = vpop.f32.mrb[0].mxu0
  %v2292 = vpop.f32.mrb[0].mxu0
  %v2293 = vadd.f32 0.0, %v2292
  %v2294 = vpop.f32.mrb[0].mxu0
  %2295 = vdwg.mxu0
  %2296 = vst.msk [vmem:[#allocation2] sm:$0xff] %vm1861, %v2058
  %2297 = vst.msk [vmem:[#allocation2 + $0x8] sm:$0xff] %vm1861, %v2061
  %2298 = vst.msk [vmem:[#allocation2 + $0x10] sm:$0xff] %vm1861, %v2066
  %2299 = vst.msk [vmem:[#allocation2 + $0x18] sm:$0xff] %vm1861, %v2069
  %2300 = vst.msk [vmem:[#allocation2 + $0x20] sm:$0xff] %vm1861, %v2074
  %2301 = vst.msk [vmem:[#allocation2 + $0x28] sm:$0xff] %vm1861, %v2077
  %2302 = vst.msk [vmem:[#allocation2 + $0x30] sm:$0xff] %vm1861, %v2082
  %2303 = vst.msk [vmem:[#allocation2 + $0x38] sm:$0xff] %vm1861, %v2085
  %2304 = vst.msk [vmem:[#allocation2 + $0x40] sm:$0xff] %vm1861, %v2090
  %2305 = vst.msk [vmem:[#allocation2 + $0x48] sm:$0xff] %vm1861, %v2093
  %2306 = vst.msk [vmem:[#allocation2 + $0x50] sm:$0xff] %vm1861, %v2098
  %2307 = vst.msk [vmem:[#allocation2 + $0x58] sm:$0xff] %vm1861, %v2101
  %2308 = vst.msk [vmem:[#allocation2 + $0x60] sm:$0xff] %vm1861, %v2106
  %2309 = vst.msk [vmem:[#allocation2 + $0x68] sm:$0xff] %vm1861, %v2109
  %2310 = vst.msk [vmem:[#allocation2 + $0x70] sm:$0xff] %vm1861, %v2114
  %2311 = vst.msk [vmem:[#allocation2 + $0x78] sm:$0xff] %vm1861, %v2117
  %2312 = vst.msk [vmem:[#allocation2 + $0x80] sm:$0xff] %vm1861, %v2122
  %2313 = vst.msk [vmem:[#allocation2 + $0x88] sm:$0xff] %vm1861, %v2125
  %2314 = vst.msk [vmem:[#allocation2 + $0x90] sm:$0xff] %vm1861, %v2130
  %2315 = vst.msk [vmem:[#allocation2 + $0x98] sm:$0xff] %vm1861, %v2133
  %2316 = vst.msk [vmem:[#allocation2 + $0xa0] sm:$0xff] %vm1861, %v2138
  %2317 = vst.msk [vmem:[#allocation2 + $0xa8] sm:$0xff] %vm1861, %v2141
  %2318 = vst.msk [vmem:[#allocation2 + $0xb0] sm:$0xff] %vm1861, %v2146
  %2319 = vst.msk [vmem:[#allocation2 + $0xb8] sm:$0xff] %vm1861, %v2149
  %2320 = vst.msk [vmem:[#allocation2 + $0xc0] sm:$0xff] %vm1861, %v2154
  %2321 = vst.msk [vmem:[#allocation2 + $0xc8] sm:$0xff] %vm1861, %v2157
  %2322 = vst.msk [vmem:[#allocation2 + $0xd0] sm:$0xff] %vm1861, %v2162
  %2323 = vst.msk [vmem:[#allocation2 + $0xd8] sm:$0xff] %vm1861, %v2165
  %2324 = vst.msk [vmem:[#allocation2 + $0xe0] sm:$0xff] %vm1861, %v2170
  %2325 = vst.msk [vmem:[#allocation2 + $0xe8] sm:$0xff] %vm1861, %v2173
  %2326 = vst.msk [vmem:[#allocation2 + $0xf0] sm:$0xff] %vm1861, %v2178
  %2327 = vst.msk [vmem:[#allocation2 + $0xf8] sm:$0xff] %vm1861, %v2181
  %2328 = vst.msk [vmem:[#allocation2 + $0x100] sm:$0xff] %vm1861, %v2186
  %2329 = vst.msk [vmem:[#allocation2 + $0x108] sm:$0xff] %vm1861, %v2189
  %2330 = vst.msk [vmem:[#allocation2 + $0x110] sm:$0xff] %vm1861, %v2194
  %2331 = vst.msk [vmem:[#allocation2 + $0x118] sm:$0xff] %vm1861, %v2197
  %2332 = vst.msk [vmem:[#allocation2 + $0x120] sm:$0xff] %vm1861, %v2202
  %2333 = vst.msk [vmem:[#allocation2 + $0x128] sm:$0xff] %vm1861, %v2205
  %2334 = vst.msk [vmem:[#allocation2 + $0x130] sm:$0xff] %vm1861, %v2210
  %2335 = vst.msk [vmem:[#allocation2 + $0x138] sm:$0xff] %vm1861, %v2213
  %2336 = vst.msk [vmem:[#allocation2 + $0x140] sm:$0xff] %vm1861, %v2218
  %2337 = vst.msk [vmem:[#allocation2 + $0x148] sm:$0xff] %vm1861, %v2221
  %2338 = vst.msk [vmem:[#allocation2 + $0x150] sm:$0xff] %vm1861, %v2226
  %2339 = vst.msk [vmem:[#allocation2 + $0x158] sm:$0xff] %vm1861, %v2229
  %2340 = vst.msk [vmem:[#allocation2 + $0x160] sm:$0xff] %vm1861, %v2234
  %2341 = vst.msk [vmem:[#allocation2 + $0x168] sm:$0xff] %vm1861, %v2237
  %2342 = vst.msk [vmem:[#allocation2 + $0x170] sm:$0xff] %vm1861, %v2242
  %2343 = vst.msk [vmem:[#allocation2 + $0x178] sm:$0xff] %vm1861, %v2245
  %2344 = vst.msk [vmem:[#allocation2 + $0x180] sm:$0xff] %vm1861, %v2250
  %2345 = vst.msk [vmem:[#allocation2 + $0x188] sm:$0xff] %vm1861, %v2253
  %2346 = vst.msk [vmem:[#allocation2 + $0x190] sm:$0xff] %vm1861, %v2258
  %2347 = vst.msk [vmem:[#allocation2 + $0x198] sm:$0xff] %vm1861, %v2261
  %2348 = vst.msk [vmem:[#allocation2 + $0x1a0] sm:$0xff] %vm1861, %v2266
  %2349 = vst.msk [vmem:[#allocation2 + $0x1a8] sm:$0xff] %vm1861, %v2269
  %2350 = vst.msk [vmem:[#allocation2 + $0x1b0] sm:$0xff] %vm1861, %v2274
  %2351 = vst.msk [vmem:[#allocation2 + $0x1b8] sm:$0xff] %vm1861, %v2277
  %2352 = vst.msk [vmem:[#allocation2 + $0x1c0] sm:$0xff] %vm1861, %v2282
  %2353 = vst.msk [vmem:[#allocation2 + $0x1c8] sm:$0xff] %vm1861, %v2285
  %2354 = vst.msk [vmem:[#allocation2 + $0x1d0] sm:$0xff] %vm1861, %v2290
  %2355 = vst.msk [vmem:[#allocation2 + $0x1d8] sm:$0xff] %vm1861, %v2293
  %v2356 = vld [vmem:[%s2] sm:$0xf]
  %v2357 = vmul.f32 %v2058, %v2058
  %v2358 = vmul.f32 %v2061, %v2061
  %v2359 = vmul.f32 %v2066, %v2066
  %v2360 = vmul.f32 %v2069, %v2069
  %v2361 = vmul.f32 %v2074, %v2074
  %v2362 = vmul.f32 %v2077, %v2077
  %v2363 = vmul.f32 %v2082, %v2082
  %v2364 = vmul.f32 %v2085, %v2085
  %v2365 = vmul.f32 %v2090, %v2090
  %v2366 = vmul.f32 %v2093, %v2093
  %v2367 = vmul.f32 %v2098, %v2098
  %v2368 = vmul.f32 %v2101, %v2101
  %v2369 = vmul.f32 %v2106, %v2106
  %v2370 = vmul.f32 %v2109, %v2109
  %v2371 = vmul.f32 %v2114, %v2114
  %v2372 = vmul.f32 %v2117, %v2117
  %v2373 = vmul.f32 %v2122, %v2122
  %v2374 = vmul.f32 %v2125, %v2125
  %v2375 = vmul.f32 %v2130, %v2130
  %v2376 = vmul.f32 %v2133, %v2133
  %v2377 = vmul.f32 %v2138, %v2138
  %v2378 = vmul.f32 %v2141, %v2141
  %v2379 = vmul.f32 %v2146, %v2146
  %v2380 = vmul.f32 %v2149, %v2149
  %v2381 = vmul.f32 %v2154, %v2154
  %v2382 = vmul.f32 %v2157, %v2157
  %v2383 = vmul.f32 %v2162, %v2162
  %v2384 = vmul.f32 %v2165, %v2165
  %v2385 = vmul.f32 %v2170, %v2170
  %v2386 = vmul.f32 %v2173, %v2173
  %v2387 = vmul.f32 %v2178, %v2178
  %v2388 = vmul.f32 %v2181, %v2181
  %v2389 = vmul.f32 %v2186, %v2186
  %v2390 = vmul.f32 %v2189, %v2189
  %v2391 = vmul.f32 %v2194, %v2194
  %v2392 = vmul.f32 %v2197, %v2197
  %v2393 = vmul.f32 %v2202, %v2202
  %v2394 = vmul.f32 %v2205, %v2205
  %v2395 = vmul.f32 %v2210, %v2210
  %v2396 = vmul.f32 %v2213, %v2213
  %v2397 = vmul.f32 %v2218, %v2218
  %v2398 = vmul.f32 %v2221, %v2221
  %v2399 = vmul.f32 %v2226, %v2226
  %v2400 = vmul.f32 %v2229, %v2229
  %v2401 = vmul.f32 %v2234, %v2234
  %v2402 = vmul.f32 %v2237, %v2237
  %v2403 = vmul.f32 %v2242, %v2242
  %v2404 = vmul.f32 %v2245, %v2245
  %v2405 = vmul.f32 %v2250, %v2250
  %v2406 = vmul.f32 %v2253, %v2253
  %v2407 = vmul.f32 %v2258, %v2258
  %v2408 = vmul.f32 %v2261, %v2261
  %v2409 = vmul.f32 %v2266, %v2266
  %v2410 = vmul.f32 %v2269, %v2269
  %v2411 = vmul.f32 %v2274, %v2274
  %v2412 = vmul.f32 %v2277, %v2277
  %v2413 = vmul.f32 %v2282, %v2282
  %v2414 = vmul.f32 %v2285, %v2285
  %v2415 = vmul.f32 %v2290, %v2290
  %v2416 = vmul.f32 %v2293, %v2293
  %2477 = vrot.lane.b32.xlu0 %v2357, 64
  %v2478 = vpop.permute.xlu0 %2477
  %2479 = vrot.lane.b32.xlu0 %v2358, 64
  %v2480 = vpop.permute.xlu0 %2479
  %2481 = vrot.lane.b32.xlu0 %v2359, 64
  %v2482 = vpop.permute.xlu0 %2481
  %2483 = vrot.lane.b32.xlu0 %v2360, 64
  %v2484 = vpop.permute.xlu0 %2483
  %2485 = vrot.lane.b32.xlu0 %v2361, 64
  %v2486 = vpop.permute.xlu0 %2485
  %2487 = vrot.lane.b32.xlu0 %v2362, 64
  %v2488 = vpop.permute.xlu0 %2487
  %2489 = vrot.lane.b32.xlu0 %v2363, 64
  %v2490 = vpop.permute.xlu0 %2489
  %2491 = vrot.lane.b32.xlu0 %v2364, 64
  %v2492 = vpop.permute.xlu0 %2491
  %2493 = vrot.lane.b32.xlu0 %v2365, 64
  %v2494 = vpop.permute.xlu0 %2493
  %2495 = vrot.lane.b32.xlu0 %v2366, 64
  %v2496 = vpop.permute.xlu0 %2495
  %2497 = vrot.lane.b32.xlu0 %v2367, 64
  %v2498 = vpop.permute.xlu0 %2497
  %2499 = vrot.lane.b32.xlu0 %v2368, 64
  %v2500 = vpop.permute.xlu0 %2499
  %2501 = vrot.lane.b32.xlu0 %v2369, 64
  %v2502 = vpop.permute.xlu0 %2501
  %2503 = vrot.lane.b32.xlu0 %v2370, 64
  %v2504 = vpop.permute.xlu0 %2503
  %2505 = vrot.lane.b32.xlu0 %v2371, 64
  %v2506 = vpop.permute.xlu0 %2505
  %2507 = vrot.lane.b32.xlu0 %v2372, 64
  %v2508 = vpop.permute.xlu0 %2507
  %2509 = vrot.lane.b32.xlu0 %v2373, 64
  %v2510 = vpop.permute.xlu0 %2509
  %2511 = vrot.lane.b32.xlu0 %v2374, 64
  %v2512 = vpop.permute.xlu0 %2511
  %2513 = vrot.lane.b32.xlu0 %v2375, 64
  %v2514 = vpop.permute.xlu0 %2513
  %2515 = vrot.lane.b32.xlu0 %v2376, 64
  %v2516 = vpop.permute.xlu0 %2515
  %2517 = vrot.lane.b32.xlu0 %v2377, 64
  %v2518 = vpop.permute.xlu0 %2517
  %2519 = vrot.lane.b32.xlu0 %v2378, 64
  %v2520 = vpop.permute.xlu0 %2519
  %2521 = vrot.lane.b32.xlu0 %v2379, 64
  %v2522 = vpop.permute.xlu0 %2521
  %2523 = vrot.lane.b32.xlu0 %v2380, 64
  %v2524 = vpop.permute.xlu0 %2523
  %2525 = vrot.lane.b32.xlu0 %v2381, 64
  %v2526 = vpop.permute.xlu0 %2525
  %2527 = vrot.lane.b32.xlu0 %v2382, 64
  %v2528 = vpop.permute.xlu0 %2527
  %2529 = vrot.lane.b32.xlu0 %v2383, 64
  %v2530 = vpop.permute.xlu0 %2529
  %2531 = vrot.lane.b32.xlu0 %v2384, 64
  %v2532 = vpop.permute.xlu0 %2531
  %2533 = vrot.lane.b32.xlu0 %v2385, 64
  %v2534 = vpop.permute.xlu0 %2533
  %2535 = vrot.lane.b32.xlu0 %v2386, 64
  %v2536 = vpop.permute.xlu0 %2535
  %2537 = vrot.lane.b32.xlu0 %v2387, 64
  %v2538 = vpop.permute.xlu0 %2537
  %2539 = vrot.lane.b32.xlu0 %v2388, 64
  %v2540 = vpop.permute.xlu0 %2539
  %2541 = vrot.lane.b32.xlu0 %v2389, 64
  %v2542 = vpop.permute.xlu0 %2541
  %2543 = vrot.lane.b32.xlu0 %v2390, 64
  %v2544 = vpop.permute.xlu0 %2543
  %2545 = vrot.lane.b32.xlu0 %v2391, 64
  %v2546 = vpop.permute.xlu0 %2545
  %2547 = vrot.lane.b32.xlu0 %v2392, 64
  %v2548 = vpop.permute.xlu0 %2547
  %2549 = vrot.lane.b32.xlu0 %v2393, 64
  %v2550 = vpop.permute.xlu0 %2549
  %2551 = vrot.lane.b32.xlu0 %v2394, 64
  %v2552 = vpop.permute.xlu0 %2551
  %2553 = vrot.lane.b32.xlu0 %v2395, 64
  %v2554 = vpop.permute.xlu0 %2553
  %2555 = vrot.lane.b32.xlu0 %v2396, 64
  %v2556 = vpop.permute.xlu0 %2555
  %2557 = vrot.lane.b32.xlu0 %v2397, 64
  %v2558 = vpop.permute.xlu0 %2557
  %2559 = vrot.lane.b32.xlu0 %v2398, 64
  %v2560 = vpop.permute.xlu0 %2559
  %2561 = vrot.lane.b32.xlu0 %v2399, 64
  %v2562 = vpop.permute.xlu0 %2561
  %2563 = vrot.lane.b32.xlu0 %v2400, 64
  %v2564 = vpop.permute.xlu0 %2563
  %2565 = vrot.lane.b32.xlu0 %v2401, 64
  %v2566 = vpop.permute.xlu0 %2565
  %2567 = vrot.lane.b32.xlu0 %v2402, 64
  %v2568 = vpop.permute.xlu0 %2567
  %2569 = vrot.lane.b32.xlu0 %v2403, 64
  %v2570 = vpop.permute.xlu0 %2569
  %2571 = vrot.lane.b32.xlu0 %v2404, 64
  %v2572 = vpop.permute.xlu0 %2571
  %2573 = vrot.lane.b32.xlu0 %v2405, 64
  %v2574 = vpop.permute.xlu0 %2573
  %2575 = vrot.lane.b32.xlu0 %v2406, 64
  %v2576 = vpop.permute.xlu0 %2575
  %2577 = vrot.lane.b32.xlu0 %v2407, 64
  %v2578 = vpop.permute.xlu0 %2577
  %2579 = vrot.lane.b32.xlu0 %v2408, 64
  %v2580 = vpop.permute.xlu0 %2579
  %2581 = vrot.lane.b32.xlu0 %v2409, 64
  %v2582 = vpop.permute.xlu0 %2581
  %2583 = vrot.lane.b32.xlu0 %v2410, 64
  %v2584 = vpop.permute.xlu0 %2583
  %2585 = vrot.lane.b32.xlu0 %v2411, 64
  %v2586 = vpop.permute.xlu0 %2585
  %2587 = vrot.lane.b32.xlu0 %v2412, 64
  %v2588 = vpop.permute.xlu0 %2587
  %2589 = vrot.lane.b32.xlu0 %v2413, 64
  %v2590 = vpop.permute.xlu0 %2589
  %2591 = vrot.lane.b32.xlu0 %v2414, 64
  %v2592 = vpop.permute.xlu0 %2591
  %2593 = vrot.lane.b32.xlu0 %v2415, 64
  %v2594 = vpop.permute.xlu0 %2593
  %2595 = vrot.lane.b32.xlu0 %v2416, 64
  %v2596 = vpop.permute.xlu0 %2595
  %v2657 = vsel %vm1861, %v2058, %v2478
  %v2658 = vsel %vm1861, %v2061, %v2480
  %v2659 = vsel %vm1861, %v2066, %v2482
  %v2660 = vsel %vm1861, %v2069, %v2484
  %v2661 = vsel %vm1861, %v2074, %v2486
  %v2662 = vsel %vm1861, %v2077, %v2488
  %v2663 = vsel %vm1861, %v2082, %v2490
  %v2664 = vsel %vm1861, %v2085, %v2492
  %v2665 = vsel %vm1861, %v2090, %v2494
  %v2666 = vsel %vm1861, %v2093, %v2496
  %v2667 = vsel %vm1861, %v2098, %v2498
  %v2668 = vsel %vm1861, %v2101, %v2500
  %v2669 = vsel %vm1861, %v2106, %v2502
  %v2670 = vsel %vm1861, %v2109, %v2504
  %v2671 = vsel %vm1861, %v2114, %v2506
  %v2672 = vsel %vm1861, %v2117, %v2508
  %v2673 = vsel %vm1861, %v2122, %v2510
  %v2674 = vsel %vm1861, %v2125, %v2512
  %v2675 = vsel %vm1861, %v2130, %v2514
  %v2676 = vsel %vm1861, %v2133, %v2516
  %v2677 = vsel %vm1861, %v2138, %v2518
  %v2678 = vsel %vm1861, %v2141, %v2520
  %v2679 = vsel %vm1861, %v2146, %v2522
  %v2680 = vsel %vm1861, %v2149, %v2524
  %v2681 = vsel %vm1861, %v2154, %v2526
  %v2682 = vsel %vm1861, %v2157, %v2528
  %v2683 = vsel %vm1861, %v2162, %v2530
  %v2684 = vsel %vm1861, %v2165, %v2532
  %v2685 = vsel %vm1861, %v2170, %v2534
  %v2686 = vsel %vm1861, %v2173, %v2536
  %v2687 = vsel %vm1861, %v2178, %v2538
  %v2688 = vsel %vm1861, %v2181, %v2540
  %v2689 = vsel %vm1861, %v2186, %v2542
  %v2690 = vsel %vm1861, %v2189, %v2544
  %v2691 = vsel %vm1861, %v2194, %v2546
  %v2692 = vsel %vm1861, %v2197, %v2548
  %v2693 = vsel %vm1861, %v2202, %v2550
  %v2694 = vsel %vm1861, %v2205, %v2552
  %v2695 = vsel %vm1861, %v2210, %v2554
  %v2696 = vsel %vm1861, %v2213, %v2556
  %v2697 = vsel %vm1861, %v2218, %v2558
  %v2698 = vsel %vm1861, %v2221, %v2560
  %v2699 = vsel %vm1861, %v2226, %v2562
  %v2700 = vsel %vm1861, %v2229, %v2564
  %v2701 = vsel %vm1861, %v2234, %v2566
  %v2702 = vsel %vm1861, %v2237, %v2568
  %v2703 = vsel %vm1861, %v2242, %v2570
  %v2704 = vsel %vm1861, %v2245, %v2572
  %v2705 = vsel %vm1861, %v2250, %v2574
  %v2706 = vsel %vm1861, %v2253, %v2576
  %v2707 = vsel %vm1861, %v2258, %v2578
  %v2708 = vsel %vm1861, %v2261, %v2580
  %v2709 = vsel %vm1861, %v2266, %v2582
  %v2710 = vsel %vm1861, %v2269, %v2584
  %v2711 = vsel %vm1861, %v2274, %v2586
  %v2712 = vsel %vm1861, %v2277, %v2588
  %v2713 = vsel %vm1861, %v2282, %v2590
  %v2714 = vsel %vm1861, %v2285, %v2592
  %v2715 = vsel %vm1861, %v2290, %v2594
  %v2716 = vsel %vm1861, %v2293, %v2596
  %s2717 = scalar_lea.vmem %s0, 268
  %v2718 = vld [vmem:[%s2717] sm:$0xf]
  %v2719 = vld [vmem:[%s2717 + $0x4] sm:$0xf]
  %v2720 = vld [vmem:[%s2717 + $0x8] sm:$0xf]
  %v2721 = vld [vmem:[%s2717 + $0xc] sm:$0xf]
  %v2722 = vld [vmem:[%s2717 + $0x10] sm:$0xf]
  %v2723 = vld [vmem:[%s2717 + $0x14] sm:$0xf]
  %v2724 = vld [vmem:[%s2717 + $0x18] sm:$0xf]
  %v2725 = vld [vmem:[%s2717 + $0x1c] sm:$0xf]
  %v2726 = vld [vmem:[%s2717 + $0x20] sm:$0xf]
  %v2727 = vld [vmem:[%s2717 + $0x24] sm:$0xf]
  %v2728 = vld [vmem:[%s2717 + $0x28] sm:$0xf]
  %v2729 = vld [vmem:[%s2717 + $0x2c] sm:$0xf]
  %v2730 = vld [vmem:[%s2717 + $0x30] sm:$0xf]
  %v2731 = vld [vmem:[%s2717 + $0x34] sm:$0xf]
  %v2732 = vld [vmem:[%s2717 + $0x38] sm:$0xf]
  %v2733 = vld [vmem:[%s2717 + $0x3c] sm:$0xf]
  %v2734 = vld [vmem:[%s2717 + $0x40] sm:$0xf]
  %v2735 = vld [vmem:[%s2717 + $0x44] sm:$0xf]
  %v2736 = vld [vmem:[%s2717 + $0x48] sm:$0xf]
  %v2737 = vld [vmem:[%s2717 + $0x4c] sm:$0xf]
  %v2738 = vld [vmem:[%s2717 + $0x50] sm:$0xf]
  %v2739 = vld [vmem:[%s2717 + $0x54] sm:$0xf]
  %v2740 = vld [vmem:[%s2717 + $0x58] sm:$0xf]
  %v2741 = vld [vmem:[%s2717 + $0x5c] sm:$0xf]
  %v2742 = vld [vmem:[%s2717 + $0x60] sm:$0xf]
  %v2743 = vld [vmem:[%s2717 + $0x64] sm:$0xf]
  %v2744 = vld [vmem:[%s2717 + $0x68] sm:$0xf]
  %v2745 = vld [vmem:[%s2717 + $0x6c] sm:$0xf]
  %v2746 = vld [vmem:[%s2717 + $0x70] sm:$0xf]
  %v2747 = vld [vmem:[%s2717 + $0x74] sm:$0xf]
  %v2748 = vld [vmem:[%s2717 + $0x78] sm:$0xf]
  %v2749 = vld [vmem:[%s2717 + $0x7c] sm:$0xf]
  %v2750 = vld [vmem:[%s2717 + $0x80] sm:$0xf]
  %v2751 = vld [vmem:[%s2717 + $0x84] sm:$0xf]
  %v2752 = vld [vmem:[%s2717 + $0x88] sm:$0xf]
  %v2753 = vld [vmem:[%s2717 + $0x8c] sm:$0xf]
  %v2754 = vld [vmem:[%s2717 + $0x90] sm:$0xf]
  %v2755 = vld [vmem:[%s2717 + $0x94] sm:$0xf]
  %v2756 = vld [vmem:[%s2717 + $0x98] sm:$0xf]
  %v2757 = vld [vmem:[%s2717 + $0x9c] sm:$0xf]
  %v2758 = vld [vmem:[%s2717 + $0xa0] sm:$0xf]
  %v2759 = vld [vmem:[%s2717 + $0xa4] sm:$0xf]
  %v2760 = vld [vmem:[%s2717 + $0xa8] sm:$0xf]
  %v2761 = vld [vmem:[%s2717 + $0xac] sm:$0xf]
  %v2762 = vld [vmem:[%s2717 + $0xb0] sm:$0xf]
  %v2763 = vld [vmem:[%s2717 + $0xb4] sm:$0xf]
  %v2764 = vld [vmem:[%s2717 + $0xb8] sm:$0xf]
  %v2765 = vld [vmem:[%s2717 + $0xbc] sm:$0xf]
  %v2766 = vld [vmem:[%s2717 + $0xc0] sm:$0xf]
  %v2767 = vld [vmem:[%s2717 + $0xc4] sm:$0xf]
  %v2768 = vld [vmem:[%s2717 + $0xc8] sm:$0xf]
  %v2769 = vld [vmem:[%s2717 + $0xcc] sm:$0xf]
  %v2770 = vld [vmem:[%s2717 + $0xd0] sm:$0xf]
  %v2771 = vld [vmem:[%s2717 + $0xd4] sm:$0xf]
  %v2772 = vld [vmem:[%s2717 + $0xd8] sm:$0xf]
  %v2773 = vld [vmem:[%s2717 + $0xdc] sm:$0xf]
  %v2774 = vld [vmem:[%s2717 + $0xe0] sm:$0xf]
  %v2775 = vld [vmem:[%s2717 + $0xe4] sm:$0xf]
  %v2776 = vld [vmem:[%s2717 + $0xe8] sm:$0xf]
  %v2777 = vld [vmem:[%s2717 + $0xec] sm:$0xf]
  %v2778 = vld [vmem:[%s2717 + $0xf0] sm:$0x1]
  %v2779 = vld [vmem:[%s2717] sm:$0xe]
  %v2780 = vld [vmem:[%s2717 + $0xf0] sm:$0xf]
  %v2781 = vld [vmem:[%s2717 + $0xf4] sm:$0xf]
  %v2782 = vld [vmem:[%s2717 + $0xf8] sm:$0xf]
  %v2783 = vld [vmem:[%s2717 + $0xfc] sm:$0x1]
  %v2784 = vld [vmem:[%s2717 + $0xc] sm:$0xe]
  %v2785 = vld [vmem:[%s2717 + $0xfc] sm:$0xf]
  %v2786 = vld [vmem:[%s2717 + $0x100] sm:$0xf]
  %v2787 = vld [vmem:[%s2717 + $0x104] sm:$0xf]
  %v2788 = vld [vmem:[%s2717 + $0x108] sm:$0x1]
  %v2789 = vld [vmem:[%s2717 + $0x18] sm:$0xe]
  %v2850 = vunpack.c.l.b16 %v2718
  %v2851 = vunpack.c.l.b16 %v2719
  %v2852 = vunpack.c.l.b16 %v2720
  %v2853 = vunpack.c.l.b16 %v2721
  %v2854 = vunpack.c.l.b16 %v2722
  %v2855 = vunpack.c.l.b16 %v2723
  %v2856 = vunpack.c.l.b16 %v2724
  %v2857 = vunpack.c.l.b16 %v2725
  %v2858 = vunpack.c.l.b16 %v2726
  %v2859 = vunpack.c.l.b16 %v2727
  %v2860 = vunpack.c.l.b16 %v2728
  %v2861 = vunpack.c.l.b16 %v2729
  %v2862 = vunpack.c.l.b16 %v2730
  %v2863 = vunpack.c.l.b16 %v2731
  %v2864 = vunpack.c.l.b16 %v2732
  %v2865 = vunpack.c.l.b16 %v2733
  %v2866 = vunpack.c.l.b16 %v2734
  %v2867 = vunpack.c.l.b16 %v2735
  %v2868 = vunpack.c.l.b16 %v2736
  %v2869 = vunpack.c.l.b16 %v2737
  %v2870 = vunpack.c.l.b16 %v2738
  %v2871 = vunpack.c.l.b16 %v2739
  %v2872 = vunpack.c.l.b16 %v2740
  %v2873 = vunpack.c.l.b16 %v2741
  %v2874 = vunpack.c.l.b16 %v2742
  %v2875 = vunpack.c.l.b16 %v2743
  %v2876 = vunpack.c.l.b16 %v2744
  %v2877 = vunpack.c.l.b16 %v2745
  %v2878 = vunpack.c.l.b16 %v2746
  %v2879 = vunpack.c.l.b16 %v2747
  %v2880 = vunpack.c.l.b16 %v2748
  %v2881 = vunpack.c.l.b16 %v2749
  %v2882 = vunpack.c.l.b16 %v2750
  %v2883 = vunpack.c.l.b16 %v2751
  %v2884 = vunpack.c.l.b16 %v2752
  %v2885 = vunpack.c.l.b16 %v2753
  %v2886 = vunpack.c.l.b16 %v2754
  %v2887 = vunpack.c.l.b16 %v2755
  %v2888 = vunpack.c.l.b16 %v2756
  %v2889 = vunpack.c.l.b16 %v2757
  %v2890 = vunpack.c.l.b16 %v2758
  %v2891 = vunpack.c.l.b16 %v2759
  %v2892 = vunpack.c.l.b16 %v2760
  %v2893 = vunpack.c.l.b16 %v2761
  %v2894 = vunpack.c.l.b16 %v2762
  %v2895 = vunpack.c.l.b16 %v2763
  %v2896 = vunpack.c.l.b16 %v2764
  %v2897 = vunpack.c.l.b16 %v2765
  %v2898 = vunpack.c.l.b16 %v2766
  %v2899 = vunpack.c.l.b16 %v2767
  %v2900 = vunpack.c.l.b16 %v2768
  %v2901 = vunpack.c.l.b16 %v2769
  %v2902 = vunpack.c.l.b16 %v2770
  %v2903 = vunpack.c.l.b16 %v2771
  %v2904 = vunpack.c.l.b16 %v2772
  %v2905 = vunpack.c.l.b16 %v2773
  %v2906 = vunpack.c.l.b16 %v2774
  %v2907 = vunpack.c.l.b16 %v2775
  %v2908 = vunpack.c.l.b16 %v2776
  %v2909 = vunpack.c.l.b16 %v2777
  %v2910 = vpack.c.b16 %v2851, %v2850
  %v2911 = vpack.c.b16 %v2853, %v2852
  %v2912 = vpack.c.b16 %v2855, %v2854
  %v2913 = vpack.c.b16 %v2857, %v2856
  %v2914 = vpack.c.b16 %v2859, %v2858
  %v2915 = vpack.c.b16 %v2861, %v2860
  %v2916 = vpack.c.b16 %v2863, %v2862
  %v2917 = vpack.c.b16 %v2865, %v2864
  %v2918 = vpack.c.b16 %v2867, %v2866
  %v2919 = vpack.c.b16 %v2869, %v2868
  %v2920 = vpack.c.b16 %v2871, %v2870
  %v2921 = vpack.c.b16 %v2873, %v2872
  %v2922 = vpack.c.b16 %v2875, %v2874
  %v2923 = vpack.c.b16 %v2877, %v2876
  %v2924 = vpack.c.b16 %v2879, %v2878
  %v2925 = vpack.c.b16 %v2881, %v2880
  %v2926 = vpack.c.b16 %v2883, %v2882
  %v2927 = vpack.c.b16 %v2885, %v2884
  %v2928 = vpack.c.b16 %v2887, %v2886
  %v2929 = vpack.c.b16 %v2889, %v2888
  %v2930 = vpack.c.b16 %v2891, %v2890
  %v2931 = vpack.c.b16 %v2893, %v2892
  %v2932 = vpack.c.b16 %v2895, %v2894
  %v2933 = vpack.c.b16 %v2897, %v2896
  %v2934 = vpack.c.b16 %v2899, %v2898
  %v2935 = vpack.c.b16 %v2901, %v2900
  %v2936 = vpack.c.b16 %v2903, %v2902
  %v2937 = vpack.c.b16 %v2905, %v2904
  %v2938 = vpack.c.b16 %v2907, %v2906
  %v2939 = vpack.c.b16 %v2909, %v2908
  %v2941 = vunpack.c.l.b16 %v2778
  %v2942 = vpack.c.b16 %v2941, %v2941
  %v2944 = vshrl.u32 %v2910, 16
  %v2946 = vshll.u32 %v2910, 16
  %v2948 = vrot.slane %v2946, 1
  %v2949 = vor.u32 %v2944, %v2948
  %v2951 = vshll.u32 %v2911, 16
  %v2953 = vrot.slane %v2951, 1
  %v2954 = vsel %vm243, %v2949, %v2953
  %v2955 = vshrl.u32 %v2911, 16
  %v2957 = vor.u32 %v2955, %v2953
  %v2959 = vshll.u32 %v2912, 16
  %v2961 = vrot.slane %v2959, 1
  %v2962 = vsel %vm243, %v2957, %v2961
  %v2963 = vshrl.u32 %v2912, 16
  %v2965 = vor.u32 %v2963, %v2961
  %v2967 = vshll.u32 %v2913, 16
  %v2969 = vrot.slane %v2967, 1
  %v2970 = vsel %vm243, %v2965, %v2969
  %v2971 = vshrl.u32 %v2913, 16
  %v2973 = vor.u32 %v2971, %v2969
  %v2975 = vshll.u32 %v2914, 16
  %v2977 = vrot.slane %v2975, 1
  %v2978 = vsel %vm243, %v2973, %v2977
  %v2979 = vshrl.u32 %v2914, 16
  %v2981 = vor.u32 %v2979, %v2977
  %v2983 = vshll.u32 %v2915, 16
  %v2985 = vrot.slane %v2983, 1
  %v2986 = vsel %vm243, %v2981, %v2985
  %v2987 = vshrl.u32 %v2915, 16
  %v2989 = vor.u32 %v2987, %v2985
  %v2991 = vshll.u32 %v2916, 16
  %v2993 = vrot.slane %v2991, 1
  %v2994 = vsel %vm243, %v2989, %v2993
  %v2995 = vshrl.u32 %v2916, 16
  %v2997 = vor.u32 %v2995, %v2993
  %v2999 = vshll.u32 %v2917, 16
  %v3001 = vrot.slane %v2999, 1
  %v3002 = vsel %vm243, %v2997, %v3001
  %v3003 = vshrl.u32 %v2917, 16
  %v3005 = vor.u32 %v3003, %v3001
  %v3007 = vshll.u32 %v2918, 16
  %v3009 = vrot.slane %v3007, 1
  %v3010 = vsel %vm243, %v3005, %v3009
  %v3011 = vshrl.u32 %v2918, 16
  %v3013 = vor.u32 %v3011, %v3009
  %v3015 = vshll.u32 %v2919, 16
  %v3017 = vrot.slane %v3015, 1
  %v3018 = vsel %vm243, %v3013, %v3017
  %v3019 = vshrl.u32 %v2919, 16
  %v3021 = vor.u32 %v3019, %v3017
  %v3023 = vshll.u32 %v2920, 16
  %v3025 = vrot.slane %v3023, 1
  %v3026 = vsel %vm243, %v3021, %v3025
  %v3027 = vshrl.u32 %v2920, 16
  %v3029 = vor.u32 %v3027, %v3025
  %v3031 = vshll.u32 %v2921, 16
  %v3033 = vrot.slane %v3031, 1
  %v3034 = vsel %vm243, %v3029, %v3033
  %v3035 = vshrl.u32 %v2921, 16
  %v3037 = vor.u32 %v3035, %v3033
  %v3039 = vshll.u32 %v2922, 16
  %v3041 = vrot.slane %v3039, 1
  %v3042 = vsel %vm243, %v3037, %v3041
  %v3043 = vshrl.u32 %v2922, 16
  %v3045 = vor.u32 %v3043, %v3041
  %v3047 = vshll.u32 %v2923, 16
  %v3049 = vrot.slane %v3047, 1
  %v3050 = vsel %vm243, %v3045, %v3049
  %v3051 = vshrl.u32 %v2923, 16
  %v3053 = vor.u32 %v3051, %v3049
  %v3055 = vshll.u32 %v2924, 16
  %v3057 = vrot.slane %v3055, 1
  %v3058 = vsel %vm243, %v3053, %v3057
  %v3059 = vshrl.u32 %v2924, 16
  %v3061 = vor.u32 %v3059, %v3057
  %v3063 = vshll.u32 %v2925, 16
  %v3065 = vrot.slane %v3063, 1
  %v3066 = vsel %vm243, %v3061, %v3065
  %v3067 = vshrl.u32 %v2925, 16
  %v3069 = vor.u32 %v3067, %v3065
  %v3071 = vshll.u32 %v2926, 16
  %v3073 = vrot.slane %v3071, 1
  %v3074 = vsel %vm243, %v3069, %v3073
  %v3075 = vshrl.u32 %v2926, 16
  %v3077 = vor.u32 %v3075, %v3073
  %v3079 = vshll.u32 %v2927, 16
  %v3081 = vrot.slane %v3079, 1
  %v3082 = vsel %vm243, %v3077, %v3081
  %v3083 = vshrl.u32 %v2927, 16
  %v3085 = vor.u32 %v3083, %v3081
  %v3087 = vshll.u32 %v2928, 16
  %v3089 = vrot.slane %v3087, 1
  %v3090 = vsel %vm243, %v3085, %v3089
  %v3091 = vshrl.u32 %v2928, 16
  %v3093 = vor.u32 %v3091, %v3089
  %v3095 = vshll.u32 %v2929, 16
  %v3097 = vrot.slane %v3095, 1
  %v3098 = vsel %vm243, %v3093, %v3097
  %v3099 = vshrl.u32 %v2929, 16
  %v3101 = vor.u32 %v3099, %v3097
  %v3103 = vshll.u32 %v2930, 16
  %v3105 = vrot.slane %v3103, 1
  %v3106 = vsel %vm243, %v3101, %v3105
  %v3107 = vshrl.u32 %v2930, 16
  %v3109 = vor.u32 %v3107, %v3105
  %v3111 = vshll.u32 %v2931, 16
  %v3113 = vrot.slane %v3111, 1
  %v3114 = vsel %vm243, %v3109, %v3113
  %v3115 = vshrl.u32 %v2931, 16
  %v3117 = vor.u32 %v3115, %v3113
  %v3119 = vshll.u32 %v2932, 16
  %v3121 = vrot.slane %v3119, 1
  %v3122 = vsel %vm243, %v3117, %v3121
  %v3123 = vshrl.u32 %v2932, 16
  %v3125 = vor.u32 %v3123, %v3121
  %v3127 = vshll.u32 %v2933, 16
  %v3129 = vrot.slane %v3127, 1
  %v3130 = vsel %vm243, %v3125, %v3129
  %v3131 = vshrl.u32 %v2933, 16
  %v3133 = vor.u32 %v3131, %v3129
  %v3135 = vshll.u32 %v2934, 16
  %v3137 = vrot.slane %v3135, 1
  %v3138 = vsel %vm243, %v3133, %v3137
  %v3139 = vshrl.u32 %v2934, 16
  %v3141 = vor.u32 %v3139, %v3137
  %v3143 = vshll.u32 %v2935, 16
  %v3145 = vrot.slane %v3143, 1
  %v3146 = vsel %vm243, %v3141, %v3145
  %v3147 = vshrl.u32 %v2935, 16
  %v3149 = vor.u32 %v3147, %v3145
  %v3151 = vshll.u32 %v2936, 16
  %v3153 = vrot.slane %v3151, 1
  %v3154 = vsel %vm243, %v3149, %v3153
  %v3155 = vshrl.u32 %v2936, 16
  %v3157 = vor.u32 %v3155, %v3153
  %v3159 = vshll.u32 %v2937, 16
  %v3161 = vrot.slane %v3159, 1
  %v3162 = vsel %vm243, %v3157, %v3161
  %v3163 = vshrl.u32 %v2937, 16
  %v3165 = vor.u32 %v3163, %v3161
  %v3167 = vshll.u32 %v2938, 16
  %v3169 = vrot.slane %v3167, 1
  %v3170 = vsel %vm243, %v3165, %v3169
  %v3171 = vshrl.u32 %v2938, 16
  %v3173 = vor.u32 %v3171, %v3169
  %v3175 = vshll.u32 %v2939, 16
  %v3177 = vrot.slane %v3175, 1
  %v3178 = vsel %vm243, %v3173, %v3177
  %v3179 = vshrl.u32 %v2939, 16
  %v3181 = vor.u32 %v3179, %v3177
  %v3183 = vshll.u32 %v2942, 16
  %v3185 = vrot.slane %v3183, 1
  %v3186 = vsel %vm243, %v3181, %v3185
  %3187 = vrot.lane.b32.xlu0 %v2954, 8
  %v3188 = vpop.permute.xlu0 %3187
  %3189 = vrot.lane.b32.xlu0 %v2962, 8
  %v3190 = vpop.permute.xlu0 %3189
  %3191 = vrot.lane.b32.xlu0 %v2970, 8
  %v3192 = vpop.permute.xlu0 %3191
  %3193 = vrot.lane.b32.xlu0 %v2978, 8
  %v3194 = vpop.permute.xlu0 %3193
  %3195 = vrot.lane.b32.xlu0 %v2986, 8
  %v3196 = vpop.permute.xlu0 %3195
  %3197 = vrot.lane.b32.xlu0 %v2994, 8
  %v3198 = vpop.permute.xlu0 %3197
  %3199 = vrot.lane.b32.xlu0 %v3002, 8
  %v3200 = vpop.permute.xlu0 %3199
  %3201 = vrot.lane.b32.xlu0 %v3010, 8
  %v3202 = vpop.permute.xlu0 %3201
  %3203 = vrot.lane.b32.xlu0 %v3018, 8
  %v3204 = vpop.permute.xlu0 %3203
  %3205 = vrot.lane.b32.xlu0 %v3026, 8
  %v3206 = vpop.permute.xlu0 %3205
  %3207 = vrot.lane.b32.xlu0 %v3034, 8
  %v3208 = vpop.permute.xlu0 %3207
  %3209 = vrot.lane.b32.xlu0 %v3042, 8
  %v3210 = vpop.permute.xlu0 %3209
  %3211 = vrot.lane.b32.xlu0 %v3050, 8
  %v3212 = vpop.permute.xlu0 %3211
  %3213 = vrot.lane.b32.xlu0 %v3058, 8
  %v3214 = vpop.permute.xlu0 %3213
  %3215 = vrot.lane.b32.xlu0 %v3066, 8
  %v3216 = vpop.permute.xlu0 %3215
  %3217 = vrot.lane.b32.xlu0 %v3074, 8
  %v3218 = vpop.permute.xlu0 %3217
  %3219 = vrot.lane.b32.xlu0 %v3082, 8
  %v3220 = vpop.permute.xlu0 %3219
  %3221 = vrot.lane.b32.xlu0 %v3090, 8
  %v3222 = vpop.permute.xlu0 %3221
  %3223 = vrot.lane.b32.xlu0 %v3098, 8
  %v3224 = vpop.permute.xlu0 %3223
  %3225 = vrot.lane.b32.xlu0 %v3106, 8
  %v3226 = vpop.permute.xlu0 %3225
  %3227 = vrot.lane.b32.xlu0 %v3114, 8
  %v3228 = vpop.permute.xlu0 %3227
  %3229 = vrot.lane.b32.xlu0 %v3122, 8
  %v3230 = vpop.permute.xlu0 %3229
  %3231 = vrot.lane.b32.xlu0 %v3130, 8
  %v3232 = vpop.permute.xlu0 %3231
  %3233 = vrot.lane.b32.xlu0 %v3138, 8
  %v3234 = vpop.permute.xlu0 %3233
  %3235 = vrot.lane.b32.xlu0 %v3146, 8
  %v3236 = vpop.permute.xlu0 %3235
  %3237 = vrot.lane.b32.xlu0 %v3154, 8
  %v3238 = vpop.permute.xlu0 %3237
  %3239 = vrot.lane.b32.xlu0 %v3162, 8
  %v3240 = vpop.permute.xlu0 %3239
  %3241 = vrot.lane.b32.xlu0 %v3170, 8
  %v3242 = vpop.permute.xlu0 %3241
  %3243 = vrot.lane.b32.xlu0 %v3178, 8
  %v3244 = vpop.permute.xlu0 %3243
  %3245 = vrot.lane.b32.xlu0 %v3186, 8
  %v3246 = vpop.permute.xlu0 %3245
  %v3248 = vunpack.c.l.b16 %v2779
  %v3249 = vpack.c.b16 %v2851, %v3248
  %v3250 = vrot.slane %v3249, 1
  %v3251 = vrot.slane %v2911, 1
  %v3252 = vsel %vm551, %v3250, %v3251
  %v3253 = vrot.slane %v2912, 1
  %v3254 = vsel %vm551, %v3251, %v3253
  %v3255 = vrot.slane %v2913, 1
  %v3256 = vsel %vm551, %v3253, %v3255
  %v3257 = vrot.slane %v2914, 1
  %v3258 = vsel %vm551, %v3255, %v3257
  %v3259 = vrot.slane %v2915, 1
  %v3260 = vsel %vm551, %v3257, %v3259
  %v3261 = vrot.slane %v2916, 1
  %v3262 = vsel %vm551, %v3259, %v3261
  %v3263 = vrot.slane %v2917, 1
  %v3264 = vsel %vm551, %v3261, %v3263
  %v3265 = vrot.slane %v2918, 1
  %v3266 = vsel %vm551, %v3263, %v3265
  %v3267 = vrot.slane %v2919, 1
  %v3268 = vsel %vm551, %v3265, %v3267
  %v3269 = vrot.slane %v2920, 1
  %v3270 = vsel %vm551, %v3267, %v3269
  %v3271 = vrot.slane %v2921, 1
  %v3272 = vsel %vm551, %v3269, %v3271
  %v3273 = vrot.slane %v2922, 1
  %v3274 = vsel %vm551, %v3271, %v3273
  %v3275 = vrot.slane %v2923, 1
  %v3276 = vsel %vm551, %v3273, %v3275
  %v3277 = vrot.slane %v2924, 1
  %v3278 = vsel %vm551, %v3275, %v3277
  %v3279 = vrot.slane %v2925, 1
  %v3280 = vsel %vm551, %v3277, %v3279
  %v3281 = vrot.slane %v2926, 1
  %v3282 = vsel %vm551, %v3279, %v3281
  %v3283 = vrot.slane %v2927, 1
  %v3284 = vsel %vm551, %v3281, %v3283
  %v3285 = vrot.slane %v2928, 1
  %v3286 = vsel %vm551, %v3283, %v3285
  %v3287 = vrot.slane %v2929, 1
  %v3288 = vsel %vm551, %v3285, %v3287
  %v3289 = vrot.slane %v2930, 1
  %v3290 = vsel %vm551, %v3287, %v3289
  %v3291 = vrot.slane %v2931, 1
  %v3292 = vsel %vm551, %v3289, %v3291
  %v3293 = vrot.slane %v2932, 1
  %v3294 = vsel %vm551, %v3291, %v3293
  %v3295 = vrot.slane %v2933, 1
  %v3296 = vsel %vm551, %v3293, %v3295
  %v3297 = vrot.slane %v2934, 1
  %v3298 = vsel %vm551, %v3295, %v3297
  %v3299 = vrot.slane %v2935, 1
  %v3300 = vsel %vm551, %v3297, %v3299
  %v3301 = vrot.slane %v2936, 1
  %v3302 = vsel %vm551, %v3299, %v3301
  %v3303 = vrot.slane %v2937, 1
  %v3304 = vsel %vm551, %v3301, %v3303
  %v3305 = vrot.slane %v2938, 1
  %v3306 = vsel %vm551, %v3303, %v3305
  %v3307 = vrot.slane %v2939, 1
  %v3308 = vsel %vm551, %v3305, %v3307
  %v3309 = vrot.slane %v2942, 1
  %v3310 = vsel %vm551, %v3307, %v3309
  %3311 = vrot.lane.b32.xlu0 %v3252, 16
  %v3312 = vpop.permute.xlu0 %3311
  %3313 = vrot.lane.b32.xlu0 %v3254, 16
  %v3314 = vpop.permute.xlu0 %3313
  %3315 = vrot.lane.b32.xlu0 %v3256, 16
  %v3316 = vpop.permute.xlu0 %3315
  %3317 = vrot.lane.b32.xlu0 %v3258, 16
  %v3318 = vpop.permute.xlu0 %3317
  %3319 = vrot.lane.b32.xlu0 %v3260, 16
  %v3320 = vpop.permute.xlu0 %3319
  %3321 = vrot.lane.b32.xlu0 %v3262, 16
  %v3322 = vpop.permute.xlu0 %3321
  %3323 = vrot.lane.b32.xlu0 %v3264, 16
  %v3324 = vpop.permute.xlu0 %3323
  %3325 = vrot.lane.b32.xlu0 %v3266, 16
  %v3326 = vpop.permute.xlu0 %3325
  %3327 = vrot.lane.b32.xlu0 %v3268, 16
  %v3328 = vpop.permute.xlu0 %3327
  %3329 = vrot.lane.b32.xlu0 %v3270, 16
  %v3330 = vpop.permute.xlu0 %3329
  %3331 = vrot.lane.b32.xlu0 %v3272, 16
  %v3332 = vpop.permute.xlu0 %3331
  %3333 = vrot.lane.b32.xlu0 %v3274, 16
  %v3334 = vpop.permute.xlu0 %3333
  %3335 = vrot.lane.b32.xlu0 %v3276, 16
  %v3336 = vpop.permute.xlu0 %3335
  %3337 = vrot.lane.b32.xlu0 %v3278, 16
  %v3338 = vpop.permute.xlu0 %3337
  %3339 = vrot.lane.b32.xlu0 %v3280, 16
  %v3340 = vpop.permute.xlu0 %3339
  %3341 = vrot.lane.b32.xlu0 %v3282, 16
  %v3342 = vpop.permute.xlu0 %3341
  %3343 = vrot.lane.b32.xlu0 %v3284, 16
  %v3344 = vpop.permute.xlu0 %3343
  %3345 = vrot.lane.b32.xlu0 %v3286, 16
  %v3346 = vpop.permute.xlu0 %3345
  %3347 = vrot.lane.b32.xlu0 %v3288, 16
  %v3348 = vpop.permute.xlu0 %3347
  %3349 = vrot.lane.b32.xlu0 %v3290, 16
  %v3350 = vpop.permute.xlu0 %3349
  %3351 = vrot.lane.b32.xlu0 %v3292, 16
  %v3352 = vpop.permute.xlu0 %3351
  %3353 = vrot.lane.b32.xlu0 %v3294, 16
  %v3354 = vpop.permute.xlu0 %3353
  %3355 = vrot.lane.b32.xlu0 %v3296, 16
  %v3356 = vpop.permute.xlu0 %3355
  %3357 = vrot.lane.b32.xlu0 %v3298, 16
  %v3358 = vpop.permute.xlu0 %3357
  %3359 = vrot.lane.b32.xlu0 %v3300, 16
  %v3360 = vpop.permute.xlu0 %3359
  %3361 = vrot.lane.b32.xlu0 %v3302, 16
  %v3362 = vpop.permute.xlu0 %3361
  %3363 = vrot.lane.b32.xlu0 %v3304, 16
  %v3364 = vpop.permute.xlu0 %3363
  %3365 = vrot.lane.b32.xlu0 %v3306, 16
  %v3366 = vpop.permute.xlu0 %3365
  %3367 = vrot.lane.b32.xlu0 %v3308, 16
  %v3368 = vpop.permute.xlu0 %3367
  %3369 = vrot.lane.b32.xlu0 %v3310, 16
  %v3370 = vpop.permute.xlu0 %3369
  %v3374 = vunpack.c.l.b16 %v2780
  %v3375 = vunpack.c.l.b16 %v2781
  %v3376 = vunpack.c.l.b16 %v2782
  %v3377 = vpack.c.b16 %v2854, %v2853
  %v3378 = vpack.c.b16 %v2856, %v2855
  %v3379 = vpack.c.b16 %v2858, %v2857
  %v3380 = vpack.c.b16 %v2860, %v2859
  %v3381 = vpack.c.b16 %v2862, %v2861
  %v3382 = vpack.c.b16 %v2864, %v2863
  %v3383 = vpack.c.b16 %v2866, %v2865
  %v3384 = vpack.c.b16 %v2868, %v2867
  %v3385 = vpack.c.b16 %v2870, %v2869
  %v3386 = vpack.c.b16 %v2872, %v2871
  %v3387 = vpack.c.b16 %v2874, %v2873
  %v3388 = vpack.c.b16 %v2876, %v2875
  %v3389 = vpack.c.b16 %v2878, %v2877
  %v3390 = vpack.c.b16 %v2880, %v2879
  %v3391 = vpack.c.b16 %v2882, %v2881
  %v3392 = vpack.c.b16 %v2884, %v2883
  %v3393 = vpack.c.b16 %v2886, %v2885
  %v3394 = vpack.c.b16 %v2888, %v2887
  %v3395 = vpack.c.b16 %v2890, %v2889
  %v3396 = vpack.c.b16 %v2892, %v2891
  %v3397 = vpack.c.b16 %v2894, %v2893
  %v3398 = vpack.c.b16 %v2896, %v2895
  %v3399 = vpack.c.b16 %v2898, %v2897
  %v3400 = vpack.c.b16 %v2900, %v2899
  %v3401 = vpack.c.b16 %v2902, %v2901
  %v3402 = vpack.c.b16 %v2904, %v2903
  %v3403 = vpack.c.b16 %v2906, %v2905
  %v3404 = vpack.c.b16 %v2908, %v2907
  %v3405 = vpack.c.b16 %v3374, %v2909
  %v3406 = vpack.c.b16 %v3376, %v3375
  %3407 = vrot.lane.b32.xlu0 %v3377, 24
  %v3408 = vpop.permute.xlu0 %3407
  %3409 = vrot.lane.b32.xlu0 %v3378, 24
  %v3410 = vpop.permute.xlu0 %3409
  %3411 = vrot.lane.b32.xlu0 %v3379, 24
  %v3412 = vpop.permute.xlu0 %3411
  %3413 = vrot.lane.b32.xlu0 %v3380, 24
  %v3414 = vpop.permute.xlu0 %3413
  %3415 = vrot.lane.b32.xlu0 %v3381, 24
  %v3416 = vpop.permute.xlu0 %3415
  %3417 = vrot.lane.b32.xlu0 %v3382, 24
  %v3418 = vpop.permute.xlu0 %3417
  %3419 = vrot.lane.b32.xlu0 %v3383, 24
  %v3420 = vpop.permute.xlu0 %3419
  %3421 = vrot.lane.b32.xlu0 %v3384, 24
  %v3422 = vpop.permute.xlu0 %3421
  %3423 = vrot.lane.b32.xlu0 %v3385, 24
  %v3424 = vpop.permute.xlu0 %3423
  %3425 = vrot.lane.b32.xlu0 %v3386, 24
  %v3426 = vpop.permute.xlu0 %3425
  %3427 = vrot.lane.b32.xlu0 %v3387, 24
  %v3428 = vpop.permute.xlu0 %3427
  %3429 = vrot.lane.b32.xlu0 %v3388, 24
  %v3430 = vpop.permute.xlu0 %3429
  %3431 = vrot.lane.b32.xlu0 %v3389, 24
  %v3432 = vpop.permute.xlu0 %3431
  %3433 = vrot.lane.b32.xlu0 %v3390, 24
  %v3434 = vpop.permute.xlu0 %3433
  %3435 = vrot.lane.b32.xlu0 %v3391, 24
  %v3436 = vpop.permute.xlu0 %3435
  %3437 = vrot.lane.b32.xlu0 %v3392, 24
  %v3438 = vpop.permute.xlu0 %3437
  %3439 = vrot.lane.b32.xlu0 %v3393, 24
  %v3440 = vpop.permute.xlu0 %3439
  %3441 = vrot.lane.b32.xlu0 %v3394, 24
  %v3442 = vpop.permute.xlu0 %3441
  %3443 = vrot.lane.b32.xlu0 %v3395, 24
  %v3444 = vpop.permute.xlu0 %3443
  %3445 = vrot.lane.b32.xlu0 %v3396, 24
  %v3446 = vpop.permute.xlu0 %3445
  %3447 = vrot.lane.b32.xlu0 %v3397, 24
  %v3448 = vpop.permute.xlu0 %3447
  %3449 = vrot.lane.b32.xlu0 %v3398, 24
  %v3450 = vpop.permute.xlu0 %3449
  %3451 = vrot.lane.b32.xlu0 %v3399, 24
  %v3452 = vpop.permute.xlu0 %3451
  %3453 = vrot.lane.b32.xlu0 %v3400, 24
  %v3454 = vpop.permute.xlu0 %3453
  %3455 = vrot.lane.b32.xlu0 %v3401, 24
  %v3456 = vpop.permute.xlu0 %3455
  %3457 = vrot.lane.b32.xlu0 %v3402, 24
  %v3458 = vpop.permute.xlu0 %3457
  %3459 = vrot.lane.b32.xlu0 %v3403, 24
  %v3460 = vpop.permute.xlu0 %3459
  %3461 = vrot.lane.b32.xlu0 %v3404, 24
  %v3462 = vpop.permute.xlu0 %3461
  %3463 = vrot.lane.b32.xlu0 %v3405, 24
  %v3464 = vpop.permute.xlu0 %3463
  %3465 = vrot.lane.b32.xlu0 %v3406, 24
  %v3466 = vpop.permute.xlu0 %3465
  %v3468 = vunpack.c.l.b16 %v2783
  %v3469 = vpack.c.b16 %v3468, %v3468
  %v3471 = vshrl.u32 %v3377, 16
  %v3473 = vshll.u32 %v3377, 16
  %v3475 = vrot.slane %v3473, 1
  %v3476 = vor.u32 %v3471, %v3475
  %v3478 = vshll.u32 %v3378, 16
  %v3480 = vrot.slane %v3478, 1
  %v3481 = vsel %vm243, %v3476, %v3480
  %v3482 = vshrl.u32 %v3378, 16
  %v3484 = vor.u32 %v3482, %v3480
  %v3486 = vshll.u32 %v3379, 16
  %v3488 = vrot.slane %v3486, 1
  %v3489 = vsel %vm243, %v3484, %v3488
  %v3490 = vshrl.u32 %v3379, 16
  %v3492 = vor.u32 %v3490, %v3488
  %v3494 = vshll.u32 %v3380, 16
  %v3496 = vrot.slane %v3494, 1
  %v3497 = vsel %vm243, %v3492, %v3496
  %v3498 = vshrl.u32 %v3380, 16
  %v3500 = vor.u32 %v3498, %v3496
  %v3502 = vshll.u32 %v3381, 16
  %v3504 = vrot.slane %v3502, 1
  %v3505 = vsel %vm243, %v3500, %v3504
  %v3506 = vshrl.u32 %v3381, 16
  %v3508 = vor.u32 %v3506, %v3504
  %v3510 = vshll.u32 %v3382, 16
  %v3512 = vrot.slane %v3510, 1
  %v3513 = vsel %vm243, %v3508, %v3512
  %v3514 = vshrl.u32 %v3382, 16
  %v3516 = vor.u32 %v3514, %v3512
  %v3518 = vshll.u32 %v3383, 16
  %v3520 = vrot.slane %v3518, 1
  %v3521 = vsel %vm243, %v3516, %v3520
  %v3522 = vshrl.u32 %v3383, 16
  %v3524 = vor.u32 %v3522, %v3520
  %v3526 = vshll.u32 %v3384, 16
  %v3528 = vrot.slane %v3526, 1
  %v3529 = vsel %vm243, %v3524, %v3528
  %v3530 = vshrl.u32 %v3384, 16
  %v3532 = vor.u32 %v3530, %v3528
  %v3534 = vshll.u32 %v3385, 16
  %v3536 = vrot.slane %v3534, 1
  %v3537 = vsel %vm243, %v3532, %v3536
  %v3538 = vshrl.u32 %v3385, 16
  %v3540 = vor.u32 %v3538, %v3536
  %v3542 = vshll.u32 %v3386, 16
  %v3544 = vrot.slane %v3542, 1
  %v3545 = vsel %vm243, %v3540, %v3544
  %v3546 = vshrl.u32 %v3386, 16
  %v3548 = vor.u32 %v3546, %v3544
  %v3550 = vshll.u32 %v3387, 16
  %v3552 = vrot.slane %v3550, 1
  %v3553 = vsel %vm243, %v3548, %v3552
  %v3554 = vshrl.u32 %v3387, 16
  %v3556 = vor.u32 %v3554, %v3552
  %v3558 = vshll.u32 %v3388, 16
  %v3560 = vrot.slane %v3558, 1
  %v3561 = vsel %vm243, %v3556, %v3560
  %v3562 = vshrl.u32 %v3388, 16
  %v3564 = vor.u32 %v3562, %v3560
  %v3566 = vshll.u32 %v3389, 16
  %v3568 = vrot.slane %v3566, 1
  %v3569 = vsel %vm243, %v3564, %v3568
  %v3570 = vshrl.u32 %v3389, 16
  %v3572 = vor.u32 %v3570, %v3568
  %v3574 = vshll.u32 %v3390, 16
  %v3576 = vrot.slane %v3574, 1
  %v3577 = vsel %vm243, %v3572, %v3576
  %v3578 = vshrl.u32 %v3390, 16
  %v3580 = vor.u32 %v3578, %v3576
  %v3582 = vshll.u32 %v3391, 16
  %v3584 = vrot.slane %v3582, 1
  %v3585 = vsel %vm243, %v3580, %v3584
  %v3586 = vshrl.u32 %v3391, 16
  %v3588 = vor.u32 %v3586, %v3584
  %v3590 = vshll.u32 %v3392, 16
  %v3592 = vrot.slane %v3590, 1
  %v3593 = vsel %vm243, %v3588, %v3592
  %v3594 = vshrl.u32 %v3392, 16
  %v3596 = vor.u32 %v3594, %v3592
  %v3598 = vshll.u32 %v3393, 16
  %v3600 = vrot.slane %v3598, 1
  %v3601 = vsel %vm243, %v3596, %v3600
  %v3602 = vshrl.u32 %v3393, 16
  %v3604 = vor.u32 %v3602, %v3600
  %v3606 = vshll.u32 %v3394, 16
  %v3608 = vrot.slane %v3606, 1
  %v3609 = vsel %vm243, %v3604, %v3608
  %v3610 = vshrl.u32 %v3394, 16
  %v3612 = vor.u32 %v3610, %v3608
  %v3614 = vshll.u32 %v3395, 16
  %v3616 = vrot.slane %v3614, 1
  %v3617 = vsel %vm243, %v3612, %v3616
  %v3618 = vshrl.u32 %v3395, 16
  %v3620 = vor.u32 %v3618, %v3616
  %v3622 = vshll.u32 %v3396, 16
  %v3624 = vrot.slane %v3622, 1
  %v3625 = vsel %vm243, %v3620, %v3624
  %v3626 = vshrl.u32 %v3396, 16
  %v3628 = vor.u32 %v3626, %v3624
  %v3630 = vshll.u32 %v3397, 16
  %v3632 = vrot.slane %v3630, 1
  %v3633 = vsel %vm243, %v3628, %v3632
  %v3634 = vshrl.u32 %v3397, 16
  %v3636 = vor.u32 %v3634, %v3632
  %v3638 = vshll.u32 %v3398, 16
  %v3640 = vrot.slane %v3638, 1
  %v3641 = vsel %vm243, %v3636, %v3640
  %v3642 = vshrl.u32 %v3398, 16
  %v3644 = vor.u32 %v3642, %v3640
  %v3646 = vshll.u32 %v3399, 16
  %v3648 = vrot.slane %v3646, 1
  %v3649 = vsel %vm243, %v3644, %v3648
  %v3650 = vshrl.u32 %v3399, 16
  %v3652 = vor.u32 %v3650, %v3648
  %v3654 = vshll.u32 %v3400, 16
  %v3656 = vrot.slane %v3654, 1
  %v3657 = vsel %vm243, %v3652, %v3656
  %v3658 = vshrl.u32 %v3400, 16
  %v3660 = vor.u32 %v3658, %v3656
  %v3662 = vshll.u32 %v3401, 16
  %v3664 = vrot.slane %v3662, 1
  %v3665 = vsel %vm243, %v3660, %v3664
  %v3666 = vshrl.u32 %v3401, 16
  %v3668 = vor.u32 %v3666, %v3664
  %v3670 = vshll.u32 %v3402, 16
  %v3672 = vrot.slane %v3670, 1
  %v3673 = vsel %vm243, %v3668, %v3672
  %v3674 = vshrl.u32 %v3402, 16
  %v3676 = vor.u32 %v3674, %v3672
  %v3678 = vshll.u32 %v3403, 16
  %v3680 = vrot.slane %v3678, 1
  %v3681 = vsel %vm243, %v3676, %v3680
  %v3682 = vshrl.u32 %v3403, 16
  %v3684 = vor.u32 %v3682, %v3680
  %v3686 = vshll.u32 %v3404, 16
  %v3688 = vrot.slane %v3686, 1
  %v3689 = vsel %vm243, %v3684, %v3688
  %v3690 = vshrl.u32 %v3404, 16
  %v3692 = vor.u32 %v3690, %v3688
  %v3694 = vshll.u32 %v3405, 16
  %v3696 = vrot.slane %v3694, 1
  %v3697 = vsel %vm243, %v3692, %v3696
  %v3698 = vshrl.u32 %v3405, 16
  %v3700 = vor.u32 %v3698, %v3696
  %v3702 = vshll.u32 %v3406, 16
  %v3704 = vrot.slane %v3702, 1
  %v3705 = vsel %vm243, %v3700, %v3704
  %v3706 = vshrl.u32 %v3406, 16
  %v3708 = vor.u32 %v3706, %v3704
  %v3710 = vshll.u32 %v3469, 16
  %v3712 = vrot.slane %v3710, 1
  %v3713 = vsel %vm243, %v3708, %v3712
  %3714 = vrot.lane.b32.xlu0 %v3481, 32
  %v3715 = vpop.permute.xlu0 %3714
  %3716 = vrot.lane.b32.xlu0 %v3489, 32
  %v3717 = vpop.permute.xlu0 %3716
  %3718 = vrot.lane.b32.xlu0 %v3497, 32
  %v3719 = vpop.permute.xlu0 %3718
  %3720 = vrot.lane.b32.xlu0 %v3505, 32
  %v3721 = vpop.permute.xlu0 %3720
  %3722 = vrot.lane.b32.xlu0 %v3513, 32
  %v3723 = vpop.permute.xlu0 %3722
  %3724 = vrot.lane.b32.xlu0 %v3521, 32
  %v3725 = vpop.permute.xlu0 %3724
  %3726 = vrot.lane.b32.xlu0 %v3529, 32
  %v3727 = vpop.permute.xlu0 %3726
  %3728 = vrot.lane.b32.xlu0 %v3537, 32
  %v3729 = vpop.permute.xlu0 %3728
  %3730 = vrot.lane.b32.xlu0 %v3545, 32
  %v3731 = vpop.permute.xlu0 %3730
  %3732 = vrot.lane.b32.xlu0 %v3553, 32
  %v3733 = vpop.permute.xlu0 %3732
  %3734 = vrot.lane.b32.xlu0 %v3561, 32
  %v3735 = vpop.permute.xlu0 %3734
  %3736 = vrot.lane.b32.xlu0 %v3569, 32
  %v3737 = vpop.permute.xlu0 %3736
  %3738 = vrot.lane.b32.xlu0 %v3577, 32
  %v3739 = vpop.permute.xlu0 %3738
  %3740 = vrot.lane.b32.xlu0 %v3585, 32
  %v3741 = vpop.permute.xlu0 %3740
  %3742 = vrot.lane.b32.xlu0 %v3593, 32
  %v3743 = vpop.permute.xlu0 %3742
  %3744 = vrot.lane.b32.xlu0 %v3601, 32
  %v3745 = vpop.permute.xlu0 %3744
  %3746 = vrot.lane.b32.xlu0 %v3609, 32
  %v3747 = vpop.permute.xlu0 %3746
  %3748 = vrot.lane.b32.xlu0 %v3617, 32
  %v3749 = vpop.permute.xlu0 %3748
  %3750 = vrot.lane.b32.xlu0 %v3625, 32
  %v3751 = vpop.permute.xlu0 %3750
  %3752 = vrot.lane.b32.xlu0 %v3633, 32
  %v3753 = vpop.permute.xlu0 %3752
  %3754 = vrot.lane.b32.xlu0 %v3641, 32
  %v3755 = vpop.permute.xlu0 %3754
  %3756 = vrot.lane.b32.xlu0 %v3649, 32
  %v3757 = vpop.permute.xlu0 %3756
  %3758 = vrot.lane.b32.xlu0 %v3657, 32
  %v3759 = vpop.permute.xlu0 %3758
  %3760 = vrot.lane.b32.xlu0 %v3665, 32
  %v3761 = vpop.permute.xlu0 %3760
  %3762 = vrot.lane.b32.xlu0 %v3673, 32
  %v3763 = vpop.permute.xlu0 %3762
  %3764 = vrot.lane.b32.xlu0 %v3681, 32
  %v3765 = vpop.permute.xlu0 %3764
  %3766 = vrot.lane.b32.xlu0 %v3689, 32
  %v3767 = vpop.permute.xlu0 %3766
  %3768 = vrot.lane.b32.xlu0 %v3697, 32
  %v3769 = vpop.permute.xlu0 %3768
  %3770 = vrot.lane.b32.xlu0 %v3705, 32
  %v3771 = vpop.permute.xlu0 %3770
  %3772 = vrot.lane.b32.xlu0 %v3713, 32
  %v3773 = vpop.permute.xlu0 %3772
  %v3775 = vunpack.c.l.b16 %v2784
  %v3776 = vpack.c.b16 %v2854, %v3775
  %v3777 = vrot.slane %v3776, 1
  %v3778 = vrot.slane %v3378, 1
  %v3779 = vsel %vm551, %v3777, %v3778
  %v3780 = vrot.slane %v3379, 1
  %v3781 = vsel %vm551, %v3778, %v3780
  %v3782 = vrot.slane %v3380, 1
  %v3783 = vsel %vm551, %v3780, %v3782
  %v3784 = vrot.slane %v3381, 1
  %v3785 = vsel %vm551, %v3782, %v3784
  %v3786 = vrot.slane %v3382, 1
  %v3787 = vsel %vm551, %v3784, %v3786
  %v3788 = vrot.slane %v3383, 1
  %v3789 = vsel %vm551, %v3786, %v3788
  %v3790 = vrot.slane %v3384, 1
  %v3791 = vsel %vm551, %v3788, %v3790
  %v3792 = vrot.slane %v3385, 1
  %v3793 = vsel %vm551, %v3790, %v3792
  %v3794 = vrot.slane %v3386, 1
  %v3795 = vsel %vm551, %v3792, %v3794
  %v3796 = vrot.slane %v3387, 1
  %v3797 = vsel %vm551, %v3794, %v3796
  %v3798 = vrot.slane %v3388, 1
  %v3799 = vsel %vm551, %v3796, %v3798
  %v3800 = vrot.slane %v3389, 1
  %v3801 = vsel %vm551, %v3798, %v3800
  %v3802 = vrot.slane %v3390, 1
  %v3803 = vsel %vm551, %v3800, %v3802
  %v3804 = vrot.slane %v3391, 1
  %v3805 = vsel %vm551, %v3802, %v3804
  %v3806 = vrot.slane %v3392, 1
  %v3807 = vsel %vm551, %v3804, %v3806
  %v3808 = vrot.slane %v3393, 1
  %v3809 = vsel %vm551, %v3806, %v3808
  %v3810 = vrot.slane %v3394, 1
  %v3811 = vsel %vm551, %v3808, %v3810
  %v3812 = vrot.slane %v3395, 1
  %v3813 = vsel %vm551, %v3810, %v3812
  %v3814 = vrot.slane %v3396, 1
  %v3815 = vsel %vm551, %v3812, %v3814
  %v3816 = vrot.slane %v3397, 1
  %v3817 = vsel %vm551, %v3814, %v3816
  %v3818 = vrot.slane %v3398, 1
  %v3819 = vsel %vm551, %v3816, %v3818
  %v3820 = vrot.slane %v3399, 1
  %v3821 = vsel %vm551, %v3818, %v3820
  %v3822 = vrot.slane %v3400, 1
  %v3823 = vsel %vm551, %v3820, %v3822
  %v3824 = vrot.slane %v3401, 1
  %v3825 = vsel %vm551, %v3822, %v3824
  %v3826 = vrot.slane %v3402, 1
  %v3827 = vsel %vm551, %v3824, %v3826
  %v3828 = vrot.slane %v3403, 1
  %v3829 = vsel %vm551, %v3826, %v3828
  %v3830 = vrot.slane %v3404, 1
  %v3831 = vsel %vm551, %v3828, %v3830
  %v3832 = vrot.slane %v3405, 1
  %v3833 = vsel %vm551, %v3830, %v3832
  %v3834 = vrot.slane %v3406, 1
  %v3835 = vsel %vm551, %v3832, %v3834
  %v3836 = vrot.slane %v3469, 1
  %v3837 = vsel %vm551, %v3834, %v3836
  %3838 = vrot.lane.b32.xlu0 %v3779, 40
  %v3839 = vpop.permute.xlu0 %3838
  %3840 = vrot.lane.b32.xlu0 %v3781, 40
  %v3841 = vpop.permute.xlu0 %3840
  %3842 = vrot.lane.b32.xlu0 %v3783, 40
  %v3843 = vpop.permute.xlu0 %3842
  %3844 = vrot.lane.b32.xlu0 %v3785, 40
  %v3845 = vpop.permute.xlu0 %3844
  %3846 = vrot.lane.b32.xlu0 %v3787, 40
  %v3847 = vpop.permute.xlu0 %3846
  %3848 = vrot.lane.b32.xlu0 %v3789, 40
  %v3849 = vpop.permute.xlu0 %3848
  %3850 = vrot.lane.b32.xlu0 %v3791, 40
  %v3851 = vpop.permute.xlu0 %3850
  %3852 = vrot.lane.b32.xlu0 %v3793, 40
  %v3853 = vpop.permute.xlu0 %3852
  %3854 = vrot.lane.b32.xlu0 %v3795, 40
  %v3855 = vpop.permute.xlu0 %3854
  %3856 = vrot.lane.b32.xlu0 %v3797, 40
  %v3857 = vpop.permute.xlu0 %3856
  %3858 = vrot.lane.b32.xlu0 %v3799, 40
  %v3859 = vpop.permute.xlu0 %3858
  %3860 = vrot.lane.b32.xlu0 %v3801, 40
  %v3861 = vpop.permute.xlu0 %3860
  %3862 = vrot.lane.b32.xlu0 %v3803, 40
  %v3863 = vpop.permute.xlu0 %3862
  %3864 = vrot.lane.b32.xlu0 %v3805, 40
  %v3865 = vpop.permute.xlu0 %3864
  %3866 = vrot.lane.b32.xlu0 %v3807, 40
  %v3867 = vpop.permute.xlu0 %3866
  %3868 = vrot.lane.b32.xlu0 %v3809, 40
  %v3869 = vpop.permute.xlu0 %3868
  %3870 = vrot.lane.b32.xlu0 %v3811, 40
  %v3871 = vpop.permute.xlu0 %3870
  %3872 = vrot.lane.b32.xlu0 %v3813, 40
  %v3873 = vpop.permute.xlu0 %3872
  %3874 = vrot.lane.b32.xlu0 %v3815, 40
  %v3875 = vpop.permute.xlu0 %3874
  %3876 = vrot.lane.b32.xlu0 %v3817, 40
  %v3877 = vpop.permute.xlu0 %3876
  %3878 = vrot.lane.b32.xlu0 %v3819, 40
  %v3879 = vpop.permute.xlu0 %3878
  %3880 = vrot.lane.b32.xlu0 %v3821, 40
  %v3881 = vpop.permute.xlu0 %3880
  %3882 = vrot.lane.b32.xlu0 %v3823, 40
  %v3883 = vpop.permute.xlu0 %3882
  %3884 = vrot.lane.b32.xlu0 %v3825, 40
  %v3885 = vpop.permute.xlu0 %3884
  %3886 = vrot.lane.b32.xlu0 %v3827, 40
  %v3887 = vpop.permute.xlu0 %3886
  %3888 = vrot.lane.b32.xlu0 %v3829, 40
  %v3889 = vpop.permute.xlu0 %3888
  %3890 = vrot.lane.b32.xlu0 %v3831, 40
  %v3891 = vpop.permute.xlu0 %3890
  %3892 = vrot.lane.b32.xlu0 %v3833, 40
  %v3893 = vpop.permute.xlu0 %3892
  %3894 = vrot.lane.b32.xlu0 %v3835, 40
  %v3895 = vpop.permute.xlu0 %3894
  %3896 = vrot.lane.b32.xlu0 %v3837, 40
  %v3897 = vpop.permute.xlu0 %3896
  %v3901 = vunpack.c.l.b16 %v2785
  %v3902 = vunpack.c.l.b16 %v2786
  %v3903 = vunpack.c.l.b16 %v2787
  %v3904 = vpack.c.b16 %v3375, %v3374
  %v3905 = vpack.c.b16 %v3901, %v3376
  %v3906 = vpack.c.b16 %v3903, %v3902
  %3907 = vrot.lane.b32.xlu0 %v2913, 48
  %v3908 = vpop.permute.xlu0 %3907
  %3909 = vrot.lane.b32.xlu0 %v2914, 48
  %v3910 = vpop.permute.xlu0 %3909
  %3911 = vrot.lane.b32.xlu0 %v2915, 48
  %v3912 = vpop.permute.xlu0 %3911
  %3913 = vrot.lane.b32.xlu0 %v2916, 48
  %v3914 = vpop.permute.xlu0 %3913
  %3915 = vrot.lane.b32.xlu0 %v2917, 48
  %v3916 = vpop.permute.xlu0 %3915
  %3917 = vrot.lane.b32.xlu0 %v2918, 48
  %v3918 = vpop.permute.xlu0 %3917
  %3919 = vrot.lane.b32.xlu0 %v2919, 48
  %v3920 = vpop.permute.xlu0 %3919
  %3921 = vrot.lane.b32.xlu0 %v2920, 48
  %v3922 = vpop.permute.xlu0 %3921
  %3923 = vrot.lane.b32.xlu0 %v2921, 48
  %v3924 = vpop.permute.xlu0 %3923
  %3925 = vrot.lane.b32.xlu0 %v2922, 48
  %v3926 = vpop.permute.xlu0 %3925
  %3927 = vrot.lane.b32.xlu0 %v2923, 48
  %v3928 = vpop.permute.xlu0 %3927
  %3929 = vrot.lane.b32.xlu0 %v2924, 48
  %v3930 = vpop.permute.xlu0 %3929
  %3931 = vrot.lane.b32.xlu0 %v2925, 48
  %v3932 = vpop.permute.xlu0 %3931
  %3933 = vrot.lane.b32.xlu0 %v2926, 48
  %v3934 = vpop.permute.xlu0 %3933
  %3935 = vrot.lane.b32.xlu0 %v2927, 48
  %v3936 = vpop.permute.xlu0 %3935
  %3937 = vrot.lane.b32.xlu0 %v2928, 48
  %v3938 = vpop.permute.xlu0 %3937
  %3939 = vrot.lane.b32.xlu0 %v2929, 48
  %v3940 = vpop.permute.xlu0 %3939
  %3941 = vrot.lane.b32.xlu0 %v2930, 48
  %v3942 = vpop.permute.xlu0 %3941
  %3943 = vrot.lane.b32.xlu0 %v2931, 48
  %v3944 = vpop.permute.xlu0 %3943
  %3945 = vrot.lane.b32.xlu0 %v2932, 48
  %v3946 = vpop.permute.xlu0 %3945
  %3947 = vrot.lane.b32.xlu0 %v2933, 48
  %v3948 = vpop.permute.xlu0 %3947
  %3949 = vrot.lane.b32.xlu0 %v2934, 48
  %v3950 = vpop.permute.xlu0 %3949
  %3951 = vrot.lane.b32.xlu0 %v2935, 48
  %v3952 = vpop.permute.xlu0 %3951
  %3953 = vrot.lane.b32.xlu0 %v2936, 48
  %v3954 = vpop.permute.xlu0 %3953
  %3955 = vrot.lane.b32.xlu0 %v2937, 48
  %v3956 = vpop.permute.xlu0 %3955
  %3957 = vrot.lane.b32.xlu0 %v2938, 48
  %v3958 = vpop.permute.xlu0 %3957
  %3959 = vrot.lane.b32.xlu0 %v2939, 48
  %v3960 = vpop.permute.xlu0 %3959
  %3961 = vrot.lane.b32.xlu0 %v3904, 48
  %v3962 = vpop.permute.xlu0 %3961
  %3963 = vrot.lane.b32.xlu0 %v3905, 48
  %v3964 = vpop.permute.xlu0 %3963
  %3965 = vrot.lane.b32.xlu0 %v3906, 48
  %v3966 = vpop.permute.xlu0 %3965
  %v3968 = vunpack.c.l.b16 %v2788
  %v3969 = vpack.c.b16 %v3968, %v3968
  %v3971 = vshll.u32 %v3904, 16
  %v3973 = vrot.slane %v3971, 1
  %v3974 = vsel %vm243, %v3181, %v3973
  %v3975 = vshrl.u32 %v3904, 16
  %v3977 = vor.u32 %v3975, %v3973
  %v3979 = vshll.u32 %v3905, 16
  %v3981 = vrot.slane %v3979, 1
  %v3982 = vsel %vm243, %v3977, %v3981
  %v3983 = vshrl.u32 %v3905, 16
  %v3985 = vor.u32 %v3983, %v3981
  %v3987 = vshll.u32 %v3906, 16
  %v3989 = vrot.slane %v3987, 1
  %v3990 = vsel %vm243, %v3985, %v3989
  %v3991 = vshrl.u32 %v3906, 16
  %v3993 = vor.u32 %v3991, %v3989
  %v3995 = vshll.u32 %v3969, 16
  %v3997 = vrot.slane %v3995, 1
  %v3998 = vsel %vm243, %v3993, %v3997
  %3999 = vrot.lane.b32.xlu0 %v2978, 56
  %v4000 = vpop.permute.xlu0 %3999
  %4001 = vrot.lane.b32.xlu0 %v2986, 56
  %v4002 = vpop.permute.xlu0 %4001
  %4003 = vrot.lane.b32.xlu0 %v2994, 56
  %v4004 = vpop.permute.xlu0 %4003
  %4005 = vrot.lane.b32.xlu0 %v3002, 56
  %v4006 = vpop.permute.xlu0 %4005
  %4007 = vrot.lane.b32.xlu0 %v3010, 56
  %v4008 = vpop.permute.xlu0 %4007
  %4009 = vrot.lane.b32.xlu0 %v3018, 56
  %v4010 = vpop.permute.xlu0 %4009
  %4011 = vrot.lane.b32.xlu0 %v3026, 56
  %v4012 = vpop.permute.xlu0 %4011
  %4013 = vrot.lane.b32.xlu0 %v3034, 56
  %v4014 = vpop.permute.xlu0 %4013
  %4015 = vrot.lane.b32.xlu0 %v3042, 56
  %v4016 = vpop.permute.xlu0 %4015
  %4017 = vrot.lane.b32.xlu0 %v3050, 56
  %v4018 = vpop.permute.xlu0 %4017
  %4019 = vrot.lane.b32.xlu0 %v3058, 56
  %v4020 = vpop.permute.xlu0 %4019
  %4021 = vrot.lane.b32.xlu0 %v3066, 56
  %v4022 = vpop.permute.xlu0 %4021
  %4023 = vrot.lane.b32.xlu0 %v3074, 56
  %v4024 = vpop.permute.xlu0 %4023
  %4025 = vrot.lane.b32.xlu0 %v3082, 56
  %v4026 = vpop.permute.xlu0 %4025
  %4027 = vrot.lane.b32.xlu0 %v3090, 56
  %v4028 = vpop.permute.xlu0 %4027
  %4029 = vrot.lane.b32.xlu0 %v3098, 56
  %v4030 = vpop.permute.xlu0 %4029
  %4031 = vrot.lane.b32.xlu0 %v3106, 56
  %v4032 = vpop.permute.xlu0 %4031
  %4033 = vrot.lane.b32.xlu0 %v3114, 56
  %v4034 = vpop.permute.xlu0 %4033
  %4035 = vrot.lane.b32.xlu0 %v3122, 56
  %v4036 = vpop.permute.xlu0 %4035
  %4037 = vrot.lane.b32.xlu0 %v3130, 56
  %v4038 = vpop.permute.xlu0 %4037
  %4039 = vrot.lane.b32.xlu0 %v3138, 56
  %v4040 = vpop.permute.xlu0 %4039
  %4041 = vrot.lane.b32.xlu0 %v3146, 56
  %v4042 = vpop.permute.xlu0 %4041
  %4043 = vrot.lane.b32.xlu0 %v3154, 56
  %v4044 = vpop.permute.xlu0 %4043
  %4045 = vrot.lane.b32.xlu0 %v3162, 56
  %v4046 = vpop.permute.xlu0 %4045
  %4047 = vrot.lane.b32.xlu0 %v3170, 56
  %v4048 = vpop.permute.xlu0 %4047
  %4049 = vrot.lane.b32.xlu0 %v3178, 56
  %v4050 = vpop.permute.xlu0 %4049
  %4051 = vrot.lane.b32.xlu0 %v3974, 56
  %v4052 = vpop.permute.xlu0 %4051
  %4053 = vrot.lane.b32.xlu0 %v3982, 56
  %v4054 = vpop.permute.xlu0 %4053
  %4055 = vrot.lane.b32.xlu0 %v3990, 56
  %v4056 = vpop.permute.xlu0 %4055
  %4057 = vrot.lane.b32.xlu0 %v3998, 56
  %v4058 = vpop.permute.xlu0 %4057
  %v4060 = vunpack.c.l.b16 %v2789
  %v4061 = vpack.c.b16 %v2857, %v4060
  %v4062 = vrot.slane %v4061, 1
  %v4063 = vsel %vm551, %v4062, %v3257
  %v4064 = vrot.slane %v3904, 1
  %v4065 = vsel %vm551, %v3307, %v4064
  %v4066 = vrot.slane %v3905, 1
  %v4067 = vsel %vm551, %v4064, %v4066
  %v4068 = vrot.slane %v3906, 1
  %v4069 = vsel %vm551, %v4066, %v4068
  %v4070 = vrot.slane %v3969, 1
  %v4071 = vsel %vm551, %v4068, %v4070
  %4072 = vrot.lane.b32.xlu0 %v4063, 64
  %v4073 = vpop.permute.xlu0 %4072
  %4074 = vrot.lane.b32.xlu0 %v3260, 64
  %v4075 = vpop.permute.xlu0 %4074
  %4076 = vrot.lane.b32.xlu0 %v3262, 64
  %v4077 = vpop.permute.xlu0 %4076
  %4078 = vrot.lane.b32.xlu0 %v3264, 64
  %v4079 = vpop.permute.xlu0 %4078
  %4080 = vrot.lane.b32.xlu0 %v3266, 64
  %v4081 = vpop.permute.xlu0 %4080
  %4082 = vrot.lane.b32.xlu0 %v3268, 64
  %v4083 = vpop.permute.xlu0 %4082
  %4084 = vrot.lane.b32.xlu0 %v3270, 64
  %v4085 = vpop.permute.xlu0 %4084
  %4086 = vrot.lane.b32.xlu0 %v3272, 64
  %v4087 = vpop.permute.xlu0 %4086
  %4088 = vrot.lane.b32.xlu0 %v3274, 64
  %v4089 = vpop.permute.xlu0 %4088
  %4090 = vrot.lane.b32.xlu0 %v3276, 64
  %v4091 = vpop.permute.xlu0 %4090
  %4092 = vrot.lane.b32.xlu0 %v3278, 64
  %v4093 = vpop.permute.xlu0 %4092
  %4094 = vrot.lane.b32.xlu0 %v3280, 64
  %v4095 = vpop.permute.xlu0 %4094
  %4096 = vrot.lane.b32.xlu0 %v3282, 64
  %v4097 = vpop.permute.xlu0 %4096
  %4098 = vrot.lane.b32.xlu0 %v3284, 64
  %v4099 = vpop.permute.xlu0 %4098
  %4100 = vrot.lane.b32.xlu0 %v3286, 64
  %v4101 = vpop.permute.xlu0 %4100
  %4102 = vrot.lane.b32.xlu0 %v3288, 64
  %v4103 = vpop.permute.xlu0 %4102
  %4104 = vrot.lane.b32.xlu0 %v3290, 64
  %v4105 = vpop.permute.xlu0 %4104
  %4106 = vrot.lane.b32.xlu0 %v3292, 64
  %v4107 = vpop.permute.xlu0 %4106
  %4108 = vrot.lane.b32.xlu0 %v3294, 64
  %v4109 = vpop.permute.xlu0 %4108
  %4110 = vrot.lane.b32.xlu0 %v3296, 64
  %v4111 = vpop.permute.xlu0 %4110
  %4112 = vrot.lane.b32.xlu0 %v3298, 64
  %v4113 = vpop.permute.xlu0 %4112
  %4114 = vrot.lane.b32.xlu0 %v3300, 64
  %v4115 = vpop.permute.xlu0 %4114
  %4116 = vrot.lane.b32.xlu0 %v3302, 64
  %v4117 = vpop.permute.xlu0 %4116
  %4118 = vrot.lane.b32.xlu0 %v3304, 64
  %v4119 = vpop.permute.xlu0 %4118
  %4120 = vrot.lane.b32.xlu0 %v3306, 64
  %v4121 = vpop.permute.xlu0 %4120
  %4122 = vrot.lane.b32.xlu0 %v3308, 64
  %v4123 = vpop.permute.xlu0 %4122
  %4124 = vrot.lane.b32.xlu0 %v4065, 64
  %v4125 = vpop.permute.xlu0 %4124
  %4126 = vrot.lane.b32.xlu0 %v4067, 64
  %v4127 = vpop.permute.xlu0 %4126
  %4128 = vrot.lane.b32.xlu0 %v4069, 64
  %v4129 = vpop.permute.xlu0 %4128
  %4130 = vrot.lane.b32.xlu0 %v4071, 64
  %v4131 = vpop.permute.xlu0 %4130
  %v4133 = vsel %vm1434, %v2910, %v3188
  %v4135 = vsel %vm1434, %v2911, %v3190
  %v4137 = vsel %vm1434, %v2912, %v3192
  %v4139 = vsel %vm1434, %v2913, %v3194
  %v4141 = vsel %vm1434, %v2914, %v3196
  %v4143 = vsel %vm1434, %v2915, %v3198
  %v4145 = vsel %vm1434, %v2916, %v3200
  %v4147 = vsel %vm1434, %v2917, %v3202
  %v4149 = vsel %vm1434, %v2918, %v3204
  %v4151 = vsel %vm1434, %v2919, %v3206
  %v4153 = vsel %vm1434, %v2920, %v3208
  %v4155 = vsel %vm1434, %v2921, %v3210
  %v4157 = vsel %vm1434, %v2922, %v3212
  %v4159 = vsel %vm1434, %v2923, %v3214
  %v4161 = vsel %vm1434, %v2924, %v3216
  %v4163 = vsel %vm1434, %v2925, %v3218
  %v4165 = vsel %vm1434, %v2926, %v3220
  %v4167 = vsel %vm1434, %v2927, %v3222
  %v4169 = vsel %vm1434, %v2928, %v3224
  %v4171 = vsel %vm1434, %v2929, %v3226
  %v4173 = vsel %vm1434, %v2930, %v3228
  %v4175 = vsel %vm1434, %v2931, %v3230
  %v4177 = vsel %vm1434, %v2932, %v3232
  %v4179 = vsel %vm1434, %v2933, %v3234
  %v4181 = vsel %vm1434, %v2934, %v3236
  %v4183 = vsel %vm1434, %v2935, %v3238
  %v4185 = vsel %vm1434, %v2936, %v3240
  %v4187 = vsel %vm1434, %v2937, %v3242
  %v4189 = vsel %vm1434, %v2938, %v3244
  %v4191 = vsel %vm1434, %v2939, %v3246
  %v4193 = vsel %vm1495, %v4133, %v3312
  %v4195 = vsel %vm1495, %v4135, %v3314
  %v4197 = vsel %vm1495, %v4137, %v3316
  %v4199 = vsel %vm1495, %v4139, %v3318
  %v4201 = vsel %vm1495, %v4141, %v3320
  %v4203 = vsel %vm1495, %v4143, %v3322
  %v4205 = vsel %vm1495, %v4145, %v3324
  %v4207 = vsel %vm1495, %v4147, %v3326
  %v4209 = vsel %vm1495, %v4149, %v3328
  %v4211 = vsel %vm1495, %v4151, %v3330
  %v4213 = vsel %vm1495, %v4153, %v3332
  %v4215 = vsel %vm1495, %v4155, %v3334
  %v4217 = vsel %vm1495, %v4157, %v3336
  %v4219 = vsel %vm1495, %v4159, %v3338
  %v4221 = vsel %vm1495, %v4161, %v3340
  %v4223 = vsel %vm1495, %v4163, %v3342
  %v4225 = vsel %vm1495, %v4165, %v3344
  %v4227 = vsel %vm1495, %v4167, %v3346
  %v4229 = vsel %vm1495, %v4169, %v3348
  %v4231 = vsel %vm1495, %v4171, %v3350
  %v4233 = vsel %vm1495, %v4173, %v3352
  %v4235 = vsel %vm1495, %v4175, %v3354
  %v4237 = vsel %vm1495, %v4177, %v3356
  %v4239 = vsel %vm1495, %v4179, %v3358
  %v4241 = vsel %vm1495, %v4181, %v3360
  %v4243 = vsel %vm1495, %v4183, %v3362
  %v4245 = vsel %vm1495, %v4185, %v3364
  %v4247 = vsel %vm1495, %v4187, %v3366
  %v4249 = vsel %vm1495, %v4189, %v3368
  %v4251 = vsel %vm1495, %v4191, %v3370
  %v4253 = vsel %vm1556, %v4193, %v3408
  %v4255 = vsel %vm1556, %v4195, %v3410
  %v4257 = vsel %vm1556, %v4197, %v3412
  %v4259 = vsel %vm1556, %v4199, %v3414
  %v4261 = vsel %vm1556, %v4201, %v3416
  %v4263 = vsel %vm1556, %v4203, %v3418
  %v4265 = vsel %vm1556, %v4205, %v3420
  %v4267 = vsel %vm1556, %v4207, %v3422
  %v4269 = vsel %vm1556, %v4209, %v3424
  %v4271 = vsel %vm1556, %v4211, %v3426
  %v4273 = vsel %vm1556, %v4213, %v3428
  %v4275 = vsel %vm1556, %v4215, %v3430
  %v4277 = vsel %vm1556, %v4217, %v3432
  %v4279 = vsel %vm1556, %v4219, %v3434
  %v4281 = vsel %vm1556, %v4221, %v3436
  %v4283 = vsel %vm1556, %v4223, %v3438
  %v4285 = vsel %vm1556, %v4225, %v3440
  %v4287 = vsel %vm1556, %v4227, %v3442
  %v4289 = vsel %vm1556, %v4229, %v3444
  %v4291 = vsel %vm1556, %v4231, %v3446
  %v4293 = vsel %vm1556, %v4233, %v3448
  %v4295 = vsel %vm1556, %v4235, %v3450
  %v4297 = vsel %vm1556, %v4237, %v3452
  %v4299 = vsel %vm1556, %v4239, %v3454
  %v4301 = vsel %vm1556, %v4241, %v3456
  %v4303 = vsel %vm1556, %v4243, %v3458
  %v4305 = vsel %vm1556, %v4245, %v3460
  %v4307 = vsel %vm1556, %v4247, %v3462
  %v4309 = vsel %vm1556, %v4249, %v3464
  %v4311 = vsel %vm1556, %v4251, %v3466
  %v4313 = vsel %vm1617, %v4253, %v3715
  %v4315 = vsel %vm1617, %v4255, %v3717
  %v4317 = vsel %vm1617, %v4257, %v3719
  %v4319 = vsel %vm1617, %v4259, %v3721
  %v4321 = vsel %vm1617, %v4261, %v3723
  %v4323 = vsel %vm1617, %v4263, %v3725
  %v4325 = vsel %vm1617, %v4265, %v3727
  %v4327 = vsel %vm1617, %v4267, %v3729
  %v4329 = vsel %vm1617, %v4269, %v3731
  %v4331 = vsel %vm1617, %v4271, %v3733
  %v4333 = vsel %vm1617, %v4273, %v3735
  %v4335 = vsel %vm1617, %v4275, %v3737
  %v4337 = vsel %vm1617, %v4277, %v3739
  %v4339 = vsel %vm1617, %v4279, %v3741
  %v4341 = vsel %vm1617, %v4281, %v3743
  %v4343 = vsel %vm1617, %v4283, %v3745
  %v4345 = vsel %vm1617, %v4285, %v3747
  %v4347 = vsel %vm1617, %v4287, %v3749
  %v4349 = vsel %vm1617, %v4289, %v3751
  %v4351 = vsel %vm1617, %v4291, %v3753
  %v4353 = vsel %vm1617, %v4293, %v3755
  %v4355 = vsel %vm1617, %v4295, %v3757
  %v4357 = vsel %vm1617, %v4297, %v3759
  %v4359 = vsel %vm1617, %v4299, %v3761
  %v4361 = vsel %vm1617, %v4301, %v3763
  %v4363 = vsel %vm1617, %v4303, %v3765
  %v4365 = vsel %vm1617, %v4305, %v3767
  %v4367 = vsel %vm1617, %v4307, %v3769
  %v4369 = vsel %vm1617, %v4309, %v3771
  %v4371 = vsel %vm1617, %v4311, %v3773
  %v4373 = vsel %vm1678, %v4313, %v3839
  %v4375 = vsel %vm1678, %v4315, %v3841
  %v4377 = vsel %vm1678, %v4317, %v3843
  %v4379 = vsel %vm1678, %v4319, %v3845
  %v4381 = vsel %vm1678, %v4321, %v3847
  %v4383 = vsel %vm1678, %v4323, %v3849
  %v4385 = vsel %vm1678, %v4325, %v3851
  %v4387 = vsel %vm1678, %v4327, %v3853
  %v4389 = vsel %vm1678, %v4329, %v3855
  %v4391 = vsel %vm1678, %v4331, %v3857
  %v4393 = vsel %vm1678, %v4333, %v3859
  %v4395 = vsel %vm1678, %v4335, %v3861
  %v4397 = vsel %vm1678, %v4337, %v3863
  %v4399 = vsel %vm1678, %v4339, %v3865
  %v4401 = vsel %vm1678, %v4341, %v3867
  %v4403 = vsel %vm1678, %v4343, %v3869
  %v4405 = vsel %vm1678, %v4345, %v3871
  %v4407 = vsel %vm1678, %v4347, %v3873
  %v4409 = vsel %vm1678, %v4349, %v3875
  %v4411 = vsel %vm1678, %v4351, %v3877
  %v4413 = vsel %vm1678, %v4353, %v3879
  %v4415 = vsel %vm1678, %v4355, %v3881
  %v4417 = vsel %vm1678, %v4357, %v3883
  %v4419 = vsel %vm1678, %v4359, %v3885
  %v4421 = vsel %vm1678, %v4361, %v3887
  %v4423 = vsel %vm1678, %v4363, %v3889
  %v4425 = vsel %vm1678, %v4365, %v3891
  %v4427 = vsel %vm1678, %v4367, %v3893
  %v4429 = vsel %vm1678, %v4369, %v3895
  %v4431 = vsel %vm1678, %v4371, %v3897
  %v4433 = vsel %vm1739, %v4373, %v3908
  %v4435 = vsel %vm1739, %v4375, %v3910
  %v4437 = vsel %vm1739, %v4377, %v3912
  %v4439 = vsel %vm1739, %v4379, %v3914
  %v4441 = vsel %vm1739, %v4381, %v3916
  %v4443 = vsel %vm1739, %v4383, %v3918
  %v4445 = vsel %vm1739, %v4385, %v3920
  %v4447 = vsel %vm1739, %v4387, %v3922
  %v4449 = vsel %vm1739, %v4389, %v3924
  %v4451 = vsel %vm1739, %v4391, %v3926
  %v4453 = vsel %vm1739, %v4393, %v3928
  %v4455 = vsel %vm1739, %v4395, %v3930
  %v4457 = vsel %vm1739, %v4397, %v3932
  %v4459 = vsel %vm1739, %v4399, %v3934
  %v4461 = vsel %vm1739, %v4401, %v3936
  %v4463 = vsel %vm1739, %v4403, %v3938
  %v4465 = vsel %vm1739, %v4405, %v3940
  %v4467 = vsel %vm1739, %v4407, %v3942
  %v4469 = vsel %vm1739, %v4409, %v3944
  %v4471 = vsel %vm1739, %v4411, %v3946
  %v4473 = vsel %vm1739, %v4413, %v3948
  %v4475 = vsel %vm1739, %v4415, %v3950
  %v4477 = vsel %vm1739, %v4417, %v3952
  %v4479 = vsel %vm1739, %v4419, %v3954
  %v4481 = vsel %vm1739, %v4421, %v3956
  %v4483 = vsel %vm1739, %v4423, %v3958
  %v4485 = vsel %vm1739, %v4425, %v3960
  %v4487 = vsel %vm1739, %v4427, %v3962
  %v4489 = vsel %vm1739, %v4429, %v3964
  %v4491 = vsel %vm1739, %v4431, %v3966
  %v4493 = vsel %vm1800, %v4433, %v4000
  %v4495 = vsel %vm1800, %v4435, %v4002
  %v4497 = vsel %vm1800, %v4437, %v4004
  %v4499 = vsel %vm1800, %v4439, %v4006
  %v4501 = vsel %vm1800, %v4441, %v4008
  %v4503 = vsel %vm1800, %v4443, %v4010
  %v4505 = vsel %vm1800, %v4445, %v4012
  %v4507 = vsel %vm1800, %v4447, %v4014
  %v4509 = vsel %vm1800, %v4449, %v4016
  %v4511 = vsel %vm1800, %v4451, %v4018
  %v4513 = vsel %vm1800, %v4453, %v4020
  %v4515 = vsel %vm1800, %v4455, %v4022
  %v4517 = vsel %vm1800, %v4457, %v4024
  %v4519 = vsel %vm1800, %v4459, %v4026
  %v4521 = vsel %vm1800, %v4461, %v4028
  %v4523 = vsel %vm1800, %v4463, %v4030
  %v4525 = vsel %vm1800, %v4465, %v4032
  %v4527 = vsel %vm1800, %v4467, %v4034
  %v4529 = vsel %vm1800, %v4469, %v4036
  %v4531 = vsel %vm1800, %v4471, %v4038
  %v4533 = vsel %vm1800, %v4473, %v4040
  %v4535 = vsel %vm1800, %v4475, %v4042
  %v4537 = vsel %vm1800, %v4477, %v4044
  %v4539 = vsel %vm1800, %v4479, %v4046
  %v4541 = vsel %vm1800, %v4481, %v4048
  %v4543 = vsel %vm1800, %v4483, %v4050
  %v4545 = vsel %vm1800, %v4485, %v4052
  %v4547 = vsel %vm1800, %v4487, %v4054
  %v4549 = vsel %vm1800, %v4489, %v4056
  %v4551 = vsel %vm1800, %v4491, %v4058
  %v4553 = vsel %vm1861, %v4493, %v4073
  %v4555 = vsel %vm1861, %v4495, %v4075
  %v4557 = vsel %vm1861, %v4497, %v4077
  %v4559 = vsel %vm1861, %v4499, %v4079
  %v4561 = vsel %vm1861, %v4501, %v4081
  %v4563 = vsel %vm1861, %v4503, %v4083
  %v4565 = vsel %vm1861, %v4505, %v4085
  %v4567 = vsel %vm1861, %v4507, %v4087
  %v4569 = vsel %vm1861, %v4509, %v4089
  %v4571 = vsel %vm1861, %v4511, %v4091
  %v4573 = vsel %vm1861, %v4513, %v4093
  %v4575 = vsel %vm1861, %v4515, %v4095
  %v4577 = vsel %vm1861, %v4517, %v4097
  %v4579 = vsel %vm1861, %v4519, %v4099
  %v4581 = vsel %vm1861, %v4521, %v4101
  %v4583 = vsel %vm1861, %v4523, %v4103
  %v4585 = vsel %vm1861, %v4525, %v4105
  %v4587 = vsel %vm1861, %v4527, %v4107
  %v4589 = vsel %vm1861, %v4529, %v4109
  %v4591 = vsel %vm1861, %v4531, %v4111
  %v4593 = vsel %vm1861, %v4533, %v4113
  %v4595 = vsel %vm1861, %v4535, %v4115
  %v4597 = vsel %vm1861, %v4537, %v4117
  %v4599 = vsel %vm1861, %v4539, %v4119
  %v4601 = vsel %vm1861, %v4541, %v4121
  %v4603 = vsel %vm1861, %v4543, %v4123
  %v4605 = vsel %vm1861, %v4545, %v4125
  %v4607 = vsel %vm1861, %v4547, %v4127
  %v4609 = vsel %vm1861, %v4549, %v4129
  %v4611 = vsel %vm1861, %v4551, %v4131
  %v4612 = vld [vmem:[%s1] sm:$0xf]
  %v4613 = vld [vmem:[%s1 + $0x4] sm:$0xf]
  %v4614 = vld [vmem:[%s1 + $0x8] sm:$0xf]
  %v4615 = vld [vmem:[%s1 + $0xc] sm:$0xf]
  %v4616 = vld [vmem:[%s1 + $0x10] sm:$0xf]
  %v4617 = vld [vmem:[%s1 + $0x14] sm:$0xf]
  %v4618 = vld [vmem:[%s1 + $0x18] sm:$0xf]
  %v4619 = vld [vmem:[%s1 + $0x1c] sm:$0xf]
  %v4620 = vld [vmem:[%s1 + $0x20] sm:$0xf]
  %v4630 = vunpack.c.l.b16 %v4612
  %v4631 = vunpack.c.l.b16 %v4613
  %v4632 = vunpack.c.l.b16 %v4614
  %v4633 = vunpack.c.l.b16 %v4615
  %v4634 = vunpack.c.l.b16 %v4616
  %v4635 = vunpack.c.l.b16 %v4617
  %v4636 = vunpack.c.l.b16 %v4618
  %v4637 = vunpack.c.l.b16 %v4619
  %v4638 = vunpack.c.l.b16 %v4620
  %v4639 = vpack.c.b16 %v4631, %v4630
  %v4640 = vpack.c.b16 %v4633, %v4632
  %v4641 = vpack.c.b16 %v4635, %v4634
  %v4642 = vpack.c.b16 %v4637, %v4636
  %v4643 = vpack.c.b16 %v4638, %v4638
  %v4648 = vsel %vm1958, %v4553, 0
  %v4650 = vsel %vm1958, %v4555, 0
  %v4652 = vsel %vm1958, %v4557, 0
  %v4654 = vsel %vm1958, %v4559, 0
  %v4656 = vsel %vm1958, %v4561, 0
  %v4658 = vsel %vm1958, %v4563, 0
  %v4660 = vsel %vm1958, %v4565, 0
  %v4662 = vsel %vm1958, %v4567, 0
  %v4664 = vsel %vm1958, %v4569, 0
  %v4666 = vsel %vm1958, %v4571, 0
  %v4668 = vsel %vm1958, %v4573, 0
  %v4670 = vsel %vm1958, %v4575, 0
  %v4672 = vsel %vm1958, %v4577, 0
  %v4674 = vsel %vm1958, %v4579, 0
  %v4676 = vsel %vm1958, %v4581, 0
  %v4678 = vsel %vm1958, %v4583, 0
  %v4680 = vsel %vm1958, %v4585, 0
  %v4682 = vsel %vm1958, %v4587, 0
  %v4684 = vsel %vm1958, %v4589, 0
  %v4686 = vsel %vm1958, %v4591, 0
  %v4688 = vsel %vm1958, %v4593, 0
  %v4690 = vsel %vm1958, %v4595, 0
  %v4692 = vsel %vm1958, %v4597, 0
  %v4694 = vsel %vm1958, %v4599, 0
  %v4696 = vsel %vm1958, %v4601, 0
  %v4698 = vsel %vm1958, %v4603, 0
  %v4700 = vsel %vm1958, %v4605, 0
  %v4702 = vsel %vm1958, %v4607, 0
  %v4704 = vsel %vm1958, %v4609, 0
  %v4706 = vsel %vm1958, %v4611, 0
  %v4709 = vsel %vm2019, %v4643, 0
  %4711 = vmatprep.subr.bf16.mxu0 0
  %4712 = vmatpush1.bf16.msra.mxu0 %v4639
  %4713 = vmatprep.subr.bf16.mxu0 0
  %4714 = vmatpush1.bf16.msra.mxu0 %v4640
  %4715 = vmatprep.subr.bf16.mxu0 0
  %4716 = vmatpush1.bf16.msra.mxu0 %v4641
  %4717 = vmatprep.subr.bf16.mxu0 0
  %4718 = vmatpush1.bf16.msra.mxu0 %v4642
  %4719 = vmatprep.subr.bf16.mxu0 0
  %4720 = vmatpush1.bf16.msra.mxu0 %v4709
  %4721 = vmatprep.subr.bf16.mxu0 0
  %4722 = vmatpush1.bf16.msra.mxu0 0
  %4723 = vmatprep.subr.bf16.mxu0 0
  %4724 = vmatpush1.bf16.msra.mxu0 0
  %4725 = vmatprep.subr.bf16.mxu0 0
  %4726 = vmatpush1.bf16.msra.mxu0 0
  %4727 = vmatprep.subr.bf16.mxu0 0
  %4728 = vmatpush1.bf16.msra.mxu0 0
  %4729 = vmatprep.subr.bf16.mxu0 0
  %4730 = vmatpush1.bf16.msra.mxu0 0
  %4731 = vmatprep.subr.bf16.mxu0 0
  %4732 = vmatpush1.bf16.msra.mxu0 0
  %4733 = vmatprep.subr.bf16.mxu0 0
  %4734 = vmatpush1.bf16.msra.mxu0 0
  %4735 = vmatprep.subr.bf16.mxu0 0
  %4736 = vmatpush1.bf16.msra.mxu0 0
  %4737 = vmatprep.subr.bf16.mxu0 0
  %4738 = vmatpush1.bf16.msra.mxu0 0
  %4739 = vmatprep.subr.bf16.mxu0 0
  %4740 = vmatpush1.bf16.msra.mxu0 0
  %4741 = vmatprep.subr.bf16.mxu0 0
  %4742 = vmatpush1.bf16.msra.mxu0 0
  %4743 = vmatprep.mubr.bf16.mxu0 0
  %4744 = vmatmul.mubr.bf16.gmra.mrb[0].mxu0 %v4648
  %v4745 = vpop.f32.mrb[0].mxu0
  %v4746 = vadd.f32 0.0, %v4745
  %v4747 = vpop.f32.mrb[0].mxu0
  %v4748 = vpop.f32.mrb[0].mxu0
  %v4749 = vadd.f32 0.0, %v4748
  %v4750 = vpop.f32.mrb[0].mxu0
  %4751 = vmatprep.mubr.bf16.mxu0 0
  %4752 = vmatmul.mubr.bf16.gmra.mrb[0].mxu0 %v4650
  %v4753 = vpop.f32.mrb[0].mxu0
  %v4754 = vadd.f32 0.0, %v4753
  %v4755 = vpop.f32.mrb[0].mxu0
  %v4756 = vpop.f32.mrb[0].mxu0
  %v4757 = vadd.f32 0.0, %v4756
  %v4758 = vpop.f32.mrb[0].mxu0
  %4759 = vmatprep.mubr.bf16.mxu0 0
  %4760 = vmatmul.mubr.bf16.gmra.mrb[0].mxu0 %v4652
  %v4761 = vpop.f32.mrb[0].mxu0
  %v4762 = vadd.f32 0.0, %v4761
  %v4763 = vpop.f32.mrb[0].mxu0
  %v4764 = vpop.f32.mrb[0].mxu0
  %v4765 = vadd.f32 0.0, %v4764
  %v4766 = vpop.f32.mrb[0].mxu0
  %4767 = vmatprep.mubr.bf16.mxu0 0
  %4768 = vmatmul.mubr.bf16.gmra.mrb[0].mxu0 %v4654
  %v4769 = vpop.f32.mrb[0].mxu0
  %v4770 = vadd.f32 0.0, %v4769
  %v4771 = vpop.f32.mrb[0].mxu0
  %v4772 = vpop.f32.mrb[0].mxu0
  %v4773 = vadd.f32 0.0, %v4772
  %v4774 = vpop.f32.mrb[0].mxu0
  %4775 = vmatprep.mubr.bf16.mxu0 0
  %4776 = vmatmul.mubr.bf16.gmra.mrb[0].mxu0 %v4656
  %v4777 = vpop.f32.mrb[0].mxu0
  %v4778 = vadd.f32 0.0, %v4777
  %v4779 = vpop.f32.mrb[0].mxu0
  %v4780 = vpop.f32.mrb[0].mxu0
  %v4781 = vadd.f32 0.0, %v4780
  %v4782 = vpop.f32.mrb[0].mxu0
  %4783 = vmatprep.mubr.bf16.mxu0 0
  %4784 = vmatmul.mubr.bf16.gmra.mrb[0].mxu0 %v4658
  %v4785 = vpop.f32.mrb[0].mxu0
  %v4786 = vadd.f32 0.0, %v4785
  %v4787 = vpop.f32.mrb[0].mxu0
  %v4788 = vpop.f32.mrb[0].mxu0
  %v4789 = vadd.f32 0.0, %v4788
  %v4790 = vpop.f32.mrb[0].mxu0
  %4791 = vmatprep.mubr.bf16.mxu0 0
  %4792 = vmatmul.mubr.bf16.gmra.mrb[0].mxu0 %v4660
  %v4793 = vpop.f32.mrb[0].mxu0
  %v4794 = vadd.f32 0.0, %v4793
  %v4795 = vpop.f32.mrb[0].mxu0
  %v4796 = vpop.f32.mrb[0].mxu0
  %v4797 = vadd.f32 0.0, %v4796
  %v4798 = vpop.f32.mrb[0].mxu0
  %4799 = vmatprep.mubr.bf16.mxu0 0
  %4800 = vmatmul.mubr.bf16.gmra.mrb[0].mxu0 %v4662
  %v4801 = vpop.f32.mrb[0].mxu0
  %v4802 = vadd.f32 0.0, %v4801
  %v4803 = vpop.f32.mrb[0].mxu0
  %v4804 = vpop.f32.mrb[0].mxu0
  %v4805 = vadd.f32 0.0, %v4804
  %v4806 = vpop.f32.mrb[0].mxu0
  %4807 = vmatprep.mubr.bf16.mxu0 0
  %4808 = vmatmul.mubr.bf16.gmra.mrb[0].mxu0 %v4664
  %v4809 = vpop.f32.mrb[0].mxu0
  %v4810 = vadd.f32 0.0, %v4809
  %v4811 = vpop.f32.mrb[0].mxu0
  %v4812 = vpop.f32.mrb[0].mxu0
  %v4813 = vadd.f32 0.0, %v4812
  %v4814 = vpop.f32.mrb[0].mxu0
  %4815 = vmatprep.mubr.bf16.mxu0 0
  %4816 = vmatmul.mubr.bf16.gmra.mrb[0].mxu0 %v4666
  %v4817 = vpop.f32.mrb[0].mxu0
  %v4818 = vadd.f32 0.0, %v4817
  %v4819 = vpop.f32.mrb[0].mxu0
  %v4820 = vpop.f32.mrb[0].mxu0
  %v4821 = vadd.f32 0.0, %v4820
  %v4822 = vpop.f32.mrb[0].mxu0
  %4823 = vmatprep.mubr.bf16.mxu0 0
  %4824 = vmatmul.mubr.bf16.gmra.mrb[0].mxu0 %v4668
  %v4825 = vpop.f32.mrb[0].mxu0
  %v4826 = vadd.f32 0.0, %v4825
  %v4827 = vpop.f32.mrb[0].mxu0
  %v4828 = vpop.f32.mrb[0].mxu0
  %v4829 = vadd.f32 0.0, %v4828
  %v4830 = vpop.f32.mrb[0].mxu0
  %4831 = vmatprep.mubr.bf16.mxu0 0
  %4832 = vmatmul.mubr.bf16.gmra.mrb[0].mxu0 %v4670
  %v4833 = vpop.f32.mrb[0].mxu0
  %v4834 = vadd.f32 0.0, %v4833
  %v4835 = vpop.f32.mrb[0].mxu0
  %v4836 = vpop.f32.mrb[0].mxu0
  %v4837 = vadd.f32 0.0, %v4836
  %v4838 = vpop.f32.mrb[0].mxu0
  %4839 = vmatprep.mubr.bf16.mxu0 0
  %4840 = vmatmul.mubr.bf16.gmra.mrb[0].mxu0 %v4672
  %v4841 = vpop.f32.mrb[0].mxu0
  %v4842 = vadd.f32 0.0, %v4841
  %v4843 = vpop.f32.mrb[0].mxu0
  %v4844 = vpop.f32.mrb[0].mxu0
  %v4845 = vadd.f32 0.0, %v4844
  %v4846 = vpop.f32.mrb[0].mxu0
  %4847 = vmatprep.mubr.bf16.mxu0 0
  %4848 = vmatmul.mubr.bf16.gmra.mrb[0].mxu0 %v4674
  %v4849 = vpop.f32.mrb[0].mxu0
  %v4850 = vadd.f32 0.0, %v4849
  %v4851 = vpop.f32.mrb[0].mxu0
  %v4852 = vpop.f32.mrb[0].mxu0
  %v4853 = vadd.f32 0.0, %v4852
  %v4854 = vpop.f32.mrb[0].mxu0
  %4855 = vmatprep.mubr.bf16.mxu0 0
  %4856 = vmatmul.mubr.bf16.gmra.mrb[0].mxu0 %v4676
  %v4857 = vpop.f32.mrb[0].mxu0
  %v4858 = vadd.f32 0.0, %v4857
  %v4859 = vpop.f32.mrb[0].mxu0
  %v4860 = vpop.f32.mrb[0].mxu0
  %v4861 = vadd.f32 0.0, %v4860
  %v4862 = vpop.f32.mrb[0].mxu0
  %4863 = vmatprep.mubr.bf16.mxu0 0
  %4864 = vmatmul.mubr.bf16.gmra.mrb[0].mxu0 %v4678
  %v4865 = vpop.f32.mrb[0].mxu0
  %v4866 = vadd.f32 0.0, %v4865
  %v4867 = vpop.f32.mrb[0].mxu0
  %v4868 = vpop.f32.mrb[0].mxu0
  %v4869 = vadd.f32 0.0, %v4868
  %v4870 = vpop.f32.mrb[0].mxu0
  %4871 = vmatprep.mubr.bf16.mxu0 0
  %4872 = vmatmul.mubr.bf16.gmra.mrb[0].mxu0 %v4680
  %v4873 = vpop.f32.mrb[0].mxu0
  %v4874 = vadd.f32 0.0, %v4873
  %v4875 = vpop.f32.mrb[0].mxu0
  %v4876 = vpop.f32.mrb[0].mxu0
  %v4877 = vadd.f32 0.0, %v4876
  %v4878 = vpop.f32.mrb[0].mxu0
  %4879 = vmatprep.mubr.bf16.mxu0 0
  %4880 = vmatmul.mubr.bf16.gmra.mrb[0].mxu0 %v4682
  %v4881 = vpop.f32.mrb[0].mxu0
  %v4882 = vadd.f32 0.0, %v4881
  %v4883 = vpop.f32.mrb[0].mxu0
  %v4884 = vpop.f32.mrb[0].mxu0
  %v4885 = vadd.f32 0.0, %v4884
  %v4886 = vpop.f32.mrb[0].mxu0
  %4887 = vmatprep.mubr.bf16.mxu0 0
  %4888 = vmatmul.mubr.bf16.gmra.mrb[0].mxu0 %v4684
  %v4889 = vpop.f32.mrb[0].mxu0
  %v4890 = vadd.f32 0.0, %v4889
  %v4891 = vpop.f32.mrb[0].mxu0
  %v4892 = vpop.f32.mrb[0].mxu0
  %v4893 = vadd.f32 0.0, %v4892
  %v4894 = vpop.f32.mrb[0].mxu0
  %4895 = vmatprep.mubr.bf16.mxu0 0
  %4896 = vmatmul.mubr.bf16.gmra.mrb[0].mxu0 %v4686
  %v4897 = vpop.f32.mrb[0].mxu0
  %v4898 = vadd.f32 0.0, %v4897
  %v4899 = vpop.f32.mrb[0].mxu0
  %v4900 = vpop.f32.mrb[0].mxu0
  %v4901 = vadd.f32 0.0, %v4900
  %v4902 = vpop.f32.mrb[0].mxu0
  %4903 = vmatprep.mubr.bf16.mxu0 0
  %4904 = vmatmul.mubr.bf16.gmra.mrb[0].mxu0 %v4688
  %v4905 = vpop.f32.mrb[0].mxu0
  %v4906 = vadd.f32 0.0, %v4905
  %v4907 = vpop.f32.mrb[0].mxu0
  %v4908 = vpop.f32.mrb[0].mxu0
  %v4909 = vadd.f32 0.0, %v4908
  %v4910 = vpop.f32.mrb[0].mxu0
  %4911 = vmatprep.mubr.bf16.mxu0 0
  %4912 = vmatmul.mubr.bf16.gmra.mrb[0].mxu0 %v4690
  %v4913 = vpop.f32.mrb[0].mxu0
  %v4914 = vadd.f32 0.0, %v4913
  %v4915 = vpop.f32.mrb[0].mxu0
  %v4916 = vpop.f32.mrb[0].mxu0
  %v4917 = vadd.f32 0.0, %v4916
  %v4918 = vpop.f32.mrb[0].mxu0
  %4919 = vmatprep.mubr.bf16.mxu0 0
  %4920 = vmatmul.mubr.bf16.gmra.mrb[0].mxu0 %v4692
  %v4921 = vpop.f32.mrb[0].mxu0
  %v4922 = vadd.f32 0.0, %v4921
  %v4923 = vpop.f32.mrb[0].mxu0
  %v4924 = vpop.f32.mrb[0].mxu0
  %v4925 = vadd.f32 0.0, %v4924
  %v4926 = vpop.f32.mrb[0].mxu0
  %4927 = vmatprep.mubr.bf16.mxu0 0
  %4928 = vmatmul.mubr.bf16.gmra.mrb[0].mxu0 %v4694
  %v4929 = vpop.f32.mrb[0].mxu0
  %v4930 = vadd.f32 0.0, %v4929
  %v4931 = vpop.f32.mrb[0].mxu0
  %v4932 = vpop.f32.mrb[0].mxu0
  %v4933 = vadd.f32 0.0, %v4932
  %v4934 = vpop.f32.mrb[0].mxu0
  %4935 = vmatprep.mubr.bf16.mxu0 0
  %4936 = vmatmul.mubr.bf16.gmra.mrb[0].mxu0 %v4696
  %v4937 = vpop.f32.mrb[0].mxu0
  %v4938 = vadd.f32 0.0, %v4937
  %v4939 = vpop.f32.mrb[0].mxu0
  %v4940 = vpop.f32.mrb[0].mxu0
  %v4941 = vadd.f32 0.0, %v4940
  %v4942 = vpop.f32.mrb[0].mxu0
  %4943 = vmatprep.mubr.bf16.mxu0 0
  %4944 = vmatmul.mubr.bf16.gmra.mrb[0].mxu0 %v4698
  %v4945 = vpop.f32.mrb[0].mxu0
  %v4946 = vadd.f32 0.0, %v4945
  %v4947 = vpop.f32.mrb[0].mxu0
  %v4948 = vpop.f32.mrb[0].mxu0
  %v4949 = vadd.f32 0.0, %v4948
  %v4950 = vpop.f32.mrb[0].mxu0
  %4951 = vmatprep.mubr.bf16.mxu0 0
  %4952 = vmatmul.mubr.bf16.gmra.mrb[0].mxu0 %v4700
  %v4953 = vpop.f32.mrb[0].mxu0
  %v4954 = vadd.f32 0.0, %v4953
  %v4955 = vpop.f32.mrb[0].mxu0
  %v4956 = vpop.f32.mrb[0].mxu0
  %v4957 = vadd.f32 0.0, %v4956
  %v4958 = vpop.f32.mrb[0].mxu0
  %4959 = vmatprep.mubr.bf16.mxu0 0
  %4960 = vmatmul.mubr.bf16.gmra.mrb[0].mxu0 %v4702
  %v4961 = vpop.f32.mrb[0].mxu0
  %v4962 = vadd.f32 0.0, %v4961
  %v4963 = vpop.f32.mrb[0].mxu0
  %v4964 = vpop.f32.mrb[0].mxu0
  %v4965 = vadd.f32 0.0, %v4964
  %v4966 = vpop.f32.mrb[0].mxu0
  %4967 = vmatprep.mubr.bf16.mxu0 0
  %4968 = vmatmul.mubr.bf16.gmra.mrb[0].mxu0 %v4704
  %v4969 = vpop.f32.mrb[0].mxu0
  %v4970 = vadd.f32 0.0, %v4969
  %v4971 = vpop.f32.mrb[0].mxu0
  %v4972 = vpop.f32.mrb[0].mxu0
  %v4973 = vadd.f32 0.0, %v4972
  %v4974 = vpop.f32.mrb[0].mxu0
  %4975 = vmatprep.mubr.bf16.mxu0 0
  %4976 = vmatmul.mubr.bf16.gmra.mrb[0].mxu0 %v4706
  %v4977 = vpop.f32.mrb[0].mxu0
  %v4978 = vadd.f32 0.0, %v4977
  %v4979 = vpop.f32.mrb[0].mxu0
  %v4980 = vpop.f32.mrb[0].mxu0
  %v4981 = vadd.f32 0.0, %v4980
  %v4982 = vpop.f32.mrb[0].mxu0
  %4983 = vdwg.mxu0
  %s4984 = scalar_lea.vmem [#allocation2], 480
  %4985 = vst.msk [vmem:[%s4984] sm:$0xff] %vm1861, %v4746
  %4986 = vst.msk [vmem:[%s4984 + $0x8] sm:$0xff] %vm1861, %v4749
  %4987 = vst.msk [vmem:[%s4984 + $0x10] sm:$0xff] %vm1861, %v4754
  %4988 = vst.msk [vmem:[%s4984 + $0x18] sm:$0xff] %vm1861, %v4757
  %4989 = vst.msk [vmem:[%s4984 + $0x20] sm:$0xff] %vm1861, %v4762
  %4990 = vst.msk [vmem:[%s4984 + $0x28] sm:$0xff] %vm1861, %v4765
  %4991 = vst.msk [vmem:[%s4984 + $0x30] sm:$0xff] %vm1861, %v4770
  %4992 = vst.msk [vmem:[%s4984 + $0x38] sm:$0xff] %vm1861, %v4773
  %4993 = vst.msk [vmem:[%s4984 + $0x40] sm:$0xff] %vm1861, %v4778
  %4994 = vst.msk [vmem:[%s4984 + $0x48] sm:$0xff] %vm1861, %v4781
  %4995 = vst.msk [vmem:[%s4984 + $0x50] sm:$0xff] %vm1861, %v4786
  %4996 = vst.msk [vmem:[%s4984 + $0x58] sm:$0xff] %vm1861, %v4789
  %4997 = vst.msk [vmem:[%s4984 + $0x60] sm:$0xff] %vm1861, %v4794
  %4998 = vst.msk [vmem:[%s4984 + $0x68] sm:$0xff] %vm1861, %v4797
  %4999 = vst.msk [vmem:[%s4984 + $0x70] sm:$0xff] %vm1861, %v4802
  %5000 = vst.msk [vmem:[%s4984 + $0x78] sm:$0xff] %vm1861, %v4805
  %5001 = vst.msk [vmem:[%s4984 + $0x80] sm:$0xff] %vm1861, %v4810
  %5002 = vst.msk [vmem:[%s4984 + $0x88] sm:$0xff] %vm1861, %v4813
  %5003 = vst.msk [vmem:[%s4984 + $0x90] sm:$0xff] %vm1861, %v4818
  %5004 = vst.msk [vmem:[%s4984 + $0x98] sm:$0xff] %vm1861, %v4821
  %5005 = vst.msk [vmem:[%s4984 + $0xa0] sm:$0xff] %vm1861, %v4826
  %5006 = vst.msk [vmem:[%s4984 + $0xa8] sm:$0xff] %vm1861, %v4829
  %5007 = vst.msk [vmem:[%s4984 + $0xb0] sm:$0xff] %vm1861, %v4834
  %5008 = vst.msk [vmem:[%s4984 + $0xb8] sm:$0xff] %vm1861, %v4837
  %5009 = vst.msk [vmem:[%s4984 + $0xc0] sm:$0xff] %vm1861, %v4842
  %5010 = vst.msk [vmem:[%s4984 + $0xc8] sm:$0xff] %vm1861, %v4845
  %5011 = vst.msk [vmem:[%s4984 + $0xd0] sm:$0xff] %vm1861, %v4850
  %5012 = vst.msk [vmem:[%s4984 + $0xd8] sm:$0xff] %vm1861, %v4853
  %5013 = vst.msk [vmem:[%s4984 + $0xe0] sm:$0xff] %vm1861, %v4858
  %5014 = vst.msk [vmem:[%s4984 + $0xe8] sm:$0xff] %vm1861, %v4861
  %5015 = vst.msk [vmem:[%s4984 + $0xf0] sm:$0xff] %vm1861, %v4866
  %5016 = vst.msk [vmem:[%s4984 + $0xf8] sm:$0xff] %vm1861, %v4869
  %5017 = vst.msk [vmem:[%s4984 + $0x100] sm:$0xff] %vm1861, %v4874
  %5018 = vst.msk [vmem:[%s4984 + $0x108] sm:$0xff] %vm1861, %v4877
  %5019 = vst.msk [vmem:[%s4984 + $0x110] sm:$0xff] %vm1861, %v4882
  %5020 = vst.msk [vmem:[%s4984 + $0x118] sm:$0xff] %vm1861, %v4885
  %5021 = vst.msk [vmem:[%s4984 + $0x120] sm:$0xff] %vm1861, %v4890
  %5022 = vst.msk [vmem:[%s4984 + $0x128] sm:$0xff] %vm1861, %v4893
  %5023 = vst.msk [vmem:[%s4984 + $0x130] sm:$0xff] %vm1861, %v4898
  %5024 = vst.msk [vmem:[%s4984 + $0x138] sm:$0xff] %vm1861, %v4901
  %5025 = vst.msk [vmem:[%s4984 + $0x140] sm:$0xff] %vm1861, %v4906
  %5026 = vst.msk [vmem:[%s4984 + $0x148] sm:$0xff] %vm1861, %v4909
  %5027 = vst.msk [vmem:[%s4984 + $0x150] sm:$0xff] %vm1861, %v4914
  %5028 = vst.msk [vmem:[%s4984 + $0x158] sm:$0xff] %vm1861, %v4917
  %5029 = vst.msk [vmem:[%s4984 + $0x160] sm:$0xff] %vm1861, %v4922
  %5030 = vst.msk [vmem:[%s4984 + $0x168] sm:$0xff] %vm1861, %v4925
  %5031 = vst.msk [vmem:[%s4984 + $0x170] sm:$0xff] %vm1861, %v4930
  %5032 = vst.msk [vmem:[%s4984 + $0x178] sm:$0xff] %vm1861, %v4933
  %5033 = vst.msk [vmem:[%s4984 + $0x180] sm:$0xff] %vm1861, %v4938
  %5034 = vst.msk [vmem:[%s4984 + $0x188] sm:$0xff] %vm1861, %v4941
  %5035 = vst.msk [vmem:[%s4984 + $0x190] sm:$0xff] %vm1861, %v4946
  %5036 = vst.msk [vmem:[%s4984 + $0x198] sm:$0xff] %vm1861, %v4949
  %5037 = vst.msk [vmem:[%s4984 + $0x1a0] sm:$0xff] %vm1861, %v4954
  %5038 = vst.msk [vmem:[%s4984 + $0x1a8] sm:$0xff] %vm1861, %v4957
  %5039 = vst.msk [vmem:[%s4984 + $0x1b0] sm:$0xff] %vm1861, %v4962
  %5040 = vst.msk [vmem:[%s4984 + $0x1b8] sm:$0xff] %vm1861, %v4965
  %5041 = vst.msk [vmem:[%s4984 + $0x1c0] sm:$0xff] %vm1861, %v4970
  %5042 = vst.msk [vmem:[%s4984 + $0x1c8] sm:$0xff] %vm1861, %v4973
  %5043 = vst.msk [vmem:[%s4984 + $0x1d0] sm:$0xff] %vm1861, %v4978
  %5044 = vst.msk [vmem:[%s4984 + $0x1d8] sm:$0xff] %vm1861, %v4981
  %v5045 = vld [vmem:[%s2] sm:$0xf]
  %v5046 = vmul.f32 %v4746, %v4746
  %v5047 = vmul.f32 %v4749, %v4749
  %v5048 = vmul.f32 %v4754, %v4754
  %v5049 = vmul.f32 %v4757, %v4757
  %v5050 = vmul.f32 %v4762, %v4762
  %v5051 = vmul.f32 %v4765, %v4765
  %v5052 = vmul.f32 %v4770, %v4770
  %v5053 = vmul.f32 %v4773, %v4773
  %v5054 = vmul.f32 %v4778, %v4778
  %v5055 = vmul.f32 %v4781, %v4781
  %v5056 = vmul.f32 %v4786, %v4786
  %v5057 = vmul.f32 %v4789, %v4789
  %v5058 = vmul.f32 %v4794, %v4794
  %v5059 = vmul.f32 %v4797, %v4797
  %v5060 = vmul.f32 %v4802, %v4802
  %v5061 = vmul.f32 %v4805, %v4805
  %v5062 = vmul.f32 %v4810, %v4810
  %v5063 = vmul.f32 %v4813, %v4813
  %v5064 = vmul.f32 %v4818, %v4818
  %v5065 = vmul.f32 %v4821, %v4821
  %v5066 = vmul.f32 %v4826, %v4826
  %v5067 = vmul.f32 %v4829, %v4829
  %v5068 = vmul.f32 %v4834, %v4834
  %v5069 = vmul.f32 %v4837, %v4837
  %v5070 = vmul.f32 %v4842, %v4842
  %v5071 = vmul.f32 %v4845, %v4845
  %v5072 = vmul.f32 %v4850, %v4850
  %v5073 = vmul.f32 %v4853, %v4853
  %v5074 = vmul.f32 %v4858, %v4858
  %v5075 = vmul.f32 %v4861, %v4861
  %v5076 = vmul.f32 %v4866, %v4866
  %v5077 = vmul.f32 %v4869, %v4869
  %v5078 = vmul.f32 %v4874, %v4874
  %v5079 = vmul.f32 %v4877, %v4877
  %v5080 = vmul.f32 %v4882, %v4882
  %v5081 = vmul.f32 %v4885, %v4885
  %v5082 = vmul.f32 %v4890, %v4890
  %v5083 = vmul.f32 %v4893, %v4893
  %v5084 = vmul.f32 %v4898, %v4898
  %v5085 = vmul.f32 %v4901, %v4901
  %v5086 = vmul.f32 %v4906, %v4906
  %v5087 = vmul.f32 %v4909, %v4909
  %v5088 = vmul.f32 %v4914, %v4914
  %v5089 = vmul.f32 %v4917, %v4917
  %v5090 = vmul.f32 %v4922, %v4922
  %v5091 = vmul.f32 %v4925, %v4925
  %v5092 = vmul.f32 %v4930, %v4930
  %v5093 = vmul.f32 %v4933, %v4933
  %v5094 = vmul.f32 %v4938, %v4938
  %v5095 = vmul.f32 %v4941, %v4941
  %v5096 = vmul.f32 %v4946, %v4946
  %v5097 = vmul.f32 %v4949, %v4949
  %v5098 = vmul.f32 %v4954, %v4954
  %v5099 = vmul.f32 %v4957, %v4957
  %v5100 = vmul.f32 %v4962, %v4962
  %v5101 = vmul.f32 %v4965, %v4965
  %v5102 = vmul.f32 %v4970, %v4970
  %v5103 = vmul.f32 %v4973, %v4973
  %v5104 = vmul.f32 %v4978, %v4978
  %v5105 = vmul.f32 %v4981, %v4981
  %5166 = vrot.lane.b32.xlu0 %v5046, 64
  %v5167 = vpop.permute.xlu0 %5166
  %5168 = vrot.lane.b32.xlu0 %v5047, 64
  %v5169 = vpop.permute.xlu0 %5168
  %5170 = vrot.lane.b32.xlu0 %v5048, 64
  %v5171 = vpop.permute.xlu0 %5170
  %5172 = vrot.lane.b32.xlu0 %v5049, 64
  %v5173 = vpop.permute.xlu0 %5172
  %5174 = vrot.lane.b32.xlu0 %v5050, 64
  %v5175 = vpop.permute.xlu0 %5174
  %5176 = vrot.lane.b32.xlu0 %v5051, 64
  %v5177 = vpop.permute.xlu0 %5176
  %5178 = vrot.lane.b32.xlu0 %v5052, 64
  %v5179 = vpop.permute.xlu0 %5178
  %5180 = vrot.lane.b32.xlu0 %v5053, 64
  %v5181 = vpop.permute.xlu0 %5180
  %5182 = vrot.lane.b32.xlu0 %v5054, 64
  %v5183 = vpop.permute.xlu0 %5182
  %5184 = vrot.lane.b32.xlu0 %v5055, 64
  %v5185 = vpop.permute.xlu0 %5184
  %5186 = vrot.lane.b32.xlu0 %v5056, 64
  %v5187 = vpop.permute.xlu0 %5186
  %5188 = vrot.lane.b32.xlu0 %v5057, 64
  %v5189 = vpop.permute.xlu0 %5188
  %5190 = vrot.lane.b32.xlu0 %v5058, 64
  %v5191 = vpop.permute.xlu0 %5190
  %5192 = vrot.lane.b32.xlu0 %v5059, 64
  %v5193 = vpop.permute.xlu0 %5192
  %5194 = vrot.lane.b32.xlu0 %v5060, 64
  %v5195 = vpop.permute.xlu0 %5194
  %5196 = vrot.lane.b32.xlu0 %v5061, 64
  %v5197 = vpop.permute.xlu0 %5196
  %5198 = vrot.lane.b32.xlu0 %v5062, 64
  %v5199 = vpop.permute.xlu0 %5198
  %5200 = vrot.lane.b32.xlu0 %v5063, 64
  %v5201 = vpop.permute.xlu0 %5200
  %5202 = vrot.lane.b32.xlu0 %v5064, 64
  %v5203 = vpop.permute.xlu0 %5202
  %5204 = vrot.lane.b32.xlu0 %v5065, 64
  %v5205 = vpop.permute.xlu0 %5204
  %5206 = vrot.lane.b32.xlu0 %v5066, 64
  %v5207 = vpop.permute.xlu0 %5206
  %5208 = vrot.lane.b32.xlu0 %v5067, 64
  %v5209 = vpop.permute.xlu0 %5208
  %5210 = vrot.lane.b32.xlu0 %v5068, 64
  %v5211 = vpop.permute.xlu0 %5210
  %5212 = vrot.lane.b32.xlu0 %v5069, 64
  %v5213 = vpop.permute.xlu0 %5212
  %5214 = vrot.lane.b32.xlu0 %v5070, 64
  %v5215 = vpop.permute.xlu0 %5214
  %5216 = vrot.lane.b32.xlu0 %v5071, 64
  %v5217 = vpop.permute.xlu0 %5216
  %5218 = vrot.lane.b32.xlu0 %v5072, 64
  %v5219 = vpop.permute.xlu0 %5218
  %5220 = vrot.lane.b32.xlu0 %v5073, 64
  %v5221 = vpop.permute.xlu0 %5220
  %5222 = vrot.lane.b32.xlu0 %v5074, 64
  %v5223 = vpop.permute.xlu0 %5222
  %5224 = vrot.lane.b32.xlu0 %v5075, 64
  %v5225 = vpop.permute.xlu0 %5224
  %5226 = vrot.lane.b32.xlu0 %v5076, 64
  %v5227 = vpop.permute.xlu0 %5226
  %5228 = vrot.lane.b32.xlu0 %v5077, 64
  %v5229 = vpop.permute.xlu0 %5228
  %5230 = vrot.lane.b32.xlu0 %v5078, 64
  %v5231 = vpop.permute.xlu0 %5230
  %5232 = vrot.lane.b32.xlu0 %v5079, 64
  %v5233 = vpop.permute.xlu0 %5232
  %5234 = vrot.lane.b32.xlu0 %v5080, 64
  %v5235 = vpop.permute.xlu0 %5234
  %5236 = vrot.lane.b32.xlu0 %v5081, 64
  %v5237 = vpop.permute.xlu0 %5236
  %5238 = vrot.lane.b32.xlu0 %v5082, 64
  %v5239 = vpop.permute.xlu0 %5238
  %5240 = vrot.lane.b32.xlu0 %v5083, 64
  %v5241 = vpop.permute.xlu0 %5240
  %5242 = vrot.lane.b32.xlu0 %v5084, 64
  %v5243 = vpop.permute.xlu0 %5242
  %5244 = vrot.lane.b32.xlu0 %v5085, 64
  %v5245 = vpop.permute.xlu0 %5244
  %5246 = vrot.lane.b32.xlu0 %v5086, 64
  %v5247 = vpop.permute.xlu0 %5246
  %5248 = vrot.lane.b32.xlu0 %v5087, 64
  %v5249 = vpop.permute.xlu0 %5248
  %5250 = vrot.lane.b32.xlu0 %v5088, 64
  %v5251 = vpop.permute.xlu0 %5250
  %5252 = vrot.lane.b32.xlu0 %v5089, 64
  %v5253 = vpop.permute.xlu0 %5252
  %5254 = vrot.lane.b32.xlu0 %v5090, 64
  %v5255 = vpop.permute.xlu0 %5254
  %5256 = vrot.lane.b32.xlu0 %v5091, 64
  %v5257 = vpop.permute.xlu0 %5256
  %5258 = vrot.lane.b32.xlu0 %v5092, 64
  %v5259 = vpop.permute.xlu0 %5258
  %5260 = vrot.lane.b32.xlu0 %v5093, 64
  %v5261 = vpop.permute.xlu0 %5260
  %5262 = vrot.lane.b32.xlu0 %v5094, 64
  %v5263 = vpop.permute.xlu0 %5262
  %5264 = vrot.lane.b32.xlu0 %v5095, 64
  %v5265 = vpop.permute.xlu0 %5264
  %5266 = vrot.lane.b32.xlu0 %v5096, 64
  %v5267 = vpop.permute.xlu0 %5266
  %5268 = vrot.lane.b32.xlu0 %v5097, 64
  %v5269 = vpop.permute.xlu0 %5268
  %5270 = vrot.lane.b32.xlu0 %v5098, 64
  %v5271 = vpop.permute.xlu0 %5270
  %5272 = vrot.lane.b32.xlu0 %v5099, 64
  %v5273 = vpop.permute.xlu0 %5272
  %5274 = vrot.lane.b32.xlu0 %v5100, 64
  %v5275 = vpop.permute.xlu0 %5274
  %5276 = vrot.lane.b32.xlu0 %v5101, 64
  %v5277 = vpop.permute.xlu0 %5276
  %5278 = vrot.lane.b32.xlu0 %v5102, 64
  %v5279 = vpop.permute.xlu0 %5278
  %5280 = vrot.lane.b32.xlu0 %v5103, 64
  %v5281 = vpop.permute.xlu0 %5280
  %5282 = vrot.lane.b32.xlu0 %v5104, 64
  %v5283 = vpop.permute.xlu0 %5282
  %5284 = vrot.lane.b32.xlu0 %v5105, 64
  %v5285 = vpop.permute.xlu0 %5284
  %v5346 = vsel %vm1861, %v4746, %v5167
  %v5347 = vsel %vm1861, %v4749, %v5169
  %v5348 = vsel %vm1861, %v4754, %v5171
  %v5349 = vsel %vm1861, %v4757, %v5173
  %v5350 = vsel %vm1861, %v4762, %v5175
  %v5351 = vsel %vm1861, %v4765, %v5177
  %v5352 = vsel %vm1861, %v4770, %v5179
  %v5353 = vsel %vm1861, %v4773, %v5181
  %v5354 = vsel %vm1861, %v4778, %v5183
  %v5355 = vsel %vm1861, %v4781, %v5185
  %v5356 = vsel %vm1861, %v4786, %v5187
  %v5357 = vsel %vm1861, %v4789, %v5189
  %v5358 = vsel %vm1861, %v4794, %v5191
  %v5359 = vsel %vm1861, %v4797, %v5193
  %v5360 = vsel %vm1861, %v4802, %v5195
  %v5361 = vsel %vm1861, %v4805, %v5197
  %v5362 = vsel %vm1861, %v4810, %v5199
  %v5363 = vsel %vm1861, %v4813, %v5201
  %v5364 = vsel %vm1861, %v4818, %v5203
  %v5365 = vsel %vm1861, %v4821, %v5205
  %v5366 = vsel %vm1861, %v4826, %v5207
  %v5367 = vsel %vm1861, %v4829, %v5209
  %v5368 = vsel %vm1861, %v4834, %v5211
  %v5369 = vsel %vm1861, %v4837, %v5213
  %v5370 = vsel %vm1861, %v4842, %v5215
  %v5371 = vsel %vm1861, %v4845, %v5217
  %v5372 = vsel %vm1861, %v4850, %v5219
  %v5373 = vsel %vm1861, %v4853, %v5221
  %v5374 = vsel %vm1861, %v4858, %v5223
  %v5375 = vsel %vm1861, %v4861, %v5225
  %v5376 = vsel %vm1861, %v4866, %v5227
  %v5377 = vsel %vm1861, %v4869, %v5229
  %v5378 = vsel %vm1861, %v4874, %v5231
  %v5379 = vsel %vm1861, %v4877, %v5233
  %v5380 = vsel %vm1861, %v4882, %v5235
  %v5381 = vsel %vm1861, %v4885, %v5237
  %v5382 = vsel %vm1861, %v4890, %v5239
  %v5383 = vsel %vm1861, %v4893, %v5241
  %v5384 = vsel %vm1861, %v4898, %v5243
  %v5385 = vsel %vm1861, %v4901, %v5245
  %v5386 = vsel %vm1861, %v4906, %v5247
  %v5387 = vsel %vm1861, %v4909, %v5249
  %v5388 = vsel %vm1861, %v4914, %v5251
  %v5389 = vsel %vm1861, %v4917, %v5253
  %v5390 = vsel %vm1861, %v4922, %v5255
  %v5391 = vsel %vm1861, %v4925, %v5257
  %v5392 = vsel %vm1861, %v4930, %v5259
  %v5393 = vsel %vm1861, %v4933, %v5261
  %v5394 = vsel %vm1861, %v4938, %v5263
  %v5395 = vsel %vm1861, %v4941, %v5265
  %v5396 = vsel %vm1861, %v4946, %v5267
  %v5397 = vsel %vm1861, %v4949, %v5269
  %v5398 = vsel %vm1861, %v4954, %v5271
  %v5399 = vsel %vm1861, %v4957, %v5273
  %v5400 = vsel %vm1861, %v4962, %v5275
  %v5401 = vsel %vm1861, %v4965, %v5277
  %v5402 = vsel %vm1861, %v4970, %v5279
  %v5403 = vsel %vm1861, %v4973, %v5281
  %v5404 = vsel %vm1861, %v4978, %v5283
  %v5405 = vsel %vm1861, %v4981, %v5285
  %v5407 = vlaneseq
  %v5408 = vshrl.u32 %v5407, 7
  %v5409 = vsub.s32 0, %v5408
  %v5410 = vrot.slane %v5045, %v5409
  %v5411 = vlaneseq
  %v5412 = vshrl.u32 %v5411, 7
  %v5413 = vsub.s32 1, %v5412
  %v5414 = vrot.slane %v5045, %v5413
  %v5415 = vlaneseq
  %v5416 = vshrl.u32 %v5415, 7
  %v5417 = vsub.s32 2, %v5416
  %v5418 = vrot.slane %v5045, %v5417
  %v5419 = vlaneseq
  %v5420 = vshrl.u32 %v5419, 7
  %v5421 = vsub.s32 3, %v5420
  %v5422 = vrot.slane %v5045, %v5421
  %vm5426 = vcmask 785408
  %v5427 = vsel %vm5426, %v5422, 0
  %5429 = vmatprep.subr.mxu0 0.0
  %5430 = vmatpush1.msra.mxu0 %v5346
  %5431 = vmatprep.subr.mxu0 0.0
  %5432 = vmatpush1.msra.mxu0 %v5347
  %5433 = vmatprep.subr.mxu0 0.0
  %5434 = vmatpush1.msra.mxu0 %v5348
  %5435 = vmatprep.subr.mxu0 0.0
  %5436 = vmatpush1.msra.mxu0 %v5349
  %5437 = vmatprep.subr.mxu0 0.0
  %5438 = vmatpush1.msra.mxu0 %v5350
  %5439 = vmatprep.subr.mxu0 0.0
  %5440 = vmatpush1.msra.mxu0 %v5351
  %5441 = vmatprep.subr.mxu0 0.0
  %5442 = vmatpush1.msra.mxu0 %v5352
  %5443 = vmatprep.subr.mxu0 0.0
  %5444 = vmatpush1.msra.mxu0 %v5353
  %5445 = vmatprep.subr.mxu0 0.0
  %5446 = vmatpush1.msra.mxu0 %v5354
  %5447 = vmatprep.subr.mxu0 0.0
  %5448 = vmatpush1.msra.mxu0 %v5355
  %5449 = vmatprep.subr.mxu0 0.0
  %5450 = vmatpush1.msra.mxu0 %v5356
  %5451 = vmatprep.subr.mxu0 0.0
  %5452 = vmatpush1.msra.mxu0 %v5357
  %5453 = vmatprep.subr.mxu0 0.0
  %5454 = vmatpush1.msra.mxu0 %v5358
  %5455 = vmatprep.subr.mxu0 0.0
  %5456 = vmatpush1.msra.mxu0 %v5359
  %5457 = vmatprep.subr.mxu0 0.0
  %5458 = vmatpush1.msra.mxu0 %v5360
  %5459 = vmatprep.subr.mxu0 0.0
  %5460 = vmatpush1.msra.mxu0 %v5361
  %5461 = vmatprep.subr.mxu0 0.0
  %5462 = vmatpush1.msra.mxu0 %v5362
  %5463 = vmatprep.subr.mxu0 0.0
  %5464 = vmatpush1.msra.mxu0 %v5363
  %5465 = vmatprep.subr.mxu0 0.0
  %5466 = vmatpush1.msra.mxu0 %v5364
  %5467 = vmatprep.subr.mxu0 0.0
  %5468 = vmatpush1.msra.mxu0 %v5365
  %5469 = vmatprep.subr.mxu0 0.0
  %5470 = vmatpush1.msra.mxu0 %v5366
  %5471 = vmatprep.subr.mxu0 0.0
  %5472 = vmatpush1.msra.mxu0 %v5367
  %5473 = vmatprep.subr.mxu0 0.0
  %5474 = vmatpush1.msra.mxu0 %v5368
  %5475 = vmatprep.subr.mxu0 0.0
  %5476 = vmatpush1.msra.mxu0 %v5369
  %5477 = vmatprep.subr.mxu0 0.0
  %5478 = vmatpush1.msra.mxu0 %v5370
  %5479 = vmatprep.subr.mxu0 0.0
  %5480 = vmatpush1.msra.mxu0 %v5371
  %5481 = vmatprep.subr.mxu0 0.0
  %5482 = vmatpush1.msra.mxu0 %v5372
  %5483 = vmatprep.subr.mxu0 0.0
  %5484 = vmatpush1.msra.mxu0 %v5373
  %5485 = vmatprep.subr.mxu0 0.0
  %5486 = vmatpush1.msra.mxu0 %v5374
  %5487 = vmatprep.subr.mxu0 0.0
  %5488 = vmatpush1.msra.mxu0 %v5375
  %5489 = vmatprep.subr.mxu0 0.0
  %5490 = vmatpush1.msra.mxu0 %v5376
  %5491 = vmatprep.subr.mxu0 0.0
  %5492 = vmatpush1.msra.mxu0 %v5377
  %5493 = vmatprep.mubr.f32.mxu0 %v5414
  %5494 = vmatmul.mubr.f32.gmra.mrb[0].mxu0 %v5410
  %v5495 = vpop.f32.mrb[0].mxu0
  %v5496 = vadd.f32 0.0, %v5495
  %v5497 = vpop.f32.mrb[0].mxu0
  %5498 = vdwg.mxu0
  %5499 = vmatprep.subr.mxu0 0.0
  %5500 = vmatpush1.msra.mxu0 %v5378
  %5501 = vmatprep.subr.mxu0 0.0
  %5502 = vmatpush1.msra.mxu0 %v5379
  %5503 = vmatprep.subr.mxu0 0.0
  %5504 = vmatpush1.msra.mxu0 %v5380
  %5505 = vmatprep.subr.mxu0 0.0
  %5506 = vmatpush1.msra.mxu0 %v5381
  %5507 = vmatprep.subr.mxu0 0.0
  %5508 = vmatpush1.msra.mxu0 %v5382
  %5509 = vmatprep.subr.mxu0 0.0
  %5510 = vmatpush1.msra.mxu0 %v5383
  %5511 = vmatprep.subr.mxu0 0.0
  %5512 = vmatpush1.msra.mxu0 %v5384
  %5513 = vmatprep.subr.mxu0 0.0
  %5514 = vmatpush1.msra.mxu0 %v5385
  %5515 = vmatprep.subr.mxu0 0.0
  %5516 = vmatpush1.msra.mxu0 %v5386
  %5517 = vmatprep.subr.mxu0 0.0
  %5518 = vmatpush1.msra.mxu0 %v5387
  %5519 = vmatprep.subr.mxu0 0.0
  %5520 = vmatpush1.msra.mxu0 %v5388
  %5521 = vmatprep.subr.mxu0 0.0
  %5522 = vmatpush1.msra.mxu0 %v5389
  %5523 = vmatprep.subr.mxu0 0.0
  %5524 = vmatpush1.msra.mxu0 %v5390
  %5525 = vmatprep.subr.mxu0 0.0
  %5526 = vmatpush1.msra.mxu0 %v5391
  %5527 = vmatprep.subr.mxu0 0.0
  %5528 = vmatpush1.msra.mxu0 %v5392
  %5529 = vmatprep.subr.mxu0 0.0
  %5530 = vmatpush1.msra.mxu0 %v5393
  %5531 = vmatprep.subr.mxu0 0.0
  %5532 = vmatpush1.msra.mxu0 %v5394
  %5533 = vmatprep.subr.mxu0 0.0
  %5534 = vmatpush1.msra.mxu0 %v5395
  %5535 = vmatprep.subr.mxu0 0.0
  %5536 = vmatpush1.msra.mxu0 %v5396
  %5537 = vmatprep.subr.mxu0 0.0
  %5538 = vmatpush1.msra.mxu0 %v5397
  %5539 = vmatprep.subr.mxu0 0.0
  %5540 = vmatpush1.msra.mxu0 %v5398
  %5541 = vmatprep.subr.mxu0 0.0
  %5542 = vmatpush1.msra.mxu0 %v5399
  %5543 = vmatprep.subr.mxu0 0.0
  %5544 = vmatpush1.msra.mxu0 %v5400
  %5545 = vmatprep.subr.mxu0 0.0
  %5546 = vmatpush1.msra.mxu0 %v5401
  %5547 = vmatprep.subr.mxu0 0.0
  %5548 = vmatpush1.msra.mxu0 %v5402
  %5549 = vmatprep.subr.mxu0 0.0
  %5550 = vmatpush1.msra.mxu0 %v5403
  %5551 = vmatprep.subr.mxu0 0.0
  %5552 = vmatpush1.msra.mxu0 %v5404
  %5553 = vmatprep.subr.mxu0 0.0
  %5554 = vmatpush1.msra.mxu0 %v5405
  %5555 = vmatprep.subr.mxu0 0.0
  %5556 = vmatpush1.msra.mxu0 0.0
  %5557 = vmatprep.subr.mxu0 0.0
  %5558 = vmatpush1.msra.mxu0 0.0
  %5559 = vmatprep.subr.mxu0 0.0
  %5560 = vmatpush1.msra.mxu0 0.0
  %5561 = vmatprep.subr.mxu0 0.0
  %5562 = vmatpush1.msra.mxu0 0.0
  %5563 = vmatprep.mubr.f32.mxu0 %v5427
  %5564 = vmatmul.mubr.f32.gmra.mrb[0].mxu0 %v5418
  %v5565 = vpop.f32.mrb[0].mxu0
  %v5566 = vadd.f32 %v5496, %v5565
  %v5567 = vpop.f32.mrb[0].mxu0
  %5568 = vdwg.mxu0
  %v5570 = vlaneseq
  %v5571 = vshrl.u32 %v5570, 7
  %v5572 = vsub.s32 0, %v5571
  %v5573 = vrot.slane %v2356, %v5572
  %v5574 = vlaneseq
  %v5575 = vshrl.u32 %v5574, 7
  %v5576 = vsub.s32 1, %v5575
  %v5577 = vrot.slane %v2356, %v5576
  %v5578 = vlaneseq
  %v5579 = vshrl.u32 %v5578, 7
  %v5580 = vsub.s32 2, %v5579
  %v5581 = vrot.slane %v2356, %v5580
  %v5582 = vlaneseq
  %v5583 = vshrl.u32 %v5582, 7
  %v5584 = vsub.s32 3, %v5583
  %v5585 = vrot.slane %v2356, %v5584
  %v5589 = vsel %vm5426, %v5585, 0
  %5591 = vmatprep.subr.mxu0 0.0
  %5592 = vmatpush1.msra.mxu0 %v2657
  %5593 = vmatprep.subr.mxu0 0.0
  %5594 = vmatpush1.msra.mxu0 %v2658
  %5595 = vmatprep.subr.mxu0 0.0
  %5596 = vmatpush1.msra.mxu0 %v2659
  %5597 = vmatprep.subr.mxu0 0.0
  %5598 = vmatpush1.msra.mxu0 %v2660
  %5599 = vmatprep.subr.mxu0 0.0
  %5600 = vmatpush1.msra.mxu0 %v2661
  %5601 = vmatprep.subr.mxu0 0.0
  %5602 = vmatpush1.msra.mxu0 %v2662
  %5603 = vmatprep.subr.mxu0 0.0
  %5604 = vmatpush1.msra.mxu0 %v2663
  %5605 = vmatprep.subr.mxu0 0.0
  %5606 = vmatpush1.msra.mxu0 %v2664
  %5607 = vmatprep.subr.mxu0 0.0
  %5608 = vmatpush1.msra.mxu0 %v2665
  %5609 = vmatprep.subr.mxu0 0.0
  %5610 = vmatpush1.msra.mxu0 %v2666
  %5611 = vmatprep.subr.mxu0 0.0
  %5612 = vmatpush1.msra.mxu0 %v2667
  %5613 = vmatprep.subr.mxu0 0.0
  %5614 = vmatpush1.msra.mxu0 %v2668
  %5615 = vmatprep.subr.mxu0 0.0
  %5616 = vmatpush1.msra.mxu0 %v2669
  %5617 = vmatprep.subr.mxu0 0.0
  %5618 = vmatpush1.msra.mxu0 %v2670
  %5619 = vmatprep.subr.mxu0 0.0
  %5620 = vmatpush1.msra.mxu0 %v2671
  %5621 = vmatprep.subr.mxu0 0.0
  %5622 = vmatpush1.msra.mxu0 %v2672
  %5623 = vmatprep.subr.mxu0 0.0
  %5624 = vmatpush1.msra.mxu0 %v2673
  %5625 = vmatprep.subr.mxu0 0.0
  %5626 = vmatpush1.msra.mxu0 %v2674
  %5627 = vmatprep.subr.mxu0 0.0
  %5628 = vmatpush1.msra.mxu0 %v2675
  %5629 = vmatprep.subr.mxu0 0.0
  %5630 = vmatpush1.msra.mxu0 %v2676
  %5631 = vmatprep.subr.mxu0 0.0
  %5632 = vmatpush1.msra.mxu0 %v2677
  %5633 = vmatprep.subr.mxu0 0.0
  %5634 = vmatpush1.msra.mxu0 %v2678
  %5635 = vmatprep.subr.mxu0 0.0
  %5636 = vmatpush1.msra.mxu0 %v2679
  %5637 = vmatprep.subr.mxu0 0.0
  %5638 = vmatpush1.msra.mxu0 %v2680
  %5639 = vmatprep.subr.mxu0 0.0
  %5640 = vmatpush1.msra.mxu0 %v2681
  %5641 = vmatprep.subr.mxu0 0.0
  %5642 = vmatpush1.msra.mxu0 %v2682
  %5643 = vmatprep.subr.mxu0 0.0
  %5644 = vmatpush1.msra.mxu0 %v2683
  %5645 = vmatprep.subr.mxu0 0.0
  %5646 = vmatpush1.msra.mxu0 %v2684
  %5647 = vmatprep.subr.mxu0 0.0
  %5648 = vmatpush1.msra.mxu0 %v2685
  %5649 = vmatprep.subr.mxu0 0.0
  %5650 = vmatpush1.msra.mxu0 %v2686
  %5651 = vmatprep.subr.mxu0 0.0
  %5652 = vmatpush1.msra.mxu0 %v2687
  %5653 = vmatprep.subr.mxu0 0.0
  %5654 = vmatpush1.msra.mxu0 %v2688
  %5655 = vmatprep.mubr.f32.mxu0 %v5577
  %5656 = vmatmul.mubr.f32.gmra.mrb[0].mxu0 %v5573
  %v5657 = vpop.f32.mrb[0].mxu0
  %v5658 = vadd.f32 %v5566, %v5657
  %v5659 = vpop.f32.mrb[0].mxu0
  %5660 = vdwg.mxu0
  %5661 = vmatprep.subr.mxu0 0.0
  %5662 = vmatpush1.msra.mxu0 %v2689
  %5663 = vmatprep.subr.mxu0 0.0
  %5664 = vmatpush1.msra.mxu0 %v2690
  %5665 = vmatprep.subr.mxu0 0.0
  %5666 = vmatpush1.msra.mxu0 %v2691
  %5667 = vmatprep.subr.mxu0 0.0
  %5668 = vmatpush1.msra.mxu0 %v2692
  %5669 = vmatprep.subr.mxu0 0.0
  %5670 = vmatpush1.msra.mxu0 %v2693
  %5671 = vmatprep.subr.mxu0 0.0
  %5672 = vmatpush1.msra.mxu0 %v2694
  %5673 = vmatprep.subr.mxu0 0.0
  %5674 = vmatpush1.msra.mxu0 %v2695
  %5675 = vmatprep.subr.mxu0 0.0
  %5676 = vmatpush1.msra.mxu0 %v2696
  %5677 = vmatprep.subr.mxu0 0.0
  %5678 = vmatpush1.msra.mxu0 %v2697
  %5679 = vmatprep.subr.mxu0 0.0
  %5680 = vmatpush1.msra.mxu0 %v2698
  %5681 = vmatprep.subr.mxu0 0.0
  %5682 = vmatpush1.msra.mxu0 %v2699
  %5683 = vmatprep.subr.mxu0 0.0
  %5684 = vmatpush1.msra.mxu0 %v2700
  %5685 = vmatprep.subr.mxu0 0.0
  %5686 = vmatpush1.msra.mxu0 %v2701
  %5687 = vmatprep.subr.mxu0 0.0
  %5688 = vmatpush1.msra.mxu0 %v2702
  %5689 = vmatprep.subr.mxu0 0.0
  %5690 = vmatpush1.msra.mxu0 %v2703
  %5691 = vmatprep.subr.mxu0 0.0
  %5692 = vmatpush1.msra.mxu0 %v2704
  %5693 = vmatprep.subr.mxu0 0.0
  %5694 = vmatpush1.msra.mxu0 %v2705
  %5695 = vmatprep.subr.mxu0 0.0
  %5696 = vmatpush1.msra.mxu0 %v2706
  %5697 = vmatprep.subr.mxu0 0.0
  %5698 = vmatpush1.msra.mxu0 %v2707
  %5699 = vmatprep.subr.mxu0 0.0
  %5700 = vmatpush1.msra.mxu0 %v2708
  %5701 = vmatprep.subr.mxu0 0.0
  %5702 = vmatpush1.msra.mxu0 %v2709
  %5703 = vmatprep.subr.mxu0 0.0
  %5704 = vmatpush1.msra.mxu0 %v2710
  %5705 = vmatprep.subr.mxu0 0.0
  %5706 = vmatpush1.msra.mxu0 %v2711
  %5707 = vmatprep.subr.mxu0 0.0
  %5708 = vmatpush1.msra.mxu0 %v2712
  %5709 = vmatprep.subr.mxu0 0.0
  %5710 = vmatpush1.msra.mxu0 %v2713
  %5711 = vmatprep.subr.mxu0 0.0
  %5712 = vmatpush1.msra.mxu0 %v2714
  %5713 = vmatprep.subr.mxu0 0.0
  %5714 = vmatpush1.msra.mxu0 %v2715
  %5715 = vmatprep.subr.mxu0 0.0
  %5716 = vmatpush1.msra.mxu0 %v2716
  %5717 = vmatprep.subr.mxu0 0.0
  %5718 = vmatpush1.msra.mxu0 0.0
  %5719 = vmatprep.subr.mxu0 0.0
  %5720 = vmatpush1.msra.mxu0 0.0
  %5721 = vmatprep.subr.mxu0 0.0
  %5722 = vmatpush1.msra.mxu0 0.0
  %5723 = vmatprep.subr.mxu0 0.0
  %5724 = vmatpush1.msra.mxu0 0.0
  %5725 = vmatprep.mubr.f32.mxu0 %v5589
  %5726 = vmatmul.mubr.f32.gmra.mrb[0].mxu0 %v5581
  %v5727 = vpop.f32.mrb[0].mxu0
  %v5728 = vadd.f32 %v5658, %v5727
  %v5729 = vpop.f32.mrb[0].mxu0
  %5730 = vdwg.mxu0
  %v5731 = vmul.f32 %v5728, 0.00125
  %v5732 = vmul.f32 %v5731, %v5731
  %5734 = vrot.lane.b32.xlu0 %v5732, 64
  %v5735 = vpop.permute.xlu0 %5734
  %v5737 = vsub.f32 %v5731, %v5735
  %v5738 = vmax.f32 %v5737, 0.0
  %v5739 = vld [vmem:[%s3] sm:$0x1]
  %v5740 = vadd.f32 %v5738, 1e-05
  %v5741 = vrsqrt.pop %v5740
  %5743 = vrot.lane.b32.xlu0 %v5741, 64
  %v5744 = vpop.permute.xlu0 %5743
  %v5746 = vmul.f32 %v5739, %v5744
  %v5747 = vld [vmem:[%s3 + $0x1] sm:$0x1]
  %v5748 = vmul.f32 %v5731, %v5746
  %v5749 = vsub.f32 %v5747, %v5748
  %v5750 = vlaneseq
  %v5751 = vshrl.u32 %v5750, 7
  %v5752 = vsub.s32 0, %v5751
  %v5753 = vrot.slane %v5746, %v5752
  %v5754 = vlaneseq
  %v5755 = vshrl.u32 %v5754, 7
  %v5756 = vsub.s32 0, %v5755
  %v5757 = vrot.slane %v5749, %v5756
  %v5758 = vld [vmem:[#allocation2] sm:$0xff]
  %v5759 = vld [vmem:[#allocation2 + $0x8] sm:$0xff]
  %v5760 = vld [vmem:[#allocation2 + $0x10] sm:$0xff]
  %v5761 = vld [vmem:[#allocation2 + $0x18] sm:$0xff]
  %v5762 = vld [vmem:[#allocation2 + $0x20] sm:$0xff]
  %v5763 = vld [vmem:[#allocation2 + $0x28] sm:$0xff]
  %v5764 = vmul.f32 %v5758, %v5753
  %v5765 = vmul.f32 %v5759, %v5753
  %v5766 = vmul.f32 %v5760, %v5753
  %v5767 = vadd.f32 %v5764, %v5757
  %v5768 = vadd.f32 %v5765, %v5757
  %v5769 = vadd.f32 %v5766, %v5757
  %v5770 = vmul.f32 %v5761, %v5753
  %v5771 = vmul.f32 %v5762, %v5753
  %v5772 = vmul.f32 %v5763, %v5753
  %v5773 = vadd.f32 %v5770, %v5757
  %v5774 = vadd.f32 %v5771, %v5757
  %v5775 = vadd.f32 %v5772, %v5757
  %v5776 = vmax.f32 %v5767, %v5773
  %v5777 = vmax.f32 %v5768, %v5774
  %v5778 = vmax.f32 %v5769, %v5775
  %v5779 = vmax.f32 %v5776, 0.0
  %v5780 = vmax.f32 %v5777, 0.0
  %v5781 = vmax.f32 %v5778, 0.0
  %5782 = vst.msk [vmem:[#allocation3] sm:$0xff] %vm1861, %v5779
  %5783 = vst.msk [vmem:[#allocation3 + $0x8] sm:$0xff] %vm1861, %v5780
  %5784 = vst.msk [vmem:[#allocation3 + $0x10] sm:$0xff] %vm1861, %v5781
  %v5785 = vld [vmem:[#allocation2 + $0x30] sm:$0xff]
  %v5786 = vld [vmem:[#allocation2 + $0x38] sm:$0xff]
  %v5787 = vld [vmem:[#allocation2 + $0x40] sm:$0xff]
  %v5788 = vld [vmem:[#allocation2 + $0x48] sm:$0xff]
  %v5789 = vld [vmem:[#allocation2 + $0x50] sm:$0xff]
  %v5790 = vld [vmem:[#allocation2 + $0x58] sm:$0xff]
  %v5791 = vmul.f32 %v5785, %v5753
  %v5792 = vmul.f32 %v5786, %v5753
  %v5793 = vmul.f32 %v5787, %v5753
  %v5794 = vadd.f32 %v5791, %v5757
  %v5795 = vadd.f32 %v5792, %v5757
  %v5796 = vadd.f32 %v5793, %v5757
  %v5797 = vmul.f32 %v5788, %v5753
  %v5798 = vmul.f32 %v5789, %v5753
  %v5799 = vmul.f32 %v5790, %v5753
  %v5800 = vadd.f32 %v5797, %v5757
  %v5801 = vadd.f32 %v5798, %v5757
  %v5802 = vadd.f32 %v5799, %v5757
  %v5803 = vmax.f32 %v5794, %v5800
  %v5804 = vmax.f32 %v5795, %v5801
  %v5805 = vmax.f32 %v5796, %v5802
  %v5806 = vmax.f32 %v5803, 0.0
  %v5807 = vmax.f32 %v5804, 0.0
  %v5808 = vmax.f32 %v5805, 0.0
  %s5809 = scalar_lea.vmem [#allocation3], 24
  %5810 = vst.msk [vmem:[%s5809] sm:$0xff] %vm1861, %v5806
  %5811 = vst.msk [vmem:[%s5809 + $0x8] sm:$0xff] %vm1861, %v5807
  %5812 = vst.msk [vmem:[%s5809 + $0x10] sm:$0xff] %vm1861, %v5808
  %v5813 = vld [vmem:[#allocation2 + $0x60] sm:$0xff]
  %v5814 = vld [vmem:[#allocation2 + $0x68] sm:$0xff]
  %v5815 = vld [vmem:[#allocation2 + $0x70] sm:$0xff]
  %v5816 = vld [vmem:[#allocation2 + $0x78] sm:$0xff]
  %v5817 = vld [vmem:[#allocation2 + $0x80] sm:$0xff]
  %v5818 = vld [vmem:[#allocation2 + $0x88] sm:$0xff]
  %v5819 = vmul.f32 %v5813, %v5753
  %v5820 = vmul.f32 %v5814, %v5753
  %v5821 = vmul.f32 %v5815, %v5753
  %v5822 = vadd.f32 %v5819, %v5757
  %v5823 = vadd.f32 %v5820, %v5757
  %v5824 = vadd.f32 %v5821, %v5757
  %v5825 = vmul.f32 %v5816, %v5753
  %v5826 = vmul.f32 %v5817, %v5753
  %v5827 = vmul.f32 %v5818, %v5753
  %v5828 = vadd.f32 %v5825, %v5757
  %v5829 = vadd.f32 %v5826, %v5757
  %v5830 = vadd.f32 %v5827, %v5757
  %v5831 = vmax.f32 %v5822, %v5828
  %v5832 = vmax.f32 %v5823, %v5829
  %v5833 = vmax.f32 %v5824, %v5830
  %v5834 = vmax.f32 %v5831, 0.0
  %v5835 = vmax.f32 %v5832, 0.0
  %v5836 = vmax.f32 %v5833, 0.0
  %s5837 = scalar_lea.vmem [#allocation3], 48
  %5838 = vst.msk [vmem:[%s5837] sm:$0xff] %vm1861, %v5834
  %5839 = vst.msk [vmem:[%s5837 + $0x8] sm:$0xff] %vm1861, %v5835
  %5840 = vst.msk [vmem:[%s5837 + $0x10] sm:$0xff] %vm1861, %v5836
  %v5841 = vld [vmem:[#allocation2 + $0x90] sm:$0xff]
  %v5842 = vld [vmem:[#allocation2 + $0x98] sm:$0xff]
  %v5843 = vld [vmem:[#allocation2 + $0xa0] sm:$0xff]
  %v5844 = vld [vmem:[#allocation2 + $0xa8] sm:$0xff]
  %v5845 = vld [vmem:[#allocation2 + $0xb0] sm:$0xff]
  %v5846 = vld [vmem:[#allocation2 + $0xb8] sm:$0xff]
  %v5847 = vmul.f32 %v5841, %v5753
  %v5848 = vmul.f32 %v5842, %v5753
  %v5849 = vmul.f32 %v5843, %v5753
  %v5850 = vadd.f32 %v5847, %v5757
  %v5851 = vadd.f32 %v5848, %v5757
  %v5852 = vadd.f32 %v5849, %v5757
  %v5853 = vmul.f32 %v5844, %v5753
  %v5854 = vmul.f32 %v5845, %v5753
  %v5855 = vmul.f32 %v5846, %v5753
  %v5856 = vadd.f32 %v5853, %v5757
  %v5857 = vadd.f32 %v5854, %v5757
  %v5858 = vadd.f32 %v5855, %v5757
  %v5859 = vmax.f32 %v5850, %v5856
  %v5860 = vmax.f32 %v5851, %v5857
  %v5861 = vmax.f32 %v5852, %v5858
  %v5862 = vmax.f32 %v5859, 0.0
  %v5863 = vmax.f32 %v5860, 0.0
  %v5864 = vmax.f32 %v5861, 0.0
  %s5865 = scalar_lea.vmem [#allocation3], 72
  %5866 = vst.msk [vmem:[%s5865] sm:$0xff] %vm1861, %v5862
  %5867 = vst.msk [vmem:[%s5865 + $0x8] sm:$0xff] %vm1861, %v5863
  %5868 = vst.msk [vmem:[%s5865 + $0x10] sm:$0xff] %vm1861, %v5864
  %v5869 = vld [vmem:[#allocation2 + $0xc0] sm:$0xff]
  %v5870 = vld [vmem:[#allocation2 + $0xc8] sm:$0xff]
  %v5871 = vld [vmem:[#allocation2 + $0xd0] sm:$0xff]
  %v5872 = vld [vmem:[#allocation2 + $0xd8] sm:$0xff]
  %v5873 = vld [vmem:[#allocation2 + $0xe0] sm:$0xff]
  %v5874 = vld [vmem:[#allocation2 + $0xe8] sm:$0xff]
  %v5875 = vmul.f32 %v5869, %v5753
  %v5876 = vmul.f32 %v5870, %v5753
  %v5877 = vmul.f32 %v5871, %v5753
  %v5878 = vadd.f32 %v5875, %v5757
  %v5879 = vadd.f32 %v5876, %v5757
  %v5880 = vadd.f32 %v5877, %v5757
  %v5881 = vmul.f32 %v5872, %v5753
  %v5882 = vmul.f32 %v5873, %v5753
  %v5883 = vmul.f32 %v5874, %v5753
  %v5884 = vadd.f32 %v5881, %v5757
  %v5885 = vadd.f32 %v5882, %v5757
  %v5886 = vadd.f32 %v5883, %v5757
  %v5887 = vmax.f32 %v5878, %v5884
  %v5888 = vmax.f32 %v5879, %v5885
  %v5889 = vmax.f32 %v5880, %v5886
  %v5890 = vmax.f32 %v5887, 0.0
  %v5891 = vmax.f32 %v5888, 0.0
  %v5892 = vmax.f32 %v5889, 0.0
  %s5893 = scalar_lea.vmem [#allocation3], 96
  %5894 = vst.msk [vmem:[%s5893] sm:$0xff] %vm1861, %v5890
  %5895 = vst.msk [vmem:[%s5893 + $0x8] sm:$0xff] %vm1861, %v5891
  %5896 = vst.msk [vmem:[%s5893 + $0x10] sm:$0xff] %vm1861, %v5892
  %v5897 = vld [vmem:[#allocation2 + $0xf0] sm:$0xff]
  %v5898 = vld [vmem:[#allocation2 + $0xf8] sm:$0xff]
  %v5899 = vld [vmem:[#allocation2 + $0x100] sm:$0xff]
  %v5900 = vld [vmem:[#allocation2 + $0x108] sm:$0xff]
  %v5901 = vld [vmem:[#allocation2 + $0x110] sm:$0xff]
  %v5902 = vld [vmem:[#allocation2 + $0x118] sm:$0xff]
  %v5903 = vmul.f32 %v5897, %v5753
  %v5904 = vmul.f32 %v5898, %v5753
  %v5905 = vmul.f32 %v5899, %v5753
  %v5906 = vadd.f32 %v5903, %v5757
  %v5907 = vadd.f32 %v5904, %v5757
  %v5908 = vadd.f32 %v5905, %v5757
  %v5909 = vmul.f32 %v5900, %v5753
  %v5910 = vmul.f32 %v5901, %v5753
  %v5911 = vmul.f32 %v5902, %v5753
  %v5912 = vadd.f32 %v5909, %v5757
  %v5913 = vadd.f32 %v5910, %v5757
  %v5914 = vadd.f32 %v5911, %v5757
  %v5915 = vmax.f32 %v5906, %v5912
  %v5916 = vmax.f32 %v5907, %v5913
  %v5917 = vmax.f32 %v5908, %v5914
  %v5918 = vmax.f32 %v5915, 0.0
  %v5919 = vmax.f32 %v5916, 0.0
  %v5920 = vmax.f32 %v5917, 0.0
  %s5921 = scalar_lea.vmem [#allocation3], 120
  %5922 = vst.msk [vmem:[%s5921] sm:$0xff] %vm1861, %v5918
  %5923 = vst.msk [vmem:[%s5921 + $0x8] sm:$0xff] %vm1861, %v5919
  %5924 = vst.msk [vmem:[%s5921 + $0x10] sm:$0xff] %vm1861, %v5920
  %v5925 = vld [vmem:[#allocation2 + $0x120] sm:$0xff]
  %v5926 = vld [vmem:[#allocation2 + $0x128] sm:$0xff]
  %v5927 = vld [vmem:[#allocation2 + $0x130] sm:$0xff]
  %v5928 = vld [vmem:[#allocation2 + $0x138] sm:$0xff]
  %v5929 = vld [vmem:[#allocation2 + $0x140] sm:$0xff]
  %v5930 = vld [vmem:[#allocation2 + $0x148] sm:$0xff]
  %v5931 = vmul.f32 %v5925, %v5753
  %v5932 = vmul.f32 %v5926, %v5753
  %v5933 = vmul.f32 %v5927, %v5753
  %v5934 = vadd.f32 %v5931, %v5757
  %v5935 = vadd.f32 %v5932, %v5757
  %v5936 = vadd.f32 %v5933, %v5757
  %v5937 = vmul.f32 %v5928, %v5753
  %v5938 = vmul.f32 %v5929, %v5753
  %v5939 = vmul.f32 %v5930, %v5753
  %v5940 = vadd.f32 %v5937, %v5757
  %v5941 = vadd.f32 %v5938, %v5757
  %v5942 = vadd.f32 %v5939, %v5757
  %v5943 = vmax.f32 %v5934, %v5940
  %v5944 = vmax.f32 %v5935, %v5941
  %v5945 = vmax.f32 %v5936, %v5942
  %v5946 = vmax.f32 %v5943, 0.0
  %v5947 = vmax.f32 %v5944, 0.0
  %v5948 = vmax.f32 %v5945, 0.0
  %s5949 = scalar_lea.vmem [#allocation3], 144
  %5950 = vst.msk [vmem:[%s5949] sm:$0xff] %vm1861, %v5946
  %5951 = vst.msk [vmem:[%s5949 + $0x8] sm:$0xff] %vm1861, %v5947
  %5952 = vst.msk [vmem:[%s5949 + $0x10] sm:$0xff] %vm1861, %v5948
  %v5953 = vld [vmem:[#allocation2 + $0x150] sm:$0xff]
  %v5954 = vld [vmem:[#allocation2 + $0x158] sm:$0xff]
  %v5955 = vld [vmem:[#allocation2 + $0x160] sm:$0xff]
  %v5956 = vld [vmem:[#allocation2 + $0x168] sm:$0xff]
  %v5957 = vld [vmem:[#allocation2 + $0x170] sm:$0xff]
  %v5958 = vld [vmem:[#allocation2 + $0x178] sm:$0xff]
  %v5959 = vmul.f32 %v5953, %v5753
  %v5960 = vmul.f32 %v5954, %v5753
  %v5961 = vmul.f32 %v5955, %v5753
  %v5962 = vadd.f32 %v5959, %v5757
  %v5963 = vadd.f32 %v5960, %v5757
  %v5964 = vadd.f32 %v5961, %v5757
  %v5965 = vmul.f32 %v5956, %v5753
  %v5966 = vmul.f32 %v5957, %v5753
  %v5967 = vmul.f32 %v5958, %v5753
  %v5968 = vadd.f32 %v5965, %v5757
  %v5969 = vadd.f32 %v5966, %v5757
  %v5970 = vadd.f32 %v5967, %v5757
  %v5971 = vmax.f32 %v5962, %v5968
  %v5972 = vmax.f32 %v5963, %v5969
  %v5973 = vmax.f32 %v5964, %v5970
  %v5974 = vmax.f32 %v5971, 0.0
  %v5975 = vmax.f32 %v5972, 0.0
  %v5976 = vmax.f32 %v5973, 0.0
  %s5977 = scalar_lea.vmem [#allocation3], 168
  %5978 = vst.msk [vmem:[%s5977] sm:$0xff] %vm1861, %v5974
  %5979 = vst.msk [vmem:[%s5977 + $0x8] sm:$0xff] %vm1861, %v5975
  %5980 = vst.msk [vmem:[%s5977 + $0x10] sm:$0xff] %vm1861, %v5976
  %v5981 = vld [vmem:[#allocation2 + $0x180] sm:$0xff]
  %v5982 = vld [vmem:[#allocation2 + $0x188] sm:$0xff]
  %v5983 = vld [vmem:[#allocation2 + $0x190] sm:$0xff]
  %v5984 = vld [vmem:[#allocation2 + $0x198] sm:$0xff]
  %v5985 = vld [vmem:[#allocation2 + $0x1a0] sm:$0xff]
  %v5986 = vld [vmem:[#allocation2 + $0x1a8] sm:$0xff]
  %v5987 = vmul.f32 %v5981, %v5753
  %v5988 = vmul.f32 %v5982, %v5753
  %v5989 = vmul.f32 %v5983, %v5753
  %v5990 = vadd.f32 %v5987, %v5757
  %v5991 = vadd.f32 %v5988, %v5757
  %v5992 = vadd.f32 %v5989, %v5757
  %v5993 = vmul.f32 %v5984, %v5753
  %v5994 = vmul.f32 %v5985, %v5753
  %v5995 = vmul.f32 %v5986, %v5753
  %v5996 = vadd.f32 %v5993, %v5757
  %v5997 = vadd.f32 %v5994, %v5757
  %v5998 = vadd.f32 %v5995, %v5757
  %v5999 = vmax.f32 %v5990, %v5996
  %v6000 = vmax.f32 %v5991, %v5997
  %v6001 = vmax.f32 %v5992, %v5998
  %v6002 = vmax.f32 %v5999, 0.0
  %v6003 = vmax.f32 %v6000, 0.0
  %v6004 = vmax.f32 %v6001, 0.0
  %s6005 = scalar_lea.vmem [#allocation3], 192
  %6006 = vst.msk [vmem:[%s6005] sm:$0xff] %vm1861, %v6002
  %6007 = vst.msk [vmem:[%s6005 + $0x8] sm:$0xff] %vm1861, %v6003
  %6008 = vst.msk [vmem:[%s6005 + $0x10] sm:$0xff] %vm1861, %v6004
  %v6009 = vld [vmem:[#allocation2 + $0x1b0] sm:$0xff]
  %v6010 = vld [vmem:[#allocation2 + $0x1b8] sm:$0xff]
  %v6011 = vld [vmem:[#allocation2 + $0x1c0] sm:$0xff]
  %v6012 = vld [vmem:[#allocation2 + $0x1c8] sm:$0xff]
  %v6013 = vld [vmem:[#allocation2 + $0x1d0] sm:$0xff]
  %v6014 = vld [vmem:[#allocation2 + $0x1d8] sm:$0xff]
  %v6015 = vmul.f32 %v6009, %v5753
  %v6016 = vmul.f32 %v6010, %v5753
  %v6017 = vmul.f32 %v6011, %v5753
  %v6018 = vadd.f32 %v6015, %v5757
  %v6019 = vadd.f32 %v6016, %v5757
  %v6020 = vadd.f32 %v6017, %v5757
  %v6021 = vmul.f32 %v6012, %v5753
  %v6022 = vmul.f32 %v6013, %v5753
  %v6023 = vmul.f32 %v6014, %v5753
  %v6024 = vadd.f32 %v6021, %v5757
  %v6025 = vadd.f32 %v6022, %v5757
  %v6026 = vadd.f32 %v6023, %v5757
  %v6027 = vmax.f32 %v6018, %v6024
  %v6028 = vmax.f32 %v6019, %v6025
  %v6029 = vmax.f32 %v6020, %v6026
  %v6030 = vmax.f32 %v6027, 0.0
  %v6031 = vmax.f32 %v6028, 0.0
  %v6032 = vmax.f32 %v6029, 0.0
  %s6033 = scalar_lea.vmem [#allocation3], 216
  %6034 = vst.msk [vmem:[%s6033] sm:$0xff] %vm1861, %v6030
  %6035 = vst.msk [vmem:[%s6033 + $0x8] sm:$0xff] %vm1861, %v6031
  %6036 = vst.msk [vmem:[%s6033 + $0x10] sm:$0xff] %vm1861, %v6032
  %v6037 = vld [vmem:[#allocation3] ss:$2 sm:$0xff]
  %s6038 = scalar_lea.vmem [#allocation3], 16
  %v6039 = vld [vmem:[%s6038] ss:$2 sm:$0x3]
  %s6040 = scalar_lea.vmem [#allocation3], 24
  %v6041 = vld [vmem:[%s6040] ss:$2 sm:$0xff]
  %s6042 = scalar_lea.vmem [#allocation3], 40
  %v6043 = vld [vmem:[%s6042] ss:$2 sm:$0x3]
  %s6044 = scalar_lea.vmem [#allocation3], 48
  %v6045 = vld [vmem:[%s6044] ss:$2 sm:$0xff]
  %s6046 = scalar_lea.vmem [#allocation3], 64
  %v6047 = vld [vmem:[%s6046] ss:$2 sm:$0x3]
  %s6048 = scalar_lea.vmem [#allocation3], 72
  %v6049 = vld [vmem:[%s6048] ss:$2 sm:$0xff]
  %s6050 = scalar_lea.vmem [#allocation3], 88
  %v6051 = vld [vmem:[%s6050] ss:$2 sm:$0x3]
  %s6052 = scalar_lea.vmem [#allocation3], 96
  %v6053 = vld [vmem:[%s6052] ss:$2 sm:$0xff]
  %s6054 = scalar_lea.vmem [#allocation3], 112
  %v6055 = vld [vmem:[%s6054] ss:$2 sm:$0x3]
  %s6056 = scalar_lea.vmem [#allocation3], 120
  %v6057 = vld [vmem:[%s6056] ss:$2 sm:$0xff]
  %s6058 = scalar_lea.vmem [#allocation3], 136
  %v6059 = vld [vmem:[%s6058] ss:$2 sm:$0x3]
  %s6060 = scalar_lea.vmem [#allocation3], 144
  %v6061 = vld [vmem:[%s6060] ss:$2 sm:$0xff]
  %s6062 = scalar_lea.vmem [#allocation3], 160
  %v6063 = vld [vmem:[%s6062] ss:$2 sm:$0x3]
  %s6064 = scalar_lea.vmem [#allocation3], 168
  %v6065 = vld [vmem:[%s6064] ss:$2 sm:$0xff]
  %s6066 = scalar_lea.vmem [#allocation3], 184
  %v6067 = vld [vmem:[%s6066] ss:$2 sm:$0x3]
  %s6068 = scalar_lea.vmem [#allocation3], 192
  %v6069 = vld [vmem:[%s6068] ss:$2 sm:$0xff]
  %s6070 = scalar_lea.vmem [#allocation3], 208
  %v6071 = vld [vmem:[%s6070] ss:$2 sm:$0x3]
  %s6072 = scalar_lea.vmem [#allocation3], 216
  %v6073 = vld [vmem:[%s6072] ss:$2 sm:$0xff]
  %s6074 = scalar_lea.vmem [#allocation3], 232
  %v6075 = vld [vmem:[%s6074] ss:$2 sm:$0x3]
  %s6076 = scalar_lea.vmem [#allocation3], 1
  %v6077 = vld [vmem:[%s6076] ss:$2 sm:$0xff]
  %s6078 = scalar_lea.vmem [#allocation3], 17
  %v6079 = vld [vmem:[%s6078] ss:$2 sm:$0x3]
  %s6080 = scalar_lea.vmem [#allocation3], 25
  %v6081 = vld [vmem:[%s6080] ss:$2 sm:$0xff]
  %s6082 = scalar_lea.vmem [#allocation3], 41
  %v6083 = vld [vmem:[%s6082] ss:$2 sm:$0x3]
  %s6084 = scalar_lea.vmem [#allocation3], 49
  %v6085 = vld [vmem:[%s6084] ss:$2 sm:$0xff]
  %s6086 = scalar_lea.vmem [#allocation3], 65
  %v6087 = vld [vmem:[%s6086] ss:$2 sm:$0x3]
  %s6088 = scalar_lea.vmem [#allocation3], 73
  %v6089 = vld [vmem:[%s6088] ss:$2 sm:$0xff]
  %s6090 = scalar_lea.vmem [#allocation3], 89
  %v6091 = vld [vmem:[%s6090] ss:$2 sm:$0x3]
  %s6092 = scalar_lea.vmem [#allocation3], 97
  %v6093 = vld [vmem:[%s6092] ss:$2 sm:$0xff]
  %s6094 = scalar_lea.vmem [#allocation3], 113
  %v6095 = vld [vmem:[%s6094] ss:$2 sm:$0x3]
  %s6096 = scalar_lea.vmem [#allocation3], 121
  %v6097 = vld [vmem:[%s6096] ss:$2 sm:$0xff]
  %s6098 = scalar_lea.vmem [#allocation3], 137
  %v6099 = vld [vmem:[%s6098] ss:$2 sm:$0x3]
  %s6100 = scalar_lea.vmem [#allocation3], 145
  %v6101 = vld [vmem:[%s6100] ss:$2 sm:$0xff]
  %s6102 = scalar_lea.vmem [#allocation3], 161
  %v6103 = vld [vmem:[%s6102] ss:$2 sm:$0x3]
  %s6104 = scalar_lea.vmem [#allocation3], 169
  %v6105 = vld [vmem:[%s6104] ss:$2 sm:$0xff]
  %s6106 = scalar_lea.vmem [#allocation3], 185
  %v6107 = vld [vmem:[%s6106] ss:$2 sm:$0x3]
  %s6108 = scalar_lea.vmem [#allocation3], 193
  %v6109 = vld [vmem:[%s6108] ss:$2 sm:$0xff]
  %s6110 = scalar_lea.vmem [#allocation3], 209
  %v6111 = vld [vmem:[%s6110] ss:$2 sm:$0x3]
  %s6112 = scalar_lea.vmem [#allocation3], 217
  %v6113 = vld [vmem:[%s6112] ss:$2 sm:$0xff]
  %s6114 = scalar_lea.vmem [#allocation3], 233
  %v6115 = vld [vmem:[%s6114] ss:$2 sm:$0x3]
  %v6116 = vmax.f32 %v6037, %v6077
  %v6117 = vmax.f32 %v6039, %v6079
  %v6118 = vmax.f32 %v6041, %v6081
  %v6119 = vmax.f32 %v6043, %v6083
  %v6120 = vmax.f32 %v6045, %v6085
  %v6121 = vmax.f32 %v6047, %v6087
  %v6122 = vmax.f32 %v6049, %v6089
  %v6123 = vmax.f32 %v6051, %v6091
  %v6124 = vmax.f32 %v6053, %v6093
  %v6125 = vmax.f32 %v6055, %v6095
  %v6126 = vmax.f32 %v6057, %v6097
  %v6127 = vmax.f32 %v6059, %v6099
  %v6128 = vmax.f32 %v6061, %v6101
  %v6129 = vmax.f32 %v6063, %v6103
  %v6130 = vmax.f32 %v6065, %v6105
  %v6131 = vmax.f32 %v6067, %v6107
  %v6132 = vmax.f32 %v6069, %v6109
  %v6133 = vmax.f32 %v6071, %v6111
  %v6134 = vmax.f32 %v6073, %v6113
  %v6135 = vmax.f32 %v6075, %v6115
  %v6136 = vpack.c.bf16 %v6117, %v6116
  %v6137 = vpack.c.bf16 %v6119, %v6118
  %v6138 = vpack.c.bf16 %v6121, %v6120
  %v6139 = vpack.c.bf16 %v6123, %v6122
  %v6140 = vpack.c.bf16 %v6125, %v6124
  %v6141 = vpack.c.bf16 %v6127, %v6126
  %v6142 = vpack.c.bf16 %v6129, %v6128
  %v6143 = vpack.c.bf16 %v6131, %v6130
  %v6144 = vpack.c.bf16 %v6133, %v6132
  %v6145 = vpack.c.bf16 %v6135, %v6134
  %v6156 = vunpack.c.l.b16 %v6136
  %v6157 = vunpack.c.h.b16 %v6136
  %v6158 = vunpack.c.l.b16 %v6137
  %v6159 = vunpack.c.h.b16 %v6137
  %v6160 = vunpack.c.l.b16 %v6138
  %v6161 = vunpack.c.h.b16 %v6138
  %v6162 = vunpack.c.l.b16 %v6139
  %v6163 = vunpack.c.h.b16 %v6139
  %v6164 = vunpack.c.l.b16 %v6140
  %v6165 = vunpack.c.h.b16 %v6140
  %v6166 = vunpack.c.l.b16 %v6141
  %v6167 = vunpack.c.h.b16 %v6141
  %v6168 = vunpack.c.l.b16 %v6142
  %v6169 = vunpack.c.h.b16 %v6142
  %v6170 = vunpack.c.l.b16 %v6143
  %v6171 = vunpack.c.h.b16 %v6143
  %v6172 = vunpack.c.l.b16 %v6144
  %v6173 = vunpack.c.h.b16 %v6144
  %v6174 = vunpack.c.l.b16 %v6145
  %v6175 = vunpack.c.h.b16 %v6145
  %v6176 = vpack.c.b16 %v6156, %v6156
  %v6177 = vpack.c.b16 %v6157, %v6157
  %v6178 = vpack.c.b16 %v6158, %v6158
  %v6179 = vpack.c.b16 %v6159, %v6159
  %v6180 = vpack.c.b16 %v6160, %v6160
  %v6181 = vpack.c.b16 %v6161, %v6161
  %v6182 = vpack.c.b16 %v6162, %v6162
  %v6183 = vpack.c.b16 %v6163, %v6163
  %v6184 = vpack.c.b16 %v6164, %v6164
  %v6185 = vpack.c.b16 %v6165, %v6165
  %v6186 = vpack.c.b16 %v6166, %v6166
  %v6187 = vpack.c.b16 %v6167, %v6167
  %v6188 = vpack.c.b16 %v6168, %v6168
  %v6189 = vpack.c.b16 %v6169, %v6169
  %v6190 = vpack.c.b16 %v6170, %v6170
  %v6191 = vpack.c.b16 %v6171, %v6171
  %v6192 = vpack.c.b16 %v6172, %v6172
  %v6193 = vpack.c.b16 %v6173, %v6173
  %v6194 = vpack.c.b16 %v6174, %v6174
  %v6195 = vpack.c.b16 %v6175, %v6175
  %vm6216 = vcmask 519168
  %6217 = vst.msk [vmem:[%s4] sm:$0xf] %vm6216, %v6176
  %vm6218 = vcmask 516096
  %6219 = vst.msk [vmem:[%s4 + $0x4] sm:$0x1] %vm6218, %v6177
  %6220 = vst.msk [vmem:[%s4 + $0x8] sm:$0xf] %vm6216, %v6178
  %6221 = vst.msk [vmem:[%s4 + $0xc] sm:$0x1] %vm6218, %v6179
  %6222 = vst.msk [vmem:[%s4 + $0x10] sm:$0xf] %vm6216, %v6180
  %6223 = vst.msk [vmem:[%s4 + $0x14] sm:$0x1] %vm6218, %v6181
  %6224 = vst.msk [vmem:[%s4 + $0x18] sm:$0xf] %vm6216, %v6182
  %6225 = vst.msk [vmem:[%s4 + $0x1c] sm:$0x1] %vm6218, %v6183
  %6226 = vst.msk [vmem:[%s4 + $0x20] sm:$0xf] %vm6216, %v6184
  %6227 = vst.msk [vmem:[%s4 + $0x24] sm:$0x1] %vm6218, %v6185
  %6228 = vst.msk [vmem:[%s4 + $0x28] sm:$0xf] %vm6216, %v6186
  %6229 = vst.msk [vmem:[%s4 + $0x2c] sm:$0x1] %vm6218, %v6187
  %6230 = vst.msk [vmem:[%s4 + $0x30] sm:$0xf] %vm6216, %v6188
  %6231 = vst.msk [vmem:[%s4 + $0x34] sm:$0x1] %vm6218, %v6189
  %6232 = vst.msk [vmem:[%s4 + $0x38] sm:$0xf] %vm6216, %v6190
  %6233 = vst.msk [vmem:[%s4 + $0x3c] sm:$0x1] %vm6218, %v6191
  %6234 = vst.msk [vmem:[%s4 + $0x40] sm:$0xf] %vm6216, %v6192
  %6235 = vst.msk [vmem:[%s4 + $0x44] sm:$0x1] %vm6218, %v6193
  %6236 = vst.msk [vmem:[%s4 + $0x48] sm:$0xf] %vm6216, %v6194
  %6237 = vst.msk [vmem:[%s4 + $0x4c] sm:$0x1] %vm6218, %v6195
  %v6238 = vld [vmem:[%s4984] sm:$0xff]
  %v6239 = vld [vmem:[%s4984 + $0x8] sm:$0xff]
  %v6240 = vld [vmem:[%s4984 + $0x10] sm:$0xff]
  %v6241 = vld [vmem:[%s4984 + $0x18] sm:$0xff]
  %v6242 = vld [vmem:[%s4984 + $0x20] sm:$0xff]
  %v6243 = vld [vmem:[%s4984 + $0x28] sm:$0xff]
  %v6244 = vmul.f32 %v6238, %v5753
  %v6245 = vmul.f32 %v6239, %v5753
  %v6246 = vmul.f32 %v6240, %v5753
  %v6247 = vadd.f32 %v6244, %v5757
  %v6248 = vadd.f32 %v6245, %v5757
  %v6249 = vadd.f32 %v6246, %v5757
  %v6250 = vmul.f32 %v6241, %v5753
  %v6251 = vmul.f32 %v6242, %v5753
  %v6252 = vmul.f32 %v6243, %v5753
  %v6253 = vadd.f32 %v6250, %v5757
  %v6254 = vadd.f32 %v6251, %v5757
  %v6255 = vadd.f32 %v6252, %v5757
  %v6256 = vmax.f32 %v6247, %v6253
  %v6257 = vmax.f32 %v6248, %v6254
  %v6258 = vmax.f32 %v6249, %v6255
  %v6259 = vmax.f32 %v6256, 0.0
  %v6260 = vmax.f32 %v6257, 0.0
  %v6261 = vmax.f32 %v6258, 0.0
  %6262 = vst.msk [vmem:[#allocation3] sm:$0xff] %vm1861, %v6259
  %6263 = vst.msk [vmem:[#allocation3 + $0x8] sm:$0xff] %vm1861, %v6260
  %6264 = vst.msk [vmem:[#allocation3 + $0x10] sm:$0xff] %vm1861, %v6261
  %v6265 = vld [vmem:[%s4984 + $0x30] sm:$0xff]
  %v6266 = vld [vmem:[%s4984 + $0x38] sm:$0xff]
  %v6267 = vld [vmem:[%s4984 + $0x40] sm:$0xff]
  %v6268 = vld [vmem:[%s4984 + $0x48] sm:$0xff]
  %v6269 = vld [vmem:[%s4984 + $0x50] sm:$0xff]
  %v6270 = vld [vmem:[%s4984 + $0x58] sm:$0xff]
  %v6271 = vmul.f32 %v6265, %v5753
  %v6272 = vmul.f32 %v6266, %v5753
  %v6273 = vmul.f32 %v6267, %v5753
  %v6274 = vadd.f32 %v6271, %v5757
  %v6275 = vadd.f32 %v6272, %v5757
  %v6276 = vadd.f32 %v6273, %v5757
  %v6277 = vmul.f32 %v6268, %v5753
  %v6278 = vmul.f32 %v6269, %v5753
  %v6279 = vmul.f32 %v6270, %v5753
  %v6280 = vadd.f32 %v6277, %v5757
  %v6281 = vadd.f32 %v6278, %v5757
  %v6282 = vadd.f32 %v6279, %v5757
  %v6283 = vmax.f32 %v6274, %v6280
  %v6284 = vmax.f32 %v6275, %v6281
  %v6285 = vmax.f32 %v6276, %v6282
  %v6286 = vmax.f32 %v6283, 0.0
  %v6287 = vmax.f32 %v6284, 0.0
  %v6288 = vmax.f32 %v6285, 0.0
  %6289 = vst.msk [vmem:[%s5809] sm:$0xff] %vm1861, %v6286
  %6290 = vst.msk [vmem:[%s5809 + $0x8] sm:$0xff] %vm1861, %v6287
  %6291 = vst.msk [vmem:[%s5809 + $0x10] sm:$0xff] %vm1861, %v6288
  %v6292 = vld [vmem:[%s4984 + $0x60] sm:$0xff]
  %v6293 = vld [vmem:[%s4984 + $0x68] sm:$0xff]
  %v6294 = vld [vmem:[%s4984 + $0x70] sm:$0xff]
  %v6295 = vld [vmem:[%s4984 + $0x78] sm:$0xff]
  %v6296 = vld [vmem:[%s4984 + $0x80] sm:$0xff]
  %v6297 = vld [vmem:[%s4984 + $0x88] sm:$0xff]
  %v6298 = vmul.f32 %v6292, %v5753
  %v6299 = vmul.f32 %v6293, %v5753
  %v6300 = vmul.f32 %v6294, %v5753
  %v6301 = vadd.f32 %v6298, %v5757
  %v6302 = vadd.f32 %v6299, %v5757
  %v6303 = vadd.f32 %v6300, %v5757
  %v6304 = vmul.f32 %v6295, %v5753
  %v6305 = vmul.f32 %v6296, %v5753
  %v6306 = vmul.f32 %v6297, %v5753
  %v6307 = vadd.f32 %v6304, %v5757
  %v6308 = vadd.f32 %v6305, %v5757
  %v6309 = vadd.f32 %v6306, %v5757
  %v6310 = vmax.f32 %v6301, %v6307
  %v6311 = vmax.f32 %v6302, %v6308
  %v6312 = vmax.f32 %v6303, %v6309
  %v6313 = vmax.f32 %v6310, 0.0
  %v6314 = vmax.f32 %v6311, 0.0
  %v6315 = vmax.f32 %v6312, 0.0
  %6316 = vst.msk [vmem:[%s5837] sm:$0xff] %vm1861, %v6313
  %6317 = vst.msk [vmem:[%s5837 + $0x8] sm:$0xff] %vm1861, %v6314
  %6318 = vst.msk [vmem:[%s5837 + $0x10] sm:$0xff] %vm1861, %v6315
  %v6319 = vld [vmem:[%s4984 + $0x90] sm:$0xff]
  %v6320 = vld [vmem:[%s4984 + $0x98] sm:$0xff]
  %v6321 = vld [vmem:[%s4984 + $0xa0] sm:$0xff]
  %v6322 = vld [vmem:[%s4984 + $0xa8] sm:$0xff]
  %v6323 = vld [vmem:[%s4984 + $0xb0] sm:$0xff]
  %v6324 = vld [vmem:[%s4984 + $0xb8] sm:$0xff]
  %v6325 = vmul.f32 %v6319, %v5753
  %v6326 = vmul.f32 %v6320, %v5753
  %v6327 = vmul.f32 %v6321, %v5753
  %v6328 = vadd.f32 %v6325, %v5757
  %v6329 = vadd.f32 %v6326, %v5757
  %v6330 = vadd.f32 %v6327, %v5757
  %v6331 = vmul.f32 %v6322, %v5753
  %v6332 = vmul.f32 %v6323, %v5753
  %v6333 = vmul.f32 %v6324, %v5753
  %v6334 = vadd.f32 %v6331, %v5757
  %v6335 = vadd.f32 %v6332, %v5757
  %v6336 = vadd.f32 %v6333, %v5757
  %v6337 = vmax.f32 %v6328, %v6334
  %v6338 = vmax.f32 %v6329, %v6335
  %v6339 = vmax.f32 %v6330, %v6336
  %v6340 = vmax.f32 %v6337, 0.0
  %v6341 = vmax.f32 %v6338, 0.0
  %v6342 = vmax.f32 %v6339, 0.0
  %6343 = vst.msk [vmem:[%s5865] sm:$0xff] %vm1861, %v6340
  %6344 = vst.msk [vmem:[%s5865 + $0x8] sm:$0xff] %vm1861, %v6341
  %6345 = vst.msk [vmem:[%s5865 + $0x10] sm:$0xff] %vm1861, %v6342
  %v6346 = vld [vmem:[%s4984 + $0xc0] sm:$0xff]
  %v6347 = vld [vmem:[%s4984 + $0xc8] sm:$0xff]
  %v6348 = vld [vmem:[%s4984 + $0xd0] sm:$0xff]
  %v6349 = vld [vmem:[%s4984 + $0xd8] sm:$0xff]
  %v6350 = vld [vmem:[%s4984 + $0xe0] sm:$0xff]
  %v6351 = vld [vmem:[%s4984 + $0xe8] sm:$0xff]
  %v6352 = vmul.f32 %v6346, %v5753
  %v6353 = vmul.f32 %v6347, %v5753
  %v6354 = vmul.f32 %v6348, %v5753
  %v6355 = vadd.f32 %v6352, %v5757
  %v6356 = vadd.f32 %v6353, %v5757
  %v6357 = vadd.f32 %v6354, %v5757
  %v6358 = vmul.f32 %v6349, %v5753
  %v6359 = vmul.f32 %v6350, %v5753
  %v6360 = vmul.f32 %v6351, %v5753
  %v6361 = vadd.f32 %v6358, %v5757
  %v6362 = vadd.f32 %v6359, %v5757
  %v6363 = vadd.f32 %v6360, %v5757
  %v6364 = vmax.f32 %v6355, %v6361
  %v6365 = vmax.f32 %v6356, %v6362
  %v6366 = vmax.f32 %v6357, %v6363
  %v6367 = vmax.f32 %v6364, 0.0
  %v6368 = vmax.f32 %v6365, 0.0
  %v6369 = vmax.f32 %v6366, 0.0
  %6370 = vst.msk [vmem:[%s5893] sm:$0xff] %vm1861, %v6367
  %6371 = vst.msk [vmem:[%s5893 + $0x8] sm:$0xff] %vm1861, %v6368
  %6372 = vst.msk [vmem:[%s5893 + $0x10] sm:$0xff] %vm1861, %v6369
  %v6373 = vld [vmem:[%s4984 + $0xf0] sm:$0xff]
  %v6374 = vld [vmem:[%s4984 + $0xf8] sm:$0xff]
  %v6375 = vld [vmem:[%s4984 + $0x100] sm:$0xff]
  %v6376 = vld [vmem:[%s4984 + $0x108] sm:$0xff]
  %v6377 = vld [vmem:[%s4984 + $0x110] sm:$0xff]
  %v6378 = vld [vmem:[%s4984 + $0x118] sm:$0xff]
  %v6379 = vmul.f32 %v6373, %v5753
  %v6380 = vmul.f32 %v6374, %v5753
  %v6381 = vmul.f32 %v6375, %v5753
  %v6382 = vadd.f32 %v6379, %v5757
  %v6383 = vadd.f32 %v6380, %v5757
  %v6384 = vadd.f32 %v6381, %v5757
  %v6385 = vmul.f32 %v6376, %v5753
  %v6386 = vmul.f32 %v6377, %v5753
  %v6387 = vmul.f32 %v6378, %v5753
  %v6388 = vadd.f32 %v6385, %v5757
  %v6389 = vadd.f32 %v6386, %v5757
  %v6390 = vadd.f32 %v6387, %v5757
  %v6391 = vmax.f32 %v6382, %v6388
  %v6392 = vmax.f32 %v6383, %v6389
  %v6393 = vmax.f32 %v6384, %v6390
  %v6394 = vmax.f32 %v6391, 0.0
  %v6395 = vmax.f32 %v6392, 0.0
  %v6396 = vmax.f32 %v6393, 0.0
  %6397 = vst.msk [vmem:[%s5921] sm:$0xff] %vm1861, %v6394
  %6398 = vst.msk [vmem:[%s5921 + $0x8] sm:$0xff] %vm1861, %v6395
  %6399 = vst.msk [vmem:[%s5921 + $0x10] sm:$0xff] %vm1861, %v6396
  %v6400 = vld [vmem:[%s4984 + $0x120] sm:$0xff]
  %v6401 = vld [vmem:[%s4984 + $0x128] sm:$0xff]
  %v6402 = vld [vmem:[%s4984 + $0x130] sm:$0xff]
  %v6403 = vld [vmem:[%s4984 + $0x138] sm:$0xff]
  %v6404 = vld [vmem:[%s4984 + $0x140] sm:$0xff]
  %v6405 = vld [vmem:[%s4984 + $0x148] sm:$0xff]
  %v6406 = vmul.f32 %v6400, %v5753
  %v6407 = vmul.f32 %v6401, %v5753
  %v6408 = vmul.f32 %v6402, %v5753
  %v6409 = vadd.f32 %v6406, %v5757
  %v6410 = vadd.f32 %v6407, %v5757
  %v6411 = vadd.f32 %v6408, %v5757
  %v6412 = vmul.f32 %v6403, %v5753
  %v6413 = vmul.f32 %v6404, %v5753
  %v6414 = vmul.f32 %v6405, %v5753
  %v6415 = vadd.f32 %v6412, %v5757
  %v6416 = vadd.f32 %v6413, %v5757
  %v6417 = vadd.f32 %v6414, %v5757
  %v6418 = vmax.f32 %v6409, %v6415
  %v6419 = vmax.f32 %v6410, %v6416
  %v6420 = vmax.f32 %v6411, %v6417
  %v6421 = vmax.f32 %v6418, 0.0
  %v6422 = vmax.f32 %v6419, 0.0
  %v6423 = vmax.f32 %v6420, 0.0
  %6424 = vst.msk [vmem:[%s5949] sm:$0xff] %vm1861, %v6421
  %6425 = vst.msk [vmem:[%s5949 + $0x8] sm:$0xff] %vm1861, %v6422
  %6426 = vst.msk [vmem:[%s5949 + $0x10] sm:$0xff] %vm1861, %v6423
  %v6427 = vld [vmem:[%s4984 + $0x150] sm:$0xff]
  %v6428 = vld [vmem:[%s4984 + $0x158] sm:$0xff]
  %v6429 = vld [vmem:[%s4984 + $0x160] sm:$0xff]
  %v6430 = vld [vmem:[%s4984 + $0x168] sm:$0xff]
  %v6431 = vld [vmem:[%s4984 + $0x170] sm:$0xff]
  %v6432 = vld [vmem:[%s4984 + $0x178] sm:$0xff]
  %v6433 = vmul.f32 %v6427, %v5753
  %v6434 = vmul.f32 %v6428, %v5753
  %v6435 = vmul.f32 %v6429, %v5753
  %v6436 = vadd.f32 %v6433, %v5757
  %v6437 = vadd.f32 %v6434, %v5757
  %v6438 = vadd.f32 %v6435, %v5757
  %v6439 = vmul.f32 %v6430, %v5753
  %v6440 = vmul.f32 %v6431, %v5753
  %v6441 = vmul.f32 %v6432, %v5753
  %v6442 = vadd.f32 %v6439, %v5757
  %v6443 = vadd.f32 %v6440, %v5757
  %v6444 = vadd.f32 %v6441, %v5757
  %v6445 = vmax.f32 %v6436, %v6442
  %v6446 = vmax.f32 %v6437, %v6443
  %v6447 = vmax.f32 %v6438, %v6444
  %v6448 = vmax.f32 %v6445, 0.0
  %v6449 = vmax.f32 %v6446, 0.0
  %v6450 = vmax.f32 %v6447, 0.0
  %6451 = vst.msk [vmem:[%s5977] sm:$0xff] %vm1861, %v6448
  %6452 = vst.msk [vmem:[%s5977 + $0x8] sm:$0xff] %vm1861, %v6449
  %6453 = vst.msk [vmem:[%s5977 + $0x10] sm:$0xff] %vm1861, %v6450
  %v6454 = vld [vmem:[%s4984 + $0x180] sm:$0xff]
  %v6455 = vld [vmem:[%s4984 + $0x188] sm:$0xff]
  %v6456 = vld [vmem:[%s4984 + $0x190] sm:$0xff]
  %v6457 = vld [vmem:[%s4984 + $0x198] sm:$0xff]
  %v6458 = vld [vmem:[%s4984 + $0x1a0] sm:$0xff]
  %v6459 = vld [vmem:[%s4984 + $0x1a8] sm:$0xff]
  %v6460 = vmul.f32 %v6454, %v5753
  %v6461 = vmul.f32 %v6455, %v5753
  %v6462 = vmul.f32 %v6456, %v5753
  %v6463 = vadd.f32 %v6460, %v5757
  %v6464 = vadd.f32 %v6461, %v5757
  %v6465 = vadd.f32 %v6462, %v5757
  %v6466 = vmul.f32 %v6457, %v5753
  %v6467 = vmul.f32 %v6458, %v5753
  %v6468 = vmul.f32 %v6459, %v5753
  %v6469 = vadd.f32 %v6466, %v5757
  %v6470 = vadd.f32 %v6467, %v5757
  %v6471 = vadd.f32 %v6468, %v5757
  %v6472 = vmax.f32 %v6463, %v6469
  %v6473 = vmax.f32 %v6464, %v6470
  %v6474 = vmax.f32 %v6465, %v6471
  %v6475 = vmax.f32 %v6472, 0.0
  %v6476 = vmax.f32 %v6473, 0.0
  %v6477 = vmax.f32 %v6474, 0.0
  %6478 = vst.msk [vmem:[%s6005] sm:$0xff] %vm1861, %v6475
  %6479 = vst.msk [vmem:[%s6005 + $0x8] sm:$0xff] %vm1861, %v6476
  %6480 = vst.msk [vmem:[%s6005 + $0x10] sm:$0xff] %vm1861, %v6477
  %v6481 = vld [vmem:[%s4984 + $0x1b0] sm:$0xff]
  %v6482 = vld [vmem:[%s4984 + $0x1b8] sm:$0xff]
  %v6483 = vld [vmem:[%s4984 + $0x1c0] sm:$0xff]
  %v6484 = vld [vmem:[%s4984 + $0x1c8] sm:$0xff]
  %v6485 = vld [vmem:[%s4984 + $0x1d0] sm:$0xff]
  %v6486 = vld [vmem:[%s4984 + $0x1d8] sm:$0xff]
  %v6487 = vmul.f32 %v6481, %v5753
  %v6488 = vmul.f32 %v6482, %v5753
  %v6489 = vmul.f32 %v6483, %v5753
  %v6490 = vadd.f32 %v6487, %v5757
  %v6491 = vadd.f32 %v6488, %v5757
  %v6492 = vadd.f32 %v6489, %v5757
  %v6493 = vmul.f32 %v6484, %v5753
  %v6494 = vmul.f32 %v6485, %v5753
  %v6495 = vmul.f32 %v6486, %v5753
  %v6496 = vadd.f32 %v6493, %v5757
  %v6497 = vadd.f32 %v6494, %v5757
  %v6498 = vadd.f32 %v6495, %v5757
  %v6499 = vmax.f32 %v6490, %v6496
  %v6500 = vmax.f32 %v6491, %v6497
  %v6501 = vmax.f32 %v6492, %v6498
  %v6502 = vmax.f32 %v6499, 0.0
  %v6503 = vmax.f32 %v6500, 0.0
  %v6504 = vmax.f32 %v6501, 0.0
  %6505 = vst.msk [vmem:[%s6033] sm:$0xff] %vm1861, %v6502
  %6506 = vst.msk [vmem:[%s6033 + $0x8] sm:$0xff] %vm1861, %v6503
  %6507 = vst.msk [vmem:[%s6033 + $0x10] sm:$0xff] %vm1861, %v6504
  %v6508 = vld [vmem:[#allocation3] ss:$2 sm:$0xff]
  %v6509 = vld [vmem:[%s6038] ss:$2 sm:$0x3]
  %v6510 = vld [vmem:[%s6040] ss:$2 sm:$0xff]
  %v6511 = vld [vmem:[%s6042] ss:$2 sm:$0x3]
  %v6512 = vld [vmem:[%s6044] ss:$2 sm:$0xff]
  %v6513 = vld [vmem:[%s6046] ss:$2 sm:$0x3]
  %v6514 = vld [vmem:[%s6048] ss:$2 sm:$0xff]
  %v6515 = vld [vmem:[%s6050] ss:$2 sm:$0x3]
  %v6516 = vld [vmem:[%s6052] ss:$2 sm:$0xff]
  %v6517 = vld [vmem:[%s6054] ss:$2 sm:$0x3]
  %v6518 = vld [vmem:[%s6056] ss:$2 sm:$0xff]
  %v6519 = vld [vmem:[%s6058] ss:$2 sm:$0x3]
  %v6520 = vld [vmem:[%s6060] ss:$2 sm:$0xff]
  %v6521 = vld [vmem:[%s6062] ss:$2 sm:$0x3]
  %v6522 = vld [vmem:[%s6064] ss:$2 sm:$0xff]
  %v6523 = vld [vmem:[%s6066] ss:$2 sm:$0x3]
  %v6524 = vld [vmem:[%s6068] ss:$2 sm:$0xff]
  %v6525 = vld [vmem:[%s6070] ss:$2 sm:$0x3]
  %v6526 = vld [vmem:[%s6072] ss:$2 sm:$0xff]
  %v6527 = vld [vmem:[%s6074] ss:$2 sm:$0x3]
  %v6528 = vld [vmem:[%s6076] ss:$2 sm:$0xff]
  %v6529 = vld [vmem:[%s6078] ss:$2 sm:$0x3]
  %v6530 = vld [vmem:[%s6080] ss:$2 sm:$0xff]
  %v6531 = vld [vmem:[%s6082] ss:$2 sm:$0x3]
  %v6532 = vld [vmem:[%s6084] ss:$2 sm:$0xff]
  %v6533 = vld [vmem:[%s6086] ss:$2 sm:$0x3]
  %v6534 = vld [vmem:[%s6088] ss:$2 sm:$0xff]
  %v6535 = vld [vmem:[%s6090] ss:$2 sm:$0x3]
  %v6536 = vld [vmem:[%s6092] ss:$2 sm:$0xff]
  %v6537 = vld [vmem:[%s6094] ss:$2 sm:$0x3]
  %v6538 = vld [vmem:[%s6096] ss:$2 sm:$0xff]
  %v6539 = vld [vmem:[%s6098] ss:$2 sm:$0x3]
  %v6540 = vld [vmem:[%s6100] ss:$2 sm:$0xff]
  %v6541 = vld [vmem:[%s6102] ss:$2 sm:$0x3]
  %v6542 = vld [vmem:[%s6104] ss:$2 sm:$0xff]
  %v6543 = vld [vmem:[%s6106] ss:$2 sm:$0x3]
  %v6544 = vld [vmem:[%s6108] ss:$2 sm:$0xff]
  %v6545 = vld [vmem:[%s6110] ss:$2 sm:$0x3]
  %v6546 = vld [vmem:[%s6112] ss:$2 sm:$0xff]
  %v6547 = vld [vmem:[%s6114] ss:$2 sm:$0x3]
  %v6548 = vmax.f32 %v6508, %v6528
  %v6549 = vmax.f32 %v6509, %v6529
  %v6550 = vmax.f32 %v6510, %v6530
  %v6551 = vmax.f32 %v6511, %v6531
  %v6552 = vmax.f32 %v6512, %v6532
  %v6553 = vmax.f32 %v6513, %v6533
  %v6554 = vmax.f32 %v6514, %v6534
  %v6555 = vmax.f32 %v6515, %v6535
  %v6556 = vmax.f32 %v6516, %v6536
  %v6557 = vmax.f32 %v6517, %v6537
  %v6558 = vmax.f32 %v6518, %v6538
  %v6559 = vmax.f32 %v6519, %v6539
  %v6560 = vmax.f32 %v6520, %v6540
  %v6561 = vmax.f32 %v6521, %v6541
  %v6562 = vmax.f32 %v6522, %v6542
  %v6563 = vmax.f32 %v6523, %v6543
  %v6564 = vmax.f32 %v6524, %v6544
  %v6565 = vmax.f32 %v6525, %v6545
  %v6566 = vmax.f32 %v6526, %v6546
  %v6567 = vmax.f32 %v6527, %v6547
  %v6568 = vpack.c.bf16 %v6549, %v6548
  %v6569 = vpack.c.bf16 %v6551, %v6550
  %v6570 = vpack.c.bf16 %v6553, %v6552
  %v6571 = vpack.c.bf16 %v6555, %v6554
  %v6572 = vpack.c.bf16 %v6557, %v6556
  %v6573 = vpack.c.bf16 %v6559, %v6558
  %v6574 = vpack.c.bf16 %v6561, %v6560
  %v6575 = vpack.c.bf16 %v6563, %v6562
  %v6576 = vpack.c.bf16 %v6565, %v6564
  %v6577 = vpack.c.bf16 %v6567, %v6566
  %v6588 = vunpack.c.l.b16 %v6568
  %v6589 = vunpack.c.h.b16 %v6568
  %v6590 = vunpack.c.l.b16 %v6569
  %v6591 = vunpack.c.h.b16 %v6569
  %v6592 = vunpack.c.l.b16 %v6570
  %v6593 = vunpack.c.h.b16 %v6570
  %v6594 = vunpack.c.l.b16 %v6571
  %v6595 = vunpack.c.h.b16 %v6571
  %v6596 = vunpack.c.l.b16 %v6572
  %v6597 = vunpack.c.h.b16 %v6572
  %v6598 = vunpack.c.l.b16 %v6573
  %v6599 = vunpack.c.h.b16 %v6573
  %v6600 = vunpack.c.l.b16 %v6574
  %v6601 = vunpack.c.h.b16 %v6574
  %v6602 = vunpack.c.l.b16 %v6575
  %v6603 = vunpack.c.h.b16 %v6575
  %v6604 = vunpack.c.l.b16 %v6576
  %v6605 = vunpack.c.h.b16 %v6576
  %v6606 = vunpack.c.l.b16 %v6577
  %v6607 = vunpack.c.h.b16 %v6577
  %v6608 = vpack.c.b16 %v6588, %v6588
  %v6609 = vpack.c.b16 %v6589, %v6589
  %v6610 = vpack.c.b16 %v6590, %v6590
  %v6611 = vpack.c.b16 %v6591, %v6591
  %v6612 = vpack.c.b16 %v6592, %v6592
  %v6613 = vpack.c.b16 %v6593, %v6593
  %v6614 = vpack.c.b16 %v6594, %v6594
  %v6615 = vpack.c.b16 %v6595, %v6595
  %v6616 = vpack.c.b16 %v6596, %v6596
  %v6617 = vpack.c.b16 %v6597, %v6597
  %v6618 = vpack.c.b16 %v6598, %v6598
  %v6619 = vpack.c.b16 %v6599, %v6599
  %v6620 = vpack.c.b16 %v6600, %v6600
  %v6621 = vpack.c.b16 %v6601, %v6601
  %v6622 = vpack.c.b16 %v6602, %v6602
  %v6623 = vpack.c.b16 %v6603, %v6603
  %v6624 = vpack.c.b16 %v6604, %v6604
  %v6625 = vpack.c.b16 %v6605, %v6605
  %v6626 = vpack.c.b16 %v6606, %v6606
  %v6627 = vpack.c.b16 %v6607, %v6607
  %s6648 = scalar_lea.vmem %s4, 80
  %6649 = vst.msk [vmem:[%s6648] sm:$0xf] %vm6216, %v6608
  %6650 = vst.msk [vmem:[%s6648 + $0x4] sm:$0x1] %vm6218, %v6609
  %6651 = vst.msk [vmem:[%s6648 + $0x8] sm:$0xf] %vm6216, %v6610
  %6652 = vst.msk [vmem:[%s6648 + $0xc] sm:$0x1] %vm6218, %v6611
  %6653 = vst.msk [vmem:[%s6648 + $0x10] sm:$0xf] %vm6216, %v6612
  %6654 = vst.msk [vmem:[%s6648 + $0x14] sm:$0x1] %vm6218, %v6613
  %6655 = vst.msk [vmem:[%s6648 + $0x18] sm:$0xf] %vm6216, %v6614
  %6656 = vst.msk [vmem:[%s6648 + $0x1c] sm:$0x1] %vm6218, %v6615
  %6657 = vst.msk [vmem:[%s6648 + $0x20] sm:$0xf] %vm6216, %v6616
  %6658 = vst.msk [vmem:[%s6648 + $0x24] sm:$0x1] %vm6218, %v6617
  %6659 = vst.msk [vmem:[%s6648 + $0x28] sm:$0xf] %vm6216, %v6618
  %6660 = vst.msk [vmem:[%s6648 + $0x2c] sm:$0x1] %vm6218, %v6619
  %6661 = vst.msk [vmem:[%s6648 + $0x30] sm:$0xf] %vm6216, %v6620
  %6662 = vst.msk [vmem:[%s6648 + $0x34] sm:$0x1] %vm6218, %v6621
  %6663 = vst.msk [vmem:[%s6648 + $0x38] sm:$0xf] %vm6216, %v6622
  %6664 = vst.msk [vmem:[%s6648 + $0x3c] sm:$0x1] %vm6218, %v6623
  %6665 = vst.msk [vmem:[%s6648 + $0x40] sm:$0xf] %vm6216, %v6624
  %6666 = vst.msk [vmem:[%s6648 + $0x44] sm:$0x1] %vm6218, %v6625
  %6667 = vst.msk [vmem:[%s6648 + $0x48] sm:$0xf] %vm6216, %v6626
  %6668 = vst.msk [vmem:[%s6648 + $0x4c] sm:$0x1] %vm6218, %v6627
  // Predicated region
  $region18: #{convnet_forward.3} parent=0 // pred_check
    _
  $region19: #{convnet_forward.3} parent=0 // pred_check_branch
    %6670 = sbr.rel (0) target = $region21
  $region20: #{convnet_forward.3} parent=0 // pred_region
    _
  $region21: #{convnet_forward.3} parent=0 // pred_fallthru
    _
  // Predicated region
  $region22: #{convnet_forward.3} parent=0 // pred_check
    _
  $region23: #{convnet_forward.3} parent=0 // pred_check_branch
    %6672 = sbr.rel (0) target = $region25
  $region24: #{convnet_forward.3} parent=0 // pred_region
    _
  $region25: #{convnet_forward.3} parent=0 // pred_fallthru
    _

</llo_original>
